<compile_context>
chip_gen: v6e
topology: v6e:2x2x1
jax: 0.10.0
libtpu: 0.0.40
codegen_flags: <defaults>
</compile_context>

<pallas_src>
import functools

import jax
import jax.numpy as jnp
from jax.experimental import pallas as pl
from jax.experimental.pallas import tpu as pltpu

EPS = 1e-5
LANE = 128


def _round_up(x, m):
    return (x + m - 1) // m * m


def _pick_row_tile(hw, target=1024):
    """Largest divisor of hw that is a multiple of 8 and <= target (or hw)."""
    if hw <= target:
        return hw
    for t in range(target, 7, -1):
        if hw % t == 0 and t % 8 == 0:
            return t
    return hw


# ----------------------------------------------------------------------------
# In-kernel 3x3 "same" convolution of one flattened image.
# ----------------------------------------------------------------------------
def _conv3x3_flat(x_flat, w_ref, *, H, W, Cp):
    """3x3 / stride 1 / pad 1 conv of a single image.

    x_flat: (H*W, Cp) activations already in the MXU dtype; rows are pixels
            (row-major h, w), lanes are the zero-padded channel dim.
    w_ref:  (9, Cp, Cp) weight ref in the same dtype, w[dy*3+dx, cin, cout].
    Returns f32 (H*W, Cp) conv output (MXU accumulates in f32).
    """
    HW = H * W
    # Column-validity masks: the +-1 column shifts of the 3x3 window wrap
    # across image rows in the flattened layout; zero the wrapped column in
    # the source instead of materializing a 2-D (H+2, W+2) halo.
    w_idx = jax.lax.broadcasted_iota(jnp.int32, (HW, 1), 0) % W
    zero = jnp.zeros((), x_flat.dtype)
    x_m = jnp.where(w_idx != (W - 1), x_flat, zero)   # used by dx = -1 taps
    x_p = jnp.where(w_idx != 0, x_flat, zero)         # used by dx = +1 taps
    zrows = jnp.zeros((W + 1, Cp), x_flat.dtype)
    padded = (
        jnp.concatenate([zrows, x_m, zrows], axis=0),      # dx = -1
        jnp.concatenate([zrows, x_flat, zrows], axis=0),   # dx =  0
        jnp.concatenate([zrows, x_p, zrows], axis=0),      # dx = +1
    )
    acc = jnp.zeros((HW, Cp), jnp.float32)
    # 9-tap accumulation: each tap is a (HW, Cp) @ (Cp, Cp) MXU matmul with a
    # lane-dense contraction (Cp >= 128), so MXU fill/drain is amortized.
    for dy in range(3):
        for dx in range(3):
            start = (W + 1) + (dy - 1) * W + (dx - 1)      # static sublane shift
            patch = padded[dx][start:start + HW, :]
            acc = acc + jax.lax.dot_general(
                patch, w_ref[dy * 3 + dx],
                (((1,), (0,)), ((), ())),
                preferred_element_type=jnp.float32)
    return acc


# ----------------------------------------------------------------------------
# Pass 1 / pass 2 kernel: [optional fused BN + ReLU on the input read] ->
# conv3x3 -> lane-dense output + per-image channel sum / sum-of-squares.
# ----------------------------------------------------------------------------
def _conv_stats_kernel(*refs, H, W, Cp, mxu_dtype, apply_affine_relu):
    if apply_affine_relu:
        x_ref, scale_ref, shift_ref, w_ref, y_ref, s1_ref, s2_ref = refs
        # BatchNorm of the *previous* conv (precomputed scale/shift) + ReLU,
        # fused into this conv's input read; f32 VPU math, one cast to MXU dtype.
        a = x_ref[0].astype(jnp.float32)
        a = jnp.maximum(a * scale_ref[...] + shift_ref[...], 0.0)
        a = a.astype(mxu_dtype)
    else:
        x_ref, w_ref, y_ref, s1_ref, s2_ref = refs
        a = x_ref[0].astype(mxu_dtype)                   # no-op cast: slab == MXU dtype

    y = _conv3x3_flat(a, w_ref, H=H, W=W, Cp=Cp)         # f32 accumulator

    y_ref[0] = y.astype(y_ref.dtype)
    # Per-image, per-channel sum and sum-of-squares (one-pass BN statistics);
    # the tiny (N, 1, Cp) reduction over N happens in the wrapper.
    s1_ref[0] = jnp.sum(y, axis=0, keepdims=True)
    s2_ref[0] = jnp.sum(y * y, axis=0, keepdims=True)


def _conv_stats_pass(x, w, *, H, W, Cp, mxu_dtype, out_dtype,
                     scale=None, shift=None):
    N, HW, _ = x.shape
    apply_affine = scale is not None
    kern = functools.partial(_conv_stats_kernel, H=H, W=W, Cp=Cp,
                             mxu_dtype=mxu_dtype,
                             apply_affine_relu=apply_affine)

    in_specs = [pl.BlockSpec((1, HW, Cp), lambda n: (n, 0, 0))]
    args = [x]
    if apply_affine:
        in_specs += [pl.BlockSpec((1, Cp), lambda n: (0, 0)),
                     pl.BlockSpec((1, Cp), lambda n: (0, 0))]
        args += [scale, shift]
    in_specs.append(pl.BlockSpec((9, Cp, Cp), lambda n: (0, 0, 0)))
    args.append(w)

    cost = pl.CostEstimate(
        flops=2 * N * HW * 9 * Cp * Cp,
        transcendentals=0,
        bytes_accessed=int(x.size * x.dtype.itemsize
                           + w.size * w.dtype.itemsize
                           + N * HW * Cp * jnp.dtype(out_dtype).itemsize
                           + 2 * N * Cp * 4))

    return pl.pallas_call(
        kern,
        out_shape=(jax.ShapeDtypeStruct((N, HW, Cp), out_dtype),
                   jax.ShapeDtypeStruct((N, 1, Cp), jnp.float32),
                   jax.ShapeDtypeStruct((N, 1, Cp), jnp.float32)),
        grid=(N,),
        in_specs=in_specs,
        out_specs=(pl.BlockSpec((1, HW, Cp), lambda n: (n, 0, 0)),
                   pl.BlockSpec((1, 1, Cp), lambda n: (n, 0, 0)),
                   pl.BlockSpec((1, 1, Cp), lambda n: (n, 0, 0))),
        compiler_params=pltpu.CompilerParams(
            dimension_semantics=("parallel",),     # shard batch across v7x TCs
            vmem_limit_bytes=32 * 1024 * 1024),
        cost_estimate=cost,
    )(*args)


# ----------------------------------------------------------------------------
# Pass 3 kernel: BN2 normalize + residual add + ReLU (elementwise, row-tiled).
# ----------------------------------------------------------------------------
def _bn_add_relu_kernel(y_ref, r_ref, scale_ref, shift_ref, o_ref):
    y = y_ref[0].astype(jnp.float32) * scale_ref[...] + shift_ref[...]
    o_ref[0] = jnp.maximum(y + r_ref[0].astype(jnp.float32), 0.0).astype(o_ref.dtype)


def _bn_add_relu_pass(y, residual, scale, shift, *, HW, Cp):
    N = y.shape[0]
    T = _pick_row_tile(HW)
    cost = pl.CostEstimate(
        flops=4 * N * HW * Cp,
        transcendentals=0,
        bytes_accessed=int(y.size * y.dtype.itemsize
                           + residual.size * residual.dtype.itemsize
                           + N * HW * Cp * 4))
    return pl.pallas_call(
        _bn_add_relu_kernel,
        out_shape=jax.ShapeDtypeStruct((N, HW, Cp), jnp.float32),
        grid=(N, HW // T),
        in_specs=[pl.BlockSpec((1, T, Cp), lambda n, t: (n, t, 0)),
                  pl.BlockSpec((1, T, Cp), lambda n, t: (n, t, 0)),
                  pl.BlockSpec((1, Cp), lambda n, t: (0, 0)),
                  pl.BlockSpec((1, Cp), lambda n, t: (0, 0))],
        out_specs=pl.BlockSpec((1, T, Cp), lambda n, t: (n, t, 0)),
        compiler_params=pltpu.CompilerParams(
            dimension_semantics=("parallel", "parallel"),
            vmem_limit_bytes=32 * 1024 * 1024),
        cost_estimate=cost,
    )(y, residual, scale, shift)


def _bn_affine(s1, s2, gamma, beta, count):
    """Fold batch statistics into a per-channel scale/shift (f32)."""
    mean = jnp.sum(s1, axis=0) / count                       # (1, Cp)
    ex2 = jnp.sum(s2, axis=0) / count
    var = jnp.maximum(ex2 - mean * mean, 0.0)                # one-pass, biased
    scale = gamma * jax.lax.rsqrt(var + EPS)
    shift = beta - mean * scale
    return scale, shift


# ----------------------------------------------------------------------------
# ResidualBlock forward (stride=1, downsample=None).
# ----------------------------------------------------------------------------
def residual_block_forward(x_nchw, kparams, *, mxu_dtype=jnp.bfloat16):
    N, C, H, W = x_nchw.shape
    Cp = kparams["w1"].shape[-1]
    HW = H * W
    count = jnp.float32(N * H * W)

    # NCHW -> lane-dense (N, H*W, Cp) slab in the MXU/activation dtype;
    # channels zero-padded to Cp lanes.  (The convs consume this dtype anyway,
    # so storing it narrow halves the pass-1 input and pass-3 residual reads.)
    x = jnp.transpose(x_nchw, (0, 2, 3, 1)).astype(mxu_dtype)
    x = jnp.pad(x, ((0, 0), (0, 0), (0, 0), (0, Cp - C))).reshape(N, HW, Cp)

    w1 = kparams["w1"].astype(mxu_dtype)
    w2 = kparams["w2"].astype(mxu_dtype)

    # Pass 1: conv1 + BN1 batch statistics.
    y1, s11, s12 = _conv_stats_pass(x, w1, H=H, W=W, Cp=Cp,
                                    mxu_dtype=mxu_dtype, out_dtype=mxu_dtype)
    scale1, shift1 = _bn_affine(s11, s12, kparams["g1"], kparams["b1"], count)

    # Pass 2: BN1 + ReLU fused into the input read, conv2 + BN2 statistics.
    y2, s21, s22 = _conv_stats_pass(y1, w2, H=H, W=W, Cp=Cp,
                                    mxu_dtype=mxu_dtype, out_dtype=mxu_dtype,
                                    scale=scale1, shift=shift1)
    scale2, shift2 = _bn_affine(s21, s22, kparams["g2"], kparams["b2"], count)

    # Pass 3: BN2 + residual add + ReLU (forced by the batch-stats barrier).
    out = _bn_add_relu_pass(y2, x, scale2, shift2, HW=HW, Cp=Cp)

    # Lane-dense slab -> NCHW, drop channel padding.
    out = out.reshape(N, H, W, Cp)[:, :, :, :C]
    return jnp.transpose(out, (0, 3, 1, 2))


# ----------------------------------------------------------------------------
# Parameters (PyTorch layout) and kernel-layout preparation.
# ----------------------------------------------------------------------------
def init_params(key, in_channels, out_channels):
    k1, k2 = jax.random.split(key)
    fan1 = in_channels * 9
    fan2 = out_channels * 9
    return {
        "w1": jax.random.normal(k1, (out_channels, in_channels, 3, 3),
                                jnp.float32) * (2.0 / fan1) ** 0.5,
        "w2": jax.random.normal(k2, (out_channels, out_channels, 3, 3),
                                jnp.float32) * (2.0 / fan2) ** 0.5,
        "g1": jnp.ones((out_channels,), jnp.float32),
        "b1": jnp.zeros((out_channels,), jnp.float32),
        "g2": jnp.ones((out_channels,), jnp.float32),
        "b2": jnp.zeros((out_channels,), jnp.float32),
    }


def prepare_params(params, in_channels, out_channels):
    """PyTorch layout -> kernel layout (tap-major weights, channels padded to
    a multiple of 128 lanes)."""
    assert in_channels == out_channels, "stride=1 / downsample=None block"
    C = out_channels
    Cp = _round_up(C, LANE)

    def prep_w(w_oihw):
        # (Cout, Cin, 3, 3) -> (9, Cp, Cp), tap-major (t = dy*3 + dx).
        w = jnp.transpose(w_oihw, (2, 3, 1, 0)).reshape(9, C, C)
        return jnp.pad(w, ((0, 0), (0, Cp - C), (0, Cp - C)))

    def prep_v(v):
        return jnp.pad(v, (0, Cp - C)).reshape(1, Cp)

    return {"w1": prep_w(params["w1"]), "w2": prep_w(params["w2"]),
            "g1": prep_v(params["g1"]), "b1": prep_v(params["b1"]),
            "g2": prep_v(params["g2"]), "b2": prep_v(params["b2"])}


# ----------------------------------------------------------------------------
# Pure-JAX reference (PyTorch training-mode forward semantics).
# ----------------------------------------------------------------------------
def _ref_forward(x_nchw, params):
    x = jnp.transpose(x_nchw, (0, 2, 3, 1)).astype(jnp.float32)

    def conv(inp, w_oihw):
        w = jnp.transpose(w_oihw, (2, 3, 1, 0))       # HWIO
        return jax.lax.conv_general_dilated(
            inp, w, window_strides=(1, 1), padding="SAME",
            dimension_numbers=("NHWC", "HWIO", "NHWC"))

    def bn(y, g, b):
        mean = jnp.mean(y, axis=(0, 1, 2), keepdims=True)
        var = jnp.mean((y - mean) ** 2, axis=(0, 1, 2), keepdims=True)
        return (y - mean) * jax.lax.rsqrt(var + EPS) * g + b

    out = jax.nn.relu(bn(conv(x, params["w1"]), params["g1"], params["b1"]))
    out = bn(conv(out, params["w2"]), params["g2"], params["b2"]) + x
    return jnp.transpose(jax.nn.relu(out), (0, 3, 1, 2))


if __name__ == "__main__":
    key = jax.random.PRNGKey(0)
    kx, kp = jax.random.split(key)

    N, C, H, W = 2, 4, 16, 16            # in_channels == out_channels, stride=1
    x = jax.random.normal(kx, (N, C, H, W), jnp.float32)
    params = init_params(kp, C, C)
    kparams = prepare_params(params, C, C)

    ref = jax.block_until_ready(_ref_forward(x, params))

    # f32 MXU path: faithful to the PyTorch f32 forward.
    fwd_f32 = jax.jit(functools.partial(residual_block_forward,
                                        mxu_dtype=jnp.float32))
    out_f32 = jax.block_until_ready(fwd_f32(x, kparams))
    assert out_f32.shape == (N, C, H, W)
    err32 = float(jnp.max(jnp.abs(out_f32 - ref)))
    assert err32 < 1e-3, f"f32 path mismatch vs reference: {err32}"

    # bf16 MXU / inter-pass path (preferred on v6e/v7x): f32 accumulation and
    # f32 VPU math, so only the expected bf16 rounding remains.
    fwd_bf16 = jax.jit(functools.partial(residual_block_forward,
                                         mxu_dtype=jnp.bfloat16))
    out_bf16 = jax.block_until_ready(fwd_bf16(x, kparams))
    err16 = float(jnp.max(jnp.abs(out_bf16 - ref)))
    assert err16 < 1e-1, f"bf16 path mismatch vs reference: {err16}"

    print("KERNEL_OK")
</pallas_src>

<mosaic_0001>
module attributes {stable_mosaic.version = 11 : i64} {
  func.func @_conv_stats_kernel(%arg0: i32, %arg1: memref<1x256x128xf32, #tpu.memory_space<vmem>>, %arg2: memref<9x128x128xf32, #tpu.memory_space<vmem>>, %arg3: memref<1x256x128xf32, #tpu.memory_space<vmem>>, %arg4: memref<1x1x128xf32, #tpu.memory_space<vmem>>, %arg5: memref<1x1x128xf32, #tpu.memory_space<vmem>>) attributes {dimension_semantics = [#tpu.dimension_semantics<parallel>], iteration_bounds = array<i64: 2>, scalar_prefetch = 0 : i64, scratch_operands = 0 : i64, tpu.core_type = #tpu.core_type<tc>, window_params = [{transform_indices = @transform_0, window_bounds = array<i64: 1, 256, 128>}, {pipeline_mode = #tpu.pipeline_mode<synchronous>, transform_indices = @transform_1, window_bounds = array<i64: 9, 128, 128>}, {transform_indices = @transform_2, window_bounds = array<i64: 1, 256, 128>}, {transform_indices = @transform_3, window_bounds = array<i64: 1, 1, 128>}, {transform_indices = @transform_4, window_bounds = array<i64: 1, 1, 128>}]} {
    %c0 = arith.constant 0 : index
    %c0_0 = arith.constant 0 : index
    %c0_1 = arith.constant 0 : index
    %0 = vector.load %arg1[%c0, %c0_0, %c0_1] : memref<1x256x128xf32, #tpu.memory_space<vmem>>, vector<1x256x128xf32>
    %1 = vector.shape_cast %0 : vector<1x256x128xf32> to vector<256x128xf32>
    %2 = tpu.iota {dimensions = array<i32: 0>} : vector<256x1xi32>
    %c16_i32 = arith.constant 16 : i32
    %c0_i32 = arith.constant 0 : i32
    %3 = arith.cmpi eq, %c16_i32, %c0_i32 : i32
    %c1_i32 = arith.constant 1 : i32
    %4 = arith.select %3, %c1_i32, %c16_i32 : i32
    %5 = vector.broadcast %4 : i32 to vector<256x1xi32>
    %6 = arith.remsi %2, %5 : vector<256x1xi32>
    %c0_i32_2 = arith.constant 0 : i32
    %7 = vector.broadcast %c0_i32_2 : i32 to vector<256x1xi32>
    %8 = arith.cmpi ne, %6, %7 : vector<256x1xi32>
    %c0_i32_3 = arith.constant 0 : i32
    %9 = vector.broadcast %c0_i32_3 : i32 to vector<256x1xi32>
    %10 = arith.cmpi slt, %6, %9 : vector<256x1xi32>
    %c0_i32_4 = arith.constant 0 : i32
    %11 = arith.cmpi slt, %4, %c0_i32_4 : i32
    %12 = vector.broadcast %11 : i1 to vector<256x1xi1>
    %13 = vector.broadcast %12 : vector<256x1xi1> to vector<256x1xi1>
    %14 = arith.xori %10, %13 : vector<256x1xi1>
    %15 = arith.andi %14, %8 : vector<256x1xi1>
    %16 = vector.broadcast %4 : i32 to vector<256x1xi32>
    %17 = arith.addi %6, %16 : vector<256x1xi32>
    %18 = arith.select %15, %17, %6 : vector<256x1xi1>, vector<256x1xi32>
    %c15_i32 = arith.constant 15 : i32
    %19 = vector.broadcast %c15_i32 : i32 to vector<256x1xi32>
    %20 = arith.cmpi ne, %18, %19 : vector<256x1xi32>
    %cst = arith.constant 0.000000e+00 : f32
    %21 = vector.shape_cast %20 : vector<256x1xi1> to vector<256x1xi1>
    %22 = vector.broadcast %21 : vector<256x1xi1> to vector<256x128xi1>
    %23 = vector.broadcast %cst : f32 to vector<256x128xf32>
    %24 = arith.select %22, %1, %23 : vector<256x128xi1>, vector<256x128xf32>
    %c0_i32_5 = arith.constant 0 : i32
    %25 = vector.broadcast %c0_i32_5 : i32 to vector<256x1xi32>
    %26 = arith.cmpi ne, %18, %25 : vector<256x1xi32>
    %cst_6 = arith.constant 0.000000e+00 : f32
    %27 = vector.shape_cast %26 : vector<256x1xi1> to vector<256x1xi1>
    %28 = vector.broadcast %27 : vector<256x1xi1> to vector<256x128xi1>
    %29 = vector.broadcast %cst_6 : f32 to vector<256x128xf32>
    %30 = arith.select %28, %1, %29 : vector<256x128xi1>, vector<256x128xf32>
    %cst_7 = arith.constant 0.000000e+00 : f32
    %31 = vector.broadcast %cst_7 : f32 to vector<17x128xf32>
    %32 = tpu.concatenate %31, %24, %31 in 0 : vector<17x128xf32>, vector<256x128xf32>, vector<17x128xf32> -> vector<290x128xf32>
    %33 = tpu.concatenate %31, %1, %31 in 0 : vector<17x128xf32>, vector<256x128xf32>, vector<17x128xf32> -> vector<290x128xf32>
    %34 = tpu.concatenate %31, %30, %31 in 0 : vector<17x128xf32>, vector<256x128xf32>, vector<17x128xf32> -> vector<290x128xf32>
    %cst_8 = arith.constant 0.000000e+00 : f32
    %35 = vector.broadcast %cst_8 : f32 to vector<256x128xf32>
    %36 = vector.extract_strided_slice %32 {offsets = [0, 0], sizes = [256, 128], strides = [1, 1]} : vector<290x128xf32> to vector<256x128xf32>
    %c0_9 = arith.constant 0 : index
    %c0_10 = arith.constant 0 : index
    %c0_11 = arith.constant 0 : index
    %37 = vector.load %arg2[%c0_9, %c0_10, %c0_11] : memref<9x128x128xf32, #tpu.memory_space<vmem>>, vector<1x128x128xf32>
    %38 = vector.shape_cast %37 : vector<1x128x128xf32> to vector<128x128xf32>
    %cst_12 = arith.constant dense<0.000000e+00> : vector<256x128xf32>
    %39 = tpu.matmul %36, %38, %cst_12 {dimension_numbers = #tpu.dot_dimension_numbers<[1], [0], [0], [1], [0, 0, 1, 1], [], []>} : vector<256x128xf32>, vector<128x128xf32>, vector<256x128xf32> -> vector<256x128xf32>
    %40 = arith.addf %35, %39 : vector<256x128xf32>
    %41 = vector.extract_strided_slice %33 {offsets = [1, 0], sizes = [256, 128], strides = [1, 1]} : vector<290x128xf32> to vector<256x128xf32>
    %c1 = arith.constant 1 : index
    %c0_13 = arith.constant 0 : index
    %c0_14 = arith.constant 0 : index
    %42 = vector.load %arg2[%c1, %c0_13, %c0_14] : memref<9x128x128xf32, #tpu.memory_space<vmem>>, vector<1x128x128xf32>
    %43 = vector.shape_cast %42 : vector<1x128x128xf32> to vector<128x128xf32>
    %cst_15 = arith.constant dense<0.000000e+00> : vector<256x128xf32>
    %44 = tpu.matmul %41, %43, %cst_15 {dimension_numbers = #tpu.dot_dimension_numbers<[1], [0], [0], [1], [0, 0, 1, 1], [], []>} : vector<256x128xf32>, vector<128x128xf32>, vector<256x128xf32> -> vector<256x128xf32>
    %45 = arith.addf %40, %44 : vector<256x128xf32>
    %46 = vector.extract_strided_slice %34 {offsets = [2, 0], sizes = [256, 128], strides = [1, 1]} : vector<290x128xf32> to vector<256x128xf32>
    %c2 = arith.constant 2 : index
    %c0_16 = arith.constant 0 : index
    %c0_17 = arith.constant 0 : index
    %47 = vector.load %arg2[%c2, %c0_16, %c0_17] : memref<9x128x128xf32, #tpu.memory_space<vmem>>, vector<1x128x128xf32>
    %48 = vector.shape_cast %47 : vector<1x128x128xf32> to vector<128x128xf32>
    %cst_18 = arith.constant dense<0.000000e+00> : vector<256x128xf32>
    %49 = tpu.matmul %46, %48, %cst_18 {dimension_numbers = #tpu.dot_dimension_numbers<[1], [0], [0], [1], [0, 0, 1, 1], [], []>} : vector<256x128xf32>, vector<128x128xf32>, vector<256x128xf32> -> vector<256x128xf32>
    %50 = arith.addf %45, %49 : vector<256x128xf32>
    %51 = vector.extract_strided_slice %32 {offsets = [16, 0], sizes = [256, 128], strides = [1, 1]} : vector<290x128xf32> to vector<256x128xf32>
    %c3 = arith.constant 3 : index
    %c0_19 = arith.constant 0 : index
    %c0_20 = arith.constant 0 : index
    %52 = vector.load %arg2[%c3, %c0_19, %c0_20] : memref<9x128x128xf32, #tpu.memory_space<vmem>>, vector<1x128x128xf32>
    %53 = vector.shape_cast %52 : vector<1x128x128xf32> to vector<128x128xf32>
    %cst_21 = arith.constant dense<0.000000e+00> : vector<256x128xf32>
    %54 = tpu.matmul %51, %53, %cst_21 {dimension_numbers = #tpu.dot_dimension_numbers<[1], [0], [0], [1], [0, 0, 1, 1], [], []>} : vector<256x128xf32>, vector<128x128xf32>, vector<256x128xf32> -> vector<256x128xf32>
    %55 = arith.addf %50, %54 : vector<256x128xf32>
    %56 = vector.extract_strided_slice %33 {offsets = [17, 0], sizes = [256, 128], strides = [1, 1]} : vector<290x128xf32> to vector<256x128xf32>
    %c4 = arith.constant 4 : index
    %c0_22 = arith.constant 0 : index
    %c0_23 = arith.constant 0 : index
    %57 = vector.load %arg2[%c4, %c0_22, %c0_23] : memref<9x128x128xf32, #tpu.memory_space<vmem>>, vector<1x128x128xf32>
    %58 = vector.shape_cast %57 : vector<1x128x128xf32> to vector<128x128xf32>
    %cst_24 = arith.constant dense<0.000000e+00> : vector<256x128xf32>
    %59 = tpu.matmul %56, %58, %cst_24 {dimension_numbers = #tpu.dot_dimension_numbers<[1], [0], [0], [1], [0, 0, 1, 1], [], []>} : vector<256x128xf32>, vector<128x128xf32>, vector<256x128xf32> -> vector<256x128xf32>
    %60 = arith.addf %55, %59 : vector<256x128xf32>
    %61 = vector.extract_strided_slice %34 {offsets = [18, 0], sizes = [256, 128], strides = [1, 1]} : vector<290x128xf32> to vector<256x128xf32>
    %c5 = arith.constant 5 : index
    %c0_25 = arith.constant 0 : index
    %c0_26 = arith.constant 0 : index
    %62 = vector.load %arg2[%c5, %c0_25, %c0_26] : memref<9x128x128xf32, #tpu.memory_space<vmem>>, vector<1x128x128xf32>
    %63 = vector.shape_cast %62 : vector<1x128x128xf32> to vector<128x128xf32>
    %cst_27 = arith.constant dense<0.000000e+00> : vector<256x128xf32>
    %64 = tpu.matmul %61, %63, %cst_27 {dimension_numbers = #tpu.dot_dimension_numbers<[1], [0], [0], [1], [0, 0, 1, 1], [], []>} : vector<256x128xf32>, vector<128x128xf32>, vector<256x128xf32> -> vector<256x128xf32>
    %65 = arith.addf %60, %64 : vector<256x128xf32>
    %66 = vector.extract_strided_slice %32 {offsets = [32, 0], sizes = [256, 128], strides = [1, 1]} : vector<290x128xf32> to vector<256x128xf32>
    %c6 = arith.constant 6 : index
    %c0_28 = arith.constant 0 : index
    %c0_29 = arith.constant 0 : index
    %67 = vector.load %arg2[%c6, %c0_28, %c0_29] : memref<9x128x128xf32, #tpu.memory_space<vmem>>, vector<1x128x128xf32>
    %68 = vector.shape_cast %67 : vector<1x128x128xf32> to vector<128x128xf32>
    %cst_30 = arith.constant dense<0.000000e+00> : vector<256x128xf32>
    %69 = tpu.matmul %66, %68, %cst_30 {dimension_numbers = #tpu.dot_dimension_numbers<[1], [0], [0], [1], [0, 0, 1, 1], [], []>} : vector<256x128xf32>, vector<128x128xf32>, vector<256x128xf32> -> vector<256x128xf32>
    %70 = arith.addf %65, %69 : vector<256x128xf32>
    %71 = vector.extract_strided_slice %33 {offsets = [33, 0], sizes = [256, 128], strides = [1, 1]} : vector<290x128xf32> to vector<256x128xf32>
    %c7 = arith.constant 7 : index
    %c0_31 = arith.constant 0 : index
    %c0_32 = arith.constant 0 : index
    %72 = vector.load %arg2[%c7, %c0_31, %c0_32] : memref<9x128x128xf32, #tpu.memory_space<vmem>>, vector<1x128x128xf32>
    %73 = vector.shape_cast %72 : vector<1x128x128xf32> to vector<128x128xf32>
    %cst_33 = arith.constant dense<0.000000e+00> : vector<256x128xf32>
    %74 = tpu.matmul %71, %73, %cst_33 {dimension_numbers = #tpu.dot_dimension_numbers<[1], [0], [0], [1], [0, 0, 1, 1], [], []>} : vector<256x128xf32>, vector<128x128xf32>, vector<256x128xf32> -> vector<256x128xf32>
    %75 = arith.addf %70, %74 : vector<256x128xf32>
    %76 = vector.extract_strided_slice %34 {offsets = [34, 0], sizes = [256, 128], strides = [1, 1]} : vector<290x128xf32> to vector<256x128xf32>
    %c8 = arith.constant 8 : index
    %c0_34 = arith.constant 0 : index
    %c0_35 = arith.constant 0 : index
    %77 = vector.load %arg2[%c8, %c0_34, %c0_35] : memref<9x128x128xf32, #tpu.memory_space<vmem>>, vector<1x128x128xf32>
    %78 = vector.shape_cast %77 : vector<1x128x128xf32> to vector<128x128xf32>
    %cst_36 = arith.constant dense<0.000000e+00> : vector<256x128xf32>
    %79 = tpu.matmul %76, %78, %cst_36 {dimension_numbers = #tpu.dot_dimension_numbers<[1], [0], [0], [1], [0, 0, 1, 1], [], []>} : vector<256x128xf32>, vector<128x128xf32>, vector<256x128xf32> -> vector<256x128xf32>
    %80 = arith.addf %75, %79 : vector<256x128xf32>
    %c0_37 = arith.constant 0 : index
    %c0_38 = arith.constant 0 : index
    %c0_39 = arith.constant 0 : index
    %81 = vector.load %arg3[%c0_37, %c0_38, %c0_39] : memref<1x256x128xf32, #tpu.memory_space<vmem>>, vector<1x256x128xf32>
    %82 = vector.shape_cast %81 : vector<1x256x128xf32> to vector<256x128xf32>
    %83 = vector.shape_cast %80 : vector<256x128xf32> to vector<1x256x128xf32>
    tpu.vector_store %arg3[%c0_37, %c0_38, %c0_39], %83 {strides = array<i32>} : memref<1x256x128xf32, #tpu.memory_space<vmem>>, vector<1x256x128xf32>,
    %cst_40 = arith.constant dense<0.000000e+00> : vector<128xf32>
    %84 = vector.multi_reduction <add>, %80, %cst_40 [0] : vector<256x128xf32> to vector<128xf32>
    %85 = vector.shape_cast %84 : vector<128xf32> to vector<1x128xf32>
    %c0_41 = arith.constant 0 : index
    %c0_42 = arith.constant 0 : index
    %c0_43 = arith.constant 0 : index
    %86 = vector.load %arg4[%c0_41, %c0_42, %c0_43] : memref<1x1x128xf32, #tpu.memory_space<vmem>>, vector<1x1x128xf32>
    %87 = vector.shape_cast %86 : vector<1x1x128xf32> to vector<1x128xf32>
    %88 = vector.shape_cast %85 : vector<1x128xf32> to vector<1x1x128xf32>
    tpu.vector_store %arg4[%c0_41, %c0_42, %c0_43], %88 {strides = array<i32>} : memref<1x1x128xf32, #tpu.memory_space<vmem>>, vector<1x1x128xf32>,
    %89 = arith.mulf %80, %80 : vector<256x128xf32>
    %cst_44 = arith.constant dense<0.000000e+00> : vector<128xf32>
    %90 = vector.multi_reduction <add>, %89, %cst_44 [0] : vector<256x128xf32> to vector<128xf32>
    %91 = vector.shape_cast %90 : vector<128xf32> to vector<1x128xf32>
    %c0_45 = arith.constant 0 : index
    %c0_46 = arith.constant 0 : index
    %c0_47 = arith.constant 0 : index
    %92 = vector.load %arg5[%c0_45, %c0_46, %c0_47] : memref<1x1x128xf32, #tpu.memory_space<vmem>>, vector<1x1x128xf32>
    %93 = vector.shape_cast %92 : vector<1x1x128xf32> to vector<1x128xf32>
    %94 = vector.shape_cast %91 : vector<1x128xf32> to vector<1x1x128xf32>
    tpu.vector_store %arg5[%c0_45, %c0_46, %c0_47], %94 {strides = array<i32>} : memref<1x1x128xf32, #tpu.memory_space<vmem>>, vector<1x1x128xf32>,
    return
  }
  func.func @transform_0(%arg0: i32) -> (i32, i32, i32) {
    %c0_i32 = arith.constant 0 : i32
    %c0_i32_0 = arith.constant 0 : i32
    %c0_i32_1 = arith.constant 0 : i32
    return %arg0, %c0_i32, %c0_i32_0 : i32, i32, i32
  }
  func.func @transform_1(%arg0: i32) -> (i32, i32, i32) {
    %c0_i32 = arith.constant 0 : i32
    %c0_i32_0 = arith.constant 0 : i32
    %c0_i32_1 = arith.constant 0 : i32
    %c0_i32_2 = arith.constant 0 : i32
    return %c0_i32, %c0_i32_0, %c0_i32_1 : i32, i32, i32
  }
  func.func @transform_2(%arg0: i32) -> (i32, i32, i32) {
    %c0_i32 = arith.constant 0 : i32
    %c0_i32_0 = arith.constant 0 : i32
    %c0_i32_1 = arith.constant 0 : i32
    return %arg0, %c0_i32, %c0_i32_0 : i32, i32, i32
  }
  func.func @transform_3(%arg0: i32) -> (i32, i32, i32) {
    %c0_i32 = arith.constant 0 : i32
    %c0_i32_0 = arith.constant 0 : i32
    %c0_i32_1 = arith.constant 0 : i32
    return %arg0, %c0_i32, %c0_i32_0 : i32, i32, i32
  }
  func.func @transform_4(%arg0: i32) -> (i32, i32, i32) {
    %c0_i32 = arith.constant 0 : i32
    %c0_i32_0 = arith.constant 0 : i32
    %c0_i32_1 = arith.constant 0 : i32
    return %arg0, %c0_i32, %c0_i32_0 : i32, i32, i32
  }
}

module attributes {stable_mosaic.version = 11 : i64} {
  func.func @_bn_add_relu_kernel(%arg0: i32, %arg1: i32, %arg2: memref<1x256x128xf32, #tpu.memory_space<vmem>>, %arg3: memref<1x256x128xf32, #tpu.memory_space<vmem>>, %arg4: memref<1x128xf32, #tpu.memory_space<vmem>>, %arg5: memref<1x128xf32, #tpu.memory_space<vmem>>, %arg6: memref<1x256x128xf32, #tpu.memory_space<vmem>>) attributes {dimension_semantics = [#tpu.dimension_semantics<parallel>, #tpu.dimension_semantics<parallel>], iteration_bounds = array<i64: 2, 1>, scalar_prefetch = 0 : i64, scratch_operands = 0 : i64, tpu.core_type = #tpu.core_type<tc>, window_params = [{transform_indices = @transform_0, window_bounds = array<i64: 1, 256, 128>}, {transform_indices = @transform_1, window_bounds = array<i64: 1, 256, 128>}, {pipeline_mode = #tpu.pipeline_mode<synchronous>, transform_indices = @transform_2, window_bounds = array<i64: 1, 128>}, {pipeline_mode = #tpu.pipeline_mode<synchronous>, transform_indices = @transform_3, window_bounds = array<i64: 1, 128>}, {transform_indices = @transform_4, window_bounds = array<i64: 1, 256, 128>}]} {
    %c0 = arith.constant 0 : index
    %c0_0 = arith.constant 0 : index
    %c0_1 = arith.constant 0 : index
    %0 = vector.load %arg2[%c0, %c0_0, %c0_1] : memref<1x256x128xf32, #tpu.memory_space<vmem>>, vector<1x256x128xf32>
    %1 = vector.shape_cast %0 : vector<1x256x128xf32> to vector<256x128xf32>
    %c0_2 = arith.constant 0 : index
    %c0_3 = arith.constant 0 : index
    %2 = vector.load %arg4[%c0_2, %c0_3] : memref<1x128xf32, #tpu.memory_space<vmem>>, vector<1x128xf32>
    %3 = vector.broadcast %2 : vector<1x128xf32> to vector<256x128xf32>
    %4 = arith.mulf %1, %3 : vector<256x128xf32>
    %c0_4 = arith.constant 0 : index
    %c0_5 = arith.constant 0 : index
    %5 = vector.load %arg5[%c0_4, %c0_5] : memref<1x128xf32, #tpu.memory_space<vmem>>, vector<1x128xf32>
    %6 = vector.broadcast %5 : vector<1x128xf32> to vector<256x128xf32>
    %7 = arith.addf %4, %6 : vector<256x128xf32>
    %c0_6 = arith.constant 0 : index
    %c0_7 = arith.constant 0 : index
    %c0_8 = arith.constant 0 : index
    %8 = vector.load %arg3[%c0_6, %c0_7, %c0_8] : memref<1x256x128xf32, #tpu.memory_space<vmem>>, vector<1x256x128xf32>
    %9 = vector.shape_cast %8 : vector<1x256x128xf32> to vector<256x128xf32>
    %10 = arith.addf %7, %9 : vector<256x128xf32>
    %cst = arith.constant 0.000000e+00 : f32
    %11 = vector.broadcast %cst : f32 to vector<256x128xf32>
    %12 = arith.maximumf %10, %11 : vector<256x128xf32>
    %c0_9 = arith.constant 0 : index
    %c0_10 = arith.constant 0 : index
    %c0_11 = arith.constant 0 : index
    %13 = vector.load %arg6[%c0_9, %c0_10, %c0_11] : memref<1x256x128xf32, #tpu.memory_space<vmem>>, vector<1x256x128xf32>
    %14 = vector.shape_cast %13 : vector<1x256x128xf32> to vector<256x128xf32>
    %15 = vector.shape_cast %12 : vector<256x128xf32> to vector<1x256x128xf32>
    tpu.vector_store %arg6[%c0_9, %c0_10, %c0_11], %15 {strides = array<i32>} : memref<1x256x128xf32, #tpu.memory_space<vmem>>, vector<1x256x128xf32>,
    return
  }
  func.func @transform_0(%arg0: i32, %arg1: i32) -> (i32, i32, i32) {
    %c0_i32 = arith.constant 0 : i32
    %c0_i32_0 = arith.constant 0 : i32
    return %arg0, %arg1, %c0_i32 : i32, i32, i32
  }
  func.func @transform_1(%arg0: i32, %arg1: i32) -> (i32, i32, i32) {
    %c0_i32 = arith.constant 0 : i32
    %c0_i32_0 = arith.constant 0 : i32
    return %arg0, %arg1, %c0_i32 : i32, i32, i32
  }
  func.func @transform_2(%arg0: i32, %arg1: i32) -> (i32, i32) {
    %c0_i32 = arith.constant 0 : i32
    %c0_i32_0 = arith.constant 0 : i32
    %c0_i32_1 = arith.constant 0 : i32
    return %c0_i32, %c0_i32_0 : i32, i32
  }
  func.func @transform_3(%arg0: i32, %arg1: i32) -> (i32, i32) {
    %c0_i32 = arith.constant 0 : i32
    %c0_i32_0 = arith.constant 0 : i32
    %c0_i32_1 = arith.constant 0 : i32
    return %c0_i32, %c0_i32_0 : i32, i32
  }
  func.func @transform_4(%arg0: i32, %arg1: i32) -> (i32, i32, i32) {
    %c0_i32 = arith.constant 0 : i32
    %c0_i32_0 = arith.constant 0 : i32
    return %arg0, %arg1, %c0_i32 : i32, i32, i32
  }
}

module attributes {stable_mosaic.version = 11 : i64} {
  func.func @_conv_stats_kernel(%arg0: i32, %arg1: memref<1x256x128xf32, #tpu.memory_space<vmem>>, %arg2: memref<1x128xf32, #tpu.memory_space<vmem>>, %arg3: memref<1x128xf32, #tpu.memory_space<vmem>>, %arg4: memref<9x128x128xf32, #tpu.memory_space<vmem>>, %arg5: memref<1x256x128xf32, #tpu.memory_space<vmem>>, %arg6: memref<1x1x128xf32, #tpu.memory_space<vmem>>, %arg7: memref<1x1x128xf32, #tpu.memory_space<vmem>>) attributes {dimension_semantics = [#tpu.dimension_semantics<parallel>], iteration_bounds = array<i64: 2>, scalar_prefetch = 0 : i64, scratch_operands = 0 : i64, tpu.core_type = #tpu.core_type<tc>, window_params = [{transform_indices = @transform_0, window_bounds = array<i64: 1, 256, 128>}, {pipeline_mode = #tpu.pipeline_mode<synchronous>, transform_indices = @transform_1, window_bounds = array<i64: 1, 128>}, {pipeline_mode = #tpu.pipeline_mode<synchronous>, transform_indices = @transform_2, window_bounds = array<i64: 1, 128>}, {pipeline_mode = #tpu.pipeline_mode<synchronous>, transform_indices = @transform_3, window_bounds = array<i64: 9, 128, 128>}, {transform_indices = @transform_4, window_bounds = array<i64: 1, 256, 128>}, {transform_indices = @transform_5, window_bounds = array<i64: 1, 1, 128>}, {transform_indices = @transform_6, window_bounds = array<i64: 1, 1, 128>}]} {
    %c0 = arith.constant 0 : index
    %c0_0 = arith.constant 0 : index
    %c0_1 = arith.constant 0 : index
    %0 = vector.load %arg1[%c0, %c0_0, %c0_1] : memref<1x256x128xf32, #tpu.memory_space<vmem>>, vector<1x256x128xf32>
    %1 = vector.shape_cast %0 : vector<1x256x128xf32> to vector<256x128xf32>
    %c0_2 = arith.constant 0 : index
    %c0_3 = arith.constant 0 : index
    %2 = vector.load %arg2[%c0_2, %c0_3] : memref<1x128xf32, #tpu.memory_space<vmem>>, vector<1x128xf32>
    %3 = vector.broadcast %2 : vector<1x128xf32> to vector<256x128xf32>
    %4 = arith.mulf %1, %3 : vector<256x128xf32>
    %c0_4 = arith.constant 0 : index
    %c0_5 = arith.constant 0 : index
    %5 = vector.load %arg3[%c0_4, %c0_5] : memref<1x128xf32, #tpu.memory_space<vmem>>, vector<1x128xf32>
    %6 = vector.broadcast %5 : vector<1x128xf32> to vector<256x128xf32>
    %7 = arith.addf %4, %6 : vector<256x128xf32>
    %cst = arith.constant 0.000000e+00 : f32
    %8 = vector.broadcast %cst : f32 to vector<256x128xf32>
    %9 = arith.maximumf %7, %8 : vector<256x128xf32>
    %10 = tpu.iota {dimensions = array<i32: 0>} : vector<256x1xi32>
    %c16_i32 = arith.constant 16 : i32
    %c0_i32 = arith.constant 0 : i32
    %11 = arith.cmpi eq, %c16_i32, %c0_i32 : i32
    %c1_i32 = arith.constant 1 : i32
    %12 = arith.select %11, %c1_i32, %c16_i32 : i32
    %13 = vector.broadcast %12 : i32 to vector<256x1xi32>
    %14 = arith.remsi %10, %13 : vector<256x1xi32>
    %c0_i32_6 = arith.constant 0 : i32
    %15 = vector.broadcast %c0_i32_6 : i32 to vector<256x1xi32>
    %16 = arith.cmpi ne, %14, %15 : vector<256x1xi32>
    %c0_i32_7 = arith.constant 0 : i32
    %17 = vector.broadcast %c0_i32_7 : i32 to vector<256x1xi32>
    %18 = arith.cmpi slt, %14, %17 : vector<256x1xi32>
    %c0_i32_8 = arith.constant 0 : i32
    %19 = arith.cmpi slt, %12, %c0_i32_8 : i32
    %20 = vector.broadcast %19 : i1 to vector<256x1xi1>
    %21 = vector.broadcast %20 : vector<256x1xi1> to vector<256x1xi1>
    %22 = arith.xori %18, %21 : vector<256x1xi1>
    %23 = arith.andi %22, %16 : vector<256x1xi1>
    %24 = vector.broadcast %12 : i32 to vector<256x1xi32>
    %25 = arith.addi %14, %24 : vector<256x1xi32>
    %26 = arith.select %23, %25, %14 : vector<256x1xi1>, vector<256x1xi32>
    %c15_i32 = arith.constant 15 : i32
    %27 = vector.broadcast %c15_i32 : i32 to vector<256x1xi32>
    %28 = arith.cmpi ne, %26, %27 : vector<256x1xi32>
    %cst_9 = arith.constant 0.000000e+00 : f32
    %29 = vector.shape_cast %28 : vector<256x1xi1> to vector<256x1xi1>
    %30 = vector.broadcast %29 : vector<256x1xi1> to vector<256x128xi1>
    %31 = vector.broadcast %cst_9 : f32 to vector<256x128xf32>
    %32 = arith.select %30, %9, %31 : vector<256x128xi1>, vector<256x128xf32>
    %c0_i32_10 = arith.constant 0 : i32
    %33 = vector.broadcast %c0_i32_10 : i32 to vector<256x1xi32>
    %34 = arith.cmpi ne, %26, %33 : vector<256x1xi32>
    %cst_11 = arith.constant 0.000000e+00 : f32
    %35 = vector.shape_cast %34 : vector<256x1xi1> to vector<256x1xi1>
    %36 = vector.broadcast %35 : vector<256x1xi1> to vector<256x128xi1>
    %37 = vector.broadcast %cst_11 : f32 to vector<256x128xf32>
    %38 = arith.select %36, %9, %37 : vector<256x128xi1>, vector<256x128xf32>
    %cst_12 = arith.constant 0.000000e+00 : f32
    %39 = vector.broadcast %cst_12 : f32 to vector<17x128xf32>
    %40 = tpu.concatenate %39, %32, %39 in 0 : vector<17x128xf32>, vector<256x128xf32>, vector<17x128xf32> -> vector<290x128xf32>
    %41 = tpu.concatenate %39, %9, %39 in 0 : vector<17x128xf32>, vector<256x128xf32>, vector<17x128xf32> -> vector<290x128xf32>
    %42 = tpu.concatenate %39, %38, %39 in 0 : vector<17x128xf32>, vector<256x128xf32>, vector<17x128xf32> -> vector<290x128xf32>
    %cst_13 = arith.constant 0.000000e+00 : f32
    %43 = vector.broadcast %cst_13 : f32 to vector<256x128xf32>
    %44 = vector.extract_strided_slice %40 {offsets = [0, 0], sizes = [256, 128], strides = [1, 1]} : vector<290x128xf32> to vector<256x128xf32>
    %c0_14 = arith.constant 0 : index
    %c0_15 = arith.constant 0 : index
    %c0_16 = arith.constant 0 : index
    %45 = vector.load %arg4[%c0_14, %c0_15, %c0_16] : memref<9x128x128xf32, #tpu.memory_space<vmem>>, vector<1x128x128xf32>
    %46 = vector.shape_cast %45 : vector<1x128x128xf32> to vector<128x128xf32>
    %cst_17 = arith.constant dense<0.000000e+00> : vector<256x128xf32>
    %47 = tpu.matmul %44, %46, %cst_17 {dimension_numbers = #tpu.dot_dimension_numbers<[1], [0], [0], [1], [0, 0, 1, 1], [], []>} : vector<256x128xf32>, vector<128x128xf32>, vector<256x128xf32> -> vector<256x128xf32>
    %48 = arith.addf %43, %47 : vector<256x128xf32>
    %49 = vector.extract_strided_slice %41 {offsets = [1, 0], sizes = [256, 128], strides = [1, 1]} : vector<290x128xf32> to vector<256x128xf32>
    %c1 = arith.constant 1 : index
    %c0_18 = arith.constant 0 : index
    %c0_19 = arith.constant 0 : index
    %50 = vector.load %arg4[%c1, %c0_18, %c0_19] : memref<9x128x128xf32, #tpu.memory_space<vmem>>, vector<1x128x128xf32>
    %51 = vector.shape_cast %50 : vector<1x128x128xf32> to vector<128x128xf32>
    %cst_20 = arith.constant dense<0.000000e+00> : vector<256x128xf32>
    %52 = tpu.matmul %49, %51, %cst_20 {dimension_numbers = #tpu.dot_dimension_numbers<[1], [0], [0], [1], [0, 0, 1, 1], [], []>} : vector<256x128xf32>, vector<128x128xf32>, vector<256x128xf32> -> vector<256x128xf32>
    %53 = arith.addf %48, %52 : vector<256x128xf32>
    %54 = vector.extract_strided_slice %42 {offsets = [2, 0], sizes = [256, 128], strides = [1, 1]} : vector<290x128xf32> to vector<256x128xf32>
    %c2 = arith.constant 2 : index
    %c0_21 = arith.constant 0 : index
    %c0_22 = arith.constant 0 : index
    %55 = vector.load %arg4[%c2, %c0_21, %c0_22] : memref<9x128x128xf32, #tpu.memory_space<vmem>>, vector<1x128x128xf32>
    %56 = vector.shape_cast %55 : vector<1x128x128xf32> to vector<128x128xf32>
    %cst_23 = arith.constant dense<0.000000e+00> : vector<256x128xf32>
    %57 = tpu.matmul %54, %56, %cst_23 {dimension_numbers = #tpu.dot_dimension_numbers<[1], [0], [0], [1], [0, 0, 1, 1], [], []>} : vector<256x128xf32>, vector<128x128xf32>, vector<256x128xf32> -> vector<256x128xf32>
    %58 = arith.addf %53, %57 : vector<256x128xf32>
    %59 = vector.extract_strided_slice %40 {offsets = [16, 0], sizes = [256, 128], strides = [1, 1]} : vector<290x128xf32> to vector<256x128xf32>
    %c3 = arith.constant 3 : index
    %c0_24 = arith.constant 0 : index
    %c0_25 = arith.constant 0 : index
    %60 = vector.load %arg4[%c3, %c0_24, %c0_25] : memref<9x128x128xf32, #tpu.memory_space<vmem>>, vector<1x128x128xf32>
    %61 = vector.shape_cast %60 : vector<1x128x128xf32> to vector<128x128xf32>
    %cst_26 = arith.constant dense<0.000000e+00> : vector<256x128xf32>
    %62 = tpu.matmul %59, %61, %cst_26 {dimension_numbers = #tpu.dot_dimension_numbers<[1], [0], [0], [1], [0, 0, 1, 1], [], []>} : vector<256x128xf32>, vector<128x128xf32>, vector<256x128xf32> -> vector<256x128xf32>
    %63 = arith.addf %58, %62 : vector<256x128xf32>
    %64 = vector.extract_strided_slice %41 {offsets = [17, 0], sizes = [256, 128], strides = [1, 1]} : vector<290x128xf32> to vector<256x128xf32>
    %c4 = arith.constant 4 : index
    %c0_27 = arith.constant 0 : index
    %c0_28 = arith.constant 0 : index
    %65 = vector.load %arg4[%c4, %c0_27, %c0_28] : memref<9x128x128xf32, #tpu.memory_space<vmem>>, vector<1x128x128xf32>
    %66 = vector.shape_cast %65 : vector<1x128x128xf32> to vector<128x128xf32>
    %cst_29 = arith.constant dense<0.000000e+00> : vector<256x128xf32>
    %67 = tpu.matmul %64, %66, %cst_29 {dimension_numbers = #tpu.dot_dimension_numbers<[1], [0], [0], [1], [0, 0, 1, 1], [], []>} : vector<256x128xf32>, vector<128x128xf32>, vector<256x128xf32> -> vector<256x128xf32>
    %68 = arith.addf %63, %67 : vector<256x128xf32>
    %69 = vector.extract_strided_slice %42 {offsets = [18, 0], sizes = [256, 128], strides = [1, 1]} : vector<290x128xf32> to vector<256x128xf32>
    %c5 = arith.constant 5 : index
    %c0_30 = arith.constant 0 : index
    %c0_31 = arith.constant 0 : index
    %70 = vector.load %arg4[%c5, %c0_30, %c0_31] : memref<9x128x128xf32, #tpu.memory_space<vmem>>, vector<1x128x128xf32>
    %71 = vector.shape_cast %70 : vector<1x128x128xf32> to vector<128x128xf32>
    %cst_32 = arith.constant dense<0.000000e+00> : vector<256x128xf32>
    %72 = tpu.matmul %69, %71, %cst_32 {dimension_numbers = #tpu.dot_dimension_numbers<[1], [0], [0], [1], [0, 0, 1, 1], [], []>} : vector<256x128xf32>, vector<128x128xf32>, vector<256x128xf32> -> vector<256x128xf32>
    %73 = arith.addf %68, %72 : vector<256x128xf32>
    %74 = vector.extract_strided_slice %40 {offsets = [32, 0], sizes = [256, 128], strides = [1, 1]} : vector<290x128xf32> to vector<256x128xf32>
    %c6 = arith.constant 6 : index
    %c0_33 = arith.constant 0 : index
    %c0_34 = arith.constant 0 : index
    %75 = vector.load %arg4[%c6, %c0_33, %c0_34] : memref<9x128x128xf32, #tpu.memory_space<vmem>>, vector<1x128x128xf32>
    %76 = vector.shape_cast %75 : vector<1x128x128xf32> to vector<128x128xf32>
    %cst_35 = arith.constant dense<0.000000e+00> : vector<256x128xf32>
    %77 = tpu.matmul %74, %76, %cst_35 {dimension_numbers = #tpu.dot_dimension_numbers<[1], [0], [0], [1], [0, 0, 1, 1], [], []>} : vector<256x128xf32>, vector<128x128xf32>, vector<256x128xf32> -> vector<256x128xf32>
    %78 = arith.addf %73, %77 : vector<256x128xf32>
    %79 = vector.extract_strided_slice %41 {offsets = [33, 0], sizes = [256, 128], strides = [1, 1]} : vector<290x128xf32> to vector<256x128xf32>
    %c7 = arith.constant 7 : index
    %c0_36 = arith.constant 0 : index
    %c0_37 = arith.constant 0 : index
    %80 = vector.load %arg4[%c7, %c0_36, %c0_37] : memref<9x128x128xf32, #tpu.memory_space<vmem>>, vector<1x128x128xf32>
    %81 = vector.shape_cast %80 : vector<1x128x128xf32> to vector<128x128xf32>
    %cst_38 = arith.constant dense<0.000000e+00> : vector<256x128xf32>
    %82 = tpu.matmul %79, %81, %cst_38 {dimension_numbers = #tpu.dot_dimension_numbers<[1], [0], [0], [1], [0, 0, 1, 1], [], []>} : vector<256x128xf32>, vector<128x128xf32>, vector<256x128xf32> -> vector<256x128xf32>
    %83 = arith.addf %78, %82 : vector<256x128xf32>
    %84 = vector.extract_strided_slice %42 {offsets = [34, 0], sizes = [256, 128], strides = [1, 1]} : vector<290x128xf32> to vector<256x128xf32>
    %c8 = arith.constant 8 : index
    %c0_39 = arith.constant 0 : index
    %c0_40 = arith.constant 0 : index
    %85 = vector.load %arg4[%c8, %c0_39, %c0_40] : memref<9x128x128xf32, #tpu.memory_space<vmem>>, vector<1x128x128xf32>
    %86 = vector.shape_cast %85 : vector<1x128x128xf32> to vector<128x128xf32>
    %cst_41 = arith.constant dense<0.000000e+00> : vector<256x128xf32>
    %87 = tpu.matmul %84, %86, %cst_41 {dimension_numbers = #tpu.dot_dimension_numbers<[1], [0], [0], [1], [0, 0, 1, 1], [], []>} : vector<256x128xf32>, vector<128x128xf32>, vector<256x128xf32> -> vector<256x128xf32>
    %88 = arith.addf %83, %87 : vector<256x128xf32>
    %c0_42 = arith.constant 0 : index
    %c0_43 = arith.constant 0 : index
    %c0_44 = arith.constant 0 : index
    %89 = vector.load %arg5[%c0_42, %c0_43, %c0_44] : memref<1x256x128xf32, #tpu.memory_space<vmem>>, vector<1x256x128xf32>
    %90 = vector.shape_cast %89 : vector<1x256x128xf32> to vector<256x128xf32>
    %91 = vector.shape_cast %88 : vector<256x128xf32> to vector<1x256x128xf32>
    tpu.vector_store %arg5[%c0_42, %c0_43, %c0_44], %91 {strides = array<i32>} : memref<1x256x128xf32, #tpu.memory_space<vmem>>, vector<1x256x128xf32>,
    %cst_45 = arith.constant dense<0.000000e+00> : vector<128xf32>
    %92 = vector.multi_reduction <add>, %88, %cst_45 [0] : vector<256x128xf32> to vector<128xf32>
    %93 = vector.shape_cast %92 : vector<128xf32> to vector<1x128xf32>
    %c0_46 = arith.constant 0 : index
    %c0_47 = arith.constant 0 : index
    %c0_48 = arith.constant 0 : index
    %94 = vector.load %arg6[%c0_46, %c0_47, %c0_48] : memref<1x1x128xf32, #tpu.memory_space<vmem>>, vector<1x1x128xf32>
    %95 = vector.shape_cast %94 : vector<1x1x128xf32> to vector<1x128xf32>
    %96 = vector.shape_cast %93 : vector<1x128xf32> to vector<1x1x128xf32>
    tpu.vector_store %arg6[%c0_46, %c0_47, %c0_48], %96 {strides = array<i32>} : memref<1x1x128xf32, #tpu.memory_space<vmem>>, vector<1x1x128xf32>,
    %97 = arith.mulf %88, %88 : vector<256x128xf32>
    %cst_49 = arith.constant dense<0.000000e+00> : vector<128xf32>
    %98 = vector.multi_reduction <add>, %97, %cst_49 [0] : vector<256x128xf32> to vector<128xf32>
    %99 = vector.shape_cast %98 : vector<128xf32> to vector<1x128xf32>
    %c0_50 = arith.constant 0 : index
    %c0_51 = arith.constant 0 : index
    %c0_52 = arith.constant 0 : index
    %100 = vector.load %arg7[%c0_50, %c0_51, %c0_52] : memref<1x1x128xf32, #tpu.memory_space<vmem>>, vector<1x1x128xf32>
    %101 = vector.shape_cast %100 : vector<1x1x128xf32> to vector<1x128xf32>
    %102 = vector.shape_cast %99 : vector<1x128xf32> to vector<1x1x128xf32>
    tpu.vector_store %arg7[%c0_50, %c0_51, %c0_52], %102 {strides = array<i32>} : memref<1x1x128xf32, #tpu.memory_space<vmem>>, vector<1x1x128xf32>,
    return
  }
  func.func @transform_0(%arg0: i32) -> (i32, i32, i32) {
    %c0_i32 = arith.constant 0 : i32
    %c0_i32_0 = arith.constant 0 : i32
    %c0_i32_1 = arith.constant 0 : i32
    return %arg0, %c0_i32, %c0_i32_0 : i32, i32, i32
  }
  func.func @transform_1(%arg0: i32) -> (i32, i32) {
    %c0_i32 = arith.constant 0 : i32
    %c0_i32_0 = arith.constant 0 : i32
    %c0_i32_1 = arith.constant 0 : i32
    return %c0_i32, %c0_i32_0 : i32, i32
  }
  func.func @transform_2(%arg0: i32) -> (i32, i32) {
    %c0_i32 = arith.constant 0 : i32
    %c0_i32_0 = arith.constant 0 : i32
    %c0_i32_1 = arith.constant 0 : i32
    return %c0_i32, %c0_i32_0 : i32, i32
  }
  func.func @transform_3(%arg0: i32) -> (i32, i32, i32) {
    %c0_i32 = arith.constant 0 : i32
    %c0_i32_0 = arith.constant 0 : i32
    %c0_i32_1 = arith.constant 0 : i32
    %c0_i32_2 = arith.constant 0 : i32
    return %c0_i32, %c0_i32_0, %c0_i32_1 : i32, i32, i32
  }
  func.func @transform_4(%arg0: i32) -> (i32, i32, i32) {
    %c0_i32 = arith.constant 0 : i32
    %c0_i32_0 = arith.constant 0 : i32
    %c0_i32_1 = arith.constant 0 : i32
    return %arg0, %c0_i32, %c0_i32_0 : i32, i32, i32
  }
  func.func @transform_5(%arg0: i32) -> (i32, i32, i32) {
    %c0_i32 = arith.constant 0 : i32
    %c0_i32_0 = arith.constant 0 : i32
    %c0_i32_1 = arith.constant 0 : i32
    return %arg0, %c0_i32, %c0_i32_0 : i32, i32, i32
  }
  func.func @transform_6(%arg0: i32) -> (i32, i32, i32) {
    %c0_i32 = arith.constant 0 : i32
    %c0_i32_0 = arith.constant 0 : i32
    %c0_i32_1 = arith.constant 0 : i32
    return %arg0, %c0_i32, %c0_i32_0 : i32, i32, i32
  }
}

</mosaic_0001>

<llo_original>
// kernel: residual_block_forward.5
$region0: #{residual_block_forward.5}
  #allocation0 [shape = 'u32[]', space=smem, size = 0x4, offset = 0x4, fixed_abs, tag = 'smem constant byte address 0x4 - core index']
  #allocation1 [shape = 'u32[144,128]{1,0:T(1,128)}', space=vmem, size = 0x12000, scoped, tag = 'internal scratch']
  %s0 = inlined_call_operand.vmem [shape: f32[2,256,128], index: 0, kind: input, shape index: {}]
  %s1 = inlined_call_operand.vmem [shape: f32[2,256,128], index: 1, kind: input, shape index: {}]
  %s2 = inlined_call_operand.vmem [shape: f32[1,128], index: 2, kind: input, shape index: {}]
  %s3 = inlined_call_operand.vmem [shape: f32[1,128], index: 3, kind: input, shape index: {}]
  %s4 = inlined_call_operand.vmem [shape: f32[2,256,128], index: 4, kind: output, shape index: {}]
  %s5 = sld [smem:[#allocation0]]
  $region49: #{residual_block_forward.5} parent=0
    _
  %s7 = ssub.s32 1, %s5
  %s8 = scalar_select 0, %s7, %s5
  loop: start=0, step=1, limit=4
  $region2: #{residual_block_forward.5} parent=0 // loop_pre_header
    _
  $region3: #{residual_block_forward.5} parent=0 // loop_header
    %s10 = sphi 0, %s14
    %p11 = scmp.ge.s32.totalorder %s10, 4
    %s17 = sphi 0, %s29
    %s18 = sphi 0, %s25
    %s19 = sphi 0, %s17
    %s20 = sphi 0, %s18
    %s21 = sphi 0, %s19
    %s22 = sphi 0, %s20
    %s34 = sphi 0, %s36
    %s37 = sphi 0, %s34
    %s38 = sphi 0, %s37
    %s54 = sphi 0, %s38
    %s62 = sphi 0, %s64
    %s65 = sphi 0, %s62
    %s66 = sphi 0, %s65
    %s82 = sphi 0, %s66
    %s86 = sphi 0, %s86
    %s88 = sphi 0, %s86
    %s89 = sphi 0, %s88
    %s103 = sphi 0, %s89
    %s107 = sphi 0, %s107
    %s109 = sphi 0, %s107
    %s110 = sphi 0, %s109
    %s124 = sphi 0, %s110
    %s132 = sphi 0, %s134
    %s135 = sphi 0, %s132
    %s136 = sphi 0, %s135
    %s152 = sphi 0, %s136
  $region4: #{residual_block_forward.5} parent=0 // loop_header_branch
    %13 = sbr.rel (%p11) target = $region8
  $region5: #{residual_block_forward.5} parent=0 // loop_body
    %s15 = ssub.s32 %s10, 1
    %s16 = ssub.s32 %s10, 2
    %s23 = sadd.s32 1, %s18
    %p24 = scmp.ge.s32.totalorder %s23, 1
    %s25 = scalar_select %p24, 0, %s23
    %s26 = sadd.s32 1, %s17
    %s27 = scalar_select %p24, %s26, %s17
    %p28 = scmp.ge.s32.totalorder %s27, 2
    %s29 = scalar_select %p28, 0, %s27
    %s30 = ssub.s32 %s17, %s29
    %s31 = ssub.s32 %s18, %s25
    %s32 = sor.u32 %s30, %s31
    %p33 = scmp.eq.s32.totalorder %s32, 0
    %s35 = sadd.s32 %s34, 1
    %s36 = scalar_select %p33, %s34, %s35
    %p39 = pneg %p33
    %p40 = scmp.eq.s32.totalorder %s10, 1
    %p41 = por %p39, %p40
    %p42 = scmp.ne.s32.totalorder %s34, %s37
    %p43 = scmp.eq.s32.totalorder %s10, 0
    %p44 = por %p42, %p43
    %p45 = scmp.ne.s32.totalorder %s34, %s37
    %p46 = scmp.eq.s32.totalorder %s15, 1
    %p47 = por %p45, %p46
    %p48 = scmp.ne.s32.totalorder %s37, %s38
    %p49 = scmp.eq.s32.totalorder %s15, 0
    %p50 = por %p48, %p49
    %p51 = scmp.ne.s32.totalorder %s37, %s38
    %p52 = scmp.eq.s32.totalorder %s16, 1
    %p53 = por %p51, %p52
    %p55 = scmp.ne.s32.totalorder %s38, %s54
    %p56 = scmp.eq.s32.totalorder %s16, 0
    %p57 = por %p55, %p56
    %s58 = ssub.s32 %s17, %s29
    %s59 = ssub.s32 %s18, %s25
    %s60 = sor.u32 %s58, %s59
    %p61 = scmp.eq.s32.totalorder %s60, 0
    %s63 = sadd.s32 %s62, 1
    %s64 = scalar_select %p61, %s62, %s63
    %p67 = pneg %p61
    %p68 = scmp.eq.s32.totalorder %s10, 1
    %p69 = por %p67, %p68
    %p70 = scmp.ne.s32.totalorder %s62, %s65
    %p71 = scmp.eq.s32.totalorder %s10, 0
    %p72 = por %p70, %p71
    %p73 = scmp.ne.s32.totalorder %s62, %s65
    %p74 = scmp.eq.s32.totalorder %s15, 1
    %p75 = por %p73, %p74
    %p76 = scmp.ne.s32.totalorder %s65, %s66
    %p77 = scmp.eq.s32.totalorder %s15, 0
    %p78 = por %p76, %p77
    %p79 = scmp.ne.s32.totalorder %s65, %s66
    %p80 = scmp.eq.s32.totalorder %s16, 1
    %p81 = por %p79, %p80
    %p83 = scmp.ne.s32.totalorder %s66, %s82
    %p84 = scmp.eq.s32.totalorder %s16, 0
    %p85 = por %p83, %p84
    %s87 = sadd.s32 %s86, 1
    %p90 = scmp.eq.s32.totalorder %s10, 1
    %p91 = scmp.ne.s32.totalorder %s86, %s88
    %p92 = scmp.eq.s32.totalorder %s10, 0
    %p93 = por %p91, %p92
    %p94 = scmp.ne.s32.totalorder %s86, %s88
    %p95 = scmp.eq.s32.totalorder %s15, 1
    %p96 = por %p94, %p95
    %p97 = scmp.ne.s32.totalorder %s88, %s89
    %p98 = scmp.eq.s32.totalorder %s15, 0
    %p99 = por %p97, %p98
    %p100 = scmp.ne.s32.totalorder %s88, %s89
    %p101 = scmp.eq.s32.totalorder %s16, 1
    %p102 = por %p100, %p101
    %p104 = scmp.ne.s32.totalorder %s89, %s103
    %p105 = scmp.eq.s32.totalorder %s16, 0
    %p106 = por %p104, %p105
    %s108 = sadd.s32 %s107, 1
    %p111 = scmp.eq.s32.totalorder %s10, 1
    %p112 = scmp.ne.s32.totalorder %s107, %s109
    %p113 = scmp.eq.s32.totalorder %s10, 0
    %p114 = por %p112, %p113
    %p115 = scmp.ne.s32.totalorder %s107, %s109
    %p116 = scmp.eq.s32.totalorder %s15, 1
    %p117 = por %p115, %p116
    %p118 = scmp.ne.s32.totalorder %s109, %s110
    %p119 = scmp.eq.s32.totalorder %s15, 0
    %p120 = por %p118, %p119
    %p121 = scmp.ne.s32.totalorder %s109, %s110
    %p122 = scmp.eq.s32.totalorder %s16, 1
    %p123 = por %p121, %p122
    %p125 = scmp.ne.s32.totalorder %s110, %s124
    %p126 = scmp.eq.s32.totalorder %s16, 0
    %p127 = por %p125, %p126
    %s128 = ssub.s32 %s17, %s29
    %s129 = ssub.s32 %s18, %s25
    %s130 = sor.u32 %s128, %s129
    %p131 = scmp.eq.s32.totalorder %s130, 0
    %s133 = sadd.s32 %s132, 1
    %s134 = scalar_select %p131, %s132, %s133
    %p137 = pneg %p131
    %p138 = scmp.eq.s32.totalorder %s10, 1
    %p139 = por %p137, %p138
    %p140 = scmp.ne.s32.totalorder %s132, %s135
    %p141 = scmp.eq.s32.totalorder %s10, 0
    %p142 = por %p140, %p141
    %p143 = scmp.ne.s32.totalorder %s132, %s135
    %p144 = scmp.eq.s32.totalorder %s15, 1
    %p145 = por %p143, %p144
    %p146 = scmp.ne.s32.totalorder %s135, %s136
    %p147 = scmp.eq.s32.totalorder %s15, 0
    %p148 = por %p146, %p147
    %p149 = scmp.ne.s32.totalorder %s135, %s136
    %p150 = scmp.eq.s32.totalorder %s16, 1
    %p151 = por %p149, %p150
    %p153 = scmp.ne.s32.totalorder %s136, %s152
    %p154 = scmp.eq.s32.totalorder %s16, 0
    %p155 = por %p153, %p154
    %p156 = scmp.le.s32.totalorder 1, %s10
    %p157 = scmp.lt.s32.totalorder %s10, 3
    %p158 = pnand %p156, %p157
    %p159 = pneg %p158
    // Predicated region
    $region9: #{residual_block_forward.5} parent=5 // pred_check
      _
    $region10: #{residual_block_forward.5} parent=5 // pred_check_branch
      %161 = sbr.rel (%p158) target = $region12
    $region11: #{residual_block_forward.5} parent=5 // pred_region
      %s162 = ssub.s32 %s10, 1
      // Predicated region
      $region13: #{residual_block_forward.5} parent=11 // pred_check
        %p163 = pneg %p99
      $region14: #{residual_block_forward.5} parent=11 // pred_check_branch
        %165 = sbr.rel (%p163) target = $region16
      $region15: #{residual_block_forward.5} parent=11 // pred_region
        _
      $region16: #{residual_block_forward.5} parent=11 // pred_fallthru
        _
      // Predicated region
      $region17: #{residual_block_forward.5} parent=11 // pred_check
        %p166 = pneg %p120
      $region18: #{residual_block_forward.5} parent=11 // pred_check_branch
        %168 = sbr.rel (%p166) target = $region20
      $region19: #{residual_block_forward.5} parent=11 // pred_region
        _
      $region20: #{residual_block_forward.5} parent=11 // pred_fallthru
        _
    $region12: #{residual_block_forward.5} parent=5 // pred_fallthru
      _
    %p169 = scmp.lt.s32.totalorder %s10, 2
    // Predicated region
    $region21: #{residual_block_forward.5} parent=5 // pred_check
      %p170 = pneg %p169
    $region22: #{residual_block_forward.5} parent=5 // pred_check_branch
      %172 = sbr.rel (%p170) target = $region24
    $region23: #{residual_block_forward.5} parent=5 // pred_region
      // Predicated region
      $region25: #{residual_block_forward.5} parent=23 // pred_check
        %p173 = pneg %p44
      $region26: #{residual_block_forward.5} parent=23 // pred_check_branch
        %175 = sbr.rel (%p173) target = $region28
      $region27: #{residual_block_forward.5} parent=23 // pred_region
        %s176 = smul.u32 32, %s18
        %p177 = scmp.lt.s32.totalorder %s17, 1
        %s178 = scalar_select %p177, %s17, 1
        %p179 = scmp.lt.s32.totalorder %s176, 31
        %s180 = scalar_select %p179, %s176, 31
        %s181 = smul.addr %s178, 32
        %s182 = sadd.s32 %s180, %s181
        %s183 = smul.addr %s182, 8
        %s184 = scalar_lea.vmem %s0, %s183
        %s185 = smul.u32 32, %s18
      $region28: #{residual_block_forward.5} parent=23 // pred_fallthru
        _
      // Predicated region
      $region29: #{residual_block_forward.5} parent=23 // pred_check
        %p186 = pneg %p72
      $region30: #{residual_block_forward.5} parent=23 // pred_check_branch
        %188 = sbr.rel (%p186) target = $region32
      $region31: #{residual_block_forward.5} parent=23 // pred_region
        %s189 = smul.u32 32, %s18
        %p190 = scmp.lt.s32.totalorder %s17, 1
        %s191 = scalar_select %p190, %s17, 1
        %p192 = scmp.lt.s32.totalorder %s189, 31
        %s193 = scalar_select %p192, %s189, 31
        %s194 = smul.addr %s191, 32
        %s195 = sadd.s32 %s193, %s194
        %s196 = smul.addr %s195, 8
        %s197 = scalar_lea.vmem %s1, %s196
        %s198 = smul.u32 32, %s18
      $region32: #{residual_block_forward.5} parent=23 // pred_fallthru
        _
    $region24: #{residual_block_forward.5} parent=5 // pred_fallthru
      _
    %p199 = scmp.le.s32.totalorder 1, %s10
    %p200 = scmp.lt.s32.totalorder %s10, 3
    %p201 = pnand %p199, %p200
    %p202 = pneg %p201
    // Predicated region
    $region33: #{residual_block_forward.5} parent=5 // pred_check
      _
    $region34: #{residual_block_forward.5} parent=5 // pred_check_branch
      %204 = sbr.rel (%p201) target = $region36
    $region35: #{residual_block_forward.5} parent=5 // pred_region
      %s205 = ssub.s32 %s10, 1
      %s206 = smul.u32 32, %s20
      %p207 = scmp.lt.s32.totalorder %s19, 1
      %s208 = scalar_select %p207, %s19, 1
      %p209 = scmp.lt.s32.totalorder %s206, 31
      %s210 = scalar_select %p209, %s206, 31
      %s211 = smul.addr %s208, 32
      %s212 = sadd.s32 %s210, %s211
      %s213 = smul.addr %s212, 8
      %s214 = scalar_lea.vmem %s0, %s213
      %p215 = pneg %p50
      %p216 = pneg %p47
      %s217 = smul.u32 32, %s20
      %p218 = scmp.lt.s32.totalorder %s19, 1
      %s219 = scalar_select %p218, %s19, 1
      %p220 = scmp.lt.s32.totalorder %s217, 31
      %s221 = scalar_select %p220, %s217, 31
      %s222 = smul.addr %s219, 32
      %s223 = sadd.s32 %s221, %s222
      %s224 = smul.addr %s223, 8
      %s225 = scalar_lea.vmem %s1, %s224
      %p226 = pneg %p78
      %p227 = pneg %p75
      %p228 = pneg %p99
      %p229 = pneg %p96
      %p230 = pneg %p120
      %p231 = pneg %p117
      %p232 = pneg %p148
      %p233 = pneg %p145
      %s234 = smul.u32 32, %s20
      %p235 = scmp.lt.s32.totalorder %s19, 1
      %s236 = scalar_select %p235, %s19, 1
      %p237 = scmp.lt.s32.totalorder %s234, 31
      %s238 = scalar_select %p237, %s234, 31
      %s239 = smul.addr %s236, 32
      %s240 = sadd.s32 %s238, %s239
      %s241 = smul.addr %s240, 8
      %s242 = scalar_lea.vmem %s4, %s241
      %s243 = smul.u32 32, %s20
      %p244 = scmp.lt.s32.totalorder %s19, 1
      %s245 = scalar_select %p244, %s19, 1
      %p246 = scmp.lt.s32.totalorder %s243, 31
      %s247 = scalar_select %p246, %s243, 31
      %s248 = smul.addr %s245, 32
      %s249 = sadd.s32 %s247, %s248
      %s250 = smul.addr %s249, 8
      %s251 = scalar_lea.vmem %s0, %s250
      %s252 = smul.u32 32, %s20
      %s253 = smul.u32 32, %s20
      %p254 = scmp.lt.s32.totalorder %s19, 1
      %s255 = scalar_select %p254, %s19, 1
      %p256 = scmp.lt.s32.totalorder %s253, 31
      %s257 = scalar_select %p256, %s253, 31
      %s258 = smul.addr %s255, 32
      %s259 = sadd.s32 %s257, %s258
      %s260 = smul.addr %s259, 8
      %s261 = scalar_lea.vmem %s1, %s260
      %s262 = smul.u32 32, %s20
      %s263 = smul.u32 32, %s20
      %p264 = scmp.lt.s32.totalorder %s19, 1
      %s265 = scalar_select %p264, %s19, 1
      %p266 = scmp.lt.s32.totalorder %s263, 31
      %s267 = scalar_select %p266, %s263, 31
      %s268 = smul.addr %s265, 32
      %s269 = sadd.s32 %s267, %s268
      %s270 = smul.addr %s269, 8
      %s271 = scalar_lea.vmem %s4, %s270
      %s272 = smul.u32 32, %s20
      %v273 = vld [vmem:[%s251] sm:$0xff]
      %v274 = vld [vmem:[%s251 + $0x8] sm:$0xff]
      %v275 = vld [vmem:[%s251 + $0x10] sm:$0xff]
      %v276 = vld [vmem:[%s251 + $0x18] sm:$0xff]
      %v277 = vld [vmem:[%s251 + $0x20] sm:$0xff]
      %v278 = vld [vmem:[%s251 + $0x28] sm:$0xff]
      %v279 = vld [vmem:[%s251 + $0x30] sm:$0xff]
      %v280 = vld [vmem:[%s251 + $0x38] sm:$0xff]
      %v281 = vld [vmem:[%s251 + $0x40] sm:$0xff]
      %v282 = vld [vmem:[%s251 + $0x48] sm:$0xff]
      %v283 = vld [vmem:[%s251 + $0x50] sm:$0xff]
      %v284 = vld [vmem:[%s251 + $0x58] sm:$0xff]
      %v285 = vld [vmem:[%s251 + $0x60] sm:$0xff]
      %v286 = vld [vmem:[%s251 + $0x68] sm:$0xff]
      %v287 = vld [vmem:[%s251 + $0x70] sm:$0xff]
      %v288 = vld [vmem:[%s251 + $0x78] sm:$0xff]
      %v289 = vld [vmem:[%s251 + $0x80] sm:$0xff]
      %v290 = vld [vmem:[%s251 + $0x88] sm:$0xff]
      %v291 = vld [vmem:[%s251 + $0x90] sm:$0xff]
      %v292 = vld [vmem:[%s251 + $0x98] sm:$0xff]
      %v293 = vld [vmem:[%s251 + $0xa0] sm:$0xff]
      %v294 = vld [vmem:[%s251 + $0xa8] sm:$0xff]
      %v295 = vld [vmem:[%s251 + $0xb0] sm:$0xff]
      %v296 = vld [vmem:[%s251 + $0xb8] sm:$0xff]
      %v297 = vld [vmem:[%s251 + $0xc0] sm:$0xff]
      %v298 = vld [vmem:[%s251 + $0xc8] sm:$0xff]
      %v299 = vld [vmem:[%s251 + $0xd0] sm:$0xff]
      %v300 = vld [vmem:[%s251 + $0xd8] sm:$0xff]
      %v301 = vld [vmem:[%s251 + $0xe0] sm:$0xff]
      %v302 = vld [vmem:[%s251 + $0xe8] sm:$0xff]
      %v303 = vld [vmem:[%s251 + $0xf0] sm:$0xff]
      %v304 = vld [vmem:[%s251 + $0xf8] sm:$0xff]
      %v305 = vld [vmem:[%s2] sm:$0x1]
      %v307 = vlaneseq
      %v308 = vshrl.u32 %v307, 7
      %v309 = vsub.s32 0, %v308
      %v310 = vrot.slane %v305, %v309
      %v312 = vmul.f32 %v273, %v310
      %v313 = vmul.f32 %v274, %v310
      %v314 = vmul.f32 %v275, %v310
      %v315 = vmul.f32 %v276, %v310
      %v316 = vmul.f32 %v277, %v310
      %v317 = vmul.f32 %v278, %v310
      %v318 = vmul.f32 %v279, %v310
      %v319 = vmul.f32 %v280, %v310
      %v320 = vmul.f32 %v281, %v310
      %v321 = vmul.f32 %v282, %v310
      %v322 = vmul.f32 %v283, %v310
      %v323 = vmul.f32 %v284, %v310
      %v324 = vmul.f32 %v285, %v310
      %v325 = vmul.f32 %v286, %v310
      %v326 = vmul.f32 %v287, %v310
      %v327 = vmul.f32 %v288, %v310
      %v328 = vmul.f32 %v289, %v310
      %v329 = vmul.f32 %v290, %v310
      %v330 = vmul.f32 %v291, %v310
      %v331 = vmul.f32 %v292, %v310
      %v332 = vmul.f32 %v293, %v310
      %v333 = vmul.f32 %v294, %v310
      %v334 = vmul.f32 %v295, %v310
      %v335 = vmul.f32 %v296, %v310
      %v336 = vmul.f32 %v297, %v310
      %v337 = vmul.f32 %v298, %v310
      %v338 = vmul.f32 %v299, %v310
      %v339 = vmul.f32 %v300, %v310
      %v340 = vmul.f32 %v301, %v310
      %v341 = vmul.f32 %v302, %v310
      %v342 = vmul.f32 %v303, %v310
      %v343 = vmul.f32 %v304, %v310
      %v344 = vld [vmem:[%s3] sm:$0x1]
      %v346 = vlaneseq
      %v347 = vshrl.u32 %v346, 7
      %v348 = vsub.s32 0, %v347
      %v349 = vrot.slane %v344, %v348
      %v351 = vadd.f32 %v312, %v349
      %v352 = vadd.f32 %v313, %v349
      %v353 = vadd.f32 %v314, %v349
      %v354 = vadd.f32 %v315, %v349
      %v355 = vadd.f32 %v316, %v349
      %v356 = vadd.f32 %v317, %v349
      %v357 = vadd.f32 %v318, %v349
      %v358 = vadd.f32 %v319, %v349
      %v359 = vadd.f32 %v320, %v349
      %v360 = vadd.f32 %v321, %v349
      %v361 = vadd.f32 %v322, %v349
      %v362 = vadd.f32 %v323, %v349
      %v363 = vadd.f32 %v324, %v349
      %v364 = vadd.f32 %v325, %v349
      %v365 = vadd.f32 %v326, %v349
      %v366 = vadd.f32 %v327, %v349
      %v367 = vadd.f32 %v328, %v349
      %v368 = vadd.f32 %v329, %v349
      %v369 = vadd.f32 %v330, %v349
      %v370 = vadd.f32 %v331, %v349
      %v371 = vadd.f32 %v332, %v349
      %v372 = vadd.f32 %v333, %v349
      %v373 = vadd.f32 %v334, %v349
      %v374 = vadd.f32 %v335, %v349
      %v375 = vadd.f32 %v336, %v349
      %v376 = vadd.f32 %v337, %v349
      %v377 = vadd.f32 %v338, %v349
      %v378 = vadd.f32 %v339, %v349
      %v379 = vadd.f32 %v340, %v349
      %v380 = vadd.f32 %v341, %v349
      %v381 = vadd.f32 %v342, %v349
      %v382 = vadd.f32 %v343, %v349
      %v383 = vld [vmem:[%s261] sm:$0xff]
      %v384 = vld [vmem:[%s261 + $0x8] sm:$0xff]
      %v385 = vld [vmem:[%s261 + $0x10] sm:$0xff]
      %v386 = vld [vmem:[%s261 + $0x18] sm:$0xff]
      %v387 = vld [vmem:[%s261 + $0x20] sm:$0xff]
      %v388 = vld [vmem:[%s261 + $0x28] sm:$0xff]
      %v389 = vld [vmem:[%s261 + $0x30] sm:$0xff]
      %v390 = vld [vmem:[%s261 + $0x38] sm:$0xff]
      %v391 = vld [vmem:[%s261 + $0x40] sm:$0xff]
      %v392 = vld [vmem:[%s261 + $0x48] sm:$0xff]
      %v393 = vld [vmem:[%s261 + $0x50] sm:$0xff]
      %v394 = vld [vmem:[%s261 + $0x58] sm:$0xff]
      %v395 = vld [vmem:[%s261 + $0x60] sm:$0xff]
      %v396 = vld [vmem:[%s261 + $0x68] sm:$0xff]
      %v397 = vld [vmem:[%s261 + $0x70] sm:$0xff]
      %v398 = vld [vmem:[%s261 + $0x78] sm:$0xff]
      %v399 = vld [vmem:[%s261 + $0x80] sm:$0xff]
      %v400 = vld [vmem:[%s261 + $0x88] sm:$0xff]
      %v401 = vld [vmem:[%s261 + $0x90] sm:$0xff]
      %v402 = vld [vmem:[%s261 + $0x98] sm:$0xff]
      %v403 = vld [vmem:[%s261 + $0xa0] sm:$0xff]
      %v404 = vld [vmem:[%s261 + $0xa8] sm:$0xff]
      %v405 = vld [vmem:[%s261 + $0xb0] sm:$0xff]
      %v406 = vld [vmem:[%s261 + $0xb8] sm:$0xff]
      %v407 = vld [vmem:[%s261 + $0xc0] sm:$0xff]
      %v408 = vld [vmem:[%s261 + $0xc8] sm:$0xff]
      %v409 = vld [vmem:[%s261 + $0xd0] sm:$0xff]
      %v410 = vld [vmem:[%s261 + $0xd8] sm:$0xff]
      %v411 = vld [vmem:[%s261 + $0xe0] sm:$0xff]
      %v412 = vld [vmem:[%s261 + $0xe8] sm:$0xff]
      %v413 = vld [vmem:[%s261 + $0xf0] sm:$0xff]
      %v414 = vld [vmem:[%s261 + $0xf8] sm:$0xff]
      %v415 = vadd.f32 %v351, %v383
      %v416 = vadd.f32 %v352, %v384
      %v417 = vadd.f32 %v353, %v385
      %v418 = vadd.f32 %v354, %v386
      %v419 = vadd.f32 %v355, %v387
      %v420 = vadd.f32 %v356, %v388
      %v421 = vadd.f32 %v357, %v389
      %v422 = vadd.f32 %v358, %v390
      %v423 = vadd.f32 %v359, %v391
      %v424 = vadd.f32 %v360, %v392
      %v425 = vadd.f32 %v361, %v393
      %v426 = vadd.f32 %v362, %v394
      %v427 = vadd.f32 %v363, %v395
      %v428 = vadd.f32 %v364, %v396
      %v429 = vadd.f32 %v365, %v397
      %v430 = vadd.f32 %v366, %v398
      %v431 = vadd.f32 %v367, %v399
      %v432 = vadd.f32 %v368, %v400
      %v433 = vadd.f32 %v369, %v401
      %v434 = vadd.f32 %v370, %v402
      %v435 = vadd.f32 %v371, %v403
      %v436 = vadd.f32 %v372, %v404
      %v437 = vadd.f32 %v373, %v405
      %v438 = vadd.f32 %v374, %v406
      %v439 = vadd.f32 %v375, %v407
      %v440 = vadd.f32 %v376, %v408
      %v441 = vadd.f32 %v377, %v409
      %v442 = vadd.f32 %v378, %v410
      %v443 = vadd.f32 %v379, %v411
      %v444 = vadd.f32 %v380, %v412
      %v445 = vadd.f32 %v381, %v413
      %v446 = vadd.f32 %v382, %v414
      %v447 = vmax.f32 %v415, 0.0
      %v448 = vmax.f32 %v416, 0.0
      %v449 = vmax.f32 %v417, 0.0
      %v450 = vmax.f32 %v418, 0.0
      %v451 = vmax.f32 %v419, 0.0
      %v452 = vmax.f32 %v420, 0.0
      %v453 = vmax.f32 %v421, 0.0
      %v454 = vmax.f32 %v422, 0.0
      %v455 = vmax.f32 %v423, 0.0
      %v456 = vmax.f32 %v424, 0.0
      %v457 = vmax.f32 %v425, 0.0
      %v458 = vmax.f32 %v426, 0.0
      %v459 = vmax.f32 %v427, 0.0
      %v460 = vmax.f32 %v428, 0.0
      %v461 = vmax.f32 %v429, 0.0
      %v462 = vmax.f32 %v430, 0.0
      %v463 = vmax.f32 %v431, 0.0
      %v464 = vmax.f32 %v432, 0.0
      %v465 = vmax.f32 %v433, 0.0
      %v466 = vmax.f32 %v434, 0.0
      %v467 = vmax.f32 %v435, 0.0
      %v468 = vmax.f32 %v436, 0.0
      %v469 = vmax.f32 %v437, 0.0
      %v470 = vmax.f32 %v438, 0.0
      %v471 = vmax.f32 %v439, 0.0
      %v472 = vmax.f32 %v440, 0.0
      %v473 = vmax.f32 %v441, 0.0
      %v474 = vmax.f32 %v442, 0.0
      %v475 = vmax.f32 %v443, 0.0
      %v476 = vmax.f32 %v444, 0.0
      %v477 = vmax.f32 %v445, 0.0
      %v478 = vmax.f32 %v446, 0.0
      %479 = vst [vmem:[%s271] sm:$0xff] %v447
      %480 = vst [vmem:[%s271 + $0x8] sm:$0xff] %v448
      %481 = vst [vmem:[%s271 + $0x10] sm:$0xff] %v449
      %482 = vst [vmem:[%s271 + $0x18] sm:$0xff] %v450
      %483 = vst [vmem:[%s271 + $0x20] sm:$0xff] %v451
      %484 = vst [vmem:[%s271 + $0x28] sm:$0xff] %v452
      %485 = vst [vmem:[%s271 + $0x30] sm:$0xff] %v453
      %486 = vst [vmem:[%s271 + $0x38] sm:$0xff] %v454
      %487 = vst [vmem:[%s271 + $0x40] sm:$0xff] %v455
      %488 = vst [vmem:[%s271 + $0x48] sm:$0xff] %v456
      %489 = vst [vmem:[%s271 + $0x50] sm:$0xff] %v457
      %490 = vst [vmem:[%s271 + $0x58] sm:$0xff] %v458
      %491 = vst [vmem:[%s271 + $0x60] sm:$0xff] %v459
      %492 = vst [vmem:[%s271 + $0x68] sm:$0xff] %v460
      %493 = vst [vmem:[%s271 + $0x70] sm:$0xff] %v461
      %494 = vst [vmem:[%s271 + $0x78] sm:$0xff] %v462
      %495 = vst [vmem:[%s271 + $0x80] sm:$0xff] %v463
      %496 = vst [vmem:[%s271 + $0x88] sm:$0xff] %v464
      %497 = vst [vmem:[%s271 + $0x90] sm:$0xff] %v465
      %498 = vst [vmem:[%s271 + $0x98] sm:$0xff] %v466
      %499 = vst [vmem:[%s271 + $0xa0] sm:$0xff] %v467
      %500 = vst [vmem:[%s271 + $0xa8] sm:$0xff] %v468
      %501 = vst [vmem:[%s271 + $0xb0] sm:$0xff] %v469
      %502 = vst [vmem:[%s271 + $0xb8] sm:$0xff] %v470
      %503 = vst [vmem:[%s271 + $0xc0] sm:$0xff] %v471
      %504 = vst [vmem:[%s271 + $0xc8] sm:$0xff] %v472
      %505 = vst [vmem:[%s271 + $0xd0] sm:$0xff] %v473
      %506 = vst [vmem:[%s271 + $0xd8] sm:$0xff] %v474
      %507 = vst [vmem:[%s271 + $0xe0] sm:$0xff] %v475
      %508 = vst [vmem:[%s271 + $0xe8] sm:$0xff] %v476
      %509 = vst [vmem:[%s271 + $0xf0] sm:$0xff] %v477
      %510 = vst [vmem:[%s271 + $0xf8] sm:$0xff] %v478
      %s511 = smul.u32 32, %s20
      %p512 = scmp.lt.s32.totalorder %s19, 1
      %s513 = scalar_select %p512, %s19, 1
      %p514 = scmp.lt.s32.totalorder %s511, 31
      %s515 = scalar_select %p514, %s511, 31
      %s516 = smul.addr %s513, 32
      %s517 = sadd.s32 %s515, %s516
      %s518 = smul.addr %s517, 8
      %s519 = scalar_lea.vmem %s4, %s518
      // Predicated region
      $region37: #{residual_block_forward.5} parent=35 // pred_check
        %p520 = pneg %p145
      $region38: #{residual_block_forward.5} parent=35 // pred_check_branch
        %522 = sbr.rel (%p520) target = $region40
      $region39: #{residual_block_forward.5} parent=35 // pred_region
        %s523 = smul.u32 32, %s20
      $region40: #{residual_block_forward.5} parent=35 // pred_fallthru
        _
    $region36: #{residual_block_forward.5} parent=5 // pred_fallthru
      _
    %p524 = scmp.le.s32.totalorder 2, %s10
    // Predicated region
    $region41: #{residual_block_forward.5} parent=5 // pred_check
      %p525 = pneg %p524
    $region42: #{residual_block_forward.5} parent=5 // pred_check_branch
      %527 = sbr.rel (%p525) target = $region44
    $region43: #{residual_block_forward.5} parent=5 // pred_region
      %s528 = ssub.s32 %s10, 2
      // Predicated region
      $region45: #{residual_block_forward.5} parent=43 // pred_check
        %p529 = pneg %p151
      $region46: #{residual_block_forward.5} parent=43 // pred_check_branch
        %531 = sbr.rel (%p529) target = $region48
      $region47: #{residual_block_forward.5} parent=43 // pred_region
        %s532 = smul.u32 32, %s22
        %p533 = scmp.lt.s32.totalorder %s21, 1
        %s534 = scalar_select %p533, %s21, 1
        %p535 = scmp.lt.s32.totalorder %s532, 31
        %s536 = scalar_select %p535, %s532, 31
        %s537 = smul.addr %s534, 32
        %s538 = sadd.s32 %s536, %s537
        %s539 = smul.addr %s538, 8
        %s540 = scalar_lea.vmem %s4, %s539
      $region48: #{residual_block_forward.5} parent=43 // pred_fallthru
        _
    $region44: #{residual_block_forward.5} parent=5 // pred_fallthru
      _
  $region6: #{residual_block_forward.5} parent=0 // loop_footer
    %s14 = sadd.s32 1, %s10
  $region7: #{residual_block_forward.5} parent=0 // loop_footer_branch
    %9 = sbr.rel target = $region3
  $region8: #{residual_block_forward.5} parent=0 // loop_exit
    _

// kernel: residual_block_forward.3
$region0: #{residual_block_forward.3}
  #allocation0 [shape = 'u32[]', space=smem, size = 0x4, offset = 0x4, fixed_abs, tag = 'smem constant byte address 0x4 - core index']
  #allocation1 [shape = 'u32[144,128]{1,0:T(1,128)}', space=vmem, size = 0x12000, scoped, tag = 'internal scratch']
  %s0 = inlined_call_operand.vmem [shape: f32[2,256,128], index: 0, kind: input, shape index: {}]
  %s1 = inlined_call_operand.vmem [shape: f32[9,128,128], index: 1, kind: input, shape index: {}]
  %s2 = inlined_call_operand.vmem [shape: f32[2,256,128], index: 2, kind: output, shape index: {0}]
  %s3 = inlined_call_operand.vmem [shape: f32[2,1,128], index: 3, kind: output, shape index: {1}]
  %s4 = inlined_call_operand.vmem [shape: f32[2,1,128], index: 4, kind: output, shape index: {2}]
  %5 = xla_tuple %s2, %s3, %s4
  %s6 = sld [smem:[#allocation0]]
  $region57: #{residual_block_forward.3} parent=0
    _
  %s8 = ssub.s32 1, %s6
  %s9 = scalar_select 0, %s8, %s6
  loop: start=0, step=1, limit=4
  $region2: #{residual_block_forward.3} parent=0 // loop_pre_header
    _
  $region3: #{residual_block_forward.3} parent=0 // loop_header
    %s11 = sphi 0, %s15
    %p12 = scmp.ge.s32.totalorder %s11, 4
    %s21 = sphi 0, %s23
    %s24 = sphi 0, %s21
    %s25 = sphi 0, %s24
    %s41 = sphi 0, %s25
    %s45 = sphi 0, %s45
    %s47 = sphi 0, %s45
    %s48 = sphi 0, %s47
    %s62 = sphi 0, %s48
    %s68 = sphi 0, %s70
    %s71 = sphi 0, %s68
    %s72 = sphi 0, %s71
    %s88 = sphi 0, %s72
    %s94 = sphi 0, %s96
    %s97 = sphi 0, %s94
    %s98 = sphi 0, %s97
    %s114 = sphi 0, %s98
    %s120 = sphi 0, %s122
    %s123 = sphi 0, %s120
    %s124 = sphi 0, %s123
    %s140 = sphi 0, %s124
  $region4: #{residual_block_forward.3} parent=0 // loop_header_branch
    %14 = sbr.rel (%p12) target = $region8
  $region5: #{residual_block_forward.3} parent=0 // loop_body
    %s16 = ssub.s32 %s11, 1
    %s17 = ssub.s32 %s11, 2
    %s18 = sadd.s32 %s11, 1
    %s19 = ssub.s32 %s11, %s18
    %p20 = scmp.eq.s32.totalorder %s19, 0
    %s22 = sadd.s32 %s21, 1
    %s23 = scalar_select %p20, %s21, %s22
    %p26 = pneg %p20
    %p27 = scmp.eq.s32.totalorder %s11, 1
    %p28 = por %p26, %p27
    %p29 = scmp.ne.s32.totalorder %s21, %s24
    %p30 = scmp.eq.s32.totalorder %s11, 0
    %p31 = por %p29, %p30
    %p32 = scmp.ne.s32.totalorder %s21, %s24
    %p33 = scmp.eq.s32.totalorder %s16, 1
    %p34 = por %p32, %p33
    %p35 = scmp.ne.s32.totalorder %s24, %s25
    %p36 = scmp.eq.s32.totalorder %s16, 0
    %p37 = por %p35, %p36
    %p38 = scmp.ne.s32.totalorder %s24, %s25
    %p39 = scmp.eq.s32.totalorder %s17, 1
    %p40 = por %p38, %p39
    %p42 = scmp.ne.s32.totalorder %s25, %s41
    %p43 = scmp.eq.s32.totalorder %s17, 0
    %p44 = por %p42, %p43
    %s46 = sadd.s32 %s45, 1
    %p49 = scmp.eq.s32.totalorder %s11, 1
    %p50 = scmp.ne.s32.totalorder %s45, %s47
    %p51 = scmp.eq.s32.totalorder %s11, 0
    %p52 = por %p50, %p51
    %p53 = scmp.ne.s32.totalorder %s45, %s47
    %p54 = scmp.eq.s32.totalorder %s16, 1
    %p55 = por %p53, %p54
    %p56 = scmp.ne.s32.totalorder %s47, %s48
    %p57 = scmp.eq.s32.totalorder %s16, 0
    %p58 = por %p56, %p57
    %p59 = scmp.ne.s32.totalorder %s47, %s48
    %p60 = scmp.eq.s32.totalorder %s17, 1
    %p61 = por %p59, %p60
    %p63 = scmp.ne.s32.totalorder %s48, %s62
    %p64 = scmp.eq.s32.totalorder %s17, 0
    %p65 = por %p63, %p64
    %s66 = ssub.s32 %s11, %s18
    %p67 = scmp.eq.s32.totalorder %s66, 0
    %s69 = sadd.s32 %s68, 1
    %s70 = scalar_select %p67, %s68, %s69
    %p73 = pneg %p67
    %p74 = scmp.eq.s32.totalorder %s11, 1
    %p75 = por %p73, %p74
    %p76 = scmp.ne.s32.totalorder %s68, %s71
    %p77 = scmp.eq.s32.totalorder %s11, 0
    %p78 = por %p76, %p77
    %p79 = scmp.ne.s32.totalorder %s68, %s71
    %p80 = scmp.eq.s32.totalorder %s16, 1
    %p81 = por %p79, %p80
    %p82 = scmp.ne.s32.totalorder %s71, %s72
    %p83 = scmp.eq.s32.totalorder %s16, 0
    %p84 = por %p82, %p83
    %p85 = scmp.ne.s32.totalorder %s71, %s72
    %p86 = scmp.eq.s32.totalorder %s17, 1
    %p87 = por %p85, %p86
    %p89 = scmp.ne.s32.totalorder %s72, %s88
    %p90 = scmp.eq.s32.totalorder %s17, 0
    %p91 = por %p89, %p90
    %s92 = ssub.s32 %s11, %s18
    %p93 = scmp.eq.s32.totalorder %s92, 0
    %s95 = sadd.s32 %s94, 1
    %s96 = scalar_select %p93, %s94, %s95
    %p99 = pneg %p93
    %p100 = scmp.eq.s32.totalorder %s11, 1
    %p101 = por %p99, %p100
    %p102 = scmp.ne.s32.totalorder %s94, %s97
    %p103 = scmp.eq.s32.totalorder %s11, 0
    %p104 = por %p102, %p103
    %p105 = scmp.ne.s32.totalorder %s94, %s97
    %p106 = scmp.eq.s32.totalorder %s16, 1
    %p107 = por %p105, %p106
    %p108 = scmp.ne.s32.totalorder %s97, %s98
    %p109 = scmp.eq.s32.totalorder %s16, 0
    %p110 = por %p108, %p109
    %p111 = scmp.ne.s32.totalorder %s97, %s98
    %p112 = scmp.eq.s32.totalorder %s17, 1
    %p113 = por %p111, %p112
    %p115 = scmp.ne.s32.totalorder %s98, %s114
    %p116 = scmp.eq.s32.totalorder %s17, 0
    %p117 = por %p115, %p116
    %s118 = ssub.s32 %s11, %s18
    %p119 = scmp.eq.s32.totalorder %s118, 0
    %s121 = sadd.s32 %s120, 1
    %s122 = scalar_select %p119, %s120, %s121
    %p125 = pneg %p119
    %p126 = scmp.eq.s32.totalorder %s11, 1
    %p127 = por %p125, %p126
    %p128 = scmp.ne.s32.totalorder %s120, %s123
    %p129 = scmp.eq.s32.totalorder %s11, 0
    %p130 = por %p128, %p129
    %p131 = scmp.ne.s32.totalorder %s120, %s123
    %p132 = scmp.eq.s32.totalorder %s16, 1
    %p133 = por %p131, %p132
    %p134 = scmp.ne.s32.totalorder %s123, %s124
    %p135 = scmp.eq.s32.totalorder %s16, 0
    %p136 = por %p134, %p135
    %p137 = scmp.ne.s32.totalorder %s123, %s124
    %p138 = scmp.eq.s32.totalorder %s17, 1
    %p139 = por %p137, %p138
    %p141 = scmp.ne.s32.totalorder %s124, %s140
    %p142 = scmp.eq.s32.totalorder %s17, 0
    %p143 = por %p141, %p142
    %p144 = scmp.le.s32.totalorder 1, %s11
    %p145 = scmp.lt.s32.totalorder %s11, 3
    %p146 = pnand %p144, %p145
    %p147 = pneg %p146
    // Predicated region
    $region9: #{residual_block_forward.3} parent=5 // pred_check
      _
    $region10: #{residual_block_forward.3} parent=5 // pred_check_branch
      %149 = sbr.rel (%p146) target = $region12
    $region11: #{residual_block_forward.3} parent=5 // pred_region
      %s150 = ssub.s32 %s11, 1
      // Predicated region
      $region13: #{residual_block_forward.3} parent=11 // pred_check
        %p151 = pneg %p58
      $region14: #{residual_block_forward.3} parent=11 // pred_check_branch
        %153 = sbr.rel (%p151) target = $region16
      $region15: #{residual_block_forward.3} parent=11 // pred_region
        _
      $region16: #{residual_block_forward.3} parent=11 // pred_fallthru
        _
    $region12: #{residual_block_forward.3} parent=5 // pred_fallthru
      _
    %p154 = scmp.lt.s32.totalorder %s11, 2
    // Predicated region
    $region17: #{residual_block_forward.3} parent=5 // pred_check
      %p155 = pneg %p154
    $region18: #{residual_block_forward.3} parent=5 // pred_check_branch
      %157 = sbr.rel (%p155) target = $region20
    $region19: #{residual_block_forward.3} parent=5 // pred_region
      // Predicated region
      $region21: #{residual_block_forward.3} parent=19 // pred_check
        %p158 = pneg %p31
      $region22: #{residual_block_forward.3} parent=19 // pred_check_branch
        %160 = sbr.rel (%p158) target = $region24
      $region23: #{residual_block_forward.3} parent=19 // pred_region
        %p161 = scmp.lt.s32.totalorder %s11, 1
        %s162 = scalar_select %p161, %s11, 1
        %s163 = smul.addr %s162, 32
        %s164 = smul.addr %s163, 8
        %s165 = scalar_lea.vmem %s0, %s164
      $region24: #{residual_block_forward.3} parent=19 // pred_fallthru
        _
    $region20: #{residual_block_forward.3} parent=5 // pred_fallthru
      _
    %p166 = scmp.le.s32.totalorder 1, %s11
    %p167 = scmp.lt.s32.totalorder %s11, 3
    %p168 = pnand %p166, %p167
    %p169 = pneg %p168
    // Predicated region
    $region25: #{residual_block_forward.3} parent=5 // pred_check
      _
    $region26: #{residual_block_forward.3} parent=5 // pred_check_branch
      %171 = sbr.rel (%p168) target = $region28
    $region27: #{residual_block_forward.3} parent=5 // pred_region
      %s172 = ssub.s32 %s11, 1
      %p173 = scmp.lt.s32.totalorder %s16, 1
      %s174 = scalar_select %p173, %s16, 1
      %s175 = smul.addr %s174, 32
      %s176 = smul.addr %s175, 8
      %s177 = scalar_lea.vmem %s0, %s176
      %p178 = pneg %p37
      %p179 = pneg %p34
      %p180 = pneg %p58
      %p181 = pneg %p55
      %p182 = pneg %p84
      %p183 = pneg %p81
      %p184 = scmp.lt.s32.totalorder %s16, 1
      %s185 = scalar_select %p184, %s16, 1
      %s186 = smul.addr %s185, 32
      %s187 = smul.addr %s186, 8
      %s188 = scalar_lea.vmem %s2, %s187
      %p189 = pneg %p110
      %p190 = pneg %p107
      %p191 = scmp.lt.s32.totalorder %s16, 1
      %s192 = scalar_select %p191, %s16, 1
      %s193 = scalar_lea.vmem %s3, %s192
      %p194 = pneg %p136
      %p195 = pneg %p133
      %p196 = scmp.lt.s32.totalorder %s16, 1
      %s197 = scalar_select %p196, %s16, 1
      %s198 = scalar_lea.vmem %s4, %s197
      %p199 = scmp.lt.s32.totalorder %s16, 1
      %s200 = scalar_select %p199, %s16, 1
      %s201 = smul.addr %s200, 32
      %s202 = smul.addr %s201, 8
      %s203 = scalar_lea.vmem %s0, %s202
      %p204 = scmp.lt.s32.totalorder %s16, 1
      %s205 = scalar_select %p204, %s16, 1
      %s206 = smul.addr %s205, 32
      %s207 = smul.addr %s206, 8
      %s208 = scalar_lea.vmem %s2, %s207
      %p209 = scmp.lt.s32.totalorder %s16, 1
      %s210 = scalar_select %p209, %s16, 1
      %s211 = scalar_lea.vmem %s3, %s210
      %p212 = scmp.lt.s32.totalorder %s16, 1
      %s213 = scalar_select %p212, %s16, 1
      %s214 = scalar_lea.vmem %s4, %s213
      %v215 = vld [vmem:[%s203] sm:$0xff]
      %v216 = vld [vmem:[%s203 + $0x8] sm:$0xff]
      %v217 = vld [vmem:[%s203 + $0x10] sm:$0xff]
      %v218 = vld [vmem:[%s203 + $0x18] sm:$0xff]
      %v219 = vld [vmem:[%s203 + $0x20] sm:$0xff]
      %v220 = vld [vmem:[%s203 + $0x28] sm:$0xff]
      %v221 = vld [vmem:[%s203 + $0x30] sm:$0xff]
      %v222 = vld [vmem:[%s203 + $0x38] sm:$0xff]
      %v223 = vld [vmem:[%s203 + $0x40] sm:$0xff]
      %v224 = vld [vmem:[%s203 + $0x48] sm:$0xff]
      %v225 = vld [vmem:[%s203 + $0x50] sm:$0xff]
      %v226 = vld [vmem:[%s203 + $0x58] sm:$0xff]
      %v227 = vld [vmem:[%s203 + $0x60] sm:$0xff]
      %v228 = vld [vmem:[%s203 + $0x68] sm:$0xff]
      %v229 = vld [vmem:[%s203 + $0x70] sm:$0xff]
      %v230 = vld [vmem:[%s203 + $0x78] sm:$0xff]
      %v231 = vld [vmem:[%s203 + $0x80] sm:$0xff]
      %v232 = vld [vmem:[%s203 + $0x88] sm:$0xff]
      %v233 = vld [vmem:[%s203 + $0x90] sm:$0xff]
      %v234 = vld [vmem:[%s203 + $0x98] sm:$0xff]
      %v235 = vld [vmem:[%s203 + $0xa0] sm:$0xff]
      %v236 = vld [vmem:[%s203 + $0xa8] sm:$0xff]
      %v237 = vld [vmem:[%s203 + $0xb0] sm:$0xff]
      %v238 = vld [vmem:[%s203 + $0xb8] sm:$0xff]
      %v239 = vld [vmem:[%s203 + $0xc0] sm:$0xff]
      %v240 = vld [vmem:[%s203 + $0xc8] sm:$0xff]
      %v241 = vld [vmem:[%s203 + $0xd0] sm:$0xff]
      %v242 = vld [vmem:[%s203 + $0xd8] sm:$0xff]
      %v243 = vld [vmem:[%s203 + $0xe0] sm:$0xff]
      %v244 = vld [vmem:[%s203 + $0xe8] sm:$0xff]
      %v245 = vld [vmem:[%s203 + $0xf0] sm:$0xff]
      %v246 = vld [vmem:[%s203 + $0xf8] sm:$0xff]
      %v247 = vlaneseq
      %v248 = vshrl.u32 %v247, 7
      %v249 = vadd.s32 %v248, 8
      %v250 = vadd.s32 %v248, 16
      %v251 = vadd.s32 %v248, 24
      %v252 = vadd.s32 %v248, 32
      %v253 = vadd.s32 %v248, 40
      %v254 = vadd.s32 %v248, 48
      %v255 = vadd.s32 %v248, 56
      %v256 = vadd.s32 %v248, 64
      %v257 = vadd.s32 %v248, 72
      %v258 = vadd.s32 %v248, 80
      %v259 = vadd.s32 %v248, 88
      %v260 = vadd.s32 %v248, 96
      %v261 = vadd.s32 %v248, 104
      %v262 = vadd.s32 %v248, 112
      %v263 = vadd.s32 %v248, 120
      %v264 = vadd.s32 %v248, 128
      %v265 = vadd.s32 %v248, 136
      %v266 = vadd.s32 %v248, 144
      %v267 = vadd.s32 %v248, 152
      %v268 = vadd.s32 %v248, 160
      %v269 = vadd.s32 %v248, 168
      %v270 = vadd.s32 %v248, 176
      %v271 = vadd.s32 %v248, 184
      %v272 = vadd.s32 %v248, 192
      %v273 = vadd.s32 %v248, 200
      %v274 = vadd.s32 %v248, 208
      %v275 = vadd.s32 %v248, 216
      %v276 = vadd.s32 %v248, 224
      %v277 = vadd.s32 %v248, 232
      %v278 = vadd.s32 %v248, 240
      %v279 = vadd.s32 %v248, 248
      %vm280 = vcmp.lt.s32.totalorder %v248, 0
      %v281 = vsub.s32 0, %v248
      %v282 = vsel %vm280, %v281, %v248
      %v283 = vshrl.u32 %v282, 4
      %v284 = vand.u32 %v282, 15
      %v285 = vsub.s32 0, %v284
      %v286 = vsel %vm280, %v285, %v284
      %vm287 = vcmp.lt.s32.totalorder %v249, 0
      %v288 = vsub.s32 0, %v249
      %v289 = vsel %vm287, %v288, %v249
      %v290 = vshrl.u32 %v289, 4
      %v291 = vand.u32 %v289, 15
      %v292 = vsub.s32 0, %v291
      %v293 = vsel %vm287, %v292, %v291
      %vm294 = vcmp.lt.s32.totalorder %v250, 0
      %v295 = vsub.s32 0, %v250
      %v296 = vsel %vm294, %v295, %v250
      %v297 = vshrl.u32 %v296, 4
      %v298 = vand.u32 %v296, 15
      %v299 = vsub.s32 0, %v298
      %v300 = vsel %vm294, %v299, %v298
      %vm301 = vcmp.lt.s32.totalorder %v251, 0
      %v302 = vsub.s32 0, %v251
      %v303 = vsel %vm301, %v302, %v251
      %v304 = vshrl.u32 %v303, 4
      %v305 = vand.u32 %v303, 15
      %v306 = vsub.s32 0, %v305
      %v307 = vsel %vm301, %v306, %v305
      %vm308 = vcmp.lt.s32.totalorder %v252, 0
      %v309 = vsub.s32 0, %v252
      %v310 = vsel %vm308, %v309, %v252
      %v311 = vshrl.u32 %v310, 4
      %v312 = vand.u32 %v310, 15
      %v313 = vsub.s32 0, %v312
      %v314 = vsel %vm308, %v313, %v312
      %vm315 = vcmp.lt.s32.totalorder %v253, 0
      %v316 = vsub.s32 0, %v253
      %v317 = vsel %vm315, %v316, %v253
      %v318 = vshrl.u32 %v317, 4
      %v319 = vand.u32 %v317, 15
      %v320 = vsub.s32 0, %v319
      %v321 = vsel %vm315, %v320, %v319
      %vm322 = vcmp.lt.s32.totalorder %v254, 0
      %v323 = vsub.s32 0, %v254
      %v324 = vsel %vm322, %v323, %v254
      %v325 = vshrl.u32 %v324, 4
      %v326 = vand.u32 %v324, 15
      %v327 = vsub.s32 0, %v326
      %v328 = vsel %vm322, %v327, %v326
      %vm329 = vcmp.lt.s32.totalorder %v255, 0
      %v330 = vsub.s32 0, %v255
      %v331 = vsel %vm329, %v330, %v255
      %v332 = vshrl.u32 %v331, 4
      %v333 = vand.u32 %v331, 15
      %v334 = vsub.s32 0, %v333
      %v335 = vsel %vm329, %v334, %v333
      %vm336 = vcmp.lt.s32.totalorder %v256, 0
      %v337 = vsub.s32 0, %v256
      %v338 = vsel %vm336, %v337, %v256
      %v339 = vshrl.u32 %v338, 4
      %v340 = vand.u32 %v338, 15
      %v341 = vsub.s32 0, %v340
      %v342 = vsel %vm336, %v341, %v340
      %vm343 = vcmp.lt.s32.totalorder %v257, 0
      %v344 = vsub.s32 0, %v257
      %v345 = vsel %vm343, %v344, %v257
      %v346 = vshrl.u32 %v345, 4
      %v347 = vand.u32 %v345, 15
      %v348 = vsub.s32 0, %v347
      %v349 = vsel %vm343, %v348, %v347
      %vm350 = vcmp.lt.s32.totalorder %v258, 0
      %v351 = vsub.s32 0, %v258
      %v352 = vsel %vm350, %v351, %v258
      %v353 = vshrl.u32 %v352, 4
      %v354 = vand.u32 %v352, 15
      %v355 = vsub.s32 0, %v354
      %v356 = vsel %vm350, %v355, %v354
      %vm357 = vcmp.lt.s32.totalorder %v259, 0
      %v358 = vsub.s32 0, %v259
      %v359 = vsel %vm357, %v358, %v259
      %v360 = vshrl.u32 %v359, 4
      %v361 = vand.u32 %v359, 15
      %v362 = vsub.s32 0, %v361
      %v363 = vsel %vm357, %v362, %v361
      %vm364 = vcmp.lt.s32.totalorder %v260, 0
      %v365 = vsub.s32 0, %v260
      %v366 = vsel %vm364, %v365, %v260
      %v367 = vshrl.u32 %v366, 4
      %v368 = vand.u32 %v366, 15
      %v369 = vsub.s32 0, %v368
      %v370 = vsel %vm364, %v369, %v368
      %vm371 = vcmp.lt.s32.totalorder %v261, 0
      %v372 = vsub.s32 0, %v261
      %v373 = vsel %vm371, %v372, %v261
      %v374 = vshrl.u32 %v373, 4
      %v375 = vand.u32 %v373, 15
      %v376 = vsub.s32 0, %v375
      %v377 = vsel %vm371, %v376, %v375
      %vm378 = vcmp.lt.s32.totalorder %v262, 0
      %v379 = vsub.s32 0, %v262
      %v380 = vsel %vm378, %v379, %v262
      %v381 = vshrl.u32 %v380, 4
      %v382 = vand.u32 %v380, 15
      %v383 = vsub.s32 0, %v382
      %v384 = vsel %vm378, %v383, %v382
      %vm385 = vcmp.lt.s32.totalorder %v263, 0
      %v386 = vsub.s32 0, %v263
      %v387 = vsel %vm385, %v386, %v263
      %v388 = vshrl.u32 %v387, 4
      %v389 = vand.u32 %v387, 15
      %v390 = vsub.s32 0, %v389
      %v391 = vsel %vm385, %v390, %v389
      %vm392 = vcmp.lt.s32.totalorder %v264, 0
      %v393 = vsub.s32 0, %v264
      %v394 = vsel %vm392, %v393, %v264
      %v395 = vshrl.u32 %v394, 4
      %v396 = vand.u32 %v394, 15
      %v397 = vsub.s32 0, %v396
      %v398 = vsel %vm392, %v397, %v396
      %vm399 = vcmp.lt.s32.totalorder %v265, 0
      %v400 = vsub.s32 0, %v265
      %v401 = vsel %vm399, %v400, %v265
      %v402 = vshrl.u32 %v401, 4
      %v403 = vand.u32 %v401, 15
      %v404 = vsub.s32 0, %v403
      %v405 = vsel %vm399, %v404, %v403
      %vm406 = vcmp.lt.s32.totalorder %v266, 0
      %v407 = vsub.s32 0, %v266
      %v408 = vsel %vm406, %v407, %v266
      %v409 = vshrl.u32 %v408, 4
      %v410 = vand.u32 %v408, 15
      %v411 = vsub.s32 0, %v410
      %v412 = vsel %vm406, %v411, %v410
      %vm413 = vcmp.lt.s32.totalorder %v267, 0
      %v414 = vsub.s32 0, %v267
      %v415 = vsel %vm413, %v414, %v267
      %v416 = vshrl.u32 %v415, 4
      %v417 = vand.u32 %v415, 15
      %v418 = vsub.s32 0, %v417
      %v419 = vsel %vm413, %v418, %v417
      %vm420 = vcmp.lt.s32.totalorder %v268, 0
      %v421 = vsub.s32 0, %v268
      %v422 = vsel %vm420, %v421, %v268
      %v423 = vshrl.u32 %v422, 4
      %v424 = vand.u32 %v422, 15
      %v425 = vsub.s32 0, %v424
      %v426 = vsel %vm420, %v425, %v424
      %vm427 = vcmp.lt.s32.totalorder %v269, 0
      %v428 = vsub.s32 0, %v269
      %v429 = vsel %vm427, %v428, %v269
      %v430 = vshrl.u32 %v429, 4
      %v431 = vand.u32 %v429, 15
      %v432 = vsub.s32 0, %v431
      %v433 = vsel %vm427, %v432, %v431
      %vm434 = vcmp.lt.s32.totalorder %v270, 0
      %v435 = vsub.s32 0, %v270
      %v436 = vsel %vm434, %v435, %v270
      %v437 = vshrl.u32 %v436, 4
      %v438 = vand.u32 %v436, 15
      %v439 = vsub.s32 0, %v438
      %v440 = vsel %vm434, %v439, %v438
      %vm441 = vcmp.lt.s32.totalorder %v271, 0
      %v442 = vsub.s32 0, %v271
      %v443 = vsel %vm441, %v442, %v271
      %v444 = vshrl.u32 %v443, 4
      %v445 = vand.u32 %v443, 15
      %v446 = vsub.s32 0, %v445
      %v447 = vsel %vm441, %v446, %v445
      %vm448 = vcmp.lt.s32.totalorder %v272, 0
      %v449 = vsub.s32 0, %v272
      %v450 = vsel %vm448, %v449, %v272
      %v451 = vshrl.u32 %v450, 4
      %v452 = vand.u32 %v450, 15
      %v453 = vsub.s32 0, %v452
      %v454 = vsel %vm448, %v453, %v452
      %vm455 = vcmp.lt.s32.totalorder %v273, 0
      %v456 = vsub.s32 0, %v273
      %v457 = vsel %vm455, %v456, %v273
      %v458 = vshrl.u32 %v457, 4
      %v459 = vand.u32 %v457, 15
      %v460 = vsub.s32 0, %v459
      %v461 = vsel %vm455, %v460, %v459
      %vm462 = vcmp.lt.s32.totalorder %v274, 0
      %v463 = vsub.s32 0, %v274
      %v464 = vsel %vm462, %v463, %v274
      %v465 = vshrl.u32 %v464, 4
      %v466 = vand.u32 %v464, 15
      %v467 = vsub.s32 0, %v466
      %v468 = vsel %vm462, %v467, %v466
      %vm469 = vcmp.lt.s32.totalorder %v275, 0
      %v470 = vsub.s32 0, %v275
      %v471 = vsel %vm469, %v470, %v275
      %v472 = vshrl.u32 %v471, 4
      %v473 = vand.u32 %v471, 15
      %v474 = vsub.s32 0, %v473
      %v475 = vsel %vm469, %v474, %v473
      %vm476 = vcmp.lt.s32.totalorder %v276, 0
      %v477 = vsub.s32 0, %v276
      %v478 = vsel %vm476, %v477, %v276
      %v479 = vshrl.u32 %v478, 4
      %v480 = vand.u32 %v478, 15
      %v481 = vsub.s32 0, %v480
      %v482 = vsel %vm476, %v481, %v480
      %vm483 = vcmp.lt.s32.totalorder %v277, 0
      %v484 = vsub.s32 0, %v277
      %v485 = vsel %vm483, %v484, %v277
      %v486 = vshrl.u32 %v485, 4
      %v487 = vand.u32 %v485, 15
      %v488 = vsub.s32 0, %v487
      %v489 = vsel %vm483, %v488, %v487
      %vm490 = vcmp.lt.s32.totalorder %v278, 0
      %v491 = vsub.s32 0, %v278
      %v492 = vsel %vm490, %v491, %v278
      %v493 = vshrl.u32 %v492, 4
      %v494 = vand.u32 %v492, 15
      %v495 = vsub.s32 0, %v494
      %v496 = vsel %vm490, %v495, %v494
      %vm497 = vcmp.lt.s32.totalorder %v279, 0
      %v498 = vsub.s32 0, %v279
      %v499 = vsel %vm497, %v498, %v279
      %v500 = vshrl.u32 %v499, 4
      %v501 = vand.u32 %v499, 15
      %v502 = vsub.s32 0, %v501
      %v503 = vsel %vm497, %v502, %v501
      %vm504 = vcmp.ne.s32.totalorder %v286, 0
      %vm505 = vcmp.ne.s32.totalorder %v293, 0
      %vm506 = vcmp.ne.s32.totalorder %v300, 0
      %vm507 = vcmp.ne.s32.totalorder %v307, 0
      %vm508 = vcmp.ne.s32.totalorder %v314, 0
      %vm509 = vcmp.ne.s32.totalorder %v321, 0
      %vm510 = vcmp.ne.s32.totalorder %v328, 0
      %vm511 = vcmp.ne.s32.totalorder %v335, 0
      %vm512 = vcmp.ne.s32.totalorder %v342, 0
      %vm513 = vcmp.ne.s32.totalorder %v349, 0
      %vm514 = vcmp.ne.s32.totalorder %v356, 0
      %vm515 = vcmp.ne.s32.totalorder %v363, 0
      %vm516 = vcmp.ne.s32.totalorder %v370, 0
      %vm517 = vcmp.ne.s32.totalorder %v377, 0
      %vm518 = vcmp.ne.s32.totalorder %v384, 0
      %vm519 = vcmp.ne.s32.totalorder %v391, 0
      %vm520 = vcmp.ne.s32.totalorder %v398, 0
      %vm521 = vcmp.ne.s32.totalorder %v405, 0
      %vm522 = vcmp.ne.s32.totalorder %v412, 0
      %vm523 = vcmp.ne.s32.totalorder %v419, 0
      %vm524 = vcmp.ne.s32.totalorder %v426, 0
      %vm525 = vcmp.ne.s32.totalorder %v433, 0
      %vm526 = vcmp.ne.s32.totalorder %v440, 0
      %vm527 = vcmp.ne.s32.totalorder %v447, 0
      %vm528 = vcmp.ne.s32.totalorder %v454, 0
      %vm529 = vcmp.ne.s32.totalorder %v461, 0
      %vm530 = vcmp.ne.s32.totalorder %v468, 0
      %vm531 = vcmp.ne.s32.totalorder %v475, 0
      %vm532 = vcmp.ne.s32.totalorder %v482, 0
      %vm533 = vcmp.ne.s32.totalorder %v489, 0
      %vm534 = vcmp.ne.s32.totalorder %v496, 0
      %vm535 = vcmp.ne.s32.totalorder %v503, 0
      %vm536 = vcmp.lt.s32.totalorder %v286, 0
      %vm537 = vcmp.lt.s32.totalorder %v293, 0
      %vm538 = vcmp.lt.s32.totalorder %v300, 0
      %vm539 = vcmp.lt.s32.totalorder %v307, 0
      %vm540 = vcmp.lt.s32.totalorder %v314, 0
      %vm541 = vcmp.lt.s32.totalorder %v321, 0
      %vm542 = vcmp.lt.s32.totalorder %v328, 0
      %vm543 = vcmp.lt.s32.totalorder %v335, 0
      %vm544 = vcmp.lt.s32.totalorder %v342, 0
      %vm545 = vcmp.lt.s32.totalorder %v349, 0
      %vm546 = vcmp.lt.s32.totalorder %v356, 0
      %vm547 = vcmp.lt.s32.totalorder %v363, 0
      %vm548 = vcmp.lt.s32.totalorder %v370, 0
      %vm549 = vcmp.lt.s32.totalorder %v377, 0
      %vm550 = vcmp.lt.s32.totalorder %v384, 0
      %vm551 = vcmp.lt.s32.totalorder %v391, 0
      %vm552 = vcmp.lt.s32.totalorder %v398, 0
      %vm553 = vcmp.lt.s32.totalorder %v405, 0
      %vm554 = vcmp.lt.s32.totalorder %v412, 0
      %vm555 = vcmp.lt.s32.totalorder %v419, 0
      %vm556 = vcmp.lt.s32.totalorder %v426, 0
      %vm557 = vcmp.lt.s32.totalorder %v433, 0
      %vm558 = vcmp.lt.s32.totalorder %v440, 0
      %vm559 = vcmp.lt.s32.totalorder %v447, 0
      %vm560 = vcmp.lt.s32.totalorder %v454, 0
      %vm561 = vcmp.lt.s32.totalorder %v461, 0
      %vm562 = vcmp.lt.s32.totalorder %v468, 0
      %vm563 = vcmp.lt.s32.totalorder %v475, 0
      %vm564 = vcmp.lt.s32.totalorder %v482, 0
      %vm565 = vcmp.lt.s32.totalorder %v489, 0
      %vm566 = vcmp.lt.s32.totalorder %v496, 0
      %vm567 = vcmp.lt.s32.totalorder %v503, 0
      %vm568 = vmand %vm536, %vm504
      %vm569 = vmand %vm537, %vm505
      %vm570 = vmand %vm538, %vm506
      %vm571 = vmand %vm539, %vm507
      %vm572 = vmand %vm540, %vm508
      %vm573 = vmand %vm541, %vm509
      %vm574 = vmand %vm542, %vm510
      %vm575 = vmand %vm543, %vm511
      %vm576 = vmand %vm544, %vm512
      %vm577 = vmand %vm545, %vm513
      %vm578 = vmand %vm546, %vm514
      %vm579 = vmand %vm547, %vm515
      %vm580 = vmand %vm548, %vm516
      %vm581 = vmand %vm549, %vm517
      %vm582 = vmand %vm550, %vm518
      %vm583 = vmand %vm551, %vm519
      %vm584 = vmand %vm552, %vm520
      %vm585 = vmand %vm553, %vm521
      %vm586 = vmand %vm554, %vm522
      %vm587 = vmand %vm555, %vm523
      %vm588 = vmand %vm556, %vm524
      %vm589 = vmand %vm557, %vm525
      %vm590 = vmand %vm558, %vm526
      %vm591 = vmand %vm559, %vm527
      %vm592 = vmand %vm560, %vm528
      %vm593 = vmand %vm561, %vm529
      %vm594 = vmand %vm562, %vm530
      %vm595 = vmand %vm563, %vm531
      %vm596 = vmand %vm564, %vm532
      %vm597 = vmand %vm565, %vm533
      %vm598 = vmand %vm566, %vm534
      %vm599 = vmand %vm567, %vm535
      %v600 = vadd.s32 %v286, 16
      %v601 = vadd.s32 %v293, 16
      %v602 = vadd.s32 %v300, 16
      %v603 = vadd.s32 %v307, 16
      %v604 = vadd.s32 %v314, 16
      %v605 = vadd.s32 %v321, 16
      %v606 = vadd.s32 %v328, 16
      %v607 = vadd.s32 %v335, 16
      %v608 = vadd.s32 %v342, 16
      %v609 = vadd.s32 %v349, 16
      %v610 = vadd.s32 %v356, 16
      %v611 = vadd.s32 %v363, 16
      %v612 = vadd.s32 %v370, 16
      %v613 = vadd.s32 %v377, 16
      %v614 = vadd.s32 %v384, 16
      %v615 = vadd.s32 %v391, 16
      %v616 = vadd.s32 %v398, 16
      %v617 = vadd.s32 %v405, 16
      %v618 = vadd.s32 %v412, 16
      %v619 = vadd.s32 %v419, 16
      %v620 = vadd.s32 %v426, 16
      %v621 = vadd.s32 %v433, 16
      %v622 = vadd.s32 %v440, 16
      %v623 = vadd.s32 %v447, 16
      %v624 = vadd.s32 %v454, 16
      %v625 = vadd.s32 %v461, 16
      %v626 = vadd.s32 %v468, 16
      %v627 = vadd.s32 %v475, 16
      %v628 = vadd.s32 %v482, 16
      %v629 = vadd.s32 %v489, 16
      %v630 = vadd.s32 %v496, 16
      %v631 = vadd.s32 %v503, 16
      %v632 = vsel %vm568, %v600, %v286
      %v633 = vsel %vm569, %v601, %v293
      %v634 = vsel %vm570, %v602, %v300
      %v635 = vsel %vm571, %v603, %v307
      %v636 = vsel %vm572, %v604, %v314
      %v637 = vsel %vm573, %v605, %v321
      %v638 = vsel %vm574, %v606, %v328
      %v639 = vsel %vm575, %v607, %v335
      %v640 = vsel %vm576, %v608, %v342
      %v641 = vsel %vm577, %v609, %v349
      %v642 = vsel %vm578, %v610, %v356
      %v643 = vsel %vm579, %v611, %v363
      %v644 = vsel %vm580, %v612, %v370
      %v645 = vsel %vm581, %v613, %v377
      %v646 = vsel %vm582, %v614, %v384
      %v647 = vsel %vm583, %v615, %v391
      %v648 = vsel %vm584, %v616, %v398
      %v649 = vsel %vm585, %v617, %v405
      %v650 = vsel %vm586, %v618, %v412
      %v651 = vsel %vm587, %v619, %v419
      %v652 = vsel %vm588, %v620, %v426
      %v653 = vsel %vm589, %v621, %v433
      %v654 = vsel %vm590, %v622, %v440
      %v655 = vsel %vm591, %v623, %v447
      %v656 = vsel %vm592, %v624, %v454
      %v657 = vsel %vm593, %v625, %v461
      %v658 = vsel %vm594, %v626, %v468
      %v659 = vsel %vm595, %v627, %v475
      %v660 = vsel %vm596, %v628, %v482
      %v661 = vsel %vm597, %v629, %v489
      %v662 = vsel %vm598, %v630, %v496
      %v663 = vsel %vm599, %v631, %v503
      %vm664 = vcmp.ne.s32.totalorder %v632, 15
      %vm665 = vcmp.ne.s32.totalorder %v633, 15
      %vm666 = vcmp.ne.s32.totalorder %v634, 15
      %vm667 = vcmp.ne.s32.totalorder %v635, 15
      %vm668 = vcmp.ne.s32.totalorder %v636, 15
      %vm669 = vcmp.ne.s32.totalorder %v637, 15
      %vm670 = vcmp.ne.s32.totalorder %v638, 15
      %vm671 = vcmp.ne.s32.totalorder %v639, 15
      %vm672 = vcmp.ne.s32.totalorder %v640, 15
      %vm673 = vcmp.ne.s32.totalorder %v641, 15
      %vm674 = vcmp.ne.s32.totalorder %v642, 15
      %vm675 = vcmp.ne.s32.totalorder %v643, 15
      %vm676 = vcmp.ne.s32.totalorder %v644, 15
      %vm677 = vcmp.ne.s32.totalorder %v645, 15
      %vm678 = vcmp.ne.s32.totalorder %v646, 15
      %vm679 = vcmp.ne.s32.totalorder %v647, 15
      %vm680 = vcmp.ne.s32.totalorder %v648, 15
      %vm681 = vcmp.ne.s32.totalorder %v649, 15
      %vm682 = vcmp.ne.s32.totalorder %v650, 15
      %vm683 = vcmp.ne.s32.totalorder %v651, 15
      %vm684 = vcmp.ne.s32.totalorder %v652, 15
      %vm685 = vcmp.ne.s32.totalorder %v653, 15
      %vm686 = vcmp.ne.s32.totalorder %v654, 15
      %vm687 = vcmp.ne.s32.totalorder %v655, 15
      %vm688 = vcmp.ne.s32.totalorder %v656, 15
      %vm689 = vcmp.ne.s32.totalorder %v657, 15
      %vm690 = vcmp.ne.s32.totalorder %v658, 15
      %vm691 = vcmp.ne.s32.totalorder %v659, 15
      %vm692 = vcmp.ne.s32.totalorder %v660, 15
      %vm693 = vcmp.ne.s32.totalorder %v661, 15
      %vm694 = vcmp.ne.s32.totalorder %v662, 15
      %vm695 = vcmp.ne.s32.totalorder %v663, 15
      %v696 = vsel %vm664, 1, 0
      %v697 = vsel %vm665, 1, 0
      %v698 = vsel %vm666, 1, 0
      %v699 = vsel %vm667, 1, 0
      %v700 = vsel %vm668, 1, 0
      %v701 = vsel %vm669, 1, 0
      %v702 = vsel %vm670, 1, 0
      %v703 = vsel %vm671, 1, 0
      %v704 = vsel %vm672, 1, 0
      %v705 = vsel %vm673, 1, 0
      %v706 = vsel %vm674, 1, 0
      %v707 = vsel %vm675, 1, 0
      %v708 = vsel %vm676, 1, 0
      %v709 = vsel %vm677, 1, 0
      %v710 = vsel %vm678, 1, 0
      %v711 = vsel %vm679, 1, 0
      %v712 = vsel %vm680, 1, 0
      %v713 = vsel %vm681, 1, 0
      %v714 = vsel %vm682, 1, 0
      %v715 = vsel %vm683, 1, 0
      %v716 = vsel %vm684, 1, 0
      %v717 = vsel %vm685, 1, 0
      %v718 = vsel %vm686, 1, 0
      %v719 = vsel %vm687, 1, 0
      %v720 = vsel %vm688, 1, 0
      %v721 = vsel %vm689, 1, 0
      %v722 = vsel %vm690, 1, 0
      %v723 = vsel %vm691, 1, 0
      %v724 = vsel %vm692, 1, 0
      %v725 = vsel %vm693, 1, 0
      %v726 = vsel %vm694, 1, 0
      %v727 = vsel %vm695, 1, 0
      %vm728 = vcmp.eq.s32.totalorder %v696, 1
      %vm729 = vcmp.eq.s32.totalorder %v697, 1
      %vm730 = vcmp.eq.s32.totalorder %v698, 1
      %vm731 = vcmp.eq.s32.totalorder %v699, 1
      %vm732 = vcmp.eq.s32.totalorder %v700, 1
      %vm733 = vcmp.eq.s32.totalorder %v701, 1
      %vm734 = vcmp.eq.s32.totalorder %v702, 1
      %vm735 = vcmp.eq.s32.totalorder %v703, 1
      %vm736 = vcmp.eq.s32.totalorder %v704, 1
      %vm737 = vcmp.eq.s32.totalorder %v705, 1
      %vm738 = vcmp.eq.s32.totalorder %v706, 1
      %vm739 = vcmp.eq.s32.totalorder %v707, 1
      %vm740 = vcmp.eq.s32.totalorder %v708, 1
      %vm741 = vcmp.eq.s32.totalorder %v709, 1
      %vm742 = vcmp.eq.s32.totalorder %v710, 1
      %vm743 = vcmp.eq.s32.totalorder %v711, 1
      %vm744 = vcmp.eq.s32.totalorder %v712, 1
      %vm745 = vcmp.eq.s32.totalorder %v713, 1
      %vm746 = vcmp.eq.s32.totalorder %v714, 1
      %vm747 = vcmp.eq.s32.totalorder %v715, 1
      %vm748 = vcmp.eq.s32.totalorder %v716, 1
      %vm749 = vcmp.eq.s32.totalorder %v717, 1
      %vm750 = vcmp.eq.s32.totalorder %v718, 1
      %vm751 = vcmp.eq.s32.totalorder %v719, 1
      %vm752 = vcmp.eq.s32.totalorder %v720, 1
      %vm753 = vcmp.eq.s32.totalorder %v721, 1
      %vm754 = vcmp.eq.s32.totalorder %v722, 1
      %vm755 = vcmp.eq.s32.totalorder %v723, 1
      %vm756 = vcmp.eq.s32.totalorder %v724, 1
      %vm757 = vcmp.eq.s32.totalorder %v725, 1
      %vm758 = vcmp.eq.s32.totalorder %v726, 1
      %vm759 = vcmp.eq.s32.totalorder %v727, 1
      %v760 = vsel %vm728, %v215, 0.0
      %v761 = vsel %vm729, %v216, 0.0
      %v762 = vsel %vm730, %v217, 0.0
      %v763 = vsel %vm731, %v218, 0.0
      %v764 = vsel %vm732, %v219, 0.0
      %v765 = vsel %vm733, %v220, 0.0
      %v766 = vsel %vm734, %v221, 0.0
      %v767 = vsel %vm735, %v222, 0.0
      %v768 = vsel %vm736, %v223, 0.0
      %v769 = vsel %vm737, %v224, 0.0
      %v770 = vsel %vm738, %v225, 0.0
      %v771 = vsel %vm739, %v226, 0.0
      %v772 = vsel %vm740, %v227, 0.0
      %v773 = vsel %vm741, %v228, 0.0
      %v774 = vsel %vm742, %v229, 0.0
      %v775 = vsel %vm743, %v230, 0.0
      %v776 = vsel %vm744, %v231, 0.0
      %v777 = vsel %vm745, %v232, 0.0
      %v778 = vsel %vm746, %v233, 0.0
      %v779 = vsel %vm747, %v234, 0.0
      %v780 = vsel %vm748, %v235, 0.0
      %v781 = vsel %vm749, %v236, 0.0
      %v782 = vsel %vm750, %v237, 0.0
      %v783 = vsel %vm751, %v238, 0.0
      %v784 = vsel %vm752, %v239, 0.0
      %v785 = vsel %vm753, %v240, 0.0
      %v786 = vsel %vm754, %v241, 0.0
      %v787 = vsel %vm755, %v242, 0.0
      %v788 = vsel %vm756, %v243, 0.0
      %v789 = vsel %vm757, %v244, 0.0
      %v790 = vsel %vm758, %v245, 0.0
      %v791 = vsel %vm759, %v246, 0.0
      %vm792 = vcmp.ne.s32.totalorder %v632, 0
      %vm793 = vcmp.ne.s32.totalorder %v633, 0
      %vm794 = vcmp.ne.s32.totalorder %v634, 0
      %vm795 = vcmp.ne.s32.totalorder %v635, 0
      %vm796 = vcmp.ne.s32.totalorder %v636, 0
      %vm797 = vcmp.ne.s32.totalorder %v637, 0
      %vm798 = vcmp.ne.s32.totalorder %v638, 0
      %vm799 = vcmp.ne.s32.totalorder %v639, 0
      %vm800 = vcmp.ne.s32.totalorder %v640, 0
      %vm801 = vcmp.ne.s32.totalorder %v641, 0
      %vm802 = vcmp.ne.s32.totalorder %v642, 0
      %vm803 = vcmp.ne.s32.totalorder %v643, 0
      %vm804 = vcmp.ne.s32.totalorder %v644, 0
      %vm805 = vcmp.ne.s32.totalorder %v645, 0
      %vm806 = vcmp.ne.s32.totalorder %v646, 0
      %vm807 = vcmp.ne.s32.totalorder %v647, 0
      %vm808 = vcmp.ne.s32.totalorder %v648, 0
      %vm809 = vcmp.ne.s32.totalorder %v649, 0
      %vm810 = vcmp.ne.s32.totalorder %v650, 0
      %vm811 = vcmp.ne.s32.totalorder %v651, 0
      %vm812 = vcmp.ne.s32.totalorder %v652, 0
      %vm813 = vcmp.ne.s32.totalorder %v653, 0
      %vm814 = vcmp.ne.s32.totalorder %v654, 0
      %vm815 = vcmp.ne.s32.totalorder %v655, 0
      %vm816 = vcmp.ne.s32.totalorder %v656, 0
      %vm817 = vcmp.ne.s32.totalorder %v657, 0
      %vm818 = vcmp.ne.s32.totalorder %v658, 0
      %vm819 = vcmp.ne.s32.totalorder %v659, 0
      %vm820 = vcmp.ne.s32.totalorder %v660, 0
      %vm821 = vcmp.ne.s32.totalorder %v661, 0
      %vm822 = vcmp.ne.s32.totalorder %v662, 0
      %vm823 = vcmp.ne.s32.totalorder %v663, 0
      %v824 = vsel %vm792, 1, 0
      %v825 = vsel %vm793, 1, 0
      %v826 = vsel %vm794, 1, 0
      %v827 = vsel %vm795, 1, 0
      %v828 = vsel %vm796, 1, 0
      %v829 = vsel %vm797, 1, 0
      %v830 = vsel %vm798, 1, 0
      %v831 = vsel %vm799, 1, 0
      %v832 = vsel %vm800, 1, 0
      %v833 = vsel %vm801, 1, 0
      %v834 = vsel %vm802, 1, 0
      %v835 = vsel %vm803, 1, 0
      %v836 = vsel %vm804, 1, 0
      %v837 = vsel %vm805, 1, 0
      %v838 = vsel %vm806, 1, 0
      %v839 = vsel %vm807, 1, 0
      %v840 = vsel %vm808, 1, 0
      %v841 = vsel %vm809, 1, 0
      %v842 = vsel %vm810, 1, 0
      %v843 = vsel %vm811, 1, 0
      %v844 = vsel %vm812, 1, 0
      %v845 = vsel %vm813, 1, 0
      %v846 = vsel %vm814, 1, 0
      %v847 = vsel %vm815, 1, 0
      %v848 = vsel %vm816, 1, 0
      %v849 = vsel %vm817, 1, 0
      %v850 = vsel %vm818, 1, 0
      %v851 = vsel %vm819, 1, 0
      %v852 = vsel %vm820, 1, 0
      %v853 = vsel %vm821, 1, 0
      %v854 = vsel %vm822, 1, 0
      %v855 = vsel %vm823, 1, 0
      %vm856 = vcmp.eq.s32.totalorder %v824, 1
      %vm857 = vcmp.eq.s32.totalorder %v825, 1
      %vm858 = vcmp.eq.s32.totalorder %v826, 1
      %vm859 = vcmp.eq.s32.totalorder %v827, 1
      %vm860 = vcmp.eq.s32.totalorder %v828, 1
      %vm861 = vcmp.eq.s32.totalorder %v829, 1
      %vm862 = vcmp.eq.s32.totalorder %v830, 1
      %vm863 = vcmp.eq.s32.totalorder %v831, 1
      %vm864 = vcmp.eq.s32.totalorder %v832, 1
      %vm865 = vcmp.eq.s32.totalorder %v833, 1
      %vm866 = vcmp.eq.s32.totalorder %v834, 1
      %vm867 = vcmp.eq.s32.totalorder %v835, 1
      %vm868 = vcmp.eq.s32.totalorder %v836, 1
      %vm869 = vcmp.eq.s32.totalorder %v837, 1
      %vm870 = vcmp.eq.s32.totalorder %v838, 1
      %vm871 = vcmp.eq.s32.totalorder %v839, 1
      %vm872 = vcmp.eq.s32.totalorder %v840, 1
      %vm873 = vcmp.eq.s32.totalorder %v841, 1
      %vm874 = vcmp.eq.s32.totalorder %v842, 1
      %vm875 = vcmp.eq.s32.totalorder %v843, 1
      %vm876 = vcmp.eq.s32.totalorder %v844, 1
      %vm877 = vcmp.eq.s32.totalorder %v845, 1
      %vm878 = vcmp.eq.s32.totalorder %v846, 1
      %vm879 = vcmp.eq.s32.totalorder %v847, 1
      %vm880 = vcmp.eq.s32.totalorder %v848, 1
      %vm881 = vcmp.eq.s32.totalorder %v849, 1
      %vm882 = vcmp.eq.s32.totalorder %v850, 1
      %vm883 = vcmp.eq.s32.totalorder %v851, 1
      %vm884 = vcmp.eq.s32.totalorder %v852, 1
      %vm885 = vcmp.eq.s32.totalorder %v853, 1
      %vm886 = vcmp.eq.s32.totalorder %v854, 1
      %vm887 = vcmp.eq.s32.totalorder %v855, 1
      %v888 = vsel %vm856, %v215, 0.0
      %v889 = vsel %vm857, %v216, 0.0
      %v890 = vsel %vm858, %v217, 0.0
      %v891 = vsel %vm859, %v218, 0.0
      %v892 = vsel %vm860, %v219, 0.0
      %v893 = vsel %vm861, %v220, 0.0
      %v894 = vsel %vm862, %v221, 0.0
      %v895 = vsel %vm863, %v222, 0.0
      %v896 = vsel %vm864, %v223, 0.0
      %v897 = vsel %vm865, %v224, 0.0
      %v898 = vsel %vm866, %v225, 0.0
      %v899 = vsel %vm867, %v226, 0.0
      %v900 = vsel %vm868, %v227, 0.0
      %v901 = vsel %vm869, %v228, 0.0
      %v902 = vsel %vm870, %v229, 0.0
      %v903 = vsel %vm871, %v230, 0.0
      %v904 = vsel %vm872, %v231, 0.0
      %v905 = vsel %vm873, %v232, 0.0
      %v906 = vsel %vm874, %v233, 0.0
      %v907 = vsel %vm875, %v234, 0.0
      %v908 = vsel %vm876, %v235, 0.0
      %v909 = vsel %vm877, %v236, 0.0
      %v910 = vsel %vm878, %v237, 0.0
      %v911 = vsel %vm879, %v238, 0.0
      %v912 = vsel %vm880, %v239, 0.0
      %v913 = vsel %vm881, %v240, 0.0
      %v914 = vsel %vm882, %v241, 0.0
      %v915 = vsel %vm883, %v242, 0.0
      %v916 = vsel %vm884, %v243, 0.0
      %v917 = vsel %vm885, %v244, 0.0
      %v918 = vsel %vm886, %v245, 0.0
      %v919 = vsel %vm887, %v246, 0.0
      %vm952 = vcmask 1040384
      %v953 = vrot.slane %v760, 7
      %v954 = vrot.slane %v761, 7
      %v955 = vsel %vm952, %v953, %v954
      %v956 = vrot.slane %v762, 7
      %v957 = vsel %vm952, %v954, %v956
      %v958 = vrot.slane %v763, 7
      %v959 = vsel %vm952, %v956, %v958
      %v960 = vrot.slane %v764, 7
      %v961 = vsel %vm952, %v958, %v960
      %v962 = vrot.slane %v765, 7
      %v963 = vsel %vm952, %v960, %v962
      %v964 = vrot.slane %v766, 7
      %v965 = vsel %vm952, %v962, %v964
      %v966 = vrot.slane %v767, 7
      %v967 = vsel %vm952, %v964, %v966
      %v968 = vrot.slane %v768, 7
      %v969 = vsel %vm952, %v966, %v968
      %v970 = vrot.slane %v769, 7
      %v971 = vsel %vm952, %v968, %v970
      %v972 = vrot.slane %v770, 7
      %v973 = vsel %vm952, %v970, %v972
      %v974 = vrot.slane %v771, 7
      %v975 = vsel %vm952, %v972, %v974
      %v976 = vrot.slane %v772, 7
      %v977 = vsel %vm952, %v974, %v976
      %v978 = vrot.slane %v773, 7
      %v979 = vsel %vm952, %v976, %v978
      %v980 = vrot.slane %v774, 7
      %v981 = vsel %vm952, %v978, %v980
      %v982 = vrot.slane %v775, 7
      %v983 = vsel %vm952, %v980, %v982
      %v984 = vrot.slane %v776, 7
      %v985 = vsel %vm952, %v982, %v984
      %v986 = vrot.slane %v777, 7
      %v987 = vsel %vm952, %v984, %v986
      %v988 = vrot.slane %v778, 7
      %v989 = vsel %vm952, %v986, %v988
      %v990 = vrot.slane %v779, 7
      %v991 = vsel %vm952, %v988, %v990
      %v992 = vrot.slane %v780, 7
      %v993 = vsel %vm952, %v990, %v992
      %v994 = vrot.slane %v781, 7
      %v995 = vsel %vm952, %v992, %v994
      %v996 = vrot.slane %v782, 7
      %v997 = vsel %vm952, %v994, %v996
      %v998 = vrot.slane %v783, 7
      %v999 = vsel %vm952, %v996, %v998
      %v1000 = vrot.slane %v784, 7
      %v1001 = vsel %vm952, %v998, %v1000
      %v1002 = vrot.slane %v785, 7
      %v1003 = vsel %vm952, %v1000, %v1002
      %v1004 = vrot.slane %v786, 7
      %v1005 = vsel %vm952, %v1002, %v1004
      %v1006 = vrot.slane %v787, 7
      %v1007 = vsel %vm952, %v1004, %v1006
      %v1008 = vrot.slane %v788, 7
      %v1009 = vsel %vm952, %v1006, %v1008
      %v1010 = vrot.slane %v789, 7
      %v1011 = vsel %vm952, %v1008, %v1010
      %v1012 = vrot.slane %v790, 7
      %v1013 = vsel %vm952, %v1010, %v1012
      %v1014 = vrot.slane %v791, 7
      %v1015 = vsel %vm952, %v1012, %v1014
      %v1049 = vsel %vm952, 0.0, %v953
      %v1050 = vsel %vm952, %v1014, 0.0
      %v1083 = vrot.slane %v215, 7
      %v1084 = vrot.slane %v216, 7
      %v1085 = vsel %vm952, %v1083, %v1084
      %v1086 = vrot.slane %v217, 7
      %v1087 = vsel %vm952, %v1084, %v1086
      %v1088 = vrot.slane %v218, 7
      %v1089 = vsel %vm952, %v1086, %v1088
      %v1090 = vrot.slane %v219, 7
      %v1091 = vsel %vm952, %v1088, %v1090
      %v1092 = vrot.slane %v220, 7
      %v1093 = vsel %vm952, %v1090, %v1092
      %v1094 = vrot.slane %v221, 7
      %v1095 = vsel %vm952, %v1092, %v1094
      %v1096 = vrot.slane %v222, 7
      %v1097 = vsel %vm952, %v1094, %v1096
      %v1098 = vrot.slane %v223, 7
      %v1099 = vsel %vm952, %v1096, %v1098
      %v1100 = vrot.slane %v224, 7
      %v1101 = vsel %vm952, %v1098, %v1100
      %v1102 = vrot.slane %v225, 7
      %v1103 = vsel %vm952, %v1100, %v1102
      %v1104 = vrot.slane %v226, 7
      %v1105 = vsel %vm952, %v1102, %v1104
      %v1106 = vrot.slane %v227, 7
      %v1107 = vsel %vm952, %v1104, %v1106
      %v1108 = vrot.slane %v228, 7
      %v1109 = vsel %vm952, %v1106, %v1108
      %v1110 = vrot.slane %v229, 7
      %v1111 = vsel %vm952, %v1108, %v1110
      %v1112 = vrot.slane %v230, 7
      %v1113 = vsel %vm952, %v1110, %v1112
      %v1114 = vrot.slane %v231, 7
      %v1115 = vsel %vm952, %v1112, %v1114
      %v1116 = vrot.slane %v232, 7
      %v1117 = vsel %vm952, %v1114, %v1116
      %v1118 = vrot.slane %v233, 7
      %v1119 = vsel %vm952, %v1116, %v1118
      %v1120 = vrot.slane %v234, 7
      %v1121 = vsel %vm952, %v1118, %v1120
      %v1122 = vrot.slane %v235, 7
      %v1123 = vsel %vm952, %v1120, %v1122
      %v1124 = vrot.slane %v236, 7
      %v1125 = vsel %vm952, %v1122, %v1124
      %v1126 = vrot.slane %v237, 7
      %v1127 = vsel %vm952, %v1124, %v1126
      %v1128 = vrot.slane %v238, 7
      %v1129 = vsel %vm952, %v1126, %v1128
      %v1130 = vrot.slane %v239, 7
      %v1131 = vsel %vm952, %v1128, %v1130
      %v1132 = vrot.slane %v240, 7
      %v1133 = vsel %vm952, %v1130, %v1132
      %v1134 = vrot.slane %v241, 7
      %v1135 = vsel %vm952, %v1132, %v1134
      %v1136 = vrot.slane %v242, 7
      %v1137 = vsel %vm952, %v1134, %v1136
      %v1138 = vrot.slane %v243, 7
      %v1139 = vsel %vm952, %v1136, %v1138
      %v1140 = vrot.slane %v244, 7
      %v1141 = vsel %vm952, %v1138, %v1140
      %v1142 = vrot.slane %v245, 7
      %v1143 = vsel %vm952, %v1140, %v1142
      %v1144 = vrot.slane %v246, 7
      %v1145 = vsel %vm952, %v1142, %v1144
      %v1148 = vsel %vm952, 0.0, %v1083
      %v1149 = vsel %vm952, %v1144, 0.0
      %v1182 = vrot.slane %v888, 7
      %v1183 = vrot.slane %v889, 7
      %v1184 = vsel %vm952, %v1182, %v1183
      %v1185 = vrot.slane %v890, 7
      %v1186 = vsel %vm952, %v1183, %v1185
      %v1187 = vrot.slane %v891, 7
      %v1188 = vsel %vm952, %v1185, %v1187
      %v1189 = vrot.slane %v892, 7
      %v1190 = vsel %vm952, %v1187, %v1189
      %v1191 = vrot.slane %v893, 7
      %v1192 = vsel %vm952, %v1189, %v1191
      %v1193 = vrot.slane %v894, 7
      %v1194 = vsel %vm952, %v1191, %v1193
      %v1195 = vrot.slane %v895, 7
      %v1196 = vsel %vm952, %v1193, %v1195
      %v1197 = vrot.slane %v896, 7
      %v1198 = vsel %vm952, %v1195, %v1197
      %v1199 = vrot.slane %v897, 7
      %v1200 = vsel %vm952, %v1197, %v1199
      %v1201 = vrot.slane %v898, 7
      %v1202 = vsel %vm952, %v1199, %v1201
      %v1203 = vrot.slane %v899, 7
      %v1204 = vsel %vm952, %v1201, %v1203
      %v1205 = vrot.slane %v900, 7
      %v1206 = vsel %vm952, %v1203, %v1205
      %v1207 = vrot.slane %v901, 7
      %v1208 = vsel %vm952, %v1205, %v1207
      %v1209 = vrot.slane %v902, 7
      %v1210 = vsel %vm952, %v1207, %v1209
      %v1211 = vrot.slane %v903, 7
      %v1212 = vsel %vm952, %v1209, %v1211
      %v1213 = vrot.slane %v904, 7
      %v1214 = vsel %vm952, %v1211, %v1213
      %v1215 = vrot.slane %v905, 7
      %v1216 = vsel %vm952, %v1213, %v1215
      %v1217 = vrot.slane %v906, 7
      %v1218 = vsel %vm952, %v1215, %v1217
      %v1219 = vrot.slane %v907, 7
      %v1220 = vsel %vm952, %v1217, %v1219
      %v1221 = vrot.slane %v908, 7
      %v1222 = vsel %vm952, %v1219, %v1221
      %v1223 = vrot.slane %v909, 7
      %v1224 = vsel %vm952, %v1221, %v1223
      %v1225 = vrot.slane %v910, 7
      %v1226 = vsel %vm952, %v1223, %v1225
      %v1227 = vrot.slane %v911, 7
      %v1228 = vsel %vm952, %v1225, %v1227
      %v1229 = vrot.slane %v912, 7
      %v1230 = vsel %vm952, %v1227, %v1229
      %v1231 = vrot.slane %v913, 7
      %v1232 = vsel %vm952, %v1229, %v1231
      %v1233 = vrot.slane %v914, 7
      %v1234 = vsel %vm952, %v1231, %v1233
      %v1235 = vrot.slane %v915, 7
      %v1236 = vsel %vm952, %v1233, %v1235
      %v1237 = vrot.slane %v916, 7
      %v1238 = vsel %vm952, %v1235, %v1237
      %v1239 = vrot.slane %v917, 7
      %v1240 = vsel %vm952, %v1237, %v1239
      %v1241 = vrot.slane %v918, 7
      %v1242 = vsel %vm952, %v1239, %v1241
      %v1243 = vrot.slane %v919, 7
      %v1244 = vsel %vm952, %v1241, %v1243
      %v1247 = vsel %vm952, 0.0, %v1182
      %v1248 = vsel %vm952, %v1243, 0.0
      %v1249 = vld [vmem:[%s1] sm:$0xff]
      %v1250 = vld [vmem:[%s1 + $0x8] sm:$0xff]
      %v1251 = vld [vmem:[%s1 + $0x10] sm:$0xff]
      %v1252 = vld [vmem:[%s1 + $0x18] sm:$0xff]
      %v1253 = vld [vmem:[%s1 + $0x20] sm:$0xff]
      %v1254 = vld [vmem:[%s1 + $0x28] sm:$0xff]
      %v1255 = vld [vmem:[%s1 + $0x30] sm:$0xff]
      %v1256 = vld [vmem:[%s1 + $0x38] sm:$0xff]
      %v1257 = vld [vmem:[%s1 + $0x40] sm:$0xff]
      %v1258 = vld [vmem:[%s1 + $0x48] sm:$0xff]
      %v1259 = vld [vmem:[%s1 + $0x50] sm:$0xff]
      %v1260 = vld [vmem:[%s1 + $0x58] sm:$0xff]
      %v1261 = vld [vmem:[%s1 + $0x60] sm:$0xff]
      %v1262 = vld [vmem:[%s1 + $0x68] sm:$0xff]
      %v1263 = vld [vmem:[%s1 + $0x70] sm:$0xff]
      %v1264 = vld [vmem:[%s1 + $0x78] sm:$0xff]
      %s1265 = scalar_lea.vmem %s1, 128
      %v1266 = vld [vmem:[%s1265] sm:$0xff]
      %v1267 = vld [vmem:[%s1265 + $0x8] sm:$0xff]
      %v1268 = vld [vmem:[%s1265 + $0x10] sm:$0xff]
      %v1269 = vld [vmem:[%s1265 + $0x18] sm:$0xff]
      %v1270 = vld [vmem:[%s1265 + $0x20] sm:$0xff]
      %v1271 = vld [vmem:[%s1265 + $0x28] sm:$0xff]
      %v1272 = vld [vmem:[%s1265 + $0x30] sm:$0xff]
      %v1273 = vld [vmem:[%s1265 + $0x38] sm:$0xff]
      %v1274 = vld [vmem:[%s1265 + $0x40] sm:$0xff]
      %v1275 = vld [vmem:[%s1265 + $0x48] sm:$0xff]
      %v1276 = vld [vmem:[%s1265 + $0x50] sm:$0xff]
      %v1277 = vld [vmem:[%s1265 + $0x58] sm:$0xff]
      %v1278 = vld [vmem:[%s1265 + $0x60] sm:$0xff]
      %v1279 = vld [vmem:[%s1265 + $0x68] sm:$0xff]
      %v1280 = vld [vmem:[%s1265 + $0x70] sm:$0xff]
      %v1281 = vld [vmem:[%s1265 + $0x78] sm:$0xff]
      %vm1284 = vcmask 1046528
      %v1285 = vrot.slane 0.0, 1
      %v1286 = vsel %vm1284, %v1285, %v1285
      %v1287 = vrot.slane %v1148, 1
      %v1288 = vsel %vm1284, %v1285, %v1287
      %v1289 = vrot.slane %v1085, 1
      %v1290 = vsel %vm1284, %v1287, %v1289
      %v1291 = vrot.slane %v1087, 1
      %v1292 = vsel %vm1284, %v1289, %v1291
      %v1293 = vrot.slane %v1089, 1
      %v1294 = vsel %vm1284, %v1291, %v1293
      %v1295 = vrot.slane %v1091, 1
      %v1296 = vsel %vm1284, %v1293, %v1295
      %v1297 = vrot.slane %v1093, 1
      %v1298 = vsel %vm1284, %v1295, %v1297
      %v1299 = vrot.slane %v1095, 1
      %v1300 = vsel %vm1284, %v1297, %v1299
      %v1301 = vrot.slane %v1097, 1
      %v1302 = vsel %vm1284, %v1299, %v1301
      %v1303 = vrot.slane %v1099, 1
      %v1304 = vsel %vm1284, %v1301, %v1303
      %v1305 = vrot.slane %v1101, 1
      %v1306 = vsel %vm1284, %v1303, %v1305
      %v1307 = vrot.slane %v1103, 1
      %v1308 = vsel %vm1284, %v1305, %v1307
      %v1309 = vrot.slane %v1105, 1
      %v1310 = vsel %vm1284, %v1307, %v1309
      %v1311 = vrot.slane %v1107, 1
      %v1312 = vsel %vm1284, %v1309, %v1311
      %v1313 = vrot.slane %v1109, 1
      %v1314 = vsel %vm1284, %v1311, %v1313
      %v1315 = vrot.slane %v1111, 1
      %v1316 = vsel %vm1284, %v1313, %v1315
      %v1317 = vrot.slane %v1113, 1
      %v1318 = vsel %vm1284, %v1315, %v1317
      %v1319 = vrot.slane %v1115, 1
      %v1320 = vsel %vm1284, %v1317, %v1319
      %v1321 = vrot.slane %v1117, 1
      %v1322 = vsel %vm1284, %v1319, %v1321
      %v1323 = vrot.slane %v1119, 1
      %v1324 = vsel %vm1284, %v1321, %v1323
      %v1325 = vrot.slane %v1121, 1
      %v1326 = vsel %vm1284, %v1323, %v1325
      %v1327 = vrot.slane %v1123, 1
      %v1328 = vsel %vm1284, %v1325, %v1327
      %v1329 = vrot.slane %v1125, 1
      %v1330 = vsel %vm1284, %v1327, %v1329
      %v1331 = vrot.slane %v1127, 1
      %v1332 = vsel %vm1284, %v1329, %v1331
      %v1333 = vrot.slane %v1129, 1
      %v1334 = vsel %vm1284, %v1331, %v1333
      %v1335 = vrot.slane %v1131, 1
      %v1336 = vsel %vm1284, %v1333, %v1335
      %v1337 = vrot.slane %v1133, 1
      %v1338 = vsel %vm1284, %v1335, %v1337
      %v1339 = vrot.slane %v1135, 1
      %v1340 = vsel %vm1284, %v1337, %v1339
      %v1341 = vrot.slane %v1137, 1
      %v1342 = vsel %vm1284, %v1339, %v1341
      %v1343 = vrot.slane %v1139, 1
      %v1344 = vsel %vm1284, %v1341, %v1343
      %v1345 = vrot.slane %v1141, 1
      %v1346 = vsel %vm1284, %v1343, %v1345
      %v1347 = vrot.slane %v1143, 1
      %v1348 = vsel %vm1284, %v1345, %v1347
      %1381 = vmatprep.subr.mxu0 0.0
      %1382 = vmatpush1.msra.mxu0 %v1281
      %1383 = vmatprep.subr.mxu0 0.0
      %1384 = vmatpush1.msra.mxu0 %v1280
      %1385 = vmatprep.subr.mxu0 0.0
      %1386 = vmatpush1.msra.mxu0 %v1279
      %1387 = vmatprep.subr.mxu0 0.0
      %1388 = vmatpush1.msra.mxu0 %v1278
      %1389 = vmatprep.subr.mxu0 0.0
      %1390 = vmatpush1.msra.mxu0 %v1277
      %1391 = vmatprep.subr.mxu0 0.0
      %1392 = vmatpush1.msra.mxu0 %v1276
      %1393 = vmatprep.subr.mxu0 0.0
      %1394 = vmatpush1.msra.mxu0 %v1275
      %1395 = vmatprep.subr.mxu0 0.0
      %1396 = vmatpush1.msra.mxu0 %v1274
      %1397 = vmatprep.subr.mxu0 0.0
      %1398 = vmatpush1.msra.mxu0 %v1273
      %1399 = vmatprep.subr.mxu0 0.0
      %1400 = vmatpush1.msra.mxu0 %v1272
      %1401 = vmatprep.subr.mxu0 0.0
      %1402 = vmatpush1.msra.mxu0 %v1271
      %1403 = vmatprep.subr.mxu0 0.0
      %1404 = vmatpush1.msra.mxu0 %v1270
      %1405 = vmatprep.subr.mxu0 0.0
      %1406 = vmatpush1.msra.mxu0 %v1269
      %1407 = vmatprep.subr.mxu0 0.0
      %1408 = vmatpush1.msra.mxu0 %v1268
      %1409 = vmatprep.subr.mxu0 0.0
      %1410 = vmatpush1.msra.mxu0 %v1267
      %1411 = vmatprep.subr.mxu0 0.0
      %1412 = vmatpush1.msra.mxu0 %v1266
      %1413 = vmatprep.subr.mxu0 0.0
      %1414 = vmatpush2.msra.mxu0 0.0
      %1415 = vmatprep.subr.mxu0 0.0
      %1416 = vmatpush2.msra.mxu0 0.0
      %1417 = vmatprep.subr.mxu0 0.0
      %1418 = vmatpush2.msra.mxu0 0.0
      %1419 = vmatprep.subr.mxu0 0.0
      %1420 = vmatpush2.msra.mxu0 0.0
      %1421 = vmatprep.subr.mxu0 0.0
      %1422 = vmatpush2.msra.mxu0 0.0
      %1423 = vmatprep.subr.mxu0 0.0
      %1424 = vmatpush2.msra.mxu0 0.0
      %1425 = vmatprep.subr.mxu0 0.0
      %1426 = vmatpush2.msra.mxu0 0.0
      %1427 = vmatprep.subr.mxu0 0.0
      %1428 = vmatpush2.msra.mxu0 0.0
      %1429 = vmatprep.subr.mxu0 0.0
      %1430 = vmatpush2.msra.mxu0 0.0
      %1431 = vmatprep.subr.mxu0 0.0
      %1432 = vmatpush2.msra.mxu0 0.0
      %1433 = vmatprep.subr.mxu0 0.0
      %1434 = vmatpush2.msra.mxu0 0.0
      %1435 = vmatprep.subr.mxu0 0.0
      %1436 = vmatpush2.msra.mxu0 0.0
      %1437 = vmatprep.subr.mxu0 0.0
      %1438 = vmatpush2.msra.mxu0 0.0
      %1439 = vmatprep.subr.mxu0 0.0
      %1440 = vmatpush2.msra.mxu0 0.0
      %1441 = vmatprep.subr.mxu0 0.0
      %1442 = vmatpush2.msra.mxu0 0.0
      %1443 = vmatprep.subr.mxu0 0.0
      %1444 = vmatpush2.msra.mxu0 0.0
      %1445 = vmatprep.mubr.f32.mxu0 0.0
      %1446 = vmatmul.mubr.f32.gmra.mxu0 %v1286
      %v1447 = vpop.f32.mrf.mxu0
      %v1448 = vadd.f32 0.0, %v1447
      %v1449 = vpop.f32.mrf.mxu0
      %1450 = vmatprep.mubr.f32.mxu0 0.0
      %1451 = vmatmul.mubr.f32.gmra.mxu0 %v1288
      %v1452 = vpop.f32.mrf.mxu0
      %v1453 = vadd.f32 0.0, %v1452
      %v1454 = vpop.f32.mrf.mxu0
      %1455 = vmatprep.mubr.f32.mxu0 0.0
      %1456 = vmatmul.mubr.f32.gmra.mxu0 %v1290
      %v1457 = vpop.f32.mrf.mxu0
      %v1458 = vadd.f32 0.0, %v1457
      %v1459 = vpop.f32.mrf.mxu0
      %1460 = vmatprep.mubr.f32.mxu0 0.0
      %1461 = vmatmul.mubr.f32.gmra.mxu0 %v1292
      %v1462 = vpop.f32.mrf.mxu0
      %v1463 = vadd.f32 0.0, %v1462
      %v1464 = vpop.f32.mrf.mxu0
      %1465 = vmatprep.mubr.f32.mxu0 0.0
      %1466 = vmatmul.mubr.f32.gmra.mxu0 %v1294
      %v1467 = vpop.f32.mrf.mxu0
      %v1468 = vadd.f32 0.0, %v1467
      %v1469 = vpop.f32.mrf.mxu0
      %1470 = vmatprep.mubr.f32.mxu0 0.0
      %1471 = vmatmul.mubr.f32.gmra.mxu0 %v1296
      %v1472 = vpop.f32.mrf.mxu0
      %v1473 = vadd.f32 0.0, %v1472
      %v1474 = vpop.f32.mrf.mxu0
      %1475 = vmatprep.mubr.f32.mxu0 0.0
      %1476 = vmatmul.mubr.f32.gmra.mxu0 %v1298
      %v1477 = vpop.f32.mrf.mxu0
      %v1478 = vadd.f32 0.0, %v1477
      %v1479 = vpop.f32.mrf.mxu0
      %1480 = vmatprep.mubr.f32.mxu0 0.0
      %1481 = vmatmul.mubr.f32.gmra.mxu0 %v1300
      %v1482 = vpop.f32.mrf.mxu0
      %v1483 = vadd.f32 0.0, %v1482
      %v1484 = vpop.f32.mrf.mxu0
      %1485 = vmatprep.mubr.f32.mxu0 0.0
      %1486 = vmatmul.mubr.f32.gmra.mxu0 %v1302
      %v1487 = vpop.f32.mrf.mxu0
      %v1488 = vadd.f32 0.0, %v1487
      %v1489 = vpop.f32.mrf.mxu0
      %1490 = vmatprep.mubr.f32.mxu0 0.0
      %1491 = vmatmul.mubr.f32.gmra.mxu0 %v1304
      %v1492 = vpop.f32.mrf.mxu0
      %v1493 = vadd.f32 0.0, %v1492
      %v1494 = vpop.f32.mrf.mxu0
      %1495 = vmatprep.mubr.f32.mxu0 0.0
      %1496 = vmatmul.mubr.f32.gmra.mxu0 %v1306
      %v1497 = vpop.f32.mrf.mxu0
      %v1498 = vadd.f32 0.0, %v1497
      %v1499 = vpop.f32.mrf.mxu0
      %1500 = vmatprep.mubr.f32.mxu0 0.0
      %1501 = vmatmul.mubr.f32.gmra.mxu0 %v1308
      %v1502 = vpop.f32.mrf.mxu0
      %v1503 = vadd.f32 0.0, %v1502
      %v1504 = vpop.f32.mrf.mxu0
      %1505 = vmatprep.mubr.f32.mxu0 0.0
      %1506 = vmatmul.mubr.f32.gmra.mxu0 %v1310
      %v1507 = vpop.f32.mrf.mxu0
      %v1508 = vadd.f32 0.0, %v1507
      %v1509 = vpop.f32.mrf.mxu0
      %1510 = vmatprep.mubr.f32.mxu0 0.0
      %1511 = vmatmul.mubr.f32.gmra.mxu0 %v1312
      %v1512 = vpop.f32.mrf.mxu0
      %v1513 = vadd.f32 0.0, %v1512
      %v1514 = vpop.f32.mrf.mxu0
      %1515 = vmatprep.mubr.f32.mxu0 0.0
      %1516 = vmatmul.mubr.f32.gmra.mxu0 %v1314
      %v1517 = vpop.f32.mrf.mxu0
      %v1518 = vadd.f32 0.0, %v1517
      %v1519 = vpop.f32.mrf.mxu0
      %1520 = vmatprep.mubr.f32.mxu0 0.0
      %1521 = vmatmul.mubr.f32.gmra.mxu0 %v1316
      %v1522 = vpop.f32.mrf.mxu0
      %v1523 = vadd.f32 0.0, %v1522
      %v1524 = vpop.f32.mrf.mxu0
      %1525 = vmatprep.mubr.f32.mxu0 0.0
      %1526 = vmatmul.mubr.f32.gmra.mxu0 %v1318
      %v1527 = vpop.f32.mrf.mxu0
      %v1528 = vadd.f32 0.0, %v1527
      %v1529 = vpop.f32.mrf.mxu0
      %1530 = vmatprep.mubr.f32.mxu0 0.0
      %1531 = vmatmul.mubr.f32.gmra.mxu0 %v1320
      %v1532 = vpop.f32.mrf.mxu0
      %v1533 = vadd.f32 0.0, %v1532
      %v1534 = vpop.f32.mrf.mxu0
      %1535 = vmatprep.mubr.f32.mxu0 0.0
      %1536 = vmatmul.mubr.f32.gmra.mxu0 %v1322
      %v1537 = vpop.f32.mrf.mxu0
      %v1538 = vadd.f32 0.0, %v1537
      %v1539 = vpop.f32.mrf.mxu0
      %1540 = vmatprep.mubr.f32.mxu0 0.0
      %1541 = vmatmul.mubr.f32.gmra.mxu0 %v1324
      %v1542 = vpop.f32.mrf.mxu0
      %v1543 = vadd.f32 0.0, %v1542
      %v1544 = vpop.f32.mrf.mxu0
      %1545 = vmatprep.mubr.f32.mxu0 0.0
      %1546 = vmatmul.mubr.f32.gmra.mxu0 %v1326
      %v1547 = vpop.f32.mrf.mxu0
      %v1548 = vadd.f32 0.0, %v1547
      %v1549 = vpop.f32.mrf.mxu0
      %1550 = vmatprep.mubr.f32.mxu0 0.0
      %1551 = vmatmul.mubr.f32.gmra.mxu0 %v1328
      %v1552 = vpop.f32.mrf.mxu0
      %v1553 = vadd.f32 0.0, %v1552
      %v1554 = vpop.f32.mrf.mxu0
      %1555 = vmatprep.mubr.f32.mxu0 0.0
      %1556 = vmatmul.mubr.f32.gmra.mxu0 %v1330
      %v1557 = vpop.f32.mrf.mxu0
      %v1558 = vadd.f32 0.0, %v1557
      %v1559 = vpop.f32.mrf.mxu0
      %1560 = vmatprep.mubr.f32.mxu0 0.0
      %1561 = vmatmul.mubr.f32.gmra.mxu0 %v1332
      %v1562 = vpop.f32.mrf.mxu0
      %v1563 = vadd.f32 0.0, %v1562
      %v1564 = vpop.f32.mrf.mxu0
      %1565 = vmatprep.mubr.f32.mxu0 0.0
      %1566 = vmatmul.mubr.f32.gmra.mxu0 %v1334
      %v1567 = vpop.f32.mrf.mxu0
      %v1568 = vadd.f32 0.0, %v1567
      %v1569 = vpop.f32.mrf.mxu0
      %1570 = vmatprep.mubr.f32.mxu0 0.0
      %1571 = vmatmul.mubr.f32.gmra.mxu0 %v1336
      %v1572 = vpop.f32.mrf.mxu0
      %v1573 = vadd.f32 0.0, %v1572
      %v1574 = vpop.f32.mrf.mxu0
      %1575 = vmatprep.mubr.f32.mxu0 0.0
      %1576 = vmatmul.mubr.f32.gmra.mxu0 %v1338
      %v1577 = vpop.f32.mrf.mxu0
      %v1578 = vadd.f32 0.0, %v1577
      %v1579 = vpop.f32.mrf.mxu0
      %1580 = vmatprep.mubr.f32.mxu0 0.0
      %1581 = vmatmul.mubr.f32.gmra.mxu0 %v1340
      %v1582 = vpop.f32.mrf.mxu0
      %v1583 = vadd.f32 0.0, %v1582
      %v1584 = vpop.f32.mrf.mxu0
      %1585 = vmatprep.mubr.f32.mxu0 0.0
      %1586 = vmatmul.mubr.f32.gmra.mxu0 %v1342
      %v1587 = vpop.f32.mrf.mxu0
      %v1588 = vadd.f32 0.0, %v1587
      %v1589 = vpop.f32.mrf.mxu0
      %1590 = vmatprep.mubr.f32.mxu0 0.0
      %1591 = vmatmul.mubr.f32.gmra.mxu0 %v1344
      %v1592 = vpop.f32.mrf.mxu0
      %v1593 = vadd.f32 0.0, %v1592
      %v1594 = vpop.f32.mrf.mxu0
      %1595 = vmatprep.mubr.f32.mxu0 0.0
      %1596 = vmatmul.mubr.f32.gmra.mxu0 %v1346
      %v1597 = vpop.f32.mrf.mxu0
      %v1598 = vadd.f32 0.0, %v1597
      %v1599 = vpop.f32.mrf.mxu0
      %1600 = vmatprep.mubr.f32.mxu0 0.0
      %1601 = vmatmul.mubr.f32.gmra.mxu0 %v1348
      %v1602 = vpop.f32.mrf.mxu0
      %v1603 = vadd.f32 0.0, %v1602
      %v1604 = vpop.f32.mrf.mxu0
      %1605 = vdwg.mxu0
      %1606 = vmatprep.subr.mxu0 0.0
      %1607 = vmatpush1.msra.mxu0 %v1264
      %1608 = vmatprep.subr.mxu0 0.0
      %1609 = vmatpush1.msra.mxu0 %v1263
      %1610 = vmatprep.subr.mxu0 0.0
      %1611 = vmatpush1.msra.mxu0 %v1262
      %1612 = vmatprep.subr.mxu0 0.0
      %1613 = vmatpush1.msra.mxu0 %v1261
      %1614 = vmatprep.subr.mxu0 0.0
      %1615 = vmatpush1.msra.mxu0 %v1260
      %1616 = vmatprep.subr.mxu0 0.0
      %1617 = vmatpush1.msra.mxu0 %v1259
      %1618 = vmatprep.subr.mxu0 0.0
      %1619 = vmatpush1.msra.mxu0 %v1258
      %1620 = vmatprep.subr.mxu0 0.0
      %1621 = vmatpush1.msra.mxu0 %v1257
      %1622 = vmatprep.subr.mxu0 0.0
      %1623 = vmatpush1.msra.mxu0 %v1256
      %1624 = vmatprep.subr.mxu0 0.0
      %1625 = vmatpush1.msra.mxu0 %v1255
      %1626 = vmatprep.subr.mxu0 0.0
      %1627 = vmatpush1.msra.mxu0 %v1254
      %1628 = vmatprep.subr.mxu0 0.0
      %1629 = vmatpush1.msra.mxu0 %v1253
      %1630 = vmatprep.subr.mxu0 0.0
      %1631 = vmatpush1.msra.mxu0 %v1252
      %1632 = vmatprep.subr.mxu0 0.0
      %1633 = vmatpush1.msra.mxu0 %v1251
      %1634 = vmatprep.subr.mxu0 0.0
      %1635 = vmatpush1.msra.mxu0 %v1250
      %1636 = vmatprep.subr.mxu0 0.0
      %1637 = vmatpush1.msra.mxu0 %v1249
      %1638 = vmatprep.subr.mxu0 0.0
      %1639 = vmatpush2.msra.mxu0 0.0
      %1640 = vmatprep.subr.mxu0 0.0
      %1641 = vmatpush2.msra.mxu0 0.0
      %1642 = vmatprep.subr.mxu0 0.0
      %1643 = vmatpush2.msra.mxu0 0.0
      %1644 = vmatprep.subr.mxu0 0.0
      %1645 = vmatpush2.msra.mxu0 0.0
      %1646 = vmatprep.subr.mxu0 0.0
      %1647 = vmatpush2.msra.mxu0 0.0
      %1648 = vmatprep.subr.mxu0 0.0
      %1649 = vmatpush2.msra.mxu0 0.0
      %1650 = vmatprep.subr.mxu0 0.0
      %1651 = vmatpush2.msra.mxu0 0.0
      %1652 = vmatprep.subr.mxu0 0.0
      %1653 = vmatpush2.msra.mxu0 0.0
      %1654 = vmatprep.subr.mxu0 0.0
      %1655 = vmatpush2.msra.mxu0 0.0
      %1656 = vmatprep.subr.mxu0 0.0
      %1657 = vmatpush2.msra.mxu0 0.0
      %1658 = vmatprep.subr.mxu0 0.0
      %1659 = vmatpush2.msra.mxu0 0.0
      %1660 = vmatprep.subr.mxu0 0.0
      %1661 = vmatpush2.msra.mxu0 0.0
      %1662 = vmatprep.subr.mxu0 0.0
      %1663 = vmatpush2.msra.mxu0 0.0
      %1664 = vmatprep.subr.mxu0 0.0
      %1665 = vmatpush2.msra.mxu0 0.0
      %1666 = vmatprep.subr.mxu0 0.0
      %1667 = vmatpush2.msra.mxu0 0.0
      %1668 = vmatprep.subr.mxu0 0.0
      %1669 = vmatpush2.msra.mxu0 0.0
      %1670 = vmatprep.mubr.f32.mxu0 0.0
      %1671 = vmatmul.mubr.f32.gmra.mxu0 0.0
      %v1672 = vpop.f32.mrf.mxu0
      %v1673 = vadd.f32 %v1448, %v1672
      %v1674 = vpop.f32.mrf.mxu0
      %1675 = vmatprep.mubr.f32.mxu0 0.0
      %1676 = vmatmul.mubr.f32.gmra.mxu0 0.0
      %v1677 = vpop.f32.mrf.mxu0
      %v1678 = vadd.f32 %v1453, %v1677
      %v1679 = vpop.f32.mrf.mxu0
      %1680 = vmatprep.mubr.f32.mxu0 0.0
      %1681 = vmatmul.mubr.f32.gmra.mxu0 %v1049
      %v1682 = vpop.f32.mrf.mxu0
      %v1683 = vadd.f32 %v1458, %v1682
      %v1684 = vpop.f32.mrf.mxu0
      %1685 = vmatprep.mubr.f32.mxu0 0.0
      %1686 = vmatmul.mubr.f32.gmra.mxu0 %v955
      %v1687 = vpop.f32.mrf.mxu0
      %v1688 = vadd.f32 %v1463, %v1687
      %v1689 = vpop.f32.mrf.mxu0
      %1690 = vmatprep.mubr.f32.mxu0 0.0
      %1691 = vmatmul.mubr.f32.gmra.mxu0 %v957
      %v1692 = vpop.f32.mrf.mxu0
      %v1693 = vadd.f32 %v1468, %v1692
      %v1694 = vpop.f32.mrf.mxu0
      %1695 = vmatprep.mubr.f32.mxu0 0.0
      %1696 = vmatmul.mubr.f32.gmra.mxu0 %v959
      %v1697 = vpop.f32.mrf.mxu0
      %v1698 = vadd.f32 %v1473, %v1697
      %v1699 = vpop.f32.mrf.mxu0
      %1700 = vmatprep.mubr.f32.mxu0 0.0
      %1701 = vmatmul.mubr.f32.gmra.mxu0 %v961
      %v1702 = vpop.f32.mrf.mxu0
      %v1703 = vadd.f32 %v1478, %v1702
      %v1704 = vpop.f32.mrf.mxu0
      %1705 = vmatprep.mubr.f32.mxu0 0.0
      %1706 = vmatmul.mubr.f32.gmra.mxu0 %v963
      %v1707 = vpop.f32.mrf.mxu0
      %v1708 = vadd.f32 %v1483, %v1707
      %v1709 = vpop.f32.mrf.mxu0
      %1710 = vmatprep.mubr.f32.mxu0 0.0
      %1711 = vmatmul.mubr.f32.gmra.mxu0 %v965
      %v1712 = vpop.f32.mrf.mxu0
      %v1713 = vadd.f32 %v1488, %v1712
      %v1714 = vpop.f32.mrf.mxu0
      %1715 = vmatprep.mubr.f32.mxu0 0.0
      %1716 = vmatmul.mubr.f32.gmra.mxu0 %v967
      %v1717 = vpop.f32.mrf.mxu0
      %v1718 = vadd.f32 %v1493, %v1717
      %v1719 = vpop.f32.mrf.mxu0
      %1720 = vmatprep.mubr.f32.mxu0 0.0
      %1721 = vmatmul.mubr.f32.gmra.mxu0 %v969
      %v1722 = vpop.f32.mrf.mxu0
      %v1723 = vadd.f32 %v1498, %v1722
      %v1724 = vpop.f32.mrf.mxu0
      %1725 = vmatprep.mubr.f32.mxu0 0.0
      %1726 = vmatmul.mubr.f32.gmra.mxu0 %v971
      %v1727 = vpop.f32.mrf.mxu0
      %v1728 = vadd.f32 %v1503, %v1727
      %v1729 = vpop.f32.mrf.mxu0
      %1730 = vmatprep.mubr.f32.mxu0 0.0
      %1731 = vmatmul.mubr.f32.gmra.mxu0 %v973
      %v1732 = vpop.f32.mrf.mxu0
      %v1733 = vadd.f32 %v1508, %v1732
      %v1734 = vpop.f32.mrf.mxu0
      %1735 = vmatprep.mubr.f32.mxu0 0.0
      %1736 = vmatmul.mubr.f32.gmra.mxu0 %v975
      %v1737 = vpop.f32.mrf.mxu0
      %v1738 = vadd.f32 %v1513, %v1737
      %v1739 = vpop.f32.mrf.mxu0
      %1740 = vmatprep.mubr.f32.mxu0 0.0
      %1741 = vmatmul.mubr.f32.gmra.mxu0 %v977
      %v1742 = vpop.f32.mrf.mxu0
      %v1743 = vadd.f32 %v1518, %v1742
      %v1744 = vpop.f32.mrf.mxu0
      %1745 = vmatprep.mubr.f32.mxu0 0.0
      %1746 = vmatmul.mubr.f32.gmra.mxu0 %v979
      %v1747 = vpop.f32.mrf.mxu0
      %v1748 = vadd.f32 %v1523, %v1747
      %v1749 = vpop.f32.mrf.mxu0
      %1750 = vmatprep.mubr.f32.mxu0 0.0
      %1751 = vmatmul.mubr.f32.gmra.mxu0 %v981
      %v1752 = vpop.f32.mrf.mxu0
      %v1753 = vadd.f32 %v1528, %v1752
      %v1754 = vpop.f32.mrf.mxu0
      %1755 = vmatprep.mubr.f32.mxu0 0.0
      %1756 = vmatmul.mubr.f32.gmra.mxu0 %v983
      %v1757 = vpop.f32.mrf.mxu0
      %v1758 = vadd.f32 %v1533, %v1757
      %v1759 = vpop.f32.mrf.mxu0
      %1760 = vmatprep.mubr.f32.mxu0 0.0
      %1761 = vmatmul.mubr.f32.gmra.mxu0 %v985
      %v1762 = vpop.f32.mrf.mxu0
      %v1763 = vadd.f32 %v1538, %v1762
      %v1764 = vpop.f32.mrf.mxu0
      %1765 = vmatprep.mubr.f32.mxu0 0.0
      %1766 = vmatmul.mubr.f32.gmra.mxu0 %v987
      %v1767 = vpop.f32.mrf.mxu0
      %v1768 = vadd.f32 %v1543, %v1767
      %v1769 = vpop.f32.mrf.mxu0
      %1770 = vmatprep.mubr.f32.mxu0 0.0
      %1771 = vmatmul.mubr.f32.gmra.mxu0 %v989
      %v1772 = vpop.f32.mrf.mxu0
      %v1773 = vadd.f32 %v1548, %v1772
      %v1774 = vpop.f32.mrf.mxu0
      %1775 = vmatprep.mubr.f32.mxu0 0.0
      %1776 = vmatmul.mubr.f32.gmra.mxu0 %v991
      %v1777 = vpop.f32.mrf.mxu0
      %v1778 = vadd.f32 %v1553, %v1777
      %v1779 = vpop.f32.mrf.mxu0
      %1780 = vmatprep.mubr.f32.mxu0 0.0
      %1781 = vmatmul.mubr.f32.gmra.mxu0 %v993
      %v1782 = vpop.f32.mrf.mxu0
      %v1783 = vadd.f32 %v1558, %v1782
      %v1784 = vpop.f32.mrf.mxu0
      %1785 = vmatprep.mubr.f32.mxu0 0.0
      %1786 = vmatmul.mubr.f32.gmra.mxu0 %v995
      %v1787 = vpop.f32.mrf.mxu0
      %v1788 = vadd.f32 %v1563, %v1787
      %v1789 = vpop.f32.mrf.mxu0
      %1790 = vmatprep.mubr.f32.mxu0 0.0
      %1791 = vmatmul.mubr.f32.gmra.mxu0 %v997
      %v1792 = vpop.f32.mrf.mxu0
      %v1793 = vadd.f32 %v1568, %v1792
      %v1794 = vpop.f32.mrf.mxu0
      %1795 = vmatprep.mubr.f32.mxu0 0.0
      %1796 = vmatmul.mubr.f32.gmra.mxu0 %v999
      %v1797 = vpop.f32.mrf.mxu0
      %v1798 = vadd.f32 %v1573, %v1797
      %v1799 = vpop.f32.mrf.mxu0
      %1800 = vmatprep.mubr.f32.mxu0 0.0
      %1801 = vmatmul.mubr.f32.gmra.mxu0 %v1001
      %v1802 = vpop.f32.mrf.mxu0
      %v1803 = vadd.f32 %v1578, %v1802
      %v1804 = vpop.f32.mrf.mxu0
      %1805 = vmatprep.mubr.f32.mxu0 0.0
      %1806 = vmatmul.mubr.f32.gmra.mxu0 %v1003
      %v1807 = vpop.f32.mrf.mxu0
      %v1808 = vadd.f32 %v1583, %v1807
      %v1809 = vpop.f32.mrf.mxu0
      %1810 = vmatprep.mubr.f32.mxu0 0.0
      %1811 = vmatmul.mubr.f32.gmra.mxu0 %v1005
      %v1812 = vpop.f32.mrf.mxu0
      %v1813 = vadd.f32 %v1588, %v1812
      %v1814 = vpop.f32.mrf.mxu0
      %1815 = vmatprep.mubr.f32.mxu0 0.0
      %1816 = vmatmul.mubr.f32.gmra.mxu0 %v1007
      %v1817 = vpop.f32.mrf.mxu0
      %v1818 = vadd.f32 %v1593, %v1817
      %v1819 = vpop.f32.mrf.mxu0
      %1820 = vmatprep.mubr.f32.mxu0 0.0
      %1821 = vmatmul.mubr.f32.gmra.mxu0 %v1009
      %v1822 = vpop.f32.mrf.mxu0
      %v1823 = vadd.f32 %v1598, %v1822
      %v1824 = vpop.f32.mrf.mxu0
      %1825 = vmatprep.mubr.f32.mxu0 0.0
      %1826 = vmatmul.mubr.f32.gmra.mxu0 %v1011
      %v1827 = vpop.f32.mrf.mxu0
      %v1828 = vadd.f32 %v1603, %v1827
      %v1829 = vpop.f32.mrf.mxu0
      %1830 = vdwg.mxu0
      %s1831 = scalar_lea.vmem %s1, 256
      %v1832 = vld [vmem:[%s1831] sm:$0xff]
      %v1833 = vld [vmem:[%s1831 + $0x8] sm:$0xff]
      %v1834 = vld [vmem:[%s1831 + $0x10] sm:$0xff]
      %v1835 = vld [vmem:[%s1831 + $0x18] sm:$0xff]
      %v1836 = vld [vmem:[%s1831 + $0x20] sm:$0xff]
      %v1837 = vld [vmem:[%s1831 + $0x28] sm:$0xff]
      %v1838 = vld [vmem:[%s1831 + $0x30] sm:$0xff]
      %v1839 = vld [vmem:[%s1831 + $0x38] sm:$0xff]
      %v1840 = vld [vmem:[%s1831 + $0x40] sm:$0xff]
      %v1841 = vld [vmem:[%s1831 + $0x48] sm:$0xff]
      %v1842 = vld [vmem:[%s1831 + $0x50] sm:$0xff]
      %v1843 = vld [vmem:[%s1831 + $0x58] sm:$0xff]
      %v1844 = vld [vmem:[%s1831 + $0x60] sm:$0xff]
      %v1845 = vld [vmem:[%s1831 + $0x68] sm:$0xff]
      %v1846 = vld [vmem:[%s1831 + $0x70] sm:$0xff]
      %v1847 = vld [vmem:[%s1831 + $0x78] sm:$0xff]
      %vm1849 = vcmask 1045504
      %v1850 = vrot.slane 0.0, 2
      %v1851 = vsel %vm1849, %v1850, %v1850
      %v1852 = vrot.slane %v1247, 2
      %v1853 = vsel %vm1849, %v1850, %v1852
      %v1854 = vrot.slane %v1184, 2
      %v1855 = vsel %vm1849, %v1852, %v1854
      %v1856 = vrot.slane %v1186, 2
      %v1857 = vsel %vm1849, %v1854, %v1856
      %v1858 = vrot.slane %v1188, 2
      %v1859 = vsel %vm1849, %v1856, %v1858
      %v1860 = vrot.slane %v1190, 2
      %v1861 = vsel %vm1849, %v1858, %v1860
      %v1862 = vrot.slane %v1192, 2
      %v1863 = vsel %vm1849, %v1860, %v1862
      %v1864 = vrot.slane %v1194, 2
      %v1865 = vsel %vm1849, %v1862, %v1864
      %v1866 = vrot.slane %v1196, 2
      %v1867 = vsel %vm1849, %v1864, %v1866
      %v1868 = vrot.slane %v1198, 2
      %v1869 = vsel %vm1849, %v1866, %v1868
      %v1870 = vrot.slane %v1200, 2
      %v1871 = vsel %vm1849, %v1868, %v1870
      %v1872 = vrot.slane %v1202, 2
      %v1873 = vsel %vm1849, %v1870, %v1872
      %v1874 = vrot.slane %v1204, 2
      %v1875 = vsel %vm1849, %v1872, %v1874
      %v1876 = vrot.slane %v1206, 2
      %v1877 = vsel %vm1849, %v1874, %v1876
      %v1878 = vrot.slane %v1208, 2
      %v1879 = vsel %vm1849, %v1876, %v1878
      %v1880 = vrot.slane %v1210, 2
      %v1881 = vsel %vm1849, %v1878, %v1880
      %v1882 = vrot.slane %v1212, 2
      %v1883 = vsel %vm1849, %v1880, %v1882
      %v1884 = vrot.slane %v1214, 2
      %v1885 = vsel %vm1849, %v1882, %v1884
      %v1886 = vrot.slane %v1216, 2
      %v1887 = vsel %vm1849, %v1884, %v1886
      %v1888 = vrot.slane %v1218, 2
      %v1889 = vsel %vm1849, %v1886, %v1888
      %v1890 = vrot.slane %v1220, 2
      %v1891 = vsel %vm1849, %v1888, %v1890
      %v1892 = vrot.slane %v1222, 2
      %v1893 = vsel %vm1849, %v1890, %v1892
      %v1894 = vrot.slane %v1224, 2
      %v1895 = vsel %vm1849, %v1892, %v1894
      %v1896 = vrot.slane %v1226, 2
      %v1897 = vsel %vm1849, %v1894, %v1896
      %v1898 = vrot.slane %v1228, 2
      %v1899 = vsel %vm1849, %v1896, %v1898
      %v1900 = vrot.slane %v1230, 2
      %v1901 = vsel %vm1849, %v1898, %v1900
      %v1902 = vrot.slane %v1232, 2
      %v1903 = vsel %vm1849, %v1900, %v1902
      %v1904 = vrot.slane %v1234, 2
      %v1905 = vsel %vm1849, %v1902, %v1904
      %v1906 = vrot.slane %v1236, 2
      %v1907 = vsel %vm1849, %v1904, %v1906
      %v1908 = vrot.slane %v1238, 2
      %v1909 = vsel %vm1849, %v1906, %v1908
      %v1910 = vrot.slane %v1240, 2
      %v1911 = vsel %vm1849, %v1908, %v1910
      %v1912 = vrot.slane %v1242, 2
      %v1913 = vsel %vm1849, %v1910, %v1912
      %1946 = vmatprep.subr.mxu0 0.0
      %1947 = vmatpush1.msra.mxu0 %v1847
      %1948 = vmatprep.subr.mxu0 0.0
      %1949 = vmatpush1.msra.mxu0 %v1846
      %1950 = vmatprep.subr.mxu0 0.0
      %1951 = vmatpush1.msra.mxu0 %v1845
      %1952 = vmatprep.subr.mxu0 0.0
      %1953 = vmatpush1.msra.mxu0 %v1844
      %1954 = vmatprep.subr.mxu0 0.0
      %1955 = vmatpush1.msra.mxu0 %v1843
      %1956 = vmatprep.subr.mxu0 0.0
      %1957 = vmatpush1.msra.mxu0 %v1842
      %1958 = vmatprep.subr.mxu0 0.0
      %1959 = vmatpush1.msra.mxu0 %v1841
      %1960 = vmatprep.subr.mxu0 0.0
      %1961 = vmatpush1.msra.mxu0 %v1840
      %1962 = vmatprep.subr.mxu0 0.0
      %1963 = vmatpush1.msra.mxu0 %v1839
      %1964 = vmatprep.subr.mxu0 0.0
      %1965 = vmatpush1.msra.mxu0 %v1838
      %1966 = vmatprep.subr.mxu0 0.0
      %1967 = vmatpush1.msra.mxu0 %v1837
      %1968 = vmatprep.subr.mxu0 0.0
      %1969 = vmatpush1.msra.mxu0 %v1836
      %1970 = vmatprep.subr.mxu0 0.0
      %1971 = vmatpush1.msra.mxu0 %v1835
      %1972 = vmatprep.subr.mxu0 0.0
      %1973 = vmatpush1.msra.mxu0 %v1834
      %1974 = vmatprep.subr.mxu0 0.0
      %1975 = vmatpush1.msra.mxu0 %v1833
      %1976 = vmatprep.subr.mxu0 0.0
      %1977 = vmatpush1.msra.mxu0 %v1832
      %1978 = vmatprep.subr.mxu0 0.0
      %1979 = vmatpush2.msra.mxu0 0.0
      %1980 = vmatprep.subr.mxu0 0.0
      %1981 = vmatpush2.msra.mxu0 0.0
      %1982 = vmatprep.subr.mxu0 0.0
      %1983 = vmatpush2.msra.mxu0 0.0
      %1984 = vmatprep.subr.mxu0 0.0
      %1985 = vmatpush2.msra.mxu0 0.0
      %1986 = vmatprep.subr.mxu0 0.0
      %1987 = vmatpush2.msra.mxu0 0.0
      %1988 = vmatprep.subr.mxu0 0.0
      %1989 = vmatpush2.msra.mxu0 0.0
      %1990 = vmatprep.subr.mxu0 0.0
      %1991 = vmatpush2.msra.mxu0 0.0
      %1992 = vmatprep.subr.mxu0 0.0
      %1993 = vmatpush2.msra.mxu0 0.0
      %1994 = vmatprep.subr.mxu0 0.0
      %1995 = vmatpush2.msra.mxu0 0.0
      %1996 = vmatprep.subr.mxu0 0.0
      %1997 = vmatpush2.msra.mxu0 0.0
      %1998 = vmatprep.subr.mxu0 0.0
      %1999 = vmatpush2.msra.mxu0 0.0
      %2000 = vmatprep.subr.mxu0 0.0
      %2001 = vmatpush2.msra.mxu0 0.0
      %2002 = vmatprep.subr.mxu0 0.0
      %2003 = vmatpush2.msra.mxu0 0.0
      %2004 = vmatprep.subr.mxu0 0.0
      %2005 = vmatpush2.msra.mxu0 0.0
      %2006 = vmatprep.subr.mxu0 0.0
      %2007 = vmatpush2.msra.mxu0 0.0
      %2008 = vmatprep.subr.mxu0 0.0
      %2009 = vmatpush2.msra.mxu0 0.0
      %2010 = vmatprep.mubr.f32.mxu0 0.0
      %2011 = vmatmul.mubr.f32.gmra.mxu0 %v1851
      %v2012 = vpop.f32.mrf.mxu0
      %v2013 = vadd.f32 0.0, %v2012
      %v2014 = vpop.f32.mrf.mxu0
      %2015 = vmatprep.mubr.f32.mxu0 0.0
      %2016 = vmatmul.mubr.f32.gmra.mxu0 %v1853
      %v2017 = vpop.f32.mrf.mxu0
      %v2018 = vadd.f32 0.0, %v2017
      %v2019 = vpop.f32.mrf.mxu0
      %2020 = vmatprep.mubr.f32.mxu0 0.0
      %2021 = vmatmul.mubr.f32.gmra.mxu0 %v1855
      %v2022 = vpop.f32.mrf.mxu0
      %v2023 = vadd.f32 0.0, %v2022
      %v2024 = vpop.f32.mrf.mxu0
      %2025 = vmatprep.mubr.f32.mxu0 0.0
      %2026 = vmatmul.mubr.f32.gmra.mxu0 %v1857
      %v2027 = vpop.f32.mrf.mxu0
      %v2028 = vadd.f32 0.0, %v2027
      %v2029 = vpop.f32.mrf.mxu0
      %2030 = vmatprep.mubr.f32.mxu0 0.0
      %2031 = vmatmul.mubr.f32.gmra.mxu0 %v1859
      %v2032 = vpop.f32.mrf.mxu0
      %v2033 = vadd.f32 0.0, %v2032
      %v2034 = vpop.f32.mrf.mxu0
      %2035 = vmatprep.mubr.f32.mxu0 0.0
      %2036 = vmatmul.mubr.f32.gmra.mxu0 %v1861
      %v2037 = vpop.f32.mrf.mxu0
      %v2038 = vadd.f32 0.0, %v2037
      %v2039 = vpop.f32.mrf.mxu0
      %2040 = vmatprep.mubr.f32.mxu0 0.0
      %2041 = vmatmul.mubr.f32.gmra.mxu0 %v1863
      %v2042 = vpop.f32.mrf.mxu0
      %v2043 = vadd.f32 0.0, %v2042
      %v2044 = vpop.f32.mrf.mxu0
      %2045 = vmatprep.mubr.f32.mxu0 0.0
      %2046 = vmatmul.mubr.f32.gmra.mxu0 %v1865
      %v2047 = vpop.f32.mrf.mxu0
      %v2048 = vadd.f32 0.0, %v2047
      %v2049 = vpop.f32.mrf.mxu0
      %2050 = vmatprep.mubr.f32.mxu0 0.0
      %2051 = vmatmul.mubr.f32.gmra.mxu0 %v1867
      %v2052 = vpop.f32.mrf.mxu0
      %v2053 = vadd.f32 0.0, %v2052
      %v2054 = vpop.f32.mrf.mxu0
      %2055 = vmatprep.mubr.f32.mxu0 0.0
      %2056 = vmatmul.mubr.f32.gmra.mxu0 %v1869
      %v2057 = vpop.f32.mrf.mxu0
      %v2058 = vadd.f32 0.0, %v2057
      %v2059 = vpop.f32.mrf.mxu0
      %2060 = vmatprep.mubr.f32.mxu0 0.0
      %2061 = vmatmul.mubr.f32.gmra.mxu0 %v1871
      %v2062 = vpop.f32.mrf.mxu0
      %v2063 = vadd.f32 0.0, %v2062
      %v2064 = vpop.f32.mrf.mxu0
      %2065 = vmatprep.mubr.f32.mxu0 0.0
      %2066 = vmatmul.mubr.f32.gmra.mxu0 %v1873
      %v2067 = vpop.f32.mrf.mxu0
      %v2068 = vadd.f32 0.0, %v2067
      %v2069 = vpop.f32.mrf.mxu0
      %2070 = vmatprep.mubr.f32.mxu0 0.0
      %2071 = vmatmul.mubr.f32.gmra.mxu0 %v1875
      %v2072 = vpop.f32.mrf.mxu0
      %v2073 = vadd.f32 0.0, %v2072
      %v2074 = vpop.f32.mrf.mxu0
      %2075 = vmatprep.mubr.f32.mxu0 0.0
      %2076 = vmatmul.mubr.f32.gmra.mxu0 %v1877
      %v2077 = vpop.f32.mrf.mxu0
      %v2078 = vadd.f32 0.0, %v2077
      %v2079 = vpop.f32.mrf.mxu0
      %2080 = vmatprep.mubr.f32.mxu0 0.0
      %2081 = vmatmul.mubr.f32.gmra.mxu0 %v1879
      %v2082 = vpop.f32.mrf.mxu0
      %v2083 = vadd.f32 0.0, %v2082
      %v2084 = vpop.f32.mrf.mxu0
      %2085 = vmatprep.mubr.f32.mxu0 0.0
      %2086 = vmatmul.mubr.f32.gmra.mxu0 %v1881
      %v2087 = vpop.f32.mrf.mxu0
      %v2088 = vadd.f32 0.0, %v2087
      %v2089 = vpop.f32.mrf.mxu0
      %2090 = vmatprep.mubr.f32.mxu0 0.0
      %2091 = vmatmul.mubr.f32.gmra.mxu0 %v1883
      %v2092 = vpop.f32.mrf.mxu0
      %v2093 = vadd.f32 0.0, %v2092
      %v2094 = vpop.f32.mrf.mxu0
      %2095 = vmatprep.mubr.f32.mxu0 0.0
      %2096 = vmatmul.mubr.f32.gmra.mxu0 %v1885
      %v2097 = vpop.f32.mrf.mxu0
      %v2098 = vadd.f32 0.0, %v2097
      %v2099 = vpop.f32.mrf.mxu0
      %2100 = vmatprep.mubr.f32.mxu0 0.0
      %2101 = vmatmul.mubr.f32.gmra.mxu0 %v1887
      %v2102 = vpop.f32.mrf.mxu0
      %v2103 = vadd.f32 0.0, %v2102
      %v2104 = vpop.f32.mrf.mxu0
      %2105 = vmatprep.mubr.f32.mxu0 0.0
      %2106 = vmatmul.mubr.f32.gmra.mxu0 %v1889
      %v2107 = vpop.f32.mrf.mxu0
      %v2108 = vadd.f32 0.0, %v2107
      %v2109 = vpop.f32.mrf.mxu0
      %2110 = vmatprep.mubr.f32.mxu0 0.0
      %2111 = vmatmul.mubr.f32.gmra.mxu0 %v1891
      %v2112 = vpop.f32.mrf.mxu0
      %v2113 = vadd.f32 0.0, %v2112
      %v2114 = vpop.f32.mrf.mxu0
      %2115 = vmatprep.mubr.f32.mxu0 0.0
      %2116 = vmatmul.mubr.f32.gmra.mxu0 %v1893
      %v2117 = vpop.f32.mrf.mxu0
      %v2118 = vadd.f32 0.0, %v2117
      %v2119 = vpop.f32.mrf.mxu0
      %2120 = vmatprep.mubr.f32.mxu0 0.0
      %2121 = vmatmul.mubr.f32.gmra.mxu0 %v1895
      %v2122 = vpop.f32.mrf.mxu0
      %v2123 = vadd.f32 0.0, %v2122
      %v2124 = vpop.f32.mrf.mxu0
      %2125 = vmatprep.mubr.f32.mxu0 0.0
      %2126 = vmatmul.mubr.f32.gmra.mxu0 %v1897
      %v2127 = vpop.f32.mrf.mxu0
      %v2128 = vadd.f32 0.0, %v2127
      %v2129 = vpop.f32.mrf.mxu0
      %2130 = vmatprep.mubr.f32.mxu0 0.0
      %2131 = vmatmul.mubr.f32.gmra.mxu0 %v1899
      %v2132 = vpop.f32.mrf.mxu0
      %v2133 = vadd.f32 0.0, %v2132
      %v2134 = vpop.f32.mrf.mxu0
      %2135 = vmatprep.mubr.f32.mxu0 0.0
      %2136 = vmatmul.mubr.f32.gmra.mxu0 %v1901
      %v2137 = vpop.f32.mrf.mxu0
      %v2138 = vadd.f32 0.0, %v2137
      %v2139 = vpop.f32.mrf.mxu0
      %2140 = vmatprep.mubr.f32.mxu0 0.0
      %2141 = vmatmul.mubr.f32.gmra.mxu0 %v1903
      %v2142 = vpop.f32.mrf.mxu0
      %v2143 = vadd.f32 0.0, %v2142
      %v2144 = vpop.f32.mrf.mxu0
      %2145 = vmatprep.mubr.f32.mxu0 0.0
      %2146 = vmatmul.mubr.f32.gmra.mxu0 %v1905
      %v2147 = vpop.f32.mrf.mxu0
      %v2148 = vadd.f32 0.0, %v2147
      %v2149 = vpop.f32.mrf.mxu0
      %2150 = vmatprep.mubr.f32.mxu0 0.0
      %2151 = vmatmul.mubr.f32.gmra.mxu0 %v1907
      %v2152 = vpop.f32.mrf.mxu0
      %v2153 = vadd.f32 0.0, %v2152
      %v2154 = vpop.f32.mrf.mxu0
      %2155 = vmatprep.mubr.f32.mxu0 0.0
      %2156 = vmatmul.mubr.f32.gmra.mxu0 %v1909
      %v2157 = vpop.f32.mrf.mxu0
      %v2158 = vadd.f32 0.0, %v2157
      %v2159 = vpop.f32.mrf.mxu0
      %2160 = vmatprep.mubr.f32.mxu0 0.0
      %2161 = vmatmul.mubr.f32.gmra.mxu0 %v1911
      %v2162 = vpop.f32.mrf.mxu0
      %v2163 = vadd.f32 0.0, %v2162
      %v2164 = vpop.f32.mrf.mxu0
      %2165 = vmatprep.mubr.f32.mxu0 0.0
      %2166 = vmatmul.mubr.f32.gmra.mxu0 %v1913
      %v2167 = vpop.f32.mrf.mxu0
      %v2168 = vadd.f32 0.0, %v2167
      %v2169 = vpop.f32.mrf.mxu0
      %2170 = vdwg.mxu0
      %v2171 = vadd.f32 %v1673, %v2013
      %v2172 = vadd.f32 %v1678, %v2018
      %v2173 = vadd.f32 %v1683, %v2023
      %v2174 = vadd.f32 %v1688, %v2028
      %v2175 = vadd.f32 %v1693, %v2033
      %v2176 = vadd.f32 %v1698, %v2038
      %v2177 = vadd.f32 %v1703, %v2043
      %v2178 = vadd.f32 %v1708, %v2048
      %v2179 = vadd.f32 %v1713, %v2053
      %v2180 = vadd.f32 %v1718, %v2058
      %v2181 = vadd.f32 %v1723, %v2063
      %v2182 = vadd.f32 %v1728, %v2068
      %v2183 = vadd.f32 %v1733, %v2073
      %v2184 = vadd.f32 %v1738, %v2078
      %v2185 = vadd.f32 %v1743, %v2083
      %v2186 = vadd.f32 %v1748, %v2088
      %v2187 = vadd.f32 %v1753, %v2093
      %v2188 = vadd.f32 %v1758, %v2098
      %v2189 = vadd.f32 %v1763, %v2103
      %v2190 = vadd.f32 %v1768, %v2108
      %v2191 = vadd.f32 %v1773, %v2113
      %v2192 = vadd.f32 %v1778, %v2118
      %v2193 = vadd.f32 %v1783, %v2123
      %v2194 = vadd.f32 %v1788, %v2128
      %v2195 = vadd.f32 %v1793, %v2133
      %v2196 = vadd.f32 %v1798, %v2138
      %v2197 = vadd.f32 %v1803, %v2143
      %v2198 = vadd.f32 %v1808, %v2148
      %v2199 = vadd.f32 %v1813, %v2153
      %v2200 = vadd.f32 %v1818, %v2158
      %v2201 = vadd.f32 %v1823, %v2163
      %v2202 = vadd.f32 %v1828, %v2168
      %s2203 = scalar_lea.vmem %s1, 384
      %v2204 = vld [vmem:[%s2203] sm:$0xff]
      %v2205 = vld [vmem:[%s2203 + $0x8] sm:$0xff]
      %v2206 = vld [vmem:[%s2203 + $0x10] sm:$0xff]
      %v2207 = vld [vmem:[%s2203 + $0x18] sm:$0xff]
      %v2208 = vld [vmem:[%s2203 + $0x20] sm:$0xff]
      %v2209 = vld [vmem:[%s2203 + $0x28] sm:$0xff]
      %v2210 = vld [vmem:[%s2203 + $0x30] sm:$0xff]
      %v2211 = vld [vmem:[%s2203 + $0x38] sm:$0xff]
      %v2212 = vld [vmem:[%s2203 + $0x40] sm:$0xff]
      %v2213 = vld [vmem:[%s2203 + $0x48] sm:$0xff]
      %v2214 = vld [vmem:[%s2203 + $0x50] sm:$0xff]
      %v2215 = vld [vmem:[%s2203 + $0x58] sm:$0xff]
      %v2216 = vld [vmem:[%s2203 + $0x60] sm:$0xff]
      %v2217 = vld [vmem:[%s2203 + $0x68] sm:$0xff]
      %v2218 = vld [vmem:[%s2203 + $0x70] sm:$0xff]
      %v2219 = vld [vmem:[%s2203 + $0x78] sm:$0xff]
      %2220 = vmatprep.subr.mxu0 0.0
      %2221 = vmatpush1.msra.mxu0 %v2219
      %2222 = vmatprep.subr.mxu0 0.0
      %2223 = vmatpush1.msra.mxu0 %v2218
      %2224 = vmatprep.subr.mxu0 0.0
      %2225 = vmatpush1.msra.mxu0 %v2217
      %2226 = vmatprep.subr.mxu0 0.0
      %2227 = vmatpush1.msra.mxu0 %v2216
      %2228 = vmatprep.subr.mxu0 0.0
      %2229 = vmatpush1.msra.mxu0 %v2215
      %2230 = vmatprep.subr.mxu0 0.0
      %2231 = vmatpush1.msra.mxu0 %v2214
      %2232 = vmatprep.subr.mxu0 0.0
      %2233 = vmatpush1.msra.mxu0 %v2213
      %2234 = vmatprep.subr.mxu0 0.0
      %2235 = vmatpush1.msra.mxu0 %v2212
      %2236 = vmatprep.subr.mxu0 0.0
      %2237 = vmatpush1.msra.mxu0 %v2211
      %2238 = vmatprep.subr.mxu0 0.0
      %2239 = vmatpush1.msra.mxu0 %v2210
      %2240 = vmatprep.subr.mxu0 0.0
      %2241 = vmatpush1.msra.mxu0 %v2209
      %2242 = vmatprep.subr.mxu0 0.0
      %2243 = vmatpush1.msra.mxu0 %v2208
      %2244 = vmatprep.subr.mxu0 0.0
      %2245 = vmatpush1.msra.mxu0 %v2207
      %2246 = vmatprep.subr.mxu0 0.0
      %2247 = vmatpush1.msra.mxu0 %v2206
      %2248 = vmatprep.subr.mxu0 0.0
      %2249 = vmatpush1.msra.mxu0 %v2205
      %2250 = vmatprep.subr.mxu0 0.0
      %2251 = vmatpush1.msra.mxu0 %v2204
      %2252 = vmatprep.subr.mxu0 0.0
      %2253 = vmatpush2.msra.mxu0 0.0
      %2254 = vmatprep.subr.mxu0 0.0
      %2255 = vmatpush2.msra.mxu0 0.0
      %2256 = vmatprep.subr.mxu0 0.0
      %2257 = vmatpush2.msra.mxu0 0.0
      %2258 = vmatprep.subr.mxu0 0.0
      %2259 = vmatpush2.msra.mxu0 0.0
      %2260 = vmatprep.subr.mxu0 0.0
      %2261 = vmatpush2.msra.mxu0 0.0
      %2262 = vmatprep.subr.mxu0 0.0
      %2263 = vmatpush2.msra.mxu0 0.0
      %2264 = vmatprep.subr.mxu0 0.0
      %2265 = vmatpush2.msra.mxu0 0.0
      %2266 = vmatprep.subr.mxu0 0.0
      %2267 = vmatpush2.msra.mxu0 0.0
      %2268 = vmatprep.subr.mxu0 0.0
      %2269 = vmatpush2.msra.mxu0 0.0
      %2270 = vmatprep.subr.mxu0 0.0
      %2271 = vmatpush2.msra.mxu0 0.0
      %2272 = vmatprep.subr.mxu0 0.0
      %2273 = vmatpush2.msra.mxu0 0.0
      %2274 = vmatprep.subr.mxu0 0.0
      %2275 = vmatpush2.msra.mxu0 0.0
      %2276 = vmatprep.subr.mxu0 0.0
      %2277 = vmatpush2.msra.mxu0 0.0
      %2278 = vmatprep.subr.mxu0 0.0
      %2279 = vmatpush2.msra.mxu0 0.0
      %2280 = vmatprep.subr.mxu0 0.0
      %2281 = vmatpush2.msra.mxu0 0.0
      %2282 = vmatprep.subr.mxu0 0.0
      %2283 = vmatpush2.msra.mxu0 0.0
      %2284 = vmatprep.mubr.f32.mxu0 0.0
      %2285 = vmatmul.mubr.f32.gmra.mxu0 %v1049
      %v2286 = vpop.f32.mrf.mxu0
      %v2287 = vadd.f32 0.0, %v2286
      %v2288 = vpop.f32.mrf.mxu0
      %2289 = vmatprep.mubr.f32.mxu0 0.0
      %2290 = vmatmul.mubr.f32.gmra.mxu0 %v955
      %v2291 = vpop.f32.mrf.mxu0
      %v2292 = vadd.f32 0.0, %v2291
      %v2293 = vpop.f32.mrf.mxu0
      %2294 = vmatprep.mubr.f32.mxu0 0.0
      %2295 = vmatmul.mubr.f32.gmra.mxu0 %v957
      %v2296 = vpop.f32.mrf.mxu0
      %v2297 = vadd.f32 0.0, %v2296
      %v2298 = vpop.f32.mrf.mxu0
      %2299 = vmatprep.mubr.f32.mxu0 0.0
      %2300 = vmatmul.mubr.f32.gmra.mxu0 %v959
      %v2301 = vpop.f32.mrf.mxu0
      %v2302 = vadd.f32 0.0, %v2301
      %v2303 = vpop.f32.mrf.mxu0
      %2304 = vmatprep.mubr.f32.mxu0 0.0
      %2305 = vmatmul.mubr.f32.gmra.mxu0 %v961
      %v2306 = vpop.f32.mrf.mxu0
      %v2307 = vadd.f32 0.0, %v2306
      %v2308 = vpop.f32.mrf.mxu0
      %2309 = vmatprep.mubr.f32.mxu0 0.0
      %2310 = vmatmul.mubr.f32.gmra.mxu0 %v963
      %v2311 = vpop.f32.mrf.mxu0
      %v2312 = vadd.f32 0.0, %v2311
      %v2313 = vpop.f32.mrf.mxu0
      %2314 = vmatprep.mubr.f32.mxu0 0.0
      %2315 = vmatmul.mubr.f32.gmra.mxu0 %v965
      %v2316 = vpop.f32.mrf.mxu0
      %v2317 = vadd.f32 0.0, %v2316
      %v2318 = vpop.f32.mrf.mxu0
      %2319 = vmatprep.mubr.f32.mxu0 0.0
      %2320 = vmatmul.mubr.f32.gmra.mxu0 %v967
      %v2321 = vpop.f32.mrf.mxu0
      %v2322 = vadd.f32 0.0, %v2321
      %v2323 = vpop.f32.mrf.mxu0
      %2324 = vmatprep.mubr.f32.mxu0 0.0
      %2325 = vmatmul.mubr.f32.gmra.mxu0 %v969
      %v2326 = vpop.f32.mrf.mxu0
      %v2327 = vadd.f32 0.0, %v2326
      %v2328 = vpop.f32.mrf.mxu0
      %2329 = vmatprep.mubr.f32.mxu0 0.0
      %2330 = vmatmul.mubr.f32.gmra.mxu0 %v971
      %v2331 = vpop.f32.mrf.mxu0
      %v2332 = vadd.f32 0.0, %v2331
      %v2333 = vpop.f32.mrf.mxu0
      %2334 = vmatprep.mubr.f32.mxu0 0.0
      %2335 = vmatmul.mubr.f32.gmra.mxu0 %v973
      %v2336 = vpop.f32.mrf.mxu0
      %v2337 = vadd.f32 0.0, %v2336
      %v2338 = vpop.f32.mrf.mxu0
      %2339 = vmatprep.mubr.f32.mxu0 0.0
      %2340 = vmatmul.mubr.f32.gmra.mxu0 %v975
      %v2341 = vpop.f32.mrf.mxu0
      %v2342 = vadd.f32 0.0, %v2341
      %v2343 = vpop.f32.mrf.mxu0
      %2344 = vmatprep.mubr.f32.mxu0 0.0
      %2345 = vmatmul.mubr.f32.gmra.mxu0 %v977
      %v2346 = vpop.f32.mrf.mxu0
      %v2347 = vadd.f32 0.0, %v2346
      %v2348 = vpop.f32.mrf.mxu0
      %2349 = vmatprep.mubr.f32.mxu0 0.0
      %2350 = vmatmul.mubr.f32.gmra.mxu0 %v979
      %v2351 = vpop.f32.mrf.mxu0
      %v2352 = vadd.f32 0.0, %v2351
      %v2353 = vpop.f32.mrf.mxu0
      %2354 = vmatprep.mubr.f32.mxu0 0.0
      %2355 = vmatmul.mubr.f32.gmra.mxu0 %v981
      %v2356 = vpop.f32.mrf.mxu0
      %v2357 = vadd.f32 0.0, %v2356
      %v2358 = vpop.f32.mrf.mxu0
      %2359 = vmatprep.mubr.f32.mxu0 0.0
      %2360 = vmatmul.mubr.f32.gmra.mxu0 %v983
      %v2361 = vpop.f32.mrf.mxu0
      %v2362 = vadd.f32 0.0, %v2361
      %v2363 = vpop.f32.mrf.mxu0
      %2364 = vmatprep.mubr.f32.mxu0 0.0
      %2365 = vmatmul.mubr.f32.gmra.mxu0 %v985
      %v2366 = vpop.f32.mrf.mxu0
      %v2367 = vadd.f32 0.0, %v2366
      %v2368 = vpop.f32.mrf.mxu0
      %2369 = vmatprep.mubr.f32.mxu0 0.0
      %2370 = vmatmul.mubr.f32.gmra.mxu0 %v987
      %v2371 = vpop.f32.mrf.mxu0
      %v2372 = vadd.f32 0.0, %v2371
      %v2373 = vpop.f32.mrf.mxu0
      %2374 = vmatprep.mubr.f32.mxu0 0.0
      %2375 = vmatmul.mubr.f32.gmra.mxu0 %v989
      %v2376 = vpop.f32.mrf.mxu0
      %v2377 = vadd.f32 0.0, %v2376
      %v2378 = vpop.f32.mrf.mxu0
      %2379 = vmatprep.mubr.f32.mxu0 0.0
      %2380 = vmatmul.mubr.f32.gmra.mxu0 %v991
      %v2381 = vpop.f32.mrf.mxu0
      %v2382 = vadd.f32 0.0, %v2381
      %v2383 = vpop.f32.mrf.mxu0
      %2384 = vmatprep.mubr.f32.mxu0 0.0
      %2385 = vmatmul.mubr.f32.gmra.mxu0 %v993
      %v2386 = vpop.f32.mrf.mxu0
      %v2387 = vadd.f32 0.0, %v2386
      %v2388 = vpop.f32.mrf.mxu0
      %2389 = vmatprep.mubr.f32.mxu0 0.0
      %2390 = vmatmul.mubr.f32.gmra.mxu0 %v995
      %v2391 = vpop.f32.mrf.mxu0
      %v2392 = vadd.f32 0.0, %v2391
      %v2393 = vpop.f32.mrf.mxu0
      %2394 = vmatprep.mubr.f32.mxu0 0.0
      %2395 = vmatmul.mubr.f32.gmra.mxu0 %v997
      %v2396 = vpop.f32.mrf.mxu0
      %v2397 = vadd.f32 0.0, %v2396
      %v2398 = vpop.f32.mrf.mxu0
      %2399 = vmatprep.mubr.f32.mxu0 0.0
      %2400 = vmatmul.mubr.f32.gmra.mxu0 %v999
      %v2401 = vpop.f32.mrf.mxu0
      %v2402 = vadd.f32 0.0, %v2401
      %v2403 = vpop.f32.mrf.mxu0
      %2404 = vmatprep.mubr.f32.mxu0 0.0
      %2405 = vmatmul.mubr.f32.gmra.mxu0 %v1001
      %v2406 = vpop.f32.mrf.mxu0
      %v2407 = vadd.f32 0.0, %v2406
      %v2408 = vpop.f32.mrf.mxu0
      %2409 = vmatprep.mubr.f32.mxu0 0.0
      %2410 = vmatmul.mubr.f32.gmra.mxu0 %v1003
      %v2411 = vpop.f32.mrf.mxu0
      %v2412 = vadd.f32 0.0, %v2411
      %v2413 = vpop.f32.mrf.mxu0
      %2414 = vmatprep.mubr.f32.mxu0 0.0
      %2415 = vmatmul.mubr.f32.gmra.mxu0 %v1005
      %v2416 = vpop.f32.mrf.mxu0
      %v2417 = vadd.f32 0.0, %v2416
      %v2418 = vpop.f32.mrf.mxu0
      %2419 = vmatprep.mubr.f32.mxu0 0.0
      %2420 = vmatmul.mubr.f32.gmra.mxu0 %v1007
      %v2421 = vpop.f32.mrf.mxu0
      %v2422 = vadd.f32 0.0, %v2421
      %v2423 = vpop.f32.mrf.mxu0
      %2424 = vmatprep.mubr.f32.mxu0 0.0
      %2425 = vmatmul.mubr.f32.gmra.mxu0 %v1009
      %v2426 = vpop.f32.mrf.mxu0
      %v2427 = vadd.f32 0.0, %v2426
      %v2428 = vpop.f32.mrf.mxu0
      %2429 = vmatprep.mubr.f32.mxu0 0.0
      %2430 = vmatmul.mubr.f32.gmra.mxu0 %v1011
      %v2431 = vpop.f32.mrf.mxu0
      %v2432 = vadd.f32 0.0, %v2431
      %v2433 = vpop.f32.mrf.mxu0
      %2434 = vmatprep.mubr.f32.mxu0 0.0
      %2435 = vmatmul.mubr.f32.gmra.mxu0 %v1013
      %v2436 = vpop.f32.mrf.mxu0
      %v2437 = vadd.f32 0.0, %v2436
      %v2438 = vpop.f32.mrf.mxu0
      %2439 = vmatprep.mubr.f32.mxu0 0.0
      %2440 = vmatmul.mubr.f32.gmra.mxu0 %v1015
      %v2441 = vpop.f32.mrf.mxu0
      %v2442 = vadd.f32 0.0, %v2441
      %v2443 = vpop.f32.mrf.mxu0
      %2444 = vdwg.mxu0
      %v2445 = vadd.f32 %v2171, %v2287
      %v2446 = vadd.f32 %v2172, %v2292
      %v2447 = vadd.f32 %v2173, %v2297
      %v2448 = vadd.f32 %v2174, %v2302
      %v2449 = vadd.f32 %v2175, %v2307
      %v2450 = vadd.f32 %v2176, %v2312
      %v2451 = vadd.f32 %v2177, %v2317
      %v2452 = vadd.f32 %v2178, %v2322
      %v2453 = vadd.f32 %v2179, %v2327
      %v2454 = vadd.f32 %v2180, %v2332
      %v2455 = vadd.f32 %v2181, %v2337
      %v2456 = vadd.f32 %v2182, %v2342
      %v2457 = vadd.f32 %v2183, %v2347
      %v2458 = vadd.f32 %v2184, %v2352
      %v2459 = vadd.f32 %v2185, %v2357
      %v2460 = vadd.f32 %v2186, %v2362
      %v2461 = vadd.f32 %v2187, %v2367
      %v2462 = vadd.f32 %v2188, %v2372
      %v2463 = vadd.f32 %v2189, %v2377
      %v2464 = vadd.f32 %v2190, %v2382
      %v2465 = vadd.f32 %v2191, %v2387
      %v2466 = vadd.f32 %v2192, %v2392
      %v2467 = vadd.f32 %v2193, %v2397
      %v2468 = vadd.f32 %v2194, %v2402
      %v2469 = vadd.f32 %v2195, %v2407
      %v2470 = vadd.f32 %v2196, %v2412
      %v2471 = vadd.f32 %v2197, %v2417
      %v2472 = vadd.f32 %v2198, %v2422
      %v2473 = vadd.f32 %v2199, %v2427
      %v2474 = vadd.f32 %v2200, %v2432
      %v2475 = vadd.f32 %v2201, %v2437
      %v2476 = vadd.f32 %v2202, %v2442
      %s2477 = scalar_lea.vmem %s1, 512
      %v2478 = vld [vmem:[%s2477] sm:$0xff]
      %v2479 = vld [vmem:[%s2477 + $0x8] sm:$0xff]
      %v2480 = vld [vmem:[%s2477 + $0x10] sm:$0xff]
      %v2481 = vld [vmem:[%s2477 + $0x18] sm:$0xff]
      %v2482 = vld [vmem:[%s2477 + $0x20] sm:$0xff]
      %v2483 = vld [vmem:[%s2477 + $0x28] sm:$0xff]
      %v2484 = vld [vmem:[%s2477 + $0x30] sm:$0xff]
      %v2485 = vld [vmem:[%s2477 + $0x38] sm:$0xff]
      %v2486 = vld [vmem:[%s2477 + $0x40] sm:$0xff]
      %v2487 = vld [vmem:[%s2477 + $0x48] sm:$0xff]
      %v2488 = vld [vmem:[%s2477 + $0x50] sm:$0xff]
      %v2489 = vld [vmem:[%s2477 + $0x58] sm:$0xff]
      %v2490 = vld [vmem:[%s2477 + $0x60] sm:$0xff]
      %v2491 = vld [vmem:[%s2477 + $0x68] sm:$0xff]
      %v2492 = vld [vmem:[%s2477 + $0x70] sm:$0xff]
      %v2493 = vld [vmem:[%s2477 + $0x78] sm:$0xff]
      %v2495 = vrot.slane %v1145, 1
      %v2496 = vsel %vm1284, %v1347, %v2495
      %v2497 = vrot.slane %v1149, 1
      %v2498 = vsel %vm1284, %v2495, %v2497
      %2501 = vmatprep.subr.mxu0 0.0
      %2502 = vmatpush1.msra.mxu0 %v2493
      %2503 = vmatprep.subr.mxu0 0.0
      %2504 = vmatpush1.msra.mxu0 %v2492
      %2505 = vmatprep.subr.mxu0 0.0
      %2506 = vmatpush1.msra.mxu0 %v2491
      %2507 = vmatprep.subr.mxu0 0.0
      %2508 = vmatpush1.msra.mxu0 %v2490
      %2509 = vmatprep.subr.mxu0 0.0
      %2510 = vmatpush1.msra.mxu0 %v2489
      %2511 = vmatprep.subr.mxu0 0.0
      %2512 = vmatpush1.msra.mxu0 %v2488
      %2513 = vmatprep.subr.mxu0 0.0
      %2514 = vmatpush1.msra.mxu0 %v2487
      %2515 = vmatprep.subr.mxu0 0.0
      %2516 = vmatpush1.msra.mxu0 %v2486
      %2517 = vmatprep.subr.mxu0 0.0
      %2518 = vmatpush1.msra.mxu0 %v2485
      %2519 = vmatprep.subr.mxu0 0.0
      %2520 = vmatpush1.msra.mxu0 %v2484
      %2521 = vmatprep.subr.mxu0 0.0
      %2522 = vmatpush1.msra.mxu0 %v2483
      %2523 = vmatprep.subr.mxu0 0.0
      %2524 = vmatpush1.msra.mxu0 %v2482
      %2525 = vmatprep.subr.mxu0 0.0
      %2526 = vmatpush1.msra.mxu0 %v2481
      %2527 = vmatprep.subr.mxu0 0.0
      %2528 = vmatpush1.msra.mxu0 %v2480
      %2529 = vmatprep.subr.mxu0 0.0
      %2530 = vmatpush1.msra.mxu0 %v2479
      %2531 = vmatprep.subr.mxu0 0.0
      %2532 = vmatpush1.msra.mxu0 %v2478
      %2533 = vmatprep.subr.mxu0 0.0
      %2534 = vmatpush2.msra.mxu0 0.0
      %2535 = vmatprep.subr.mxu0 0.0
      %2536 = vmatpush2.msra.mxu0 0.0
      %2537 = vmatprep.subr.mxu0 0.0
      %2538 = vmatpush2.msra.mxu0 0.0
      %2539 = vmatprep.subr.mxu0 0.0
      %2540 = vmatpush2.msra.mxu0 0.0
      %2541 = vmatprep.subr.mxu0 0.0
      %2542 = vmatpush2.msra.mxu0 0.0
      %2543 = vmatprep.subr.mxu0 0.0
      %2544 = vmatpush2.msra.mxu0 0.0
      %2545 = vmatprep.subr.mxu0 0.0
      %2546 = vmatpush2.msra.mxu0 0.0
      %2547 = vmatprep.subr.mxu0 0.0
      %2548 = vmatpush2.msra.mxu0 0.0
      %2549 = vmatprep.subr.mxu0 0.0
      %2550 = vmatpush2.msra.mxu0 0.0
      %2551 = vmatprep.subr.mxu0 0.0
      %2552 = vmatpush2.msra.mxu0 0.0
      %2553 = vmatprep.subr.mxu0 0.0
      %2554 = vmatpush2.msra.mxu0 0.0
      %2555 = vmatprep.subr.mxu0 0.0
      %2556 = vmatpush2.msra.mxu0 0.0
      %2557 = vmatprep.subr.mxu0 0.0
      %2558 = vmatpush2.msra.mxu0 0.0
      %2559 = vmatprep.subr.mxu0 0.0
      %2560 = vmatpush2.msra.mxu0 0.0
      %2561 = vmatprep.subr.mxu0 0.0
      %2562 = vmatpush2.msra.mxu0 0.0
      %2563 = vmatprep.subr.mxu0 0.0
      %2564 = vmatpush2.msra.mxu0 0.0
      %2565 = vmatprep.mubr.f32.mxu0 0.0
      %2566 = vmatmul.mubr.f32.gmra.mxu0 %v1290
      %v2567 = vpop.f32.mrf.mxu0
      %v2568 = vadd.f32 0.0, %v2567
      %v2569 = vpop.f32.mrf.mxu0
      %2570 = vmatprep.mubr.f32.mxu0 0.0
      %2571 = vmatmul.mubr.f32.gmra.mxu0 %v1292
      %v2572 = vpop.f32.mrf.mxu0
      %v2573 = vadd.f32 0.0, %v2572
      %v2574 = vpop.f32.mrf.mxu0
      %2575 = vmatprep.mubr.f32.mxu0 0.0
      %2576 = vmatmul.mubr.f32.gmra.mxu0 %v1294
      %v2577 = vpop.f32.mrf.mxu0
      %v2578 = vadd.f32 0.0, %v2577
      %v2579 = vpop.f32.mrf.mxu0
      %2580 = vmatprep.mubr.f32.mxu0 0.0
      %2581 = vmatmul.mubr.f32.gmra.mxu0 %v1296
      %v2582 = vpop.f32.mrf.mxu0
      %v2583 = vadd.f32 0.0, %v2582
      %v2584 = vpop.f32.mrf.mxu0
      %2585 = vmatprep.mubr.f32.mxu0 0.0
      %2586 = vmatmul.mubr.f32.gmra.mxu0 %v1298
      %v2587 = vpop.f32.mrf.mxu0
      %v2588 = vadd.f32 0.0, %v2587
      %v2589 = vpop.f32.mrf.mxu0
      %2590 = vmatprep.mubr.f32.mxu0 0.0
      %2591 = vmatmul.mubr.f32.gmra.mxu0 %v1300
      %v2592 = vpop.f32.mrf.mxu0
      %v2593 = vadd.f32 0.0, %v2592
      %v2594 = vpop.f32.mrf.mxu0
      %2595 = vmatprep.mubr.f32.mxu0 0.0
      %2596 = vmatmul.mubr.f32.gmra.mxu0 %v1302
      %v2597 = vpop.f32.mrf.mxu0
      %v2598 = vadd.f32 0.0, %v2597
      %v2599 = vpop.f32.mrf.mxu0
      %2600 = vmatprep.mubr.f32.mxu0 0.0
      %2601 = vmatmul.mubr.f32.gmra.mxu0 %v1304
      %v2602 = vpop.f32.mrf.mxu0
      %v2603 = vadd.f32 0.0, %v2602
      %v2604 = vpop.f32.mrf.mxu0
      %2605 = vmatprep.mubr.f32.mxu0 0.0
      %2606 = vmatmul.mubr.f32.gmra.mxu0 %v1306
      %v2607 = vpop.f32.mrf.mxu0
      %v2608 = vadd.f32 0.0, %v2607
      %v2609 = vpop.f32.mrf.mxu0
      %2610 = vmatprep.mubr.f32.mxu0 0.0
      %2611 = vmatmul.mubr.f32.gmra.mxu0 %v1308
      %v2612 = vpop.f32.mrf.mxu0
      %v2613 = vadd.f32 0.0, %v2612
      %v2614 = vpop.f32.mrf.mxu0
      %2615 = vmatprep.mubr.f32.mxu0 0.0
      %2616 = vmatmul.mubr.f32.gmra.mxu0 %v1310
      %v2617 = vpop.f32.mrf.mxu0
      %v2618 = vadd.f32 0.0, %v2617
      %v2619 = vpop.f32.mrf.mxu0
      %2620 = vmatprep.mubr.f32.mxu0 0.0
      %2621 = vmatmul.mubr.f32.gmra.mxu0 %v1312
      %v2622 = vpop.f32.mrf.mxu0
      %v2623 = vadd.f32 0.0, %v2622
      %v2624 = vpop.f32.mrf.mxu0
      %2625 = vmatprep.mubr.f32.mxu0 0.0
      %2626 = vmatmul.mubr.f32.gmra.mxu0 %v1314
      %v2627 = vpop.f32.mrf.mxu0
      %v2628 = vadd.f32 0.0, %v2627
      %v2629 = vpop.f32.mrf.mxu0
      %2630 = vmatprep.mubr.f32.mxu0 0.0
      %2631 = vmatmul.mubr.f32.gmra.mxu0 %v1316
      %v2632 = vpop.f32.mrf.mxu0
      %v2633 = vadd.f32 0.0, %v2632
      %v2634 = vpop.f32.mrf.mxu0
      %2635 = vmatprep.mubr.f32.mxu0 0.0
      %2636 = vmatmul.mubr.f32.gmra.mxu0 %v1318
      %v2637 = vpop.f32.mrf.mxu0
      %v2638 = vadd.f32 0.0, %v2637
      %v2639 = vpop.f32.mrf.mxu0
      %2640 = vmatprep.mubr.f32.mxu0 0.0
      %2641 = vmatmul.mubr.f32.gmra.mxu0 %v1320
      %v2642 = vpop.f32.mrf.mxu0
      %v2643 = vadd.f32 0.0, %v2642
      %v2644 = vpop.f32.mrf.mxu0
      %2645 = vmatprep.mubr.f32.mxu0 0.0
      %2646 = vmatmul.mubr.f32.gmra.mxu0 %v1322
      %v2647 = vpop.f32.mrf.mxu0
      %v2648 = vadd.f32 0.0, %v2647
      %v2649 = vpop.f32.mrf.mxu0
      %2650 = vmatprep.mubr.f32.mxu0 0.0
      %2651 = vmatmul.mubr.f32.gmra.mxu0 %v1324
      %v2652 = vpop.f32.mrf.mxu0
      %v2653 = vadd.f32 0.0, %v2652
      %v2654 = vpop.f32.mrf.mxu0
      %2655 = vmatprep.mubr.f32.mxu0 0.0
      %2656 = vmatmul.mubr.f32.gmra.mxu0 %v1326
      %v2657 = vpop.f32.mrf.mxu0
      %v2658 = vadd.f32 0.0, %v2657
      %v2659 = vpop.f32.mrf.mxu0
      %2660 = vmatprep.mubr.f32.mxu0 0.0
      %2661 = vmatmul.mubr.f32.gmra.mxu0 %v1328
      %v2662 = vpop.f32.mrf.mxu0
      %v2663 = vadd.f32 0.0, %v2662
      %v2664 = vpop.f32.mrf.mxu0
      %2665 = vmatprep.mubr.f32.mxu0 0.0
      %2666 = vmatmul.mubr.f32.gmra.mxu0 %v1330
      %v2667 = vpop.f32.mrf.mxu0
      %v2668 = vadd.f32 0.0, %v2667
      %v2669 = vpop.f32.mrf.mxu0
      %2670 = vmatprep.mubr.f32.mxu0 0.0
      %2671 = vmatmul.mubr.f32.gmra.mxu0 %v1332
      %v2672 = vpop.f32.mrf.mxu0
      %v2673 = vadd.f32 0.0, %v2672
      %v2674 = vpop.f32.mrf.mxu0
      %2675 = vmatprep.mubr.f32.mxu0 0.0
      %2676 = vmatmul.mubr.f32.gmra.mxu0 %v1334
      %v2677 = vpop.f32.mrf.mxu0
      %v2678 = vadd.f32 0.0, %v2677
      %v2679 = vpop.f32.mrf.mxu0
      %2680 = vmatprep.mubr.f32.mxu0 0.0
      %2681 = vmatmul.mubr.f32.gmra.mxu0 %v1336
      %v2682 = vpop.f32.mrf.mxu0
      %v2683 = vadd.f32 0.0, %v2682
      %v2684 = vpop.f32.mrf.mxu0
      %2685 = vmatprep.mubr.f32.mxu0 0.0
      %2686 = vmatmul.mubr.f32.gmra.mxu0 %v1338
      %v2687 = vpop.f32.mrf.mxu0
      %v2688 = vadd.f32 0.0, %v2687
      %v2689 = vpop.f32.mrf.mxu0
      %2690 = vmatprep.mubr.f32.mxu0 0.0
      %2691 = vmatmul.mubr.f32.gmra.mxu0 %v1340
      %v2692 = vpop.f32.mrf.mxu0
      %v2693 = vadd.f32 0.0, %v2692
      %v2694 = vpop.f32.mrf.mxu0
      %2695 = vmatprep.mubr.f32.mxu0 0.0
      %2696 = vmatmul.mubr.f32.gmra.mxu0 %v1342
      %v2697 = vpop.f32.mrf.mxu0
      %v2698 = vadd.f32 0.0, %v2697
      %v2699 = vpop.f32.mrf.mxu0
      %2700 = vmatprep.mubr.f32.mxu0 0.0
      %2701 = vmatmul.mubr.f32.gmra.mxu0 %v1344
      %v2702 = vpop.f32.mrf.mxu0
      %v2703 = vadd.f32 0.0, %v2702
      %v2704 = vpop.f32.mrf.mxu0
      %2705 = vmatprep.mubr.f32.mxu0 0.0
      %2706 = vmatmul.mubr.f32.gmra.mxu0 %v1346
      %v2707 = vpop.f32.mrf.mxu0
      %v2708 = vadd.f32 0.0, %v2707
      %v2709 = vpop.f32.mrf.mxu0
      %2710 = vmatprep.mubr.f32.mxu0 0.0
      %2711 = vmatmul.mubr.f32.gmra.mxu0 %v1348
      %v2712 = vpop.f32.mrf.mxu0
      %v2713 = vadd.f32 0.0, %v2712
      %v2714 = vpop.f32.mrf.mxu0
      %2715 = vmatprep.mubr.f32.mxu0 0.0
      %2716 = vmatmul.mubr.f32.gmra.mxu0 %v2496
      %v2717 = vpop.f32.mrf.mxu0
      %v2718 = vadd.f32 0.0, %v2717
      %v2719 = vpop.f32.mrf.mxu0
      %2720 = vmatprep.mubr.f32.mxu0 0.0
      %2721 = vmatmul.mubr.f32.gmra.mxu0 %v2498
      %v2722 = vpop.f32.mrf.mxu0
      %v2723 = vadd.f32 0.0, %v2722
      %v2724 = vpop.f32.mrf.mxu0
      %2725 = vdwg.mxu0
      %v2726 = vadd.f32 %v2445, %v2568
      %v2727 = vadd.f32 %v2446, %v2573
      %v2728 = vadd.f32 %v2447, %v2578
      %v2729 = vadd.f32 %v2448, %v2583
      %v2730 = vadd.f32 %v2449, %v2588
      %v2731 = vadd.f32 %v2450, %v2593
      %v2732 = vadd.f32 %v2451, %v2598
      %v2733 = vadd.f32 %v2452, %v2603
      %v2734 = vadd.f32 %v2453, %v2608
      %v2735 = vadd.f32 %v2454, %v2613
      %v2736 = vadd.f32 %v2455, %v2618
      %v2737 = vadd.f32 %v2456, %v2623
      %v2738 = vadd.f32 %v2457, %v2628
      %v2739 = vadd.f32 %v2458, %v2633
      %v2740 = vadd.f32 %v2459, %v2638
      %v2741 = vadd.f32 %v2460, %v2643
      %v2742 = vadd.f32 %v2461, %v2648
      %v2743 = vadd.f32 %v2462, %v2653
      %v2744 = vadd.f32 %v2463, %v2658
      %v2745 = vadd.f32 %v2464, %v2663
      %v2746 = vadd.f32 %v2465, %v2668
      %v2747 = vadd.f32 %v2466, %v2673
      %v2748 = vadd.f32 %v2467, %v2678
      %v2749 = vadd.f32 %v2468, %v2683
      %v2750 = vadd.f32 %v2469, %v2688
      %v2751 = vadd.f32 %v2470, %v2693
      %v2752 = vadd.f32 %v2471, %v2698
      %v2753 = vadd.f32 %v2472, %v2703
      %v2754 = vadd.f32 %v2473, %v2708
      %v2755 = vadd.f32 %v2474, %v2713
      %v2756 = vadd.f32 %v2475, %v2718
      %v2757 = vadd.f32 %v2476, %v2723
      %s2758 = scalar_lea.vmem %s1, 640
      %v2759 = vld [vmem:[%s2758] sm:$0xff]
      %v2760 = vld [vmem:[%s2758 + $0x8] sm:$0xff]
      %v2761 = vld [vmem:[%s2758 + $0x10] sm:$0xff]
      %v2762 = vld [vmem:[%s2758 + $0x18] sm:$0xff]
      %v2763 = vld [vmem:[%s2758 + $0x20] sm:$0xff]
      %v2764 = vld [vmem:[%s2758 + $0x28] sm:$0xff]
      %v2765 = vld [vmem:[%s2758 + $0x30] sm:$0xff]
      %v2766 = vld [vmem:[%s2758 + $0x38] sm:$0xff]
      %v2767 = vld [vmem:[%s2758 + $0x40] sm:$0xff]
      %v2768 = vld [vmem:[%s2758 + $0x48] sm:$0xff]
      %v2769 = vld [vmem:[%s2758 + $0x50] sm:$0xff]
      %v2770 = vld [vmem:[%s2758 + $0x58] sm:$0xff]
      %v2771 = vld [vmem:[%s2758 + $0x60] sm:$0xff]
      %v2772 = vld [vmem:[%s2758 + $0x68] sm:$0xff]
      %v2773 = vld [vmem:[%s2758 + $0x70] sm:$0xff]
      %v2774 = vld [vmem:[%s2758 + $0x78] sm:$0xff]
      %v2776 = vrot.slane %v1244, 2
      %v2777 = vsel %vm1849, %v1912, %v2776
      %v2778 = vrot.slane %v1248, 2
      %v2779 = vsel %vm1849, %v2776, %v2778
      %2782 = vmatprep.subr.mxu0 0.0
      %2783 = vmatpush1.msra.mxu0 %v2774
      %2784 = vmatprep.subr.mxu0 0.0
      %2785 = vmatpush1.msra.mxu0 %v2773
      %2786 = vmatprep.subr.mxu0 0.0
      %2787 = vmatpush1.msra.mxu0 %v2772
      %2788 = vmatprep.subr.mxu0 0.0
      %2789 = vmatpush1.msra.mxu0 %v2771
      %2790 = vmatprep.subr.mxu0 0.0
      %2791 = vmatpush1.msra.mxu0 %v2770
      %2792 = vmatprep.subr.mxu0 0.0
      %2793 = vmatpush1.msra.mxu0 %v2769
      %2794 = vmatprep.subr.mxu0 0.0
      %2795 = vmatpush1.msra.mxu0 %v2768
      %2796 = vmatprep.subr.mxu0 0.0
      %2797 = vmatpush1.msra.mxu0 %v2767
      %2798 = vmatprep.subr.mxu0 0.0
      %2799 = vmatpush1.msra.mxu0 %v2766
      %2800 = vmatprep.subr.mxu0 0.0
      %2801 = vmatpush1.msra.mxu0 %v2765
      %2802 = vmatprep.subr.mxu0 0.0
      %2803 = vmatpush1.msra.mxu0 %v2764
      %2804 = vmatprep.subr.mxu0 0.0
      %2805 = vmatpush1.msra.mxu0 %v2763
      %2806 = vmatprep.subr.mxu0 0.0
      %2807 = vmatpush1.msra.mxu0 %v2762
      %2808 = vmatprep.subr.mxu0 0.0
      %2809 = vmatpush1.msra.mxu0 %v2761
      %2810 = vmatprep.subr.mxu0 0.0
      %2811 = vmatpush1.msra.mxu0 %v2760
      %2812 = vmatprep.subr.mxu0 0.0
      %2813 = vmatpush1.msra.mxu0 %v2759
      %2814 = vmatprep.subr.mxu0 0.0
      %2815 = vmatpush2.msra.mxu0 0.0
      %2816 = vmatprep.subr.mxu0 0.0
      %2817 = vmatpush2.msra.mxu0 0.0
      %2818 = vmatprep.subr.mxu0 0.0
      %2819 = vmatpush2.msra.mxu0 0.0
      %2820 = vmatprep.subr.mxu0 0.0
      %2821 = vmatpush2.msra.mxu0 0.0
      %2822 = vmatprep.subr.mxu0 0.0
      %2823 = vmatpush2.msra.mxu0 0.0
      %2824 = vmatprep.subr.mxu0 0.0
      %2825 = vmatpush2.msra.mxu0 0.0
      %2826 = vmatprep.subr.mxu0 0.0
      %2827 = vmatpush2.msra.mxu0 0.0
      %2828 = vmatprep.subr.mxu0 0.0
      %2829 = vmatpush2.msra.mxu0 0.0
      %2830 = vmatprep.subr.mxu0 0.0
      %2831 = vmatpush2.msra.mxu0 0.0
      %2832 = vmatprep.subr.mxu0 0.0
      %2833 = vmatpush2.msra.mxu0 0.0
      %2834 = vmatprep.subr.mxu0 0.0
      %2835 = vmatpush2.msra.mxu0 0.0
      %2836 = vmatprep.subr.mxu0 0.0
      %2837 = vmatpush2.msra.mxu0 0.0
      %2838 = vmatprep.subr.mxu0 0.0
      %2839 = vmatpush2.msra.mxu0 0.0
      %2840 = vmatprep.subr.mxu0 0.0
      %2841 = vmatpush2.msra.mxu0 0.0
      %2842 = vmatprep.subr.mxu0 0.0
      %2843 = vmatpush2.msra.mxu0 0.0
      %2844 = vmatprep.subr.mxu0 0.0
      %2845 = vmatpush2.msra.mxu0 0.0
      %2846 = vmatprep.mubr.f32.mxu0 0.0
      %2847 = vmatmul.mubr.f32.gmra.mxu0 %v1855
      %v2848 = vpop.f32.mrf.mxu0
      %v2849 = vadd.f32 0.0, %v2848
      %v2850 = vpop.f32.mrf.mxu0
      %2851 = vmatprep.mubr.f32.mxu0 0.0
      %2852 = vmatmul.mubr.f32.gmra.mxu0 %v1857
      %v2853 = vpop.f32.mrf.mxu0
      %v2854 = vadd.f32 0.0, %v2853
      %v2855 = vpop.f32.mrf.mxu0
      %2856 = vmatprep.mubr.f32.mxu0 0.0
      %2857 = vmatmul.mubr.f32.gmra.mxu0 %v1859
      %v2858 = vpop.f32.mrf.mxu0
      %v2859 = vadd.f32 0.0, %v2858
      %v2860 = vpop.f32.mrf.mxu0
      %2861 = vmatprep.mubr.f32.mxu0 0.0
      %2862 = vmatmul.mubr.f32.gmra.mxu0 %v1861
      %v2863 = vpop.f32.mrf.mxu0
      %v2864 = vadd.f32 0.0, %v2863
      %v2865 = vpop.f32.mrf.mxu0
      %2866 = vmatprep.mubr.f32.mxu0 0.0
      %2867 = vmatmul.mubr.f32.gmra.mxu0 %v1863
      %v2868 = vpop.f32.mrf.mxu0
      %v2869 = vadd.f32 0.0, %v2868
      %v2870 = vpop.f32.mrf.mxu0
      %2871 = vmatprep.mubr.f32.mxu0 0.0
      %2872 = vmatmul.mubr.f32.gmra.mxu0 %v1865
      %v2873 = vpop.f32.mrf.mxu0
      %v2874 = vadd.f32 0.0, %v2873
      %v2875 = vpop.f32.mrf.mxu0
      %2876 = vmatprep.mubr.f32.mxu0 0.0
      %2877 = vmatmul.mubr.f32.gmra.mxu0 %v1867
      %v2878 = vpop.f32.mrf.mxu0
      %v2879 = vadd.f32 0.0, %v2878
      %v2880 = vpop.f32.mrf.mxu0
      %2881 = vmatprep.mubr.f32.mxu0 0.0
      %2882 = vmatmul.mubr.f32.gmra.mxu0 %v1869
      %v2883 = vpop.f32.mrf.mxu0
      %v2884 = vadd.f32 0.0, %v2883
      %v2885 = vpop.f32.mrf.mxu0
      %2886 = vmatprep.mubr.f32.mxu0 0.0
      %2887 = vmatmul.mubr.f32.gmra.mxu0 %v1871
      %v2888 = vpop.f32.mrf.mxu0
      %v2889 = vadd.f32 0.0, %v2888
      %v2890 = vpop.f32.mrf.mxu0
      %2891 = vmatprep.mubr.f32.mxu0 0.0
      %2892 = vmatmul.mubr.f32.gmra.mxu0 %v1873
      %v2893 = vpop.f32.mrf.mxu0
      %v2894 = vadd.f32 0.0, %v2893
      %v2895 = vpop.f32.mrf.mxu0
      %2896 = vmatprep.mubr.f32.mxu0 0.0
      %2897 = vmatmul.mubr.f32.gmra.mxu0 %v1875
      %v2898 = vpop.f32.mrf.mxu0
      %v2899 = vadd.f32 0.0, %v2898
      %v2900 = vpop.f32.mrf.mxu0
      %2901 = vmatprep.mubr.f32.mxu0 0.0
      %2902 = vmatmul.mubr.f32.gmra.mxu0 %v1877
      %v2903 = vpop.f32.mrf.mxu0
      %v2904 = vadd.f32 0.0, %v2903
      %v2905 = vpop.f32.mrf.mxu0
      %2906 = vmatprep.mubr.f32.mxu0 0.0
      %2907 = vmatmul.mubr.f32.gmra.mxu0 %v1879
      %v2908 = vpop.f32.mrf.mxu0
      %v2909 = vadd.f32 0.0, %v2908
      %v2910 = vpop.f32.mrf.mxu0
      %2911 = vmatprep.mubr.f32.mxu0 0.0
      %2912 = vmatmul.mubr.f32.gmra.mxu0 %v1881
      %v2913 = vpop.f32.mrf.mxu0
      %v2914 = vadd.f32 0.0, %v2913
      %v2915 = vpop.f32.mrf.mxu0
      %2916 = vmatprep.mubr.f32.mxu0 0.0
      %2917 = vmatmul.mubr.f32.gmra.mxu0 %v1883
      %v2918 = vpop.f32.mrf.mxu0
      %v2919 = vadd.f32 0.0, %v2918
      %v2920 = vpop.f32.mrf.mxu0
      %2921 = vmatprep.mubr.f32.mxu0 0.0
      %2922 = vmatmul.mubr.f32.gmra.mxu0 %v1885
      %v2923 = vpop.f32.mrf.mxu0
      %v2924 = vadd.f32 0.0, %v2923
      %v2925 = vpop.f32.mrf.mxu0
      %2926 = vmatprep.mubr.f32.mxu0 0.0
      %2927 = vmatmul.mubr.f32.gmra.mxu0 %v1887
      %v2928 = vpop.f32.mrf.mxu0
      %v2929 = vadd.f32 0.0, %v2928
      %v2930 = vpop.f32.mrf.mxu0
      %2931 = vmatprep.mubr.f32.mxu0 0.0
      %2932 = vmatmul.mubr.f32.gmra.mxu0 %v1889
      %v2933 = vpop.f32.mrf.mxu0
      %v2934 = vadd.f32 0.0, %v2933
      %v2935 = vpop.f32.mrf.mxu0
      %2936 = vmatprep.mubr.f32.mxu0 0.0
      %2937 = vmatmul.mubr.f32.gmra.mxu0 %v1891
      %v2938 = vpop.f32.mrf.mxu0
      %v2939 = vadd.f32 0.0, %v2938
      %v2940 = vpop.f32.mrf.mxu0
      %2941 = vmatprep.mubr.f32.mxu0 0.0
      %2942 = vmatmul.mubr.f32.gmra.mxu0 %v1893
      %v2943 = vpop.f32.mrf.mxu0
      %v2944 = vadd.f32 0.0, %v2943
      %v2945 = vpop.f32.mrf.mxu0
      %2946 = vmatprep.mubr.f32.mxu0 0.0
      %2947 = vmatmul.mubr.f32.gmra.mxu0 %v1895
      %v2948 = vpop.f32.mrf.mxu0
      %v2949 = vadd.f32 0.0, %v2948
      %v2950 = vpop.f32.mrf.mxu0
      %2951 = vmatprep.mubr.f32.mxu0 0.0
      %2952 = vmatmul.mubr.f32.gmra.mxu0 %v1897
      %v2953 = vpop.f32.mrf.mxu0
      %v2954 = vadd.f32 0.0, %v2953
      %v2955 = vpop.f32.mrf.mxu0
      %2956 = vmatprep.mubr.f32.mxu0 0.0
      %2957 = vmatmul.mubr.f32.gmra.mxu0 %v1899
      %v2958 = vpop.f32.mrf.mxu0
      %v2959 = vadd.f32 0.0, %v2958
      %v2960 = vpop.f32.mrf.mxu0
      %2961 = vmatprep.mubr.f32.mxu0 0.0
      %2962 = vmatmul.mubr.f32.gmra.mxu0 %v1901
      %v2963 = vpop.f32.mrf.mxu0
      %v2964 = vadd.f32 0.0, %v2963
      %v2965 = vpop.f32.mrf.mxu0
      %2966 = vmatprep.mubr.f32.mxu0 0.0
      %2967 = vmatmul.mubr.f32.gmra.mxu0 %v1903
      %v2968 = vpop.f32.mrf.mxu0
      %v2969 = vadd.f32 0.0, %v2968
      %v2970 = vpop.f32.mrf.mxu0
      %2971 = vmatprep.mubr.f32.mxu0 0.0
      %2972 = vmatmul.mubr.f32.gmra.mxu0 %v1905
      %v2973 = vpop.f32.mrf.mxu0
      %v2974 = vadd.f32 0.0, %v2973
      %v2975 = vpop.f32.mrf.mxu0
      %2976 = vmatprep.mubr.f32.mxu0 0.0
      %2977 = vmatmul.mubr.f32.gmra.mxu0 %v1907
      %v2978 = vpop.f32.mrf.mxu0
      %v2979 = vadd.f32 0.0, %v2978
      %v2980 = vpop.f32.mrf.mxu0
      %2981 = vmatprep.mubr.f32.mxu0 0.0
      %2982 = vmatmul.mubr.f32.gmra.mxu0 %v1909
      %v2983 = vpop.f32.mrf.mxu0
      %v2984 = vadd.f32 0.0, %v2983
      %v2985 = vpop.f32.mrf.mxu0
      %2986 = vmatprep.mubr.f32.mxu0 0.0
      %2987 = vmatmul.mubr.f32.gmra.mxu0 %v1911
      %v2988 = vpop.f32.mrf.mxu0
      %v2989 = vadd.f32 0.0, %v2988
      %v2990 = vpop.f32.mrf.mxu0
      %2991 = vmatprep.mubr.f32.mxu0 0.0
      %2992 = vmatmul.mubr.f32.gmra.mxu0 %v1913
      %v2993 = vpop.f32.mrf.mxu0
      %v2994 = vadd.f32 0.0, %v2993
      %v2995 = vpop.f32.mrf.mxu0
      %2996 = vmatprep.mubr.f32.mxu0 0.0
      %2997 = vmatmul.mubr.f32.gmra.mxu0 %v2777
      %v2998 = vpop.f32.mrf.mxu0
      %v2999 = vadd.f32 0.0, %v2998
      %v3000 = vpop.f32.mrf.mxu0
      %3001 = vmatprep.mubr.f32.mxu0 0.0
      %3002 = vmatmul.mubr.f32.gmra.mxu0 %v2779
      %v3003 = vpop.f32.mrf.mxu0
      %v3004 = vadd.f32 0.0, %v3003
      %v3005 = vpop.f32.mrf.mxu0
      %3006 = vdwg.mxu0
      %v3007 = vadd.f32 %v2726, %v2849
      %v3008 = vadd.f32 %v2727, %v2854
      %v3009 = vadd.f32 %v2728, %v2859
      %v3010 = vadd.f32 %v2729, %v2864
      %v3011 = vadd.f32 %v2730, %v2869
      %v3012 = vadd.f32 %v2731, %v2874
      %v3013 = vadd.f32 %v2732, %v2879
      %v3014 = vadd.f32 %v2733, %v2884
      %v3015 = vadd.f32 %v2734, %v2889
      %v3016 = vadd.f32 %v2735, %v2894
      %v3017 = vadd.f32 %v2736, %v2899
      %v3018 = vadd.f32 %v2737, %v2904
      %v3019 = vadd.f32 %v2738, %v2909
      %v3020 = vadd.f32 %v2739, %v2914
      %v3021 = vadd.f32 %v2740, %v2919
      %v3022 = vadd.f32 %v2741, %v2924
      %v3023 = vadd.f32 %v2742, %v2929
      %v3024 = vadd.f32 %v2743, %v2934
      %v3025 = vadd.f32 %v2744, %v2939
      %v3026 = vadd.f32 %v2745, %v2944
      %v3027 = vadd.f32 %v2746, %v2949
      %v3028 = vadd.f32 %v2747, %v2954
      %v3029 = vadd.f32 %v2748, %v2959
      %v3030 = vadd.f32 %v2749, %v2964
      %v3031 = vadd.f32 %v2750, %v2969
      %v3032 = vadd.f32 %v2751, %v2974
      %v3033 = vadd.f32 %v2752, %v2979
      %v3034 = vadd.f32 %v2753, %v2984
      %v3035 = vadd.f32 %v2754, %v2989
      %v3036 = vadd.f32 %v2755, %v2994
      %v3037 = vadd.f32 %v2756, %v2999
      %v3038 = vadd.f32 %v2757, %v3004
      %s3039 = scalar_lea.vmem %s1, 768
      %v3040 = vld [vmem:[%s3039] sm:$0xff]
      %v3041 = vld [vmem:[%s3039 + $0x8] sm:$0xff]
      %v3042 = vld [vmem:[%s3039 + $0x10] sm:$0xff]
      %v3043 = vld [vmem:[%s3039 + $0x18] sm:$0xff]
      %v3044 = vld [vmem:[%s3039 + $0x20] sm:$0xff]
      %v3045 = vld [vmem:[%s3039 + $0x28] sm:$0xff]
      %v3046 = vld [vmem:[%s3039 + $0x30] sm:$0xff]
      %v3047 = vld [vmem:[%s3039 + $0x38] sm:$0xff]
      %v3048 = vld [vmem:[%s3039 + $0x40] sm:$0xff]
      %v3049 = vld [vmem:[%s3039 + $0x48] sm:$0xff]
      %v3050 = vld [vmem:[%s3039 + $0x50] sm:$0xff]
      %v3051 = vld [vmem:[%s3039 + $0x58] sm:$0xff]
      %v3052 = vld [vmem:[%s3039 + $0x60] sm:$0xff]
      %v3053 = vld [vmem:[%s3039 + $0x68] sm:$0xff]
      %v3054 = vld [vmem:[%s3039 + $0x70] sm:$0xff]
      %v3055 = vld [vmem:[%s3039 + $0x78] sm:$0xff]
      %3056 = vmatprep.subr.mxu0 0.0
      %3057 = vmatpush1.msra.mxu0 %v3055
      %3058 = vmatprep.subr.mxu0 0.0
      %3059 = vmatpush1.msra.mxu0 %v3054
      %3060 = vmatprep.subr.mxu0 0.0
      %3061 = vmatpush1.msra.mxu0 %v3053
      %3062 = vmatprep.subr.mxu0 0.0
      %3063 = vmatpush1.msra.mxu0 %v3052
      %3064 = vmatprep.subr.mxu0 0.0
      %3065 = vmatpush1.msra.mxu0 %v3051
      %3066 = vmatprep.subr.mxu0 0.0
      %3067 = vmatpush1.msra.mxu0 %v3050
      %3068 = vmatprep.subr.mxu0 0.0
      %3069 = vmatpush1.msra.mxu0 %v3049
      %3070 = vmatprep.subr.mxu0 0.0
      %3071 = vmatpush1.msra.mxu0 %v3048
      %3072 = vmatprep.subr.mxu0 0.0
      %3073 = vmatpush1.msra.mxu0 %v3047
      %3074 = vmatprep.subr.mxu0 0.0
      %3075 = vmatpush1.msra.mxu0 %v3046
      %3076 = vmatprep.subr.mxu0 0.0
      %3077 = vmatpush1.msra.mxu0 %v3045
      %3078 = vmatprep.subr.mxu0 0.0
      %3079 = vmatpush1.msra.mxu0 %v3044
      %3080 = vmatprep.subr.mxu0 0.0
      %3081 = vmatpush1.msra.mxu0 %v3043
      %3082 = vmatprep.subr.mxu0 0.0
      %3083 = vmatpush1.msra.mxu0 %v3042
      %3084 = vmatprep.subr.mxu0 0.0
      %3085 = vmatpush1.msra.mxu0 %v3041
      %3086 = vmatprep.subr.mxu0 0.0
      %3087 = vmatpush1.msra.mxu0 %v3040
      %3088 = vmatprep.subr.mxu0 0.0
      %3089 = vmatpush2.msra.mxu0 0.0
      %3090 = vmatprep.subr.mxu0 0.0
      %3091 = vmatpush2.msra.mxu0 0.0
      %3092 = vmatprep.subr.mxu0 0.0
      %3093 = vmatpush2.msra.mxu0 0.0
      %3094 = vmatprep.subr.mxu0 0.0
      %3095 = vmatpush2.msra.mxu0 0.0
      %3096 = vmatprep.subr.mxu0 0.0
      %3097 = vmatpush2.msra.mxu0 0.0
      %3098 = vmatprep.subr.mxu0 0.0
      %3099 = vmatpush2.msra.mxu0 0.0
      %3100 = vmatprep.subr.mxu0 0.0
      %3101 = vmatpush2.msra.mxu0 0.0
      %3102 = vmatprep.subr.mxu0 0.0
      %3103 = vmatpush2.msra.mxu0 0.0
      %3104 = vmatprep.subr.mxu0 0.0
      %3105 = vmatpush2.msra.mxu0 0.0
      %3106 = vmatprep.subr.mxu0 0.0
      %3107 = vmatpush2.msra.mxu0 0.0
      %3108 = vmatprep.subr.mxu0 0.0
      %3109 = vmatpush2.msra.mxu0 0.0
      %3110 = vmatprep.subr.mxu0 0.0
      %3111 = vmatpush2.msra.mxu0 0.0
      %3112 = vmatprep.subr.mxu0 0.0
      %3113 = vmatpush2.msra.mxu0 0.0
      %3114 = vmatprep.subr.mxu0 0.0
      %3115 = vmatpush2.msra.mxu0 0.0
      %3116 = vmatprep.subr.mxu0 0.0
      %3117 = vmatpush2.msra.mxu0 0.0
      %3118 = vmatprep.subr.mxu0 0.0
      %3119 = vmatpush2.msra.mxu0 0.0
      %3120 = vmatprep.mubr.f32.mxu0 0.0
      %3121 = vmatmul.mubr.f32.gmra.mxu0 %v957
      %v3122 = vpop.f32.mrf.mxu0
      %v3123 = vadd.f32 0.0, %v3122
      %v3124 = vpop.f32.mrf.mxu0
      %3125 = vmatprep.mubr.f32.mxu0 0.0
      %3126 = vmatmul.mubr.f32.gmra.mxu0 %v959
      %v3127 = vpop.f32.mrf.mxu0
      %v3128 = vadd.f32 0.0, %v3127
      %v3129 = vpop.f32.mrf.mxu0
      %3130 = vmatprep.mubr.f32.mxu0 0.0
      %3131 = vmatmul.mubr.f32.gmra.mxu0 %v961
      %v3132 = vpop.f32.mrf.mxu0
      %v3133 = vadd.f32 0.0, %v3132
      %v3134 = vpop.f32.mrf.mxu0
      %3135 = vmatprep.mubr.f32.mxu0 0.0
      %3136 = vmatmul.mubr.f32.gmra.mxu0 %v963
      %v3137 = vpop.f32.mrf.mxu0
      %v3138 = vadd.f32 0.0, %v3137
      %v3139 = vpop.f32.mrf.mxu0
      %3140 = vmatprep.mubr.f32.mxu0 0.0
      %3141 = vmatmul.mubr.f32.gmra.mxu0 %v965
      %v3142 = vpop.f32.mrf.mxu0
      %v3143 = vadd.f32 0.0, %v3142
      %v3144 = vpop.f32.mrf.mxu0
      %3145 = vmatprep.mubr.f32.mxu0 0.0
      %3146 = vmatmul.mubr.f32.gmra.mxu0 %v967
      %v3147 = vpop.f32.mrf.mxu0
      %v3148 = vadd.f32 0.0, %v3147
      %v3149 = vpop.f32.mrf.mxu0
      %3150 = vmatprep.mubr.f32.mxu0 0.0
      %3151 = vmatmul.mubr.f32.gmra.mxu0 %v969
      %v3152 = vpop.f32.mrf.mxu0
      %v3153 = vadd.f32 0.0, %v3152
      %v3154 = vpop.f32.mrf.mxu0
      %3155 = vmatprep.mubr.f32.mxu0 0.0
      %3156 = vmatmul.mubr.f32.gmra.mxu0 %v971
      %v3157 = vpop.f32.mrf.mxu0
      %v3158 = vadd.f32 0.0, %v3157
      %v3159 = vpop.f32.mrf.mxu0
      %3160 = vmatprep.mubr.f32.mxu0 0.0
      %3161 = vmatmul.mubr.f32.gmra.mxu0 %v973
      %v3162 = vpop.f32.mrf.mxu0
      %v3163 = vadd.f32 0.0, %v3162
      %v3164 = vpop.f32.mrf.mxu0
      %3165 = vmatprep.mubr.f32.mxu0 0.0
      %3166 = vmatmul.mubr.f32.gmra.mxu0 %v975
      %v3167 = vpop.f32.mrf.mxu0
      %v3168 = vadd.f32 0.0, %v3167
      %v3169 = vpop.f32.mrf.mxu0
      %3170 = vmatprep.mubr.f32.mxu0 0.0
      %3171 = vmatmul.mubr.f32.gmra.mxu0 %v977
      %v3172 = vpop.f32.mrf.mxu0
      %v3173 = vadd.f32 0.0, %v3172
      %v3174 = vpop.f32.mrf.mxu0
      %3175 = vmatprep.mubr.f32.mxu0 0.0
      %3176 = vmatmul.mubr.f32.gmra.mxu0 %v979
      %v3177 = vpop.f32.mrf.mxu0
      %v3178 = vadd.f32 0.0, %v3177
      %v3179 = vpop.f32.mrf.mxu0
      %3180 = vmatprep.mubr.f32.mxu0 0.0
      %3181 = vmatmul.mubr.f32.gmra.mxu0 %v981
      %v3182 = vpop.f32.mrf.mxu0
      %v3183 = vadd.f32 0.0, %v3182
      %v3184 = vpop.f32.mrf.mxu0
      %3185 = vmatprep.mubr.f32.mxu0 0.0
      %3186 = vmatmul.mubr.f32.gmra.mxu0 %v983
      %v3187 = vpop.f32.mrf.mxu0
      %v3188 = vadd.f32 0.0, %v3187
      %v3189 = vpop.f32.mrf.mxu0
      %3190 = vmatprep.mubr.f32.mxu0 0.0
      %3191 = vmatmul.mubr.f32.gmra.mxu0 %v985
      %v3192 = vpop.f32.mrf.mxu0
      %v3193 = vadd.f32 0.0, %v3192
      %v3194 = vpop.f32.mrf.mxu0
      %3195 = vmatprep.mubr.f32.mxu0 0.0
      %3196 = vmatmul.mubr.f32.gmra.mxu0 %v987
      %v3197 = vpop.f32.mrf.mxu0
      %v3198 = vadd.f32 0.0, %v3197
      %v3199 = vpop.f32.mrf.mxu0
      %3200 = vmatprep.mubr.f32.mxu0 0.0
      %3201 = vmatmul.mubr.f32.gmra.mxu0 %v989
      %v3202 = vpop.f32.mrf.mxu0
      %v3203 = vadd.f32 0.0, %v3202
      %v3204 = vpop.f32.mrf.mxu0
      %3205 = vmatprep.mubr.f32.mxu0 0.0
      %3206 = vmatmul.mubr.f32.gmra.mxu0 %v991
      %v3207 = vpop.f32.mrf.mxu0
      %v3208 = vadd.f32 0.0, %v3207
      %v3209 = vpop.f32.mrf.mxu0
      %3210 = vmatprep.mubr.f32.mxu0 0.0
      %3211 = vmatmul.mubr.f32.gmra.mxu0 %v993
      %v3212 = vpop.f32.mrf.mxu0
      %v3213 = vadd.f32 0.0, %v3212
      %v3214 = vpop.f32.mrf.mxu0
      %3215 = vmatprep.mubr.f32.mxu0 0.0
      %3216 = vmatmul.mubr.f32.gmra.mxu0 %v995
      %v3217 = vpop.f32.mrf.mxu0
      %v3218 = vadd.f32 0.0, %v3217
      %v3219 = vpop.f32.mrf.mxu0
      %3220 = vmatprep.mubr.f32.mxu0 0.0
      %3221 = vmatmul.mubr.f32.gmra.mxu0 %v997
      %v3222 = vpop.f32.mrf.mxu0
      %v3223 = vadd.f32 0.0, %v3222
      %v3224 = vpop.f32.mrf.mxu0
      %3225 = vmatprep.mubr.f32.mxu0 0.0
      %3226 = vmatmul.mubr.f32.gmra.mxu0 %v999
      %v3227 = vpop.f32.mrf.mxu0
      %v3228 = vadd.f32 0.0, %v3227
      %v3229 = vpop.f32.mrf.mxu0
      %3230 = vmatprep.mubr.f32.mxu0 0.0
      %3231 = vmatmul.mubr.f32.gmra.mxu0 %v1001
      %v3232 = vpop.f32.mrf.mxu0
      %v3233 = vadd.f32 0.0, %v3232
      %v3234 = vpop.f32.mrf.mxu0
      %3235 = vmatprep.mubr.f32.mxu0 0.0
      %3236 = vmatmul.mubr.f32.gmra.mxu0 %v1003
      %v3237 = vpop.f32.mrf.mxu0
      %v3238 = vadd.f32 0.0, %v3237
      %v3239 = vpop.f32.mrf.mxu0
      %3240 = vmatprep.mubr.f32.mxu0 0.0
      %3241 = vmatmul.mubr.f32.gmra.mxu0 %v1005
      %v3242 = vpop.f32.mrf.mxu0
      %v3243 = vadd.f32 0.0, %v3242
      %v3244 = vpop.f32.mrf.mxu0
      %3245 = vmatprep.mubr.f32.mxu0 0.0
      %3246 = vmatmul.mubr.f32.gmra.mxu0 %v1007
      %v3247 = vpop.f32.mrf.mxu0
      %v3248 = vadd.f32 0.0, %v3247
      %v3249 = vpop.f32.mrf.mxu0
      %3250 = vmatprep.mubr.f32.mxu0 0.0
      %3251 = vmatmul.mubr.f32.gmra.mxu0 %v1009
      %v3252 = vpop.f32.mrf.mxu0
      %v3253 = vadd.f32 0.0, %v3252
      %v3254 = vpop.f32.mrf.mxu0
      %3255 = vmatprep.mubr.f32.mxu0 0.0
      %3256 = vmatmul.mubr.f32.gmra.mxu0 %v1011
      %v3257 = vpop.f32.mrf.mxu0
      %v3258 = vadd.f32 0.0, %v3257
      %v3259 = vpop.f32.mrf.mxu0
      %3260 = vmatprep.mubr.f32.mxu0 0.0
      %3261 = vmatmul.mubr.f32.gmra.mxu0 %v1013
      %v3262 = vpop.f32.mrf.mxu0
      %v3263 = vadd.f32 0.0, %v3262
      %v3264 = vpop.f32.mrf.mxu0
      %3265 = vmatprep.mubr.f32.mxu0 0.0
      %3266 = vmatmul.mubr.f32.gmra.mxu0 %v1015
      %v3267 = vpop.f32.mrf.mxu0
      %v3268 = vadd.f32 0.0, %v3267
      %v3269 = vpop.f32.mrf.mxu0
      %3270 = vmatprep.mubr.f32.mxu0 0.0
      %3271 = vmatmul.mubr.f32.gmra.mxu0 %v1050
      %v3272 = vpop.f32.mrf.mxu0
      %v3273 = vadd.f32 0.0, %v3272
      %v3274 = vpop.f32.mrf.mxu0
      %3275 = vmatprep.mubr.f32.mxu0 0.0
      %3276 = vmatmul.mubr.f32.gmra.mxu0 0.0
      %v3277 = vpop.f32.mrf.mxu0
      %v3278 = vadd.f32 0.0, %v3277
      %v3279 = vpop.f32.mrf.mxu0
      %3280 = vdwg.mxu0
      %v3281 = vadd.f32 %v3007, %v3123
      %v3282 = vadd.f32 %v3008, %v3128
      %v3283 = vadd.f32 %v3009, %v3133
      %v3284 = vadd.f32 %v3010, %v3138
      %v3285 = vadd.f32 %v3011, %v3143
      %v3286 = vadd.f32 %v3012, %v3148
      %v3287 = vadd.f32 %v3013, %v3153
      %v3288 = vadd.f32 %v3014, %v3158
      %v3289 = vadd.f32 %v3015, %v3163
      %v3290 = vadd.f32 %v3016, %v3168
      %v3291 = vadd.f32 %v3017, %v3173
      %v3292 = vadd.f32 %v3018, %v3178
      %v3293 = vadd.f32 %v3019, %v3183
      %v3294 = vadd.f32 %v3020, %v3188
      %v3295 = vadd.f32 %v3021, %v3193
      %v3296 = vadd.f32 %v3022, %v3198
      %v3297 = vadd.f32 %v3023, %v3203
      %v3298 = vadd.f32 %v3024, %v3208
      %v3299 = vadd.f32 %v3025, %v3213
      %v3300 = vadd.f32 %v3026, %v3218
      %v3301 = vadd.f32 %v3027, %v3223
      %v3302 = vadd.f32 %v3028, %v3228
      %v3303 = vadd.f32 %v3029, %v3233
      %v3304 = vadd.f32 %v3030, %v3238
      %v3305 = vadd.f32 %v3031, %v3243
      %v3306 = vadd.f32 %v3032, %v3248
      %v3307 = vadd.f32 %v3033, %v3253
      %v3308 = vadd.f32 %v3034, %v3258
      %v3309 = vadd.f32 %v3035, %v3263
      %v3310 = vadd.f32 %v3036, %v3268
      %v3311 = vadd.f32 %v3037, %v3273
      %v3312 = vadd.f32 %v3038, %v3278
      %s3313 = scalar_lea.vmem %s1, 896
      %v3314 = vld [vmem:[%s3313] sm:$0xff]
      %v3315 = vld [vmem:[%s3313 + $0x8] sm:$0xff]
      %v3316 = vld [vmem:[%s3313 + $0x10] sm:$0xff]
      %v3317 = vld [vmem:[%s3313 + $0x18] sm:$0xff]
      %v3318 = vld [vmem:[%s3313 + $0x20] sm:$0xff]
      %v3319 = vld [vmem:[%s3313 + $0x28] sm:$0xff]
      %v3320 = vld [vmem:[%s3313 + $0x30] sm:$0xff]
      %v3321 = vld [vmem:[%s3313 + $0x38] sm:$0xff]
      %v3322 = vld [vmem:[%s3313 + $0x40] sm:$0xff]
      %v3323 = vld [vmem:[%s3313 + $0x48] sm:$0xff]
      %v3324 = vld [vmem:[%s3313 + $0x50] sm:$0xff]
      %v3325 = vld [vmem:[%s3313 + $0x58] sm:$0xff]
      %v3326 = vld [vmem:[%s3313 + $0x60] sm:$0xff]
      %v3327 = vld [vmem:[%s3313 + $0x68] sm:$0xff]
      %v3328 = vld [vmem:[%s3313 + $0x70] sm:$0xff]
      %v3329 = vld [vmem:[%s3313 + $0x78] sm:$0xff]
      %v3330 = vsel %vm1284, %v2497, %v1285
      %3332 = vmatprep.subr.mxu0 0.0
      %3333 = vmatpush1.msra.mxu0 %v3329
      %3334 = vmatprep.subr.mxu0 0.0
      %3335 = vmatpush1.msra.mxu0 %v3328
      %3336 = vmatprep.subr.mxu0 0.0
      %3337 = vmatpush1.msra.mxu0 %v3327
      %3338 = vmatprep.subr.mxu0 0.0
      %3339 = vmatpush1.msra.mxu0 %v3326
      %3340 = vmatprep.subr.mxu0 0.0
      %3341 = vmatpush1.msra.mxu0 %v3325
      %3342 = vmatprep.subr.mxu0 0.0
      %3343 = vmatpush1.msra.mxu0 %v3324
      %3344 = vmatprep.subr.mxu0 0.0
      %3345 = vmatpush1.msra.mxu0 %v3323
      %3346 = vmatprep.subr.mxu0 0.0
      %3347 = vmatpush1.msra.mxu0 %v3322
      %3348 = vmatprep.subr.mxu0 0.0
      %3349 = vmatpush1.msra.mxu0 %v3321
      %3350 = vmatprep.subr.mxu0 0.0
      %3351 = vmatpush1.msra.mxu0 %v3320
      %3352 = vmatprep.subr.mxu0 0.0
      %3353 = vmatpush1.msra.mxu0 %v3319
      %3354 = vmatprep.subr.mxu0 0.0
      %3355 = vmatpush1.msra.mxu0 %v3318
      %3356 = vmatprep.subr.mxu0 0.0
      %3357 = vmatpush1.msra.mxu0 %v3317
      %3358 = vmatprep.subr.mxu0 0.0
      %3359 = vmatpush1.msra.mxu0 %v3316
      %3360 = vmatprep.subr.mxu0 0.0
      %3361 = vmatpush1.msra.mxu0 %v3315
      %3362 = vmatprep.subr.mxu0 0.0
      %3363 = vmatpush1.msra.mxu0 %v3314
      %3364 = vmatprep.subr.mxu0 0.0
      %3365 = vmatpush2.msra.mxu0 0.0
      %3366 = vmatprep.subr.mxu0 0.0
      %3367 = vmatpush2.msra.mxu0 0.0
      %3368 = vmatprep.subr.mxu0 0.0
      %3369 = vmatpush2.msra.mxu0 0.0
      %3370 = vmatprep.subr.mxu0 0.0
      %3371 = vmatpush2.msra.mxu0 0.0
      %3372 = vmatprep.subr.mxu0 0.0
      %3373 = vmatpush2.msra.mxu0 0.0
      %3374 = vmatprep.subr.mxu0 0.0
      %3375 = vmatpush2.msra.mxu0 0.0
      %3376 = vmatprep.subr.mxu0 0.0
      %3377 = vmatpush2.msra.mxu0 0.0
      %3378 = vmatprep.subr.mxu0 0.0
      %3379 = vmatpush2.msra.mxu0 0.0
      %3380 = vmatprep.subr.mxu0 0.0
      %3381 = vmatpush2.msra.mxu0 0.0
      %3382 = vmatprep.subr.mxu0 0.0
      %3383 = vmatpush2.msra.mxu0 0.0
      %3384 = vmatprep.subr.mxu0 0.0
      %3385 = vmatpush2.msra.mxu0 0.0
      %3386 = vmatprep.subr.mxu0 0.0
      %3387 = vmatpush2.msra.mxu0 0.0
      %3388 = vmatprep.subr.mxu0 0.0
      %3389 = vmatpush2.msra.mxu0 0.0
      %3390 = vmatprep.subr.mxu0 0.0
      %3391 = vmatpush2.msra.mxu0 0.0
      %3392 = vmatprep.subr.mxu0 0.0
      %3393 = vmatpush2.msra.mxu0 0.0
      %3394 = vmatprep.subr.mxu0 0.0
      %3395 = vmatpush2.msra.mxu0 0.0
      %3396 = vmatprep.mubr.f32.mxu0 0.0
      %3397 = vmatmul.mubr.f32.gmra.mxu0 %v1294
      %v3398 = vpop.f32.mrf.mxu0
      %v3399 = vadd.f32 0.0, %v3398
      %v3400 = vpop.f32.mrf.mxu0
      %3401 = vmatprep.mubr.f32.mxu0 0.0
      %3402 = vmatmul.mubr.f32.gmra.mxu0 %v1296
      %v3403 = vpop.f32.mrf.mxu0
      %v3404 = vadd.f32 0.0, %v3403
      %v3405 = vpop.f32.mrf.mxu0
      %3406 = vmatprep.mubr.f32.mxu0 0.0
      %3407 = vmatmul.mubr.f32.gmra.mxu0 %v1298
      %v3408 = vpop.f32.mrf.mxu0
      %v3409 = vadd.f32 0.0, %v3408
      %v3410 = vpop.f32.mrf.mxu0
      %3411 = vmatprep.mubr.f32.mxu0 0.0
      %3412 = vmatmul.mubr.f32.gmra.mxu0 %v1300
      %v3413 = vpop.f32.mrf.mxu0
      %v3414 = vadd.f32 0.0, %v3413
      %v3415 = vpop.f32.mrf.mxu0
      %3416 = vmatprep.mubr.f32.mxu0 0.0
      %3417 = vmatmul.mubr.f32.gmra.mxu0 %v1302
      %v3418 = vpop.f32.mrf.mxu0
      %v3419 = vadd.f32 0.0, %v3418
      %v3420 = vpop.f32.mrf.mxu0
      %3421 = vmatprep.mubr.f32.mxu0 0.0
      %3422 = vmatmul.mubr.f32.gmra.mxu0 %v1304
      %v3423 = vpop.f32.mrf.mxu0
      %v3424 = vadd.f32 0.0, %v3423
      %v3425 = vpop.f32.mrf.mxu0
      %3426 = vmatprep.mubr.f32.mxu0 0.0
      %3427 = vmatmul.mubr.f32.gmra.mxu0 %v1306
      %v3428 = vpop.f32.mrf.mxu0
      %v3429 = vadd.f32 0.0, %v3428
      %v3430 = vpop.f32.mrf.mxu0
      %3431 = vmatprep.mubr.f32.mxu0 0.0
      %3432 = vmatmul.mubr.f32.gmra.mxu0 %v1308
      %v3433 = vpop.f32.mrf.mxu0
      %v3434 = vadd.f32 0.0, %v3433
      %v3435 = vpop.f32.mrf.mxu0
      %3436 = vmatprep.mubr.f32.mxu0 0.0
      %3437 = vmatmul.mubr.f32.gmra.mxu0 %v1310
      %v3438 = vpop.f32.mrf.mxu0
      %v3439 = vadd.f32 0.0, %v3438
      %v3440 = vpop.f32.mrf.mxu0
      %3441 = vmatprep.mubr.f32.mxu0 0.0
      %3442 = vmatmul.mubr.f32.gmra.mxu0 %v1312
      %v3443 = vpop.f32.mrf.mxu0
      %v3444 = vadd.f32 0.0, %v3443
      %v3445 = vpop.f32.mrf.mxu0
      %3446 = vmatprep.mubr.f32.mxu0 0.0
      %3447 = vmatmul.mubr.f32.gmra.mxu0 %v1314
      %v3448 = vpop.f32.mrf.mxu0
      %v3449 = vadd.f32 0.0, %v3448
      %v3450 = vpop.f32.mrf.mxu0
      %3451 = vmatprep.mubr.f32.mxu0 0.0
      %3452 = vmatmul.mubr.f32.gmra.mxu0 %v1316
      %v3453 = vpop.f32.mrf.mxu0
      %v3454 = vadd.f32 0.0, %v3453
      %v3455 = vpop.f32.mrf.mxu0
      %3456 = vmatprep.mubr.f32.mxu0 0.0
      %3457 = vmatmul.mubr.f32.gmra.mxu0 %v1318
      %v3458 = vpop.f32.mrf.mxu0
      %v3459 = vadd.f32 0.0, %v3458
      %v3460 = vpop.f32.mrf.mxu0
      %3461 = vmatprep.mubr.f32.mxu0 0.0
      %3462 = vmatmul.mubr.f32.gmra.mxu0 %v1320
      %v3463 = vpop.f32.mrf.mxu0
      %v3464 = vadd.f32 0.0, %v3463
      %v3465 = vpop.f32.mrf.mxu0
      %3466 = vmatprep.mubr.f32.mxu0 0.0
      %3467 = vmatmul.mubr.f32.gmra.mxu0 %v1322
      %v3468 = vpop.f32.mrf.mxu0
      %v3469 = vadd.f32 0.0, %v3468
      %v3470 = vpop.f32.mrf.mxu0
      %3471 = vmatprep.mubr.f32.mxu0 0.0
      %3472 = vmatmul.mubr.f32.gmra.mxu0 %v1324
      %v3473 = vpop.f32.mrf.mxu0
      %v3474 = vadd.f32 0.0, %v3473
      %v3475 = vpop.f32.mrf.mxu0
      %3476 = vmatprep.mubr.f32.mxu0 0.0
      %3477 = vmatmul.mubr.f32.gmra.mxu0 %v1326
      %v3478 = vpop.f32.mrf.mxu0
      %v3479 = vadd.f32 0.0, %v3478
      %v3480 = vpop.f32.mrf.mxu0
      %3481 = vmatprep.mubr.f32.mxu0 0.0
      %3482 = vmatmul.mubr.f32.gmra.mxu0 %v1328
      %v3483 = vpop.f32.mrf.mxu0
      %v3484 = vadd.f32 0.0, %v3483
      %v3485 = vpop.f32.mrf.mxu0
      %3486 = vmatprep.mubr.f32.mxu0 0.0
      %3487 = vmatmul.mubr.f32.gmra.mxu0 %v1330
      %v3488 = vpop.f32.mrf.mxu0
      %v3489 = vadd.f32 0.0, %v3488
      %v3490 = vpop.f32.mrf.mxu0
      %3491 = vmatprep.mubr.f32.mxu0 0.0
      %3492 = vmatmul.mubr.f32.gmra.mxu0 %v1332
      %v3493 = vpop.f32.mrf.mxu0
      %v3494 = vadd.f32 0.0, %v3493
      %v3495 = vpop.f32.mrf.mxu0
      %3496 = vmatprep.mubr.f32.mxu0 0.0
      %3497 = vmatmul.mubr.f32.gmra.mxu0 %v1334
      %v3498 = vpop.f32.mrf.mxu0
      %v3499 = vadd.f32 0.0, %v3498
      %v3500 = vpop.f32.mrf.mxu0
      %3501 = vmatprep.mubr.f32.mxu0 0.0
      %3502 = vmatmul.mubr.f32.gmra.mxu0 %v1336
      %v3503 = vpop.f32.mrf.mxu0
      %v3504 = vadd.f32 0.0, %v3503
      %v3505 = vpop.f32.mrf.mxu0
      %3506 = vmatprep.mubr.f32.mxu0 0.0
      %3507 = vmatmul.mubr.f32.gmra.mxu0 %v1338
      %v3508 = vpop.f32.mrf.mxu0
      %v3509 = vadd.f32 0.0, %v3508
      %v3510 = vpop.f32.mrf.mxu0
      %3511 = vmatprep.mubr.f32.mxu0 0.0
      %3512 = vmatmul.mubr.f32.gmra.mxu0 %v1340
      %v3513 = vpop.f32.mrf.mxu0
      %v3514 = vadd.f32 0.0, %v3513
      %v3515 = vpop.f32.mrf.mxu0
      %3516 = vmatprep.mubr.f32.mxu0 0.0
      %3517 = vmatmul.mubr.f32.gmra.mxu0 %v1342
      %v3518 = vpop.f32.mrf.mxu0
      %v3519 = vadd.f32 0.0, %v3518
      %v3520 = vpop.f32.mrf.mxu0
      %3521 = vmatprep.mubr.f32.mxu0 0.0
      %3522 = vmatmul.mubr.f32.gmra.mxu0 %v1344
      %v3523 = vpop.f32.mrf.mxu0
      %v3524 = vadd.f32 0.0, %v3523
      %v3525 = vpop.f32.mrf.mxu0
      %3526 = vmatprep.mubr.f32.mxu0 0.0
      %3527 = vmatmul.mubr.f32.gmra.mxu0 %v1346
      %v3528 = vpop.f32.mrf.mxu0
      %v3529 = vadd.f32 0.0, %v3528
      %v3530 = vpop.f32.mrf.mxu0
      %3531 = vmatprep.mubr.f32.mxu0 0.0
      %3532 = vmatmul.mubr.f32.gmra.mxu0 %v1348
      %v3533 = vpop.f32.mrf.mxu0
      %v3534 = vadd.f32 0.0, %v3533
      %v3535 = vpop.f32.mrf.mxu0
      %3536 = vmatprep.mubr.f32.mxu0 0.0
      %3537 = vmatmul.mubr.f32.gmra.mxu0 %v2496
      %v3538 = vpop.f32.mrf.mxu0
      %v3539 = vadd.f32 0.0, %v3538
      %v3540 = vpop.f32.mrf.mxu0
      %3541 = vmatprep.mubr.f32.mxu0 0.0
      %3542 = vmatmul.mubr.f32.gmra.mxu0 %v2498
      %v3543 = vpop.f32.mrf.mxu0
      %v3544 = vadd.f32 0.0, %v3543
      %v3545 = vpop.f32.mrf.mxu0
      %3546 = vmatprep.mubr.f32.mxu0 0.0
      %3547 = vmatmul.mubr.f32.gmra.mxu0 %v3330
      %v3548 = vpop.f32.mrf.mxu0
      %v3549 = vadd.f32 0.0, %v3548
      %v3550 = vpop.f32.mrf.mxu0
      %3551 = vmatprep.mubr.f32.mxu0 0.0
      %3552 = vmatmul.mubr.f32.gmra.mxu0 %v1286
      %v3553 = vpop.f32.mrf.mxu0
      %v3554 = vadd.f32 0.0, %v3553
      %v3555 = vpop.f32.mrf.mxu0
      %3556 = vdwg.mxu0
      %v3557 = vadd.f32 %v3281, %v3399
      %v3558 = vadd.f32 %v3282, %v3404
      %v3559 = vadd.f32 %v3283, %v3409
      %v3560 = vadd.f32 %v3284, %v3414
      %v3561 = vadd.f32 %v3285, %v3419
      %v3562 = vadd.f32 %v3286, %v3424
      %v3563 = vadd.f32 %v3287, %v3429
      %v3564 = vadd.f32 %v3288, %v3434
      %v3565 = vadd.f32 %v3289, %v3439
      %v3566 = vadd.f32 %v3290, %v3444
      %v3567 = vadd.f32 %v3291, %v3449
      %v3568 = vadd.f32 %v3292, %v3454
      %v3569 = vadd.f32 %v3293, %v3459
      %v3570 = vadd.f32 %v3294, %v3464
      %v3571 = vadd.f32 %v3295, %v3469
      %v3572 = vadd.f32 %v3296, %v3474
      %v3573 = vadd.f32 %v3297, %v3479
      %v3574 = vadd.f32 %v3298, %v3484
      %v3575 = vadd.f32 %v3299, %v3489
      %v3576 = vadd.f32 %v3300, %v3494
      %v3577 = vadd.f32 %v3301, %v3499
      %v3578 = vadd.f32 %v3302, %v3504
      %v3579 = vadd.f32 %v3303, %v3509
      %v3580 = vadd.f32 %v3304, %v3514
      %v3581 = vadd.f32 %v3305, %v3519
      %v3582 = vadd.f32 %v3306, %v3524
      %v3583 = vadd.f32 %v3307, %v3529
      %v3584 = vadd.f32 %v3308, %v3534
      %v3585 = vadd.f32 %v3309, %v3539
      %v3586 = vadd.f32 %v3310, %v3544
      %v3587 = vadd.f32 %v3311, %v3549
      %v3588 = vadd.f32 %v3312, %v3554
      %s3589 = scalar_lea.vmem %s1, 1024
      %v3590 = vld [vmem:[%s3589] sm:$0xff]
      %v3591 = vld [vmem:[%s3589 + $0x8] sm:$0xff]
      %v3592 = vld [vmem:[%s3589 + $0x10] sm:$0xff]
      %v3593 = vld [vmem:[%s3589 + $0x18] sm:$0xff]
      %v3594 = vld [vmem:[%s3589 + $0x20] sm:$0xff]
      %v3595 = vld [vmem:[%s3589 + $0x28] sm:$0xff]
      %v3596 = vld [vmem:[%s3589 + $0x30] sm:$0xff]
      %v3597 = vld [vmem:[%s3589 + $0x38] sm:$0xff]
      %v3598 = vld [vmem:[%s3589 + $0x40] sm:$0xff]
      %v3599 = vld [vmem:[%s3589 + $0x48] sm:$0xff]
      %v3600 = vld [vmem:[%s3589 + $0x50] sm:$0xff]
      %v3601 = vld [vmem:[%s3589 + $0x58] sm:$0xff]
      %v3602 = vld [vmem:[%s3589 + $0x60] sm:$0xff]
      %v3603 = vld [vmem:[%s3589 + $0x68] sm:$0xff]
      %v3604 = vld [vmem:[%s3589 + $0x70] sm:$0xff]
      %v3605 = vld [vmem:[%s3589 + $0x78] sm:$0xff]
      %v3606 = vsel %vm1849, %v2778, %v1850
      %3608 = vmatprep.subr.mxu0 0.0
      %3609 = vmatpush1.msra.mxu0 %v3605
      %3610 = vmatprep.subr.mxu0 0.0
      %3611 = vmatpush1.msra.mxu0 %v3604
      %3612 = vmatprep.subr.mxu0 0.0
      %3613 = vmatpush1.msra.mxu0 %v3603
      %3614 = vmatprep.subr.mxu0 0.0
      %3615 = vmatpush1.msra.mxu0 %v3602
      %3616 = vmatprep.subr.mxu0 0.0
      %3617 = vmatpush1.msra.mxu0 %v3601
      %3618 = vmatprep.subr.mxu0 0.0
      %3619 = vmatpush1.msra.mxu0 %v3600
      %3620 = vmatprep.subr.mxu0 0.0
      %3621 = vmatpush1.msra.mxu0 %v3599
      %3622 = vmatprep.subr.mxu0 0.0
      %3623 = vmatpush1.msra.mxu0 %v3598
      %3624 = vmatprep.subr.mxu0 0.0
      %3625 = vmatpush1.msra.mxu0 %v3597
      %3626 = vmatprep.subr.mxu0 0.0
      %3627 = vmatpush1.msra.mxu0 %v3596
      %3628 = vmatprep.subr.mxu0 0.0
      %3629 = vmatpush1.msra.mxu0 %v3595
      %3630 = vmatprep.subr.mxu0 0.0
      %3631 = vmatpush1.msra.mxu0 %v3594
      %3632 = vmatprep.subr.mxu0 0.0
      %3633 = vmatpush1.msra.mxu0 %v3593
      %3634 = vmatprep.subr.mxu0 0.0
      %3635 = vmatpush1.msra.mxu0 %v3592
      %3636 = vmatprep.subr.mxu0 0.0
      %3637 = vmatpush1.msra.mxu0 %v3591
      %3638 = vmatprep.subr.mxu0 0.0
      %3639 = vmatpush1.msra.mxu0 %v3590
      %3640 = vmatprep.subr.mxu0 0.0
      %3641 = vmatpush2.msra.mxu0 0.0
      %3642 = vmatprep.subr.mxu0 0.0
      %3643 = vmatpush2.msra.mxu0 0.0
      %3644 = vmatprep.subr.mxu0 0.0
      %3645 = vmatpush2.msra.mxu0 0.0
      %3646 = vmatprep.subr.mxu0 0.0
      %3647 = vmatpush2.msra.mxu0 0.0
      %3648 = vmatprep.subr.mxu0 0.0
      %3649 = vmatpush2.msra.mxu0 0.0
      %3650 = vmatprep.subr.mxu0 0.0
      %3651 = vmatpush2.msra.mxu0 0.0
      %3652 = vmatprep.subr.mxu0 0.0
      %3653 = vmatpush2.msra.mxu0 0.0
      %3654 = vmatprep.subr.mxu0 0.0
      %3655 = vmatpush2.msra.mxu0 0.0
      %3656 = vmatprep.subr.mxu0 0.0
      %3657 = vmatpush2.msra.mxu0 0.0
      %3658 = vmatprep.subr.mxu0 0.0
      %3659 = vmatpush2.msra.mxu0 0.0
      %3660 = vmatprep.subr.mxu0 0.0
      %3661 = vmatpush2.msra.mxu0 0.0
      %3662 = vmatprep.subr.mxu0 0.0
      %3663 = vmatpush2.msra.mxu0 0.0
      %3664 = vmatprep.subr.mxu0 0.0
      %3665 = vmatpush2.msra.mxu0 0.0
      %3666 = vmatprep.subr.mxu0 0.0
      %3667 = vmatpush2.msra.mxu0 0.0
      %3668 = vmatprep.subr.mxu0 0.0
      %3669 = vmatpush2.msra.mxu0 0.0
      %3670 = vmatprep.subr.mxu0 0.0
      %3671 = vmatpush2.msra.mxu0 0.0
      %3672 = vmatprep.mubr.f32.mxu0 0.0
      %3673 = vmatmul.mubr.f32.gmra.mxu0 %v1859
      %v3674 = vpop.f32.mrf.mxu0
      %v3675 = vadd.f32 0.0, %v3674
      %v3676 = vpop.f32.mrf.mxu0
      %3677 = vmatprep.mubr.f32.mxu0 0.0
      %3678 = vmatmul.mubr.f32.gmra.mxu0 %v1861
      %v3679 = vpop.f32.mrf.mxu0
      %v3680 = vadd.f32 0.0, %v3679
      %v3681 = vpop.f32.mrf.mxu0
      %3682 = vmatprep.mubr.f32.mxu0 0.0
      %3683 = vmatmul.mubr.f32.gmra.mxu0 %v1863
      %v3684 = vpop.f32.mrf.mxu0
      %v3685 = vadd.f32 0.0, %v3684
      %v3686 = vpop.f32.mrf.mxu0
      %3687 = vmatprep.mubr.f32.mxu0 0.0
      %3688 = vmatmul.mubr.f32.gmra.mxu0 %v1865
      %v3689 = vpop.f32.mrf.mxu0
      %v3690 = vadd.f32 0.0, %v3689
      %v3691 = vpop.f32.mrf.mxu0
      %3692 = vmatprep.mubr.f32.mxu0 0.0
      %3693 = vmatmul.mubr.f32.gmra.mxu0 %v1867
      %v3694 = vpop.f32.mrf.mxu0
      %v3695 = vadd.f32 0.0, %v3694
      %v3696 = vpop.f32.mrf.mxu0
      %3697 = vmatprep.mubr.f32.mxu0 0.0
      %3698 = vmatmul.mubr.f32.gmra.mxu0 %v1869
      %v3699 = vpop.f32.mrf.mxu0
      %v3700 = vadd.f32 0.0, %v3699
      %v3701 = vpop.f32.mrf.mxu0
      %3702 = vmatprep.mubr.f32.mxu0 0.0
      %3703 = vmatmul.mubr.f32.gmra.mxu0 %v1871
      %v3704 = vpop.f32.mrf.mxu0
      %v3705 = vadd.f32 0.0, %v3704
      %v3706 = vpop.f32.mrf.mxu0
      %3707 = vmatprep.mubr.f32.mxu0 0.0
      %3708 = vmatmul.mubr.f32.gmra.mxu0 %v1873
      %v3709 = vpop.f32.mrf.mxu0
      %v3710 = vadd.f32 0.0, %v3709
      %v3711 = vpop.f32.mrf.mxu0
      %3712 = vmatprep.mubr.f32.mxu0 0.0
      %3713 = vmatmul.mubr.f32.gmra.mxu0 %v1875
      %v3714 = vpop.f32.mrf.mxu0
      %v3715 = vadd.f32 0.0, %v3714
      %v3716 = vpop.f32.mrf.mxu0
      %3717 = vmatprep.mubr.f32.mxu0 0.0
      %3718 = vmatmul.mubr.f32.gmra.mxu0 %v1877
      %v3719 = vpop.f32.mrf.mxu0
      %v3720 = vadd.f32 0.0, %v3719
      %v3721 = vpop.f32.mrf.mxu0
      %3722 = vmatprep.mubr.f32.mxu0 0.0
      %3723 = vmatmul.mubr.f32.gmra.mxu0 %v1879
      %v3724 = vpop.f32.mrf.mxu0
      %v3725 = vadd.f32 0.0, %v3724
      %v3726 = vpop.f32.mrf.mxu0
      %3727 = vmatprep.mubr.f32.mxu0 0.0
      %3728 = vmatmul.mubr.f32.gmra.mxu0 %v1881
      %v3729 = vpop.f32.mrf.mxu0
      %v3730 = vadd.f32 0.0, %v3729
      %v3731 = vpop.f32.mrf.mxu0
      %3732 = vmatprep.mubr.f32.mxu0 0.0
      %3733 = vmatmul.mubr.f32.gmra.mxu0 %v1883
      %v3734 = vpop.f32.mrf.mxu0
      %v3735 = vadd.f32 0.0, %v3734
      %v3736 = vpop.f32.mrf.mxu0
      %3737 = vmatprep.mubr.f32.mxu0 0.0
      %3738 = vmatmul.mubr.f32.gmra.mxu0 %v1885
      %v3739 = vpop.f32.mrf.mxu0
      %v3740 = vadd.f32 0.0, %v3739
      %v3741 = vpop.f32.mrf.mxu0
      %3742 = vmatprep.mubr.f32.mxu0 0.0
      %3743 = vmatmul.mubr.f32.gmra.mxu0 %v1887
      %v3744 = vpop.f32.mrf.mxu0
      %v3745 = vadd.f32 0.0, %v3744
      %v3746 = vpop.f32.mrf.mxu0
      %3747 = vmatprep.mubr.f32.mxu0 0.0
      %3748 = vmatmul.mubr.f32.gmra.mxu0 %v1889
      %v3749 = vpop.f32.mrf.mxu0
      %v3750 = vadd.f32 0.0, %v3749
      %v3751 = vpop.f32.mrf.mxu0
      %3752 = vmatprep.mubr.f32.mxu0 0.0
      %3753 = vmatmul.mubr.f32.gmra.mxu0 %v1891
      %v3754 = vpop.f32.mrf.mxu0
      %v3755 = vadd.f32 0.0, %v3754
      %v3756 = vpop.f32.mrf.mxu0
      %3757 = vmatprep.mubr.f32.mxu0 0.0
      %3758 = vmatmul.mubr.f32.gmra.mxu0 %v1893
      %v3759 = vpop.f32.mrf.mxu0
      %v3760 = vadd.f32 0.0, %v3759
      %v3761 = vpop.f32.mrf.mxu0
      %3762 = vmatprep.mubr.f32.mxu0 0.0
      %3763 = vmatmul.mubr.f32.gmra.mxu0 %v1895
      %v3764 = vpop.f32.mrf.mxu0
      %v3765 = vadd.f32 0.0, %v3764
      %v3766 = vpop.f32.mrf.mxu0
      %3767 = vmatprep.mubr.f32.mxu0 0.0
      %3768 = vmatmul.mubr.f32.gmra.mxu0 %v1897
      %v3769 = vpop.f32.mrf.mxu0
      %v3770 = vadd.f32 0.0, %v3769
      %v3771 = vpop.f32.mrf.mxu0
      %3772 = vmatprep.mubr.f32.mxu0 0.0
      %3773 = vmatmul.mubr.f32.gmra.mxu0 %v1899
      %v3774 = vpop.f32.mrf.mxu0
      %v3775 = vadd.f32 0.0, %v3774
      %v3776 = vpop.f32.mrf.mxu0
      %3777 = vmatprep.mubr.f32.mxu0 0.0
      %3778 = vmatmul.mubr.f32.gmra.mxu0 %v1901
      %v3779 = vpop.f32.mrf.mxu0
      %v3780 = vadd.f32 0.0, %v3779
      %v3781 = vpop.f32.mrf.mxu0
      %3782 = vmatprep.mubr.f32.mxu0 0.0
      %3783 = vmatmul.mubr.f32.gmra.mxu0 %v1903
      %v3784 = vpop.f32.mrf.mxu0
      %v3785 = vadd.f32 0.0, %v3784
      %v3786 = vpop.f32.mrf.mxu0
      %3787 = vmatprep.mubr.f32.mxu0 0.0
      %3788 = vmatmul.mubr.f32.gmra.mxu0 %v1905
      %v3789 = vpop.f32.mrf.mxu0
      %v3790 = vadd.f32 0.0, %v3789
      %v3791 = vpop.f32.mrf.mxu0
      %3792 = vmatprep.mubr.f32.mxu0 0.0
      %3793 = vmatmul.mubr.f32.gmra.mxu0 %v1907
      %v3794 = vpop.f32.mrf.mxu0
      %v3795 = vadd.f32 0.0, %v3794
      %v3796 = vpop.f32.mrf.mxu0
      %3797 = vmatprep.mubr.f32.mxu0 0.0
      %3798 = vmatmul.mubr.f32.gmra.mxu0 %v1909
      %v3799 = vpop.f32.mrf.mxu0
      %v3800 = vadd.f32 0.0, %v3799
      %v3801 = vpop.f32.mrf.mxu0
      %3802 = vmatprep.mubr.f32.mxu0 0.0
      %3803 = vmatmul.mubr.f32.gmra.mxu0 %v1911
      %v3804 = vpop.f32.mrf.mxu0
      %v3805 = vadd.f32 0.0, %v3804
      %v3806 = vpop.f32.mrf.mxu0
      %3807 = vmatprep.mubr.f32.mxu0 0.0
      %3808 = vmatmul.mubr.f32.gmra.mxu0 %v1913
      %v3809 = vpop.f32.mrf.mxu0
      %v3810 = vadd.f32 0.0, %v3809
      %v3811 = vpop.f32.mrf.mxu0
      %3812 = vmatprep.mubr.f32.mxu0 0.0
      %3813 = vmatmul.mubr.f32.gmra.mxu0 %v2777
      %v3814 = vpop.f32.mrf.mxu0
      %v3815 = vadd.f32 0.0, %v3814
      %v3816 = vpop.f32.mrf.mxu0
      %3817 = vmatprep.mubr.f32.mxu0 0.0
      %3818 = vmatmul.mubr.f32.gmra.mxu0 %v2779
      %v3819 = vpop.f32.mrf.mxu0
      %v3820 = vadd.f32 0.0, %v3819
      %v3821 = vpop.f32.mrf.mxu0
      %3822 = vmatprep.mubr.f32.mxu0 0.0
      %3823 = vmatmul.mubr.f32.gmra.mxu0 %v3606
      %v3824 = vpop.f32.mrf.mxu0
      %v3825 = vadd.f32 0.0, %v3824
      %v3826 = vpop.f32.mrf.mxu0
      %3827 = vmatprep.mubr.f32.mxu0 0.0
      %3828 = vmatmul.mubr.f32.gmra.mxu0 %v1851
      %v3829 = vpop.f32.mrf.mxu0
      %v3830 = vadd.f32 0.0, %v3829
      %v3831 = vpop.f32.mrf.mxu0
      %3832 = vdwg.mxu0
      %v3833 = vadd.f32 %v3557, %v3675
      %v3834 = vadd.f32 %v3558, %v3680
      %v3835 = vadd.f32 %v3559, %v3685
      %v3836 = vadd.f32 %v3560, %v3690
      %v3837 = vadd.f32 %v3561, %v3695
      %v3838 = vadd.f32 %v3562, %v3700
      %v3839 = vadd.f32 %v3563, %v3705
      %v3840 = vadd.f32 %v3564, %v3710
      %v3841 = vadd.f32 %v3565, %v3715
      %v3842 = vadd.f32 %v3566, %v3720
      %v3843 = vadd.f32 %v3567, %v3725
      %v3844 = vadd.f32 %v3568, %v3730
      %v3845 = vadd.f32 %v3569, %v3735
      %v3846 = vadd.f32 %v3570, %v3740
      %v3847 = vadd.f32 %v3571, %v3745
      %v3848 = vadd.f32 %v3572, %v3750
      %v3849 = vadd.f32 %v3573, %v3755
      %v3850 = vadd.f32 %v3574, %v3760
      %v3851 = vadd.f32 %v3575, %v3765
      %v3852 = vadd.f32 %v3576, %v3770
      %v3853 = vadd.f32 %v3577, %v3775
      %v3854 = vadd.f32 %v3578, %v3780
      %v3855 = vadd.f32 %v3579, %v3785
      %v3856 = vadd.f32 %v3580, %v3790
      %v3857 = vadd.f32 %v3581, %v3795
      %v3858 = vadd.f32 %v3582, %v3800
      %v3859 = vadd.f32 %v3583, %v3805
      %v3860 = vadd.f32 %v3584, %v3810
      %v3861 = vadd.f32 %v3585, %v3815
      %v3862 = vadd.f32 %v3586, %v3820
      %v3863 = vadd.f32 %v3587, %v3825
      %v3864 = vadd.f32 %v3588, %v3830
      %3865 = vst [vmem:[%s208] sm:$0xff] %v3833
      %3866 = vst [vmem:[%s208 + $0x8] sm:$0xff] %v3834
      %3867 = vst [vmem:[%s208 + $0x10] sm:$0xff] %v3835
      %3868 = vst [vmem:[%s208 + $0x18] sm:$0xff] %v3836
      %3869 = vst [vmem:[%s208 + $0x20] sm:$0xff] %v3837
      %3870 = vst [vmem:[%s208 + $0x28] sm:$0xff] %v3838
      %3871 = vst [vmem:[%s208 + $0x30] sm:$0xff] %v3839
      %3872 = vst [vmem:[%s208 + $0x38] sm:$0xff] %v3840
      %3873 = vst [vmem:[%s208 + $0x40] sm:$0xff] %v3841
      %3874 = vst [vmem:[%s208 + $0x48] sm:$0xff] %v3842
      %3875 = vst [vmem:[%s208 + $0x50] sm:$0xff] %v3843
      %3876 = vst [vmem:[%s208 + $0x58] sm:$0xff] %v3844
      %3877 = vst [vmem:[%s208 + $0x60] sm:$0xff] %v3845
      %3878 = vst [vmem:[%s208 + $0x68] sm:$0xff] %v3846
      %3879 = vst [vmem:[%s208 + $0x70] sm:$0xff] %v3847
      %3880 = vst [vmem:[%s208 + $0x78] sm:$0xff] %v3848
      %3881 = vst [vmem:[%s208 + $0x80] sm:$0xff] %v3849
      %3882 = vst [vmem:[%s208 + $0x88] sm:$0xff] %v3850
      %3883 = vst [vmem:[%s208 + $0x90] sm:$0xff] %v3851
      %3884 = vst [vmem:[%s208 + $0x98] sm:$0xff] %v3852
      %3885 = vst [vmem:[%s208 + $0xa0] sm:$0xff] %v3853
      %3886 = vst [vmem:[%s208 + $0xa8] sm:$0xff] %v3854
      %3887 = vst [vmem:[%s208 + $0xb0] sm:$0xff] %v3855
      %3888 = vst [vmem:[%s208 + $0xb8] sm:$0xff] %v3856
      %3889 = vst [vmem:[%s208 + $0xc0] sm:$0xff] %v3857
      %3890 = vst [vmem:[%s208 + $0xc8] sm:$0xff] %v3858
      %3891 = vst [vmem:[%s208 + $0xd0] sm:$0xff] %v3859
      %3892 = vst [vmem:[%s208 + $0xd8] sm:$0xff] %v3860
      %3893 = vst [vmem:[%s208 + $0xe0] sm:$0xff] %v3861
      %3894 = vst [vmem:[%s208 + $0xe8] sm:$0xff] %v3862
      %3895 = vst [vmem:[%s208 + $0xf0] sm:$0xff] %v3863
      %3896 = vst [vmem:[%s208 + $0xf8] sm:$0xff] %v3864
      %v3897 = vadd.f32 %v3833, %v3834
      %v3898 = vadd.f32 %v3897, %v3835
      %v3899 = vadd.f32 %v3898, %v3836
      %v3900 = vadd.f32 %v3899, %v3837
      %v3901 = vadd.f32 %v3900, %v3838
      %v3902 = vadd.f32 %v3901, %v3839
      %v3903 = vadd.f32 %v3902, %v3840
      %v3904 = vadd.f32 %v3903, %v3841
      %v3905 = vadd.f32 %v3904, %v3842
      %v3906 = vadd.f32 %v3905, %v3843
      %v3907 = vadd.f32 %v3906, %v3844
      %v3908 = vadd.f32 %v3907, %v3845
      %v3909 = vadd.f32 %v3908, %v3846
      %v3910 = vadd.f32 %v3909, %v3847
      %v3911 = vadd.f32 %v3910, %v3848
      %v3912 = vadd.f32 %v3911, %v3849
      %v3913 = vadd.f32 %v3912, %v3850
      %v3914 = vadd.f32 %v3913, %v3851
      %v3915 = vadd.f32 %v3914, %v3852
      %v3916 = vadd.f32 %v3915, %v3853
      %v3917 = vadd.f32 %v3916, %v3854
      %v3918 = vadd.f32 %v3917, %v3855
      %v3919 = vadd.f32 %v3918, %v3856
      %v3920 = vadd.f32 %v3919, %v3857
      %v3921 = vadd.f32 %v3920, %v3858
      %v3922 = vadd.f32 %v3921, %v3859
      %v3923 = vadd.f32 %v3922, %v3860
      %v3924 = vadd.f32 %v3923, %v3861
      %v3925 = vadd.f32 %v3924, %v3862
      %v3926 = vadd.f32 %v3925, %v3863
      %v3927 = vadd.f32 %v3926, %v3864
      %v3928 = vrot.slane %v3927, 4
      %v3929 = vadd.f32 %v3927, %v3928
      %v3930 = vrot.slane %v3929, 2
      %v3931 = vadd.f32 %v3929, %v3930
      %v3932 = vrot.slane %v3931, 1
      %v3933 = vadd.f32 %v3931, %v3932
      %3934 = vst [vmem:[%s211] sm:$0x1] %v3933
      %v3935 = vmul.f32 %v3833, %v3833
      %v3936 = vmul.f32 %v3834, %v3834
      %v3937 = vmul.f32 %v3835, %v3835
      %v3938 = vmul.f32 %v3836, %v3836
      %v3939 = vmul.f32 %v3837, %v3837
      %v3940 = vmul.f32 %v3838, %v3838
      %v3941 = vmul.f32 %v3839, %v3839
      %v3942 = vmul.f32 %v3840, %v3840
      %v3943 = vmul.f32 %v3841, %v3841
      %v3944 = vmul.f32 %v3842, %v3842
      %v3945 = vmul.f32 %v3843, %v3843
      %v3946 = vmul.f32 %v3844, %v3844
      %v3947 = vmul.f32 %v3845, %v3845
      %v3948 = vmul.f32 %v3846, %v3846
      %v3949 = vmul.f32 %v3847, %v3847
      %v3950 = vmul.f32 %v3848, %v3848
      %v3951 = vmul.f32 %v3849, %v3849
      %v3952 = vmul.f32 %v3850, %v3850
      %v3953 = vmul.f32 %v3851, %v3851
      %v3954 = vmul.f32 %v3852, %v3852
      %v3955 = vmul.f32 %v3853, %v3853
      %v3956 = vmul.f32 %v3854, %v3854
      %v3957 = vmul.f32 %v3855, %v3855
      %v3958 = vmul.f32 %v3856, %v3856
      %v3959 = vmul.f32 %v3857, %v3857
      %v3960 = vmul.f32 %v3858, %v3858
      %v3961 = vmul.f32 %v3859, %v3859
      %v3962 = vmul.f32 %v3860, %v3860
      %v3963 = vmul.f32 %v3861, %v3861
      %v3964 = vmul.f32 %v3862, %v3862
      %v3965 = vmul.f32 %v3863, %v3863
      %v3966 = vmul.f32 %v3864, %v3864
      %v3967 = vadd.f32 %v3935, %v3936
      %v3968 = vadd.f32 %v3967, %v3937
      %v3969 = vadd.f32 %v3968, %v3938
      %v3970 = vadd.f32 %v3969, %v3939
      %v3971 = vadd.f32 %v3970, %v3940
      %v3972 = vadd.f32 %v3971, %v3941
      %v3973 = vadd.f32 %v3972, %v3942
      %v3974 = vadd.f32 %v3973, %v3943
      %v3975 = vadd.f32 %v3974, %v3944
      %v3976 = vadd.f32 %v3975, %v3945
      %v3977 = vadd.f32 %v3976, %v3946
      %v3978 = vadd.f32 %v3977, %v3947
      %v3979 = vadd.f32 %v3978, %v3948
      %v3980 = vadd.f32 %v3979, %v3949
      %v3981 = vadd.f32 %v3980, %v3950
      %v3982 = vadd.f32 %v3981, %v3951
      %v3983 = vadd.f32 %v3982, %v3952
      %v3984 = vadd.f32 %v3983, %v3953
      %v3985 = vadd.f32 %v3984, %v3954
      %v3986 = vadd.f32 %v3985, %v3955
      %v3987 = vadd.f32 %v3986, %v3956
      %v3988 = vadd.f32 %v3987, %v3957
      %v3989 = vadd.f32 %v3988, %v3958
      %v3990 = vadd.f32 %v3989, %v3959
      %v3991 = vadd.f32 %v3990, %v3960
      %v3992 = vadd.f32 %v3991, %v3961
      %v3993 = vadd.f32 %v3992, %v3962
      %v3994 = vadd.f32 %v3993, %v3963
      %v3995 = vadd.f32 %v3994, %v3964
      %v3996 = vadd.f32 %v3995, %v3965
      %v3997 = vadd.f32 %v3996, %v3966
      %v3998 = vrot.slane %v3997, 4
      %v3999 = vadd.f32 %v3997, %v3998
      %v4000 = vrot.slane %v3999, 2
      %v4001 = vadd.f32 %v3999, %v4000
      %v4002 = vrot.slane %v4001, 1
      %v4003 = vadd.f32 %v4001, %v4002
      %4004 = vst [vmem:[%s214] sm:$0x1] %v4003
      %p4005 = scmp.lt.s32.totalorder %s16, 1
      %s4006 = scalar_select %p4005, %s16, 1
      %s4007 = smul.addr %s4006, 32
      %s4008 = smul.addr %s4007, 8
      %s4009 = scalar_lea.vmem %s2, %s4008
      %p4010 = scmp.lt.s32.totalorder %s16, 1
      %s4011 = scalar_select %p4010, %s16, 1
      %s4012 = scalar_lea.vmem %s3, %s4011
      %p4013 = scmp.lt.s32.totalorder %s16, 1
      %s4014 = scalar_select %p4013, %s16, 1
      %s4015 = scalar_lea.vmem %s4, %s4014
      // Predicated region
      $region29: #{residual_block_forward.3} parent=27 // pred_check
        %p4016 = pneg %p81
      $region30: #{residual_block_forward.3} parent=27 // pred_check_branch
        %4018 = sbr.rel (%p4016) target = $region32
      $region31: #{residual_block_forward.3} parent=27 // pred_region
        _
      $region32: #{residual_block_forward.3} parent=27 // pred_fallthru
        _
      // Predicated region
      $region33: #{residual_block_forward.3} parent=27 // pred_check
        %p4019 = pneg %p107
      $region34: #{residual_block_forward.3} parent=27 // pred_check_branch
        %4021 = sbr.rel (%p4019) target = $region36
      $region35: #{residual_block_forward.3} parent=27 // pred_region
        _
      $region36: #{residual_block_forward.3} parent=27 // pred_fallthru
        _
      // Predicated region
      $region37: #{residual_block_forward.3} parent=27 // pred_check
        %p4022 = pneg %p133
      $region38: #{residual_block_forward.3} parent=27 // pred_check_branch
        %4024 = sbr.rel (%p4022) target = $region40
      $region39: #{residual_block_forward.3} parent=27 // pred_region
        _
      $region40: #{residual_block_forward.3} parent=27 // pred_fallthru
        _
    $region28: #{residual_block_forward.3} parent=5 // pred_fallthru
      _
    %p4025 = scmp.le.s32.totalorder 2, %s11
    // Predicated region
    $region41: #{residual_block_forward.3} parent=5 // pred_check
      %p4026 = pneg %p4025
    $region42: #{residual_block_forward.3} parent=5 // pred_check_branch
      %4028 = sbr.rel (%p4026) target = $region44
    $region43: #{residual_block_forward.3} parent=5 // pred_region
      %s4029 = ssub.s32 %s11, 2
      // Predicated region
      $region45: #{residual_block_forward.3} parent=43 // pred_check
        %p4030 = pneg %p87
      $region46: #{residual_block_forward.3} parent=43 // pred_check_branch
        %4032 = sbr.rel (%p4030) target = $region48
      $region47: #{residual_block_forward.3} parent=43 // pred_region
        %p4033 = scmp.lt.s32.totalorder %s17, 1
        %s4034 = scalar_select %p4033, %s17, 1
        %s4035 = smul.addr %s4034, 32
        %s4036 = smul.addr %s4035, 8
        %s4037 = scalar_lea.vmem %s2, %s4036
      $region48: #{residual_block_forward.3} parent=43 // pred_fallthru
        _
      // Predicated region
      $region49: #{residual_block_forward.3} parent=43 // pred_check
        %p4038 = pneg %p113
      $region50: #{residual_block_forward.3} parent=43 // pred_check_branch
        %4040 = sbr.rel (%p4038) target = $region52
      $region51: #{residual_block_forward.3} parent=43 // pred_region
        %p4041 = scmp.lt.s32.totalorder %s17, 1
        %s4042 = scalar_select %p4041, %s17, 1
        %s4043 = scalar_lea.vmem %s3, %s4042
      $region52: #{residual_block_forward.3} parent=43 // pred_fallthru
        _
      // Predicated region
      $region53: #{residual_block_forward.3} parent=43 // pred_check
        %p4044 = pneg %p139
      $region54: #{residual_block_forward.3} parent=43 // pred_check_branch
        %4046 = sbr.rel (%p4044) target = $region56
      $region55: #{residual_block_forward.3} parent=43 // pred_region
        %p4047 = scmp.lt.s32.totalorder %s17, 1
        %s4048 = scalar_select %p4047, %s17, 1
        %s4049 = scalar_lea.vmem %s4, %s4048
      $region56: #{residual_block_forward.3} parent=43 // pred_fallthru
        _
    $region44: #{residual_block_forward.3} parent=5 // pred_fallthru
      _
  $region6: #{residual_block_forward.3} parent=0 // loop_footer
    %s15 = sadd.s32 1, %s11
  $region7: #{residual_block_forward.3} parent=0 // loop_footer_branch
    %10 = sbr.rel target = $region3
  $region8: #{residual_block_forward.3} parent=0 // loop_exit
    _

// kernel: residual_block_forward.4
$region0: #{residual_block_forward.4}
  #allocation0 [shape = 'u32[]', space=smem, size = 0x4, offset = 0x4, fixed_abs, tag = 'smem constant byte address 0x4 - core index']
  #allocation1 [shape = 'u32[144,128]{1,0:T(1,128)}', space=vmem, size = 0x12000, scoped, tag = 'internal scratch']
  %s0 = inlined_call_operand.vmem [shape: f32[2,256,128], index: 0, kind: input, shape index: {}]
  %s1 = inlined_call_operand.vmem [shape: f32[1,128], index: 1, kind: input, shape index: {}]
  %s2 = inlined_call_operand.vmem [shape: f32[1,128], index: 2, kind: input, shape index: {}]
  %s3 = inlined_call_operand.vmem [shape: f32[9,128,128], index: 3, kind: input, shape index: {}]
  %s4 = inlined_call_operand.vmem [shape: f32[2,256,128], index: 4, kind: output, shape index: {0}]
  %s5 = inlined_call_operand.vmem [shape: f32[2,1,128], index: 5, kind: output, shape index: {1}]
  %s6 = inlined_call_operand.vmem [shape: f32[2,1,128], index: 6, kind: output, shape index: {2}]
  %7 = xla_tuple %s4, %s5, %s6
  %s8 = sld [smem:[#allocation0]]
  $region65: #{residual_block_forward.4} parent=0
    _
  %s10 = ssub.s32 1, %s8
  %s11 = scalar_select 0, %s10, %s8
  loop: start=0, step=1, limit=4
  $region2: #{residual_block_forward.4} parent=0 // loop_pre_header
    _
  $region3: #{residual_block_forward.4} parent=0 // loop_header
    %s13 = sphi 0, %s17
    %p14 = scmp.ge.s32.totalorder %s13, 4
    %s23 = sphi 0, %s25
    %s26 = sphi 0, %s23
    %s27 = sphi 0, %s26
    %s43 = sphi 0, %s27
    %s47 = sphi 0, %s47
    %s49 = sphi 0, %s47
    %s50 = sphi 0, %s49
    %s64 = sphi 0, %s50
    %s68 = sphi 0, %s68
    %s70 = sphi 0, %s68
    %s71 = sphi 0, %s70
    %s85 = sphi 0, %s71
    %s89 = sphi 0, %s89
    %s91 = sphi 0, %s89
    %s92 = sphi 0, %s91
    %s106 = sphi 0, %s92
    %s112 = sphi 0, %s114
    %s115 = sphi 0, %s112
    %s116 = sphi 0, %s115
    %s132 = sphi 0, %s116
    %s138 = sphi 0, %s140
    %s141 = sphi 0, %s138
    %s142 = sphi 0, %s141
    %s158 = sphi 0, %s142
    %s164 = sphi 0, %s166
    %s167 = sphi 0, %s164
    %s168 = sphi 0, %s167
    %s184 = sphi 0, %s168
  $region4: #{residual_block_forward.4} parent=0 // loop_header_branch
    %16 = sbr.rel (%p14) target = $region8
  $region5: #{residual_block_forward.4} parent=0 // loop_body
    %s18 = ssub.s32 %s13, 1
    %s19 = ssub.s32 %s13, 2
    %s20 = sadd.s32 %s13, 1
    %s21 = ssub.s32 %s13, %s20
    %p22 = scmp.eq.s32.totalorder %s21, 0
    %s24 = sadd.s32 %s23, 1
    %s25 = scalar_select %p22, %s23, %s24
    %p28 = pneg %p22
    %p29 = scmp.eq.s32.totalorder %s13, 1
    %p30 = por %p28, %p29
    %p31 = scmp.ne.s32.totalorder %s23, %s26
    %p32 = scmp.eq.s32.totalorder %s13, 0
    %p33 = por %p31, %p32
    %p34 = scmp.ne.s32.totalorder %s23, %s26
    %p35 = scmp.eq.s32.totalorder %s18, 1
    %p36 = por %p34, %p35
    %p37 = scmp.ne.s32.totalorder %s26, %s27
    %p38 = scmp.eq.s32.totalorder %s18, 0
    %p39 = por %p37, %p38
    %p40 = scmp.ne.s32.totalorder %s26, %s27
    %p41 = scmp.eq.s32.totalorder %s19, 1
    %p42 = por %p40, %p41
    %p44 = scmp.ne.s32.totalorder %s27, %s43
    %p45 = scmp.eq.s32.totalorder %s19, 0
    %p46 = por %p44, %p45
    %s48 = sadd.s32 %s47, 1
    %p51 = scmp.eq.s32.totalorder %s13, 1
    %p52 = scmp.ne.s32.totalorder %s47, %s49
    %p53 = scmp.eq.s32.totalorder %s13, 0
    %p54 = por %p52, %p53
    %p55 = scmp.ne.s32.totalorder %s47, %s49
    %p56 = scmp.eq.s32.totalorder %s18, 1
    %p57 = por %p55, %p56
    %p58 = scmp.ne.s32.totalorder %s49, %s50
    %p59 = scmp.eq.s32.totalorder %s18, 0
    %p60 = por %p58, %p59
    %p61 = scmp.ne.s32.totalorder %s49, %s50
    %p62 = scmp.eq.s32.totalorder %s19, 1
    %p63 = por %p61, %p62
    %p65 = scmp.ne.s32.totalorder %s50, %s64
    %p66 = scmp.eq.s32.totalorder %s19, 0
    %p67 = por %p65, %p66
    %s69 = sadd.s32 %s68, 1
    %p72 = scmp.eq.s32.totalorder %s13, 1
    %p73 = scmp.ne.s32.totalorder %s68, %s70
    %p74 = scmp.eq.s32.totalorder %s13, 0
    %p75 = por %p73, %p74
    %p76 = scmp.ne.s32.totalorder %s68, %s70
    %p77 = scmp.eq.s32.totalorder %s18, 1
    %p78 = por %p76, %p77
    %p79 = scmp.ne.s32.totalorder %s70, %s71
    %p80 = scmp.eq.s32.totalorder %s18, 0
    %p81 = por %p79, %p80
    %p82 = scmp.ne.s32.totalorder %s70, %s71
    %p83 = scmp.eq.s32.totalorder %s19, 1
    %p84 = por %p82, %p83
    %p86 = scmp.ne.s32.totalorder %s71, %s85
    %p87 = scmp.eq.s32.totalorder %s19, 0
    %p88 = por %p86, %p87
    %s90 = sadd.s32 %s89, 1
    %p93 = scmp.eq.s32.totalorder %s13, 1
    %p94 = scmp.ne.s32.totalorder %s89, %s91
    %p95 = scmp.eq.s32.totalorder %s13, 0
    %p96 = por %p94, %p95
    %p97 = scmp.ne.s32.totalorder %s89, %s91
    %p98 = scmp.eq.s32.totalorder %s18, 1
    %p99 = por %p97, %p98
    %p100 = scmp.ne.s32.totalorder %s91, %s92
    %p101 = scmp.eq.s32.totalorder %s18, 0
    %p102 = por %p100, %p101
    %p103 = scmp.ne.s32.totalorder %s91, %s92
    %p104 = scmp.eq.s32.totalorder %s19, 1
    %p105 = por %p103, %p104
    %p107 = scmp.ne.s32.totalorder %s92, %s106
    %p108 = scmp.eq.s32.totalorder %s19, 0
    %p109 = por %p107, %p108
    %s110 = ssub.s32 %s13, %s20
    %p111 = scmp.eq.s32.totalorder %s110, 0
    %s113 = sadd.s32 %s112, 1
    %s114 = scalar_select %p111, %s112, %s113
    %p117 = pneg %p111
    %p118 = scmp.eq.s32.totalorder %s13, 1
    %p119 = por %p117, %p118
    %p120 = scmp.ne.s32.totalorder %s112, %s115
    %p121 = scmp.eq.s32.totalorder %s13, 0
    %p122 = por %p120, %p121
    %p123 = scmp.ne.s32.totalorder %s112, %s115
    %p124 = scmp.eq.s32.totalorder %s18, 1
    %p125 = por %p123, %p124
    %p126 = scmp.ne.s32.totalorder %s115, %s116
    %p127 = scmp.eq.s32.totalorder %s18, 0
    %p128 = por %p126, %p127
    %p129 = scmp.ne.s32.totalorder %s115, %s116
    %p130 = scmp.eq.s32.totalorder %s19, 1
    %p131 = por %p129, %p130
    %p133 = scmp.ne.s32.totalorder %s116, %s132
    %p134 = scmp.eq.s32.totalorder %s19, 0
    %p135 = por %p133, %p134
    %s136 = ssub.s32 %s13, %s20
    %p137 = scmp.eq.s32.totalorder %s136, 0
    %s139 = sadd.s32 %s138, 1
    %s140 = scalar_select %p137, %s138, %s139
    %p143 = pneg %p137
    %p144 = scmp.eq.s32.totalorder %s13, 1
    %p145 = por %p143, %p144
    %p146 = scmp.ne.s32.totalorder %s138, %s141
    %p147 = scmp.eq.s32.totalorder %s13, 0
    %p148 = por %p146, %p147
    %p149 = scmp.ne.s32.totalorder %s138, %s141
    %p150 = scmp.eq.s32.totalorder %s18, 1
    %p151 = por %p149, %p150
    %p152 = scmp.ne.s32.totalorder %s141, %s142
    %p153 = scmp.eq.s32.totalorder %s18, 0
    %p154 = por %p152, %p153
    %p155 = scmp.ne.s32.totalorder %s141, %s142
    %p156 = scmp.eq.s32.totalorder %s19, 1
    %p157 = por %p155, %p156
    %p159 = scmp.ne.s32.totalorder %s142, %s158
    %p160 = scmp.eq.s32.totalorder %s19, 0
    %p161 = por %p159, %p160
    %s162 = ssub.s32 %s13, %s20
    %p163 = scmp.eq.s32.totalorder %s162, 0
    %s165 = sadd.s32 %s164, 1
    %s166 = scalar_select %p163, %s164, %s165
    %p169 = pneg %p163
    %p170 = scmp.eq.s32.totalorder %s13, 1
    %p171 = por %p169, %p170
    %p172 = scmp.ne.s32.totalorder %s164, %s167
    %p173 = scmp.eq.s32.totalorder %s13, 0
    %p174 = por %p172, %p173
    %p175 = scmp.ne.s32.totalorder %s164, %s167
    %p176 = scmp.eq.s32.totalorder %s18, 1
    %p177 = por %p175, %p176
    %p178 = scmp.ne.s32.totalorder %s167, %s168
    %p179 = scmp.eq.s32.totalorder %s18, 0
    %p180 = por %p178, %p179
    %p181 = scmp.ne.s32.totalorder %s167, %s168
    %p182 = scmp.eq.s32.totalorder %s19, 1
    %p183 = por %p181, %p182
    %p185 = scmp.ne.s32.totalorder %s168, %s184
    %p186 = scmp.eq.s32.totalorder %s19, 0
    %p187 = por %p185, %p186
    %p188 = scmp.le.s32.totalorder 1, %s13
    %p189 = scmp.lt.s32.totalorder %s13, 3
    %p190 = pnand %p188, %p189
    %p191 = pneg %p190
    // Predicated region
    $region9: #{residual_block_forward.4} parent=5 // pred_check
      _
    $region10: #{residual_block_forward.4} parent=5 // pred_check_branch
      %193 = sbr.rel (%p190) target = $region12
    $region11: #{residual_block_forward.4} parent=5 // pred_region
      %s194 = ssub.s32 %s13, 1
      // Predicated region
      $region13: #{residual_block_forward.4} parent=11 // pred_check
        %p195 = pneg %p60
      $region14: #{residual_block_forward.4} parent=11 // pred_check_branch
        %197 = sbr.rel (%p195) target = $region16
      $region15: #{residual_block_forward.4} parent=11 // pred_region
        _
      $region16: #{residual_block_forward.4} parent=11 // pred_fallthru
        _
      // Predicated region
      $region17: #{residual_block_forward.4} parent=11 // pred_check
        %p198 = pneg %p81
      $region18: #{residual_block_forward.4} parent=11 // pred_check_branch
        %200 = sbr.rel (%p198) target = $region20
      $region19: #{residual_block_forward.4} parent=11 // pred_region
        _
      $region20: #{residual_block_forward.4} parent=11 // pred_fallthru
        _
      // Predicated region
      $region21: #{residual_block_forward.4} parent=11 // pred_check
        %p201 = pneg %p102
      $region22: #{residual_block_forward.4} parent=11 // pred_check_branch
        %203 = sbr.rel (%p201) target = $region24
      $region23: #{residual_block_forward.4} parent=11 // pred_region
        _
      $region24: #{residual_block_forward.4} parent=11 // pred_fallthru
        _
    $region12: #{residual_block_forward.4} parent=5 // pred_fallthru
      _
    %p204 = scmp.lt.s32.totalorder %s13, 2
    // Predicated region
    $region25: #{residual_block_forward.4} parent=5 // pred_check
      %p205 = pneg %p204
    $region26: #{residual_block_forward.4} parent=5 // pred_check_branch
      %207 = sbr.rel (%p205) target = $region28
    $region27: #{residual_block_forward.4} parent=5 // pred_region
      // Predicated region
      $region29: #{residual_block_forward.4} parent=27 // pred_check
        %p208 = pneg %p33
      $region30: #{residual_block_forward.4} parent=27 // pred_check_branch
        %210 = sbr.rel (%p208) target = $region32
      $region31: #{residual_block_forward.4} parent=27 // pred_region
        %p211 = scmp.lt.s32.totalorder %s13, 1
        %s212 = scalar_select %p211, %s13, 1
        %s213 = smul.addr %s212, 32
        %s214 = smul.addr %s213, 8
        %s215 = scalar_lea.vmem %s0, %s214
      $region32: #{residual_block_forward.4} parent=27 // pred_fallthru
        _
    $region28: #{residual_block_forward.4} parent=5 // pred_fallthru
      _
    %p216 = scmp.le.s32.totalorder 1, %s13
    %p217 = scmp.lt.s32.totalorder %s13, 3
    %p218 = pnand %p216, %p217
    %p219 = pneg %p218
    // Predicated region
    $region33: #{residual_block_forward.4} parent=5 // pred_check
      _
    $region34: #{residual_block_forward.4} parent=5 // pred_check_branch
      %221 = sbr.rel (%p218) target = $region36
    $region35: #{residual_block_forward.4} parent=5 // pred_region
      %s222 = ssub.s32 %s13, 1
      %p223 = scmp.lt.s32.totalorder %s18, 1
      %s224 = scalar_select %p223, %s18, 1
      %s225 = smul.addr %s224, 32
      %s226 = smul.addr %s225, 8
      %s227 = scalar_lea.vmem %s0, %s226
      %p228 = pneg %p39
      %p229 = pneg %p36
      %p230 = pneg %p60
      %p231 = pneg %p57
      %p232 = pneg %p81
      %p233 = pneg %p78
      %p234 = pneg %p102
      %p235 = pneg %p99
      %p236 = pneg %p128
      %p237 = pneg %p125
      %p238 = scmp.lt.s32.totalorder %s18, 1
      %s239 = scalar_select %p238, %s18, 1
      %s240 = smul.addr %s239, 32
      %s241 = smul.addr %s240, 8
      %s242 = scalar_lea.vmem %s4, %s241
      %p243 = pneg %p154
      %p244 = pneg %p151
      %p245 = scmp.lt.s32.totalorder %s18, 1
      %s246 = scalar_select %p245, %s18, 1
      %s247 = scalar_lea.vmem %s5, %s246
      %p248 = pneg %p180
      %p249 = pneg %p177
      %p250 = scmp.lt.s32.totalorder %s18, 1
      %s251 = scalar_select %p250, %s18, 1
      %s252 = scalar_lea.vmem %s6, %s251
      %p253 = scmp.lt.s32.totalorder %s18, 1
      %s254 = scalar_select %p253, %s18, 1
      %s255 = smul.addr %s254, 32
      %s256 = smul.addr %s255, 8
      %s257 = scalar_lea.vmem %s0, %s256
      %p258 = scmp.lt.s32.totalorder %s18, 1
      %s259 = scalar_select %p258, %s18, 1
      %s260 = smul.addr %s259, 32
      %s261 = smul.addr %s260, 8
      %s262 = scalar_lea.vmem %s4, %s261
      %p263 = scmp.lt.s32.totalorder %s18, 1
      %s264 = scalar_select %p263, %s18, 1
      %s265 = scalar_lea.vmem %s5, %s264
      %p266 = scmp.lt.s32.totalorder %s18, 1
      %s267 = scalar_select %p266, %s18, 1
      %s268 = scalar_lea.vmem %s6, %s267
      %v269 = vld [vmem:[%s257] sm:$0xff]
      %v270 = vld [vmem:[%s257 + $0x8] sm:$0xff]
      %v271 = vld [vmem:[%s257 + $0x10] sm:$0xff]
      %v272 = vld [vmem:[%s257 + $0x18] sm:$0xff]
      %v273 = vld [vmem:[%s257 + $0x20] sm:$0xff]
      %v274 = vld [vmem:[%s257 + $0x28] sm:$0xff]
      %v275 = vld [vmem:[%s257 + $0x30] sm:$0xff]
      %v276 = vld [vmem:[%s257 + $0x38] sm:$0xff]
      %v277 = vld [vmem:[%s257 + $0x40] sm:$0xff]
      %v278 = vld [vmem:[%s257 + $0x48] sm:$0xff]
      %v279 = vld [vmem:[%s257 + $0x50] sm:$0xff]
      %v280 = vld [vmem:[%s257 + $0x58] sm:$0xff]
      %v281 = vld [vmem:[%s257 + $0x60] sm:$0xff]
      %v282 = vld [vmem:[%s257 + $0x68] sm:$0xff]
      %v283 = vld [vmem:[%s257 + $0x70] sm:$0xff]
      %v284 = vld [vmem:[%s257 + $0x78] sm:$0xff]
      %v285 = vld [vmem:[%s257 + $0x80] sm:$0xff]
      %v286 = vld [vmem:[%s257 + $0x88] sm:$0xff]
      %v287 = vld [vmem:[%s257 + $0x90] sm:$0xff]
      %v288 = vld [vmem:[%s257 + $0x98] sm:$0xff]
      %v289 = vld [vmem:[%s257 + $0xa0] sm:$0xff]
      %v290 = vld [vmem:[%s257 + $0xa8] sm:$0xff]
      %v291 = vld [vmem:[%s257 + $0xb0] sm:$0xff]
      %v292 = vld [vmem:[%s257 + $0xb8] sm:$0xff]
      %v293 = vld [vmem:[%s257 + $0xc0] sm:$0xff]
      %v294 = vld [vmem:[%s257 + $0xc8] sm:$0xff]
      %v295 = vld [vmem:[%s257 + $0xd0] sm:$0xff]
      %v296 = vld [vmem:[%s257 + $0xd8] sm:$0xff]
      %v297 = vld [vmem:[%s257 + $0xe0] sm:$0xff]
      %v298 = vld [vmem:[%s257 + $0xe8] sm:$0xff]
      %v299 = vld [vmem:[%s257 + $0xf0] sm:$0xff]
      %v300 = vld [vmem:[%s257 + $0xf8] sm:$0xff]
      %v301 = vld [vmem:[%s1] sm:$0x1]
      %v303 = vlaneseq
      %v304 = vshrl.u32 %v303, 7
      %v305 = vsub.s32 0, %v304
      %v306 = vrot.slane %v301, %v305
      %v308 = vmul.f32 %v269, %v306
      %v309 = vmul.f32 %v270, %v306
      %v310 = vmul.f32 %v271, %v306
      %v311 = vmul.f32 %v272, %v306
      %v312 = vmul.f32 %v273, %v306
      %v313 = vmul.f32 %v274, %v306
      %v314 = vmul.f32 %v275, %v306
      %v315 = vmul.f32 %v276, %v306
      %v316 = vmul.f32 %v277, %v306
      %v317 = vmul.f32 %v278, %v306
      %v318 = vmul.f32 %v279, %v306
      %v319 = vmul.f32 %v280, %v306
      %v320 = vmul.f32 %v281, %v306
      %v321 = vmul.f32 %v282, %v306
      %v322 = vmul.f32 %v283, %v306
      %v323 = vmul.f32 %v284, %v306
      %v324 = vmul.f32 %v285, %v306
      %v325 = vmul.f32 %v286, %v306
      %v326 = vmul.f32 %v287, %v306
      %v327 = vmul.f32 %v288, %v306
      %v328 = vmul.f32 %v289, %v306
      %v329 = vmul.f32 %v290, %v306
      %v330 = vmul.f32 %v291, %v306
      %v331 = vmul.f32 %v292, %v306
      %v332 = vmul.f32 %v293, %v306
      %v333 = vmul.f32 %v294, %v306
      %v334 = vmul.f32 %v295, %v306
      %v335 = vmul.f32 %v296, %v306
      %v336 = vmul.f32 %v297, %v306
      %v337 = vmul.f32 %v298, %v306
      %v338 = vmul.f32 %v299, %v306
      %v339 = vmul.f32 %v300, %v306
      %v340 = vld [vmem:[%s2] sm:$0x1]
      %v342 = vlaneseq
      %v343 = vshrl.u32 %v342, 7
      %v344 = vsub.s32 0, %v343
      %v345 = vrot.slane %v340, %v344
      %v347 = vadd.f32 %v308, %v345
      %v348 = vadd.f32 %v309, %v345
      %v349 = vadd.f32 %v310, %v345
      %v350 = vadd.f32 %v311, %v345
      %v351 = vadd.f32 %v312, %v345
      %v352 = vadd.f32 %v313, %v345
      %v353 = vadd.f32 %v314, %v345
      %v354 = vadd.f32 %v315, %v345
      %v355 = vadd.f32 %v316, %v345
      %v356 = vadd.f32 %v317, %v345
      %v357 = vadd.f32 %v318, %v345
      %v358 = vadd.f32 %v319, %v345
      %v359 = vadd.f32 %v320, %v345
      %v360 = vadd.f32 %v321, %v345
      %v361 = vadd.f32 %v322, %v345
      %v362 = vadd.f32 %v323, %v345
      %v363 = vadd.f32 %v324, %v345
      %v364 = vadd.f32 %v325, %v345
      %v365 = vadd.f32 %v326, %v345
      %v366 = vadd.f32 %v327, %v345
      %v367 = vadd.f32 %v328, %v345
      %v368 = vadd.f32 %v329, %v345
      %v369 = vadd.f32 %v330, %v345
      %v370 = vadd.f32 %v331, %v345
      %v371 = vadd.f32 %v332, %v345
      %v372 = vadd.f32 %v333, %v345
      %v373 = vadd.f32 %v334, %v345
      %v374 = vadd.f32 %v335, %v345
      %v375 = vadd.f32 %v336, %v345
      %v376 = vadd.f32 %v337, %v345
      %v377 = vadd.f32 %v338, %v345
      %v378 = vadd.f32 %v339, %v345
      %v379 = vmax.f32 %v347, 0.0
      %v380 = vmax.f32 %v348, 0.0
      %v381 = vmax.f32 %v349, 0.0
      %v382 = vmax.f32 %v350, 0.0
      %v383 = vmax.f32 %v351, 0.0
      %v384 = vmax.f32 %v352, 0.0
      %v385 = vmax.f32 %v353, 0.0
      %v386 = vmax.f32 %v354, 0.0
      %v387 = vmax.f32 %v355, 0.0
      %v388 = vmax.f32 %v356, 0.0
      %v389 = vmax.f32 %v357, 0.0
      %v390 = vmax.f32 %v358, 0.0
      %v391 = vmax.f32 %v359, 0.0
      %v392 = vmax.f32 %v360, 0.0
      %v393 = vmax.f32 %v361, 0.0
      %v394 = vmax.f32 %v362, 0.0
      %v395 = vmax.f32 %v363, 0.0
      %v396 = vmax.f32 %v364, 0.0
      %v397 = vmax.f32 %v365, 0.0
      %v398 = vmax.f32 %v366, 0.0
      %v399 = vmax.f32 %v367, 0.0
      %v400 = vmax.f32 %v368, 0.0
      %v401 = vmax.f32 %v369, 0.0
      %v402 = vmax.f32 %v370, 0.0
      %v403 = vmax.f32 %v371, 0.0
      %v404 = vmax.f32 %v372, 0.0
      %v405 = vmax.f32 %v373, 0.0
      %v406 = vmax.f32 %v374, 0.0
      %v407 = vmax.f32 %v375, 0.0
      %v408 = vmax.f32 %v376, 0.0
      %v409 = vmax.f32 %v377, 0.0
      %v410 = vmax.f32 %v378, 0.0
      %v411 = vlaneseq
      %v412 = vshrl.u32 %v411, 7
      %v413 = vadd.s32 %v412, 8
      %v414 = vadd.s32 %v412, 16
      %v415 = vadd.s32 %v412, 24
      %v416 = vadd.s32 %v412, 32
      %v417 = vadd.s32 %v412, 40
      %v418 = vadd.s32 %v412, 48
      %v419 = vadd.s32 %v412, 56
      %v420 = vadd.s32 %v412, 64
      %v421 = vadd.s32 %v412, 72
      %v422 = vadd.s32 %v412, 80
      %v423 = vadd.s32 %v412, 88
      %v424 = vadd.s32 %v412, 96
      %v425 = vadd.s32 %v412, 104
      %v426 = vadd.s32 %v412, 112
      %v427 = vadd.s32 %v412, 120
      %v428 = vadd.s32 %v412, 128
      %v429 = vadd.s32 %v412, 136
      %v430 = vadd.s32 %v412, 144
      %v431 = vadd.s32 %v412, 152
      %v432 = vadd.s32 %v412, 160
      %v433 = vadd.s32 %v412, 168
      %v434 = vadd.s32 %v412, 176
      %v435 = vadd.s32 %v412, 184
      %v436 = vadd.s32 %v412, 192
      %v437 = vadd.s32 %v412, 200
      %v438 = vadd.s32 %v412, 208
      %v439 = vadd.s32 %v412, 216
      %v440 = vadd.s32 %v412, 224
      %v441 = vadd.s32 %v412, 232
      %v442 = vadd.s32 %v412, 240
      %v443 = vadd.s32 %v412, 248
      %vm444 = vcmp.lt.s32.totalorder %v412, 0
      %v445 = vsub.s32 0, %v412
      %v446 = vsel %vm444, %v445, %v412
      %v447 = vshrl.u32 %v446, 4
      %v448 = vand.u32 %v446, 15
      %v449 = vsub.s32 0, %v448
      %v450 = vsel %vm444, %v449, %v448
      %vm451 = vcmp.lt.s32.totalorder %v413, 0
      %v452 = vsub.s32 0, %v413
      %v453 = vsel %vm451, %v452, %v413
      %v454 = vshrl.u32 %v453, 4
      %v455 = vand.u32 %v453, 15
      %v456 = vsub.s32 0, %v455
      %v457 = vsel %vm451, %v456, %v455
      %vm458 = vcmp.lt.s32.totalorder %v414, 0
      %v459 = vsub.s32 0, %v414
      %v460 = vsel %vm458, %v459, %v414
      %v461 = vshrl.u32 %v460, 4
      %v462 = vand.u32 %v460, 15
      %v463 = vsub.s32 0, %v462
      %v464 = vsel %vm458, %v463, %v462
      %vm465 = vcmp.lt.s32.totalorder %v415, 0
      %v466 = vsub.s32 0, %v415
      %v467 = vsel %vm465, %v466, %v415
      %v468 = vshrl.u32 %v467, 4
      %v469 = vand.u32 %v467, 15
      %v470 = vsub.s32 0, %v469
      %v471 = vsel %vm465, %v470, %v469
      %vm472 = vcmp.lt.s32.totalorder %v416, 0
      %v473 = vsub.s32 0, %v416
      %v474 = vsel %vm472, %v473, %v416
      %v475 = vshrl.u32 %v474, 4
      %v476 = vand.u32 %v474, 15
      %v477 = vsub.s32 0, %v476
      %v478 = vsel %vm472, %v477, %v476
      %vm479 = vcmp.lt.s32.totalorder %v417, 0
      %v480 = vsub.s32 0, %v417
      %v481 = vsel %vm479, %v480, %v417
      %v482 = vshrl.u32 %v481, 4
      %v483 = vand.u32 %v481, 15
      %v484 = vsub.s32 0, %v483
      %v485 = vsel %vm479, %v484, %v483
      %vm486 = vcmp.lt.s32.totalorder %v418, 0
      %v487 = vsub.s32 0, %v418
      %v488 = vsel %vm486, %v487, %v418
      %v489 = vshrl.u32 %v488, 4
      %v490 = vand.u32 %v488, 15
      %v491 = vsub.s32 0, %v490
      %v492 = vsel %vm486, %v491, %v490
      %vm493 = vcmp.lt.s32.totalorder %v419, 0
      %v494 = vsub.s32 0, %v419
      %v495 = vsel %vm493, %v494, %v419
      %v496 = vshrl.u32 %v495, 4
      %v497 = vand.u32 %v495, 15
      %v498 = vsub.s32 0, %v497
      %v499 = vsel %vm493, %v498, %v497
      %vm500 = vcmp.lt.s32.totalorder %v420, 0
      %v501 = vsub.s32 0, %v420
      %v502 = vsel %vm500, %v501, %v420
      %v503 = vshrl.u32 %v502, 4
      %v504 = vand.u32 %v502, 15
      %v505 = vsub.s32 0, %v504
      %v506 = vsel %vm500, %v505, %v504
      %vm507 = vcmp.lt.s32.totalorder %v421, 0
      %v508 = vsub.s32 0, %v421
      %v509 = vsel %vm507, %v508, %v421
      %v510 = vshrl.u32 %v509, 4
      %v511 = vand.u32 %v509, 15
      %v512 = vsub.s32 0, %v511
      %v513 = vsel %vm507, %v512, %v511
      %vm514 = vcmp.lt.s32.totalorder %v422, 0
      %v515 = vsub.s32 0, %v422
      %v516 = vsel %vm514, %v515, %v422
      %v517 = vshrl.u32 %v516, 4
      %v518 = vand.u32 %v516, 15
      %v519 = vsub.s32 0, %v518
      %v520 = vsel %vm514, %v519, %v518
      %vm521 = vcmp.lt.s32.totalorder %v423, 0
      %v522 = vsub.s32 0, %v423
      %v523 = vsel %vm521, %v522, %v423
      %v524 = vshrl.u32 %v523, 4
      %v525 = vand.u32 %v523, 15
      %v526 = vsub.s32 0, %v525
      %v527 = vsel %vm521, %v526, %v525
      %vm528 = vcmp.lt.s32.totalorder %v424, 0
      %v529 = vsub.s32 0, %v424
      %v530 = vsel %vm528, %v529, %v424
      %v531 = vshrl.u32 %v530, 4
      %v532 = vand.u32 %v530, 15
      %v533 = vsub.s32 0, %v532
      %v534 = vsel %vm528, %v533, %v532
      %vm535 = vcmp.lt.s32.totalorder %v425, 0
      %v536 = vsub.s32 0, %v425
      %v537 = vsel %vm535, %v536, %v425
      %v538 = vshrl.u32 %v537, 4
      %v539 = vand.u32 %v537, 15
      %v540 = vsub.s32 0, %v539
      %v541 = vsel %vm535, %v540, %v539
      %vm542 = vcmp.lt.s32.totalorder %v426, 0
      %v543 = vsub.s32 0, %v426
      %v544 = vsel %vm542, %v543, %v426
      %v545 = vshrl.u32 %v544, 4
      %v546 = vand.u32 %v544, 15
      %v547 = vsub.s32 0, %v546
      %v548 = vsel %vm542, %v547, %v546
      %vm549 = vcmp.lt.s32.totalorder %v427, 0
      %v550 = vsub.s32 0, %v427
      %v551 = vsel %vm549, %v550, %v427
      %v552 = vshrl.u32 %v551, 4
      %v553 = vand.u32 %v551, 15
      %v554 = vsub.s32 0, %v553
      %v555 = vsel %vm549, %v554, %v553
      %vm556 = vcmp.lt.s32.totalorder %v428, 0
      %v557 = vsub.s32 0, %v428
      %v558 = vsel %vm556, %v557, %v428
      %v559 = vshrl.u32 %v558, 4
      %v560 = vand.u32 %v558, 15
      %v561 = vsub.s32 0, %v560
      %v562 = vsel %vm556, %v561, %v560
      %vm563 = vcmp.lt.s32.totalorder %v429, 0
      %v564 = vsub.s32 0, %v429
      %v565 = vsel %vm563, %v564, %v429
      %v566 = vshrl.u32 %v565, 4
      %v567 = vand.u32 %v565, 15
      %v568 = vsub.s32 0, %v567
      %v569 = vsel %vm563, %v568, %v567
      %vm570 = vcmp.lt.s32.totalorder %v430, 0
      %v571 = vsub.s32 0, %v430
      %v572 = vsel %vm570, %v571, %v430
      %v573 = vshrl.u32 %v572, 4
      %v574 = vand.u32 %v572, 15
      %v575 = vsub.s32 0, %v574
      %v576 = vsel %vm570, %v575, %v574
      %vm577 = vcmp.lt.s32.totalorder %v431, 0
      %v578 = vsub.s32 0, %v431
      %v579 = vsel %vm577, %v578, %v431
      %v580 = vshrl.u32 %v579, 4
      %v581 = vand.u32 %v579, 15
      %v582 = vsub.s32 0, %v581
      %v583 = vsel %vm577, %v582, %v581
      %vm584 = vcmp.lt.s32.totalorder %v432, 0
      %v585 = vsub.s32 0, %v432
      %v586 = vsel %vm584, %v585, %v432
      %v587 = vshrl.u32 %v586, 4
      %v588 = vand.u32 %v586, 15
      %v589 = vsub.s32 0, %v588
      %v590 = vsel %vm584, %v589, %v588
      %vm591 = vcmp.lt.s32.totalorder %v433, 0
      %v592 = vsub.s32 0, %v433
      %v593 = vsel %vm591, %v592, %v433
      %v594 = vshrl.u32 %v593, 4
      %v595 = vand.u32 %v593, 15
      %v596 = vsub.s32 0, %v595
      %v597 = vsel %vm591, %v596, %v595
      %vm598 = vcmp.lt.s32.totalorder %v434, 0
      %v599 = vsub.s32 0, %v434
      %v600 = vsel %vm598, %v599, %v434
      %v601 = vshrl.u32 %v600, 4
      %v602 = vand.u32 %v600, 15
      %v603 = vsub.s32 0, %v602
      %v604 = vsel %vm598, %v603, %v602
      %vm605 = vcmp.lt.s32.totalorder %v435, 0
      %v606 = vsub.s32 0, %v435
      %v607 = vsel %vm605, %v606, %v435
      %v608 = vshrl.u32 %v607, 4
      %v609 = vand.u32 %v607, 15
      %v610 = vsub.s32 0, %v609
      %v611 = vsel %vm605, %v610, %v609
      %vm612 = vcmp.lt.s32.totalorder %v436, 0
      %v613 = vsub.s32 0, %v436
      %v614 = vsel %vm612, %v613, %v436
      %v615 = vshrl.u32 %v614, 4
      %v616 = vand.u32 %v614, 15
      %v617 = vsub.s32 0, %v616
      %v618 = vsel %vm612, %v617, %v616
      %vm619 = vcmp.lt.s32.totalorder %v437, 0
      %v620 = vsub.s32 0, %v437
      %v621 = vsel %vm619, %v620, %v437
      %v622 = vshrl.u32 %v621, 4
      %v623 = vand.u32 %v621, 15
      %v624 = vsub.s32 0, %v623
      %v625 = vsel %vm619, %v624, %v623
      %vm626 = vcmp.lt.s32.totalorder %v438, 0
      %v627 = vsub.s32 0, %v438
      %v628 = vsel %vm626, %v627, %v438
      %v629 = vshrl.u32 %v628, 4
      %v630 = vand.u32 %v628, 15
      %v631 = vsub.s32 0, %v630
      %v632 = vsel %vm626, %v631, %v630
      %vm633 = vcmp.lt.s32.totalorder %v439, 0
      %v634 = vsub.s32 0, %v439
      %v635 = vsel %vm633, %v634, %v439
      %v636 = vshrl.u32 %v635, 4
      %v637 = vand.u32 %v635, 15
      %v638 = vsub.s32 0, %v637
      %v639 = vsel %vm633, %v638, %v637
      %vm640 = vcmp.lt.s32.totalorder %v440, 0
      %v641 = vsub.s32 0, %v440
      %v642 = vsel %vm640, %v641, %v440
      %v643 = vshrl.u32 %v642, 4
      %v644 = vand.u32 %v642, 15
      %v645 = vsub.s32 0, %v644
      %v646 = vsel %vm640, %v645, %v644
      %vm647 = vcmp.lt.s32.totalorder %v441, 0
      %v648 = vsub.s32 0, %v441
      %v649 = vsel %vm647, %v648, %v441
      %v650 = vshrl.u32 %v649, 4
      %v651 = vand.u32 %v649, 15
      %v652 = vsub.s32 0, %v651
      %v653 = vsel %vm647, %v652, %v651
      %vm654 = vcmp.lt.s32.totalorder %v442, 0
      %v655 = vsub.s32 0, %v442
      %v656 = vsel %vm654, %v655, %v442
      %v657 = vshrl.u32 %v656, 4
      %v658 = vand.u32 %v656, 15
      %v659 = vsub.s32 0, %v658
      %v660 = vsel %vm654, %v659, %v658
      %vm661 = vcmp.lt.s32.totalorder %v443, 0
      %v662 = vsub.s32 0, %v443
      %v663 = vsel %vm661, %v662, %v443
      %v664 = vshrl.u32 %v663, 4
      %v665 = vand.u32 %v663, 15
      %v666 = vsub.s32 0, %v665
      %v667 = vsel %vm661, %v666, %v665
      %vm668 = vcmp.ne.s32.totalorder %v450, 0
      %vm669 = vcmp.ne.s32.totalorder %v457, 0
      %vm670 = vcmp.ne.s32.totalorder %v464, 0
      %vm671 = vcmp.ne.s32.totalorder %v471, 0
      %vm672 = vcmp.ne.s32.totalorder %v478, 0
      %vm673 = vcmp.ne.s32.totalorder %v485, 0
      %vm674 = vcmp.ne.s32.totalorder %v492, 0
      %vm675 = vcmp.ne.s32.totalorder %v499, 0
      %vm676 = vcmp.ne.s32.totalorder %v506, 0
      %vm677 = vcmp.ne.s32.totalorder %v513, 0
      %vm678 = vcmp.ne.s32.totalorder %v520, 0
      %vm679 = vcmp.ne.s32.totalorder %v527, 0
      %vm680 = vcmp.ne.s32.totalorder %v534, 0
      %vm681 = vcmp.ne.s32.totalorder %v541, 0
      %vm682 = vcmp.ne.s32.totalorder %v548, 0
      %vm683 = vcmp.ne.s32.totalorder %v555, 0
      %vm684 = vcmp.ne.s32.totalorder %v562, 0
      %vm685 = vcmp.ne.s32.totalorder %v569, 0
      %vm686 = vcmp.ne.s32.totalorder %v576, 0
      %vm687 = vcmp.ne.s32.totalorder %v583, 0
      %vm688 = vcmp.ne.s32.totalorder %v590, 0
      %vm689 = vcmp.ne.s32.totalorder %v597, 0
      %vm690 = vcmp.ne.s32.totalorder %v604, 0
      %vm691 = vcmp.ne.s32.totalorder %v611, 0
      %vm692 = vcmp.ne.s32.totalorder %v618, 0
      %vm693 = vcmp.ne.s32.totalorder %v625, 0
      %vm694 = vcmp.ne.s32.totalorder %v632, 0
      %vm695 = vcmp.ne.s32.totalorder %v639, 0
      %vm696 = vcmp.ne.s32.totalorder %v646, 0
      %vm697 = vcmp.ne.s32.totalorder %v653, 0
      %vm698 = vcmp.ne.s32.totalorder %v660, 0
      %vm699 = vcmp.ne.s32.totalorder %v667, 0
      %vm700 = vcmp.lt.s32.totalorder %v450, 0
      %vm701 = vcmp.lt.s32.totalorder %v457, 0
      %vm702 = vcmp.lt.s32.totalorder %v464, 0
      %vm703 = vcmp.lt.s32.totalorder %v471, 0
      %vm704 = vcmp.lt.s32.totalorder %v478, 0
      %vm705 = vcmp.lt.s32.totalorder %v485, 0
      %vm706 = vcmp.lt.s32.totalorder %v492, 0
      %vm707 = vcmp.lt.s32.totalorder %v499, 0
      %vm708 = vcmp.lt.s32.totalorder %v506, 0
      %vm709 = vcmp.lt.s32.totalorder %v513, 0
      %vm710 = vcmp.lt.s32.totalorder %v520, 0
      %vm711 = vcmp.lt.s32.totalorder %v527, 0
      %vm712 = vcmp.lt.s32.totalorder %v534, 0
      %vm713 = vcmp.lt.s32.totalorder %v541, 0
      %vm714 = vcmp.lt.s32.totalorder %v548, 0
      %vm715 = vcmp.lt.s32.totalorder %v555, 0
      %vm716 = vcmp.lt.s32.totalorder %v562, 0
      %vm717 = vcmp.lt.s32.totalorder %v569, 0
      %vm718 = vcmp.lt.s32.totalorder %v576, 0
      %vm719 = vcmp.lt.s32.totalorder %v583, 0
      %vm720 = vcmp.lt.s32.totalorder %v590, 0
      %vm721 = vcmp.lt.s32.totalorder %v597, 0
      %vm722 = vcmp.lt.s32.totalorder %v604, 0
      %vm723 = vcmp.lt.s32.totalorder %v611, 0
      %vm724 = vcmp.lt.s32.totalorder %v618, 0
      %vm725 = vcmp.lt.s32.totalorder %v625, 0
      %vm726 = vcmp.lt.s32.totalorder %v632, 0
      %vm727 = vcmp.lt.s32.totalorder %v639, 0
      %vm728 = vcmp.lt.s32.totalorder %v646, 0
      %vm729 = vcmp.lt.s32.totalorder %v653, 0
      %vm730 = vcmp.lt.s32.totalorder %v660, 0
      %vm731 = vcmp.lt.s32.totalorder %v667, 0
      %vm732 = vmand %vm700, %vm668
      %vm733 = vmand %vm701, %vm669
      %vm734 = vmand %vm702, %vm670
      %vm735 = vmand %vm703, %vm671
      %vm736 = vmand %vm704, %vm672
      %vm737 = vmand %vm705, %vm673
      %vm738 = vmand %vm706, %vm674
      %vm739 = vmand %vm707, %vm675
      %vm740 = vmand %vm708, %vm676
      %vm741 = vmand %vm709, %vm677
      %vm742 = vmand %vm710, %vm678
      %vm743 = vmand %vm711, %vm679
      %vm744 = vmand %vm712, %vm680
      %vm745 = vmand %vm713, %vm681
      %vm746 = vmand %vm714, %vm682
      %vm747 = vmand %vm715, %vm683
      %vm748 = vmand %vm716, %vm684
      %vm749 = vmand %vm717, %vm685
      %vm750 = vmand %vm718, %vm686
      %vm751 = vmand %vm719, %vm687
      %vm752 = vmand %vm720, %vm688
      %vm753 = vmand %vm721, %vm689
      %vm754 = vmand %vm722, %vm690
      %vm755 = vmand %vm723, %vm691
      %vm756 = vmand %vm724, %vm692
      %vm757 = vmand %vm725, %vm693
      %vm758 = vmand %vm726, %vm694
      %vm759 = vmand %vm727, %vm695
      %vm760 = vmand %vm728, %vm696
      %vm761 = vmand %vm729, %vm697
      %vm762 = vmand %vm730, %vm698
      %vm763 = vmand %vm731, %vm699
      %v764 = vadd.s32 %v450, 16
      %v765 = vadd.s32 %v457, 16
      %v766 = vadd.s32 %v464, 16
      %v767 = vadd.s32 %v471, 16
      %v768 = vadd.s32 %v478, 16
      %v769 = vadd.s32 %v485, 16
      %v770 = vadd.s32 %v492, 16
      %v771 = vadd.s32 %v499, 16
      %v772 = vadd.s32 %v506, 16
      %v773 = vadd.s32 %v513, 16
      %v774 = vadd.s32 %v520, 16
      %v775 = vadd.s32 %v527, 16
      %v776 = vadd.s32 %v534, 16
      %v777 = vadd.s32 %v541, 16
      %v778 = vadd.s32 %v548, 16
      %v779 = vadd.s32 %v555, 16
      %v780 = vadd.s32 %v562, 16
      %v781 = vadd.s32 %v569, 16
      %v782 = vadd.s32 %v576, 16
      %v783 = vadd.s32 %v583, 16
      %v784 = vadd.s32 %v590, 16
      %v785 = vadd.s32 %v597, 16
      %v786 = vadd.s32 %v604, 16
      %v787 = vadd.s32 %v611, 16
      %v788 = vadd.s32 %v618, 16
      %v789 = vadd.s32 %v625, 16
      %v790 = vadd.s32 %v632, 16
      %v791 = vadd.s32 %v639, 16
      %v792 = vadd.s32 %v646, 16
      %v793 = vadd.s32 %v653, 16
      %v794 = vadd.s32 %v660, 16
      %v795 = vadd.s32 %v667, 16
      %v796 = vsel %vm732, %v764, %v450
      %v797 = vsel %vm733, %v765, %v457
      %v798 = vsel %vm734, %v766, %v464
      %v799 = vsel %vm735, %v767, %v471
      %v800 = vsel %vm736, %v768, %v478
      %v801 = vsel %vm737, %v769, %v485
      %v802 = vsel %vm738, %v770, %v492
      %v803 = vsel %vm739, %v771, %v499
      %v804 = vsel %vm740, %v772, %v506
      %v805 = vsel %vm741, %v773, %v513
      %v806 = vsel %vm742, %v774, %v520
      %v807 = vsel %vm743, %v775, %v527
      %v808 = vsel %vm744, %v776, %v534
      %v809 = vsel %vm745, %v777, %v541
      %v810 = vsel %vm746, %v778, %v548
      %v811 = vsel %vm747, %v779, %v555
      %v812 = vsel %vm748, %v780, %v562
      %v813 = vsel %vm749, %v781, %v569
      %v814 = vsel %vm750, %v782, %v576
      %v815 = vsel %vm751, %v783, %v583
      %v816 = vsel %vm752, %v784, %v590
      %v817 = vsel %vm753, %v785, %v597
      %v818 = vsel %vm754, %v786, %v604
      %v819 = vsel %vm755, %v787, %v611
      %v820 = vsel %vm756, %v788, %v618
      %v821 = vsel %vm757, %v789, %v625
      %v822 = vsel %vm758, %v790, %v632
      %v823 = vsel %vm759, %v791, %v639
      %v824 = vsel %vm760, %v792, %v646
      %v825 = vsel %vm761, %v793, %v653
      %v826 = vsel %vm762, %v794, %v660
      %v827 = vsel %vm763, %v795, %v667
      %vm828 = vcmp.ne.s32.totalorder %v796, 15
      %vm829 = vcmp.ne.s32.totalorder %v797, 15
      %vm830 = vcmp.ne.s32.totalorder %v798, 15
      %vm831 = vcmp.ne.s32.totalorder %v799, 15
      %vm832 = vcmp.ne.s32.totalorder %v800, 15
      %vm833 = vcmp.ne.s32.totalorder %v801, 15
      %vm834 = vcmp.ne.s32.totalorder %v802, 15
      %vm835 = vcmp.ne.s32.totalorder %v803, 15
      %vm836 = vcmp.ne.s32.totalorder %v804, 15
      %vm837 = vcmp.ne.s32.totalorder %v805, 15
      %vm838 = vcmp.ne.s32.totalorder %v806, 15
      %vm839 = vcmp.ne.s32.totalorder %v807, 15
      %vm840 = vcmp.ne.s32.totalorder %v808, 15
      %vm841 = vcmp.ne.s32.totalorder %v809, 15
      %vm842 = vcmp.ne.s32.totalorder %v810, 15
      %vm843 = vcmp.ne.s32.totalorder %v811, 15
      %vm844 = vcmp.ne.s32.totalorder %v812, 15
      %vm845 = vcmp.ne.s32.totalorder %v813, 15
      %vm846 = vcmp.ne.s32.totalorder %v814, 15
      %vm847 = vcmp.ne.s32.totalorder %v815, 15
      %vm848 = vcmp.ne.s32.totalorder %v816, 15
      %vm849 = vcmp.ne.s32.totalorder %v817, 15
      %vm850 = vcmp.ne.s32.totalorder %v818, 15
      %vm851 = vcmp.ne.s32.totalorder %v819, 15
      %vm852 = vcmp.ne.s32.totalorder %v820, 15
      %vm853 = vcmp.ne.s32.totalorder %v821, 15
      %vm854 = vcmp.ne.s32.totalorder %v822, 15
      %vm855 = vcmp.ne.s32.totalorder %v823, 15
      %vm856 = vcmp.ne.s32.totalorder %v824, 15
      %vm857 = vcmp.ne.s32.totalorder %v825, 15
      %vm858 = vcmp.ne.s32.totalorder %v826, 15
      %vm859 = vcmp.ne.s32.totalorder %v827, 15
      %v860 = vsel %vm828, 1, 0
      %v861 = vsel %vm829, 1, 0
      %v862 = vsel %vm830, 1, 0
      %v863 = vsel %vm831, 1, 0
      %v864 = vsel %vm832, 1, 0
      %v865 = vsel %vm833, 1, 0
      %v866 = vsel %vm834, 1, 0
      %v867 = vsel %vm835, 1, 0
      %v868 = vsel %vm836, 1, 0
      %v869 = vsel %vm837, 1, 0
      %v870 = vsel %vm838, 1, 0
      %v871 = vsel %vm839, 1, 0
      %v872 = vsel %vm840, 1, 0
      %v873 = vsel %vm841, 1, 0
      %v874 = vsel %vm842, 1, 0
      %v875 = vsel %vm843, 1, 0
      %v876 = vsel %vm844, 1, 0
      %v877 = vsel %vm845, 1, 0
      %v878 = vsel %vm846, 1, 0
      %v879 = vsel %vm847, 1, 0
      %v880 = vsel %vm848, 1, 0
      %v881 = vsel %vm849, 1, 0
      %v882 = vsel %vm850, 1, 0
      %v883 = vsel %vm851, 1, 0
      %v884 = vsel %vm852, 1, 0
      %v885 = vsel %vm853, 1, 0
      %v886 = vsel %vm854, 1, 0
      %v887 = vsel %vm855, 1, 0
      %v888 = vsel %vm856, 1, 0
      %v889 = vsel %vm857, 1, 0
      %v890 = vsel %vm858, 1, 0
      %v891 = vsel %vm859, 1, 0
      %vm892 = vcmp.eq.s32.totalorder %v860, 1
      %vm893 = vcmp.eq.s32.totalorder %v861, 1
      %vm894 = vcmp.eq.s32.totalorder %v862, 1
      %vm895 = vcmp.eq.s32.totalorder %v863, 1
      %vm896 = vcmp.eq.s32.totalorder %v864, 1
      %vm897 = vcmp.eq.s32.totalorder %v865, 1
      %vm898 = vcmp.eq.s32.totalorder %v866, 1
      %vm899 = vcmp.eq.s32.totalorder %v867, 1
      %vm900 = vcmp.eq.s32.totalorder %v868, 1
      %vm901 = vcmp.eq.s32.totalorder %v869, 1
      %vm902 = vcmp.eq.s32.totalorder %v870, 1
      %vm903 = vcmp.eq.s32.totalorder %v871, 1
      %vm904 = vcmp.eq.s32.totalorder %v872, 1
      %vm905 = vcmp.eq.s32.totalorder %v873, 1
      %vm906 = vcmp.eq.s32.totalorder %v874, 1
      %vm907 = vcmp.eq.s32.totalorder %v875, 1
      %vm908 = vcmp.eq.s32.totalorder %v876, 1
      %vm909 = vcmp.eq.s32.totalorder %v877, 1
      %vm910 = vcmp.eq.s32.totalorder %v878, 1
      %vm911 = vcmp.eq.s32.totalorder %v879, 1
      %vm912 = vcmp.eq.s32.totalorder %v880, 1
      %vm913 = vcmp.eq.s32.totalorder %v881, 1
      %vm914 = vcmp.eq.s32.totalorder %v882, 1
      %vm915 = vcmp.eq.s32.totalorder %v883, 1
      %vm916 = vcmp.eq.s32.totalorder %v884, 1
      %vm917 = vcmp.eq.s32.totalorder %v885, 1
      %vm918 = vcmp.eq.s32.totalorder %v886, 1
      %vm919 = vcmp.eq.s32.totalorder %v887, 1
      %vm920 = vcmp.eq.s32.totalorder %v888, 1
      %vm921 = vcmp.eq.s32.totalorder %v889, 1
      %vm922 = vcmp.eq.s32.totalorder %v890, 1
      %vm923 = vcmp.eq.s32.totalorder %v891, 1
      %v924 = vsel %vm892, %v379, 0.0
      %v925 = vsel %vm893, %v380, 0.0
      %v926 = vsel %vm894, %v381, 0.0
      %v927 = vsel %vm895, %v382, 0.0
      %v928 = vsel %vm896, %v383, 0.0
      %v929 = vsel %vm897, %v384, 0.0
      %v930 = vsel %vm898, %v385, 0.0
      %v931 = vsel %vm899, %v386, 0.0
      %v932 = vsel %vm900, %v387, 0.0
      %v933 = vsel %vm901, %v388, 0.0
      %v934 = vsel %vm902, %v389, 0.0
      %v935 = vsel %vm903, %v390, 0.0
      %v936 = vsel %vm904, %v391, 0.0
      %v937 = vsel %vm905, %v392, 0.0
      %v938 = vsel %vm906, %v393, 0.0
      %v939 = vsel %vm907, %v394, 0.0
      %v940 = vsel %vm908, %v395, 0.0
      %v941 = vsel %vm909, %v396, 0.0
      %v942 = vsel %vm910, %v397, 0.0
      %v943 = vsel %vm911, %v398, 0.0
      %v944 = vsel %vm912, %v399, 0.0
      %v945 = vsel %vm913, %v400, 0.0
      %v946 = vsel %vm914, %v401, 0.0
      %v947 = vsel %vm915, %v402, 0.0
      %v948 = vsel %vm916, %v403, 0.0
      %v949 = vsel %vm917, %v404, 0.0
      %v950 = vsel %vm918, %v405, 0.0
      %v951 = vsel %vm919, %v406, 0.0
      %v952 = vsel %vm920, %v407, 0.0
      %v953 = vsel %vm921, %v408, 0.0
      %v954 = vsel %vm922, %v409, 0.0
      %v955 = vsel %vm923, %v410, 0.0
      %vm956 = vcmp.ne.s32.totalorder %v796, 0
      %vm957 = vcmp.ne.s32.totalorder %v797, 0
      %vm958 = vcmp.ne.s32.totalorder %v798, 0
      %vm959 = vcmp.ne.s32.totalorder %v799, 0
      %vm960 = vcmp.ne.s32.totalorder %v800, 0
      %vm961 = vcmp.ne.s32.totalorder %v801, 0
      %vm962 = vcmp.ne.s32.totalorder %v802, 0
      %vm963 = vcmp.ne.s32.totalorder %v803, 0
      %vm964 = vcmp.ne.s32.totalorder %v804, 0
      %vm965 = vcmp.ne.s32.totalorder %v805, 0
      %vm966 = vcmp.ne.s32.totalorder %v806, 0
      %vm967 = vcmp.ne.s32.totalorder %v807, 0
      %vm968 = vcmp.ne.s32.totalorder %v808, 0
      %vm969 = vcmp.ne.s32.totalorder %v809, 0
      %vm970 = vcmp.ne.s32.totalorder %v810, 0
      %vm971 = vcmp.ne.s32.totalorder %v811, 0
      %vm972 = vcmp.ne.s32.totalorder %v812, 0
      %vm973 = vcmp.ne.s32.totalorder %v813, 0
      %vm974 = vcmp.ne.s32.totalorder %v814, 0
      %vm975 = vcmp.ne.s32.totalorder %v815, 0
      %vm976 = vcmp.ne.s32.totalorder %v816, 0
      %vm977 = vcmp.ne.s32.totalorder %v817, 0
      %vm978 = vcmp.ne.s32.totalorder %v818, 0
      %vm979 = vcmp.ne.s32.totalorder %v819, 0
      %vm980 = vcmp.ne.s32.totalorder %v820, 0
      %vm981 = vcmp.ne.s32.totalorder %v821, 0
      %vm982 = vcmp.ne.s32.totalorder %v822, 0
      %vm983 = vcmp.ne.s32.totalorder %v823, 0
      %vm984 = vcmp.ne.s32.totalorder %v824, 0
      %vm985 = vcmp.ne.s32.totalorder %v825, 0
      %vm986 = vcmp.ne.s32.totalorder %v826, 0
      %vm987 = vcmp.ne.s32.totalorder %v827, 0
      %v988 = vsel %vm956, 1, 0
      %v989 = vsel %vm957, 1, 0
      %v990 = vsel %vm958, 1, 0
      %v991 = vsel %vm959, 1, 0
      %v992 = vsel %vm960, 1, 0
      %v993 = vsel %vm961, 1, 0
      %v994 = vsel %vm962, 1, 0
      %v995 = vsel %vm963, 1, 0
      %v996 = vsel %vm964, 1, 0
      %v997 = vsel %vm965, 1, 0
      %v998 = vsel %vm966, 1, 0
      %v999 = vsel %vm967, 1, 0
      %v1000 = vsel %vm968, 1, 0
      %v1001 = vsel %vm969, 1, 0
      %v1002 = vsel %vm970, 1, 0
      %v1003 = vsel %vm971, 1, 0
      %v1004 = vsel %vm972, 1, 0
      %v1005 = vsel %vm973, 1, 0
      %v1006 = vsel %vm974, 1, 0
      %v1007 = vsel %vm975, 1, 0
      %v1008 = vsel %vm976, 1, 0
      %v1009 = vsel %vm977, 1, 0
      %v1010 = vsel %vm978, 1, 0
      %v1011 = vsel %vm979, 1, 0
      %v1012 = vsel %vm980, 1, 0
      %v1013 = vsel %vm981, 1, 0
      %v1014 = vsel %vm982, 1, 0
      %v1015 = vsel %vm983, 1, 0
      %v1016 = vsel %vm984, 1, 0
      %v1017 = vsel %vm985, 1, 0
      %v1018 = vsel %vm986, 1, 0
      %v1019 = vsel %vm987, 1, 0
      %vm1020 = vcmp.eq.s32.totalorder %v988, 1
      %vm1021 = vcmp.eq.s32.totalorder %v989, 1
      %vm1022 = vcmp.eq.s32.totalorder %v990, 1
      %vm1023 = vcmp.eq.s32.totalorder %v991, 1
      %vm1024 = vcmp.eq.s32.totalorder %v992, 1
      %vm1025 = vcmp.eq.s32.totalorder %v993, 1
      %vm1026 = vcmp.eq.s32.totalorder %v994, 1
      %vm1027 = vcmp.eq.s32.totalorder %v995, 1
      %vm1028 = vcmp.eq.s32.totalorder %v996, 1
      %vm1029 = vcmp.eq.s32.totalorder %v997, 1
      %vm1030 = vcmp.eq.s32.totalorder %v998, 1
      %vm1031 = vcmp.eq.s32.totalorder %v999, 1
      %vm1032 = vcmp.eq.s32.totalorder %v1000, 1
      %vm1033 = vcmp.eq.s32.totalorder %v1001, 1
      %vm1034 = vcmp.eq.s32.totalorder %v1002, 1
      %vm1035 = vcmp.eq.s32.totalorder %v1003, 1
      %vm1036 = vcmp.eq.s32.totalorder %v1004, 1
      %vm1037 = vcmp.eq.s32.totalorder %v1005, 1
      %vm1038 = vcmp.eq.s32.totalorder %v1006, 1
      %vm1039 = vcmp.eq.s32.totalorder %v1007, 1
      %vm1040 = vcmp.eq.s32.totalorder %v1008, 1
      %vm1041 = vcmp.eq.s32.totalorder %v1009, 1
      %vm1042 = vcmp.eq.s32.totalorder %v1010, 1
      %vm1043 = vcmp.eq.s32.totalorder %v1011, 1
      %vm1044 = vcmp.eq.s32.totalorder %v1012, 1
      %vm1045 = vcmp.eq.s32.totalorder %v1013, 1
      %vm1046 = vcmp.eq.s32.totalorder %v1014, 1
      %vm1047 = vcmp.eq.s32.totalorder %v1015, 1
      %vm1048 = vcmp.eq.s32.totalorder %v1016, 1
      %vm1049 = vcmp.eq.s32.totalorder %v1017, 1
      %vm1050 = vcmp.eq.s32.totalorder %v1018, 1
      %vm1051 = vcmp.eq.s32.totalorder %v1019, 1
      %v1052 = vsel %vm1020, %v379, 0.0
      %v1053 = vsel %vm1021, %v380, 0.0
      %v1054 = vsel %vm1022, %v381, 0.0
      %v1055 = vsel %vm1023, %v382, 0.0
      %v1056 = vsel %vm1024, %v383, 0.0
      %v1057 = vsel %vm1025, %v384, 0.0
      %v1058 = vsel %vm1026, %v385, 0.0
      %v1059 = vsel %vm1027, %v386, 0.0
      %v1060 = vsel %vm1028, %v387, 0.0
      %v1061 = vsel %vm1029, %v388, 0.0
      %v1062 = vsel %vm1030, %v389, 0.0
      %v1063 = vsel %vm1031, %v390, 0.0
      %v1064 = vsel %vm1032, %v391, 0.0
      %v1065 = vsel %vm1033, %v392, 0.0
      %v1066 = vsel %vm1034, %v393, 0.0
      %v1067 = vsel %vm1035, %v394, 0.0
      %v1068 = vsel %vm1036, %v395, 0.0
      %v1069 = vsel %vm1037, %v396, 0.0
      %v1070 = vsel %vm1038, %v397, 0.0
      %v1071 = vsel %vm1039, %v398, 0.0
      %v1072 = vsel %vm1040, %v399, 0.0
      %v1073 = vsel %vm1041, %v400, 0.0
      %v1074 = vsel %vm1042, %v401, 0.0
      %v1075 = vsel %vm1043, %v402, 0.0
      %v1076 = vsel %vm1044, %v403, 0.0
      %v1077 = vsel %vm1045, %v404, 0.0
      %v1078 = vsel %vm1046, %v405, 0.0
      %v1079 = vsel %vm1047, %v406, 0.0
      %v1080 = vsel %vm1048, %v407, 0.0
      %v1081 = vsel %vm1049, %v408, 0.0
      %v1082 = vsel %vm1050, %v409, 0.0
      %v1083 = vsel %vm1051, %v410, 0.0
      %vm1116 = vcmask 1040384
      %v1117 = vrot.slane %v924, 7
      %v1118 = vrot.slane %v925, 7
      %v1119 = vsel %vm1116, %v1117, %v1118
      %v1120 = vrot.slane %v926, 7
      %v1121 = vsel %vm1116, %v1118, %v1120
      %v1122 = vrot.slane %v927, 7
      %v1123 = vsel %vm1116, %v1120, %v1122
      %v1124 = vrot.slane %v928, 7
      %v1125 = vsel %vm1116, %v1122, %v1124
      %v1126 = vrot.slane %v929, 7
      %v1127 = vsel %vm1116, %v1124, %v1126
      %v1128 = vrot.slane %v930, 7
      %v1129 = vsel %vm1116, %v1126, %v1128
      %v1130 = vrot.slane %v931, 7
      %v1131 = vsel %vm1116, %v1128, %v1130
      %v1132 = vrot.slane %v932, 7
      %v1133 = vsel %vm1116, %v1130, %v1132
      %v1134 = vrot.slane %v933, 7
      %v1135 = vsel %vm1116, %v1132, %v1134
      %v1136 = vrot.slane %v934, 7
      %v1137 = vsel %vm1116, %v1134, %v1136
      %v1138 = vrot.slane %v935, 7
      %v1139 = vsel %vm1116, %v1136, %v1138
      %v1140 = vrot.slane %v936, 7
      %v1141 = vsel %vm1116, %v1138, %v1140
      %v1142 = vrot.slane %v937, 7
      %v1143 = vsel %vm1116, %v1140, %v1142
      %v1144 = vrot.slane %v938, 7
      %v1145 = vsel %vm1116, %v1142, %v1144
      %v1146 = vrot.slane %v939, 7
      %v1147 = vsel %vm1116, %v1144, %v1146
      %v1148 = vrot.slane %v940, 7
      %v1149 = vsel %vm1116, %v1146, %v1148
      %v1150 = vrot.slane %v941, 7
      %v1151 = vsel %vm1116, %v1148, %v1150
      %v1152 = vrot.slane %v942, 7
      %v1153 = vsel %vm1116, %v1150, %v1152
      %v1154 = vrot.slane %v943, 7
      %v1155 = vsel %vm1116, %v1152, %v1154
      %v1156 = vrot.slane %v944, 7
      %v1157 = vsel %vm1116, %v1154, %v1156
      %v1158 = vrot.slane %v945, 7
      %v1159 = vsel %vm1116, %v1156, %v1158
      %v1160 = vrot.slane %v946, 7
      %v1161 = vsel %vm1116, %v1158, %v1160
      %v1162 = vrot.slane %v947, 7
      %v1163 = vsel %vm1116, %v1160, %v1162
      %v1164 = vrot.slane %v948, 7
      %v1165 = vsel %vm1116, %v1162, %v1164
      %v1166 = vrot.slane %v949, 7
      %v1167 = vsel %vm1116, %v1164, %v1166
      %v1168 = vrot.slane %v950, 7
      %v1169 = vsel %vm1116, %v1166, %v1168
      %v1170 = vrot.slane %v951, 7
      %v1171 = vsel %vm1116, %v1168, %v1170
      %v1172 = vrot.slane %v952, 7
      %v1173 = vsel %vm1116, %v1170, %v1172
      %v1174 = vrot.slane %v953, 7
      %v1175 = vsel %vm1116, %v1172, %v1174
      %v1176 = vrot.slane %v954, 7
      %v1177 = vsel %vm1116, %v1174, %v1176
      %v1178 = vrot.slane %v955, 7
      %v1179 = vsel %vm1116, %v1176, %v1178
      %v1213 = vsel %vm1116, 0.0, %v1117
      %v1214 = vsel %vm1116, %v1178, 0.0
      %v1247 = vrot.slane %v379, 7
      %v1248 = vrot.slane %v380, 7
      %v1249 = vsel %vm1116, %v1247, %v1248
      %v1250 = vrot.slane %v381, 7
      %v1251 = vsel %vm1116, %v1248, %v1250
      %v1252 = vrot.slane %v382, 7
      %v1253 = vsel %vm1116, %v1250, %v1252
      %v1254 = vrot.slane %v383, 7
      %v1255 = vsel %vm1116, %v1252, %v1254
      %v1256 = vrot.slane %v384, 7
      %v1257 = vsel %vm1116, %v1254, %v1256
      %v1258 = vrot.slane %v385, 7
      %v1259 = vsel %vm1116, %v1256, %v1258
      %v1260 = vrot.slane %v386, 7
      %v1261 = vsel %vm1116, %v1258, %v1260
      %v1262 = vrot.slane %v387, 7
      %v1263 = vsel %vm1116, %v1260, %v1262
      %v1264 = vrot.slane %v388, 7
      %v1265 = vsel %vm1116, %v1262, %v1264
      %v1266 = vrot.slane %v389, 7
      %v1267 = vsel %vm1116, %v1264, %v1266
      %v1268 = vrot.slane %v390, 7
      %v1269 = vsel %vm1116, %v1266, %v1268
      %v1270 = vrot.slane %v391, 7
      %v1271 = vsel %vm1116, %v1268, %v1270
      %v1272 = vrot.slane %v392, 7
      %v1273 = vsel %vm1116, %v1270, %v1272
      %v1274 = vrot.slane %v393, 7
      %v1275 = vsel %vm1116, %v1272, %v1274
      %v1276 = vrot.slane %v394, 7
      %v1277 = vsel %vm1116, %v1274, %v1276
      %v1278 = vrot.slane %v395, 7
      %v1279 = vsel %vm1116, %v1276, %v1278
      %v1280 = vrot.slane %v396, 7
      %v1281 = vsel %vm1116, %v1278, %v1280
      %v1282 = vrot.slane %v397, 7
      %v1283 = vsel %vm1116, %v1280, %v1282
      %v1284 = vrot.slane %v398, 7
      %v1285 = vsel %vm1116, %v1282, %v1284
      %v1286 = vrot.slane %v399, 7
      %v1287 = vsel %vm1116, %v1284, %v1286
      %v1288 = vrot.slane %v400, 7
      %v1289 = vsel %vm1116, %v1286, %v1288
      %v1290 = vrot.slane %v401, 7
      %v1291 = vsel %vm1116, %v1288, %v1290
      %v1292 = vrot.slane %v402, 7
      %v1293 = vsel %vm1116, %v1290, %v1292
      %v1294 = vrot.slane %v403, 7
      %v1295 = vsel %vm1116, %v1292, %v1294
      %v1296 = vrot.slane %v404, 7
      %v1297 = vsel %vm1116, %v1294, %v1296
      %v1298 = vrot.slane %v405, 7
      %v1299 = vsel %vm1116, %v1296, %v1298
      %v1300 = vrot.slane %v406, 7
      %v1301 = vsel %vm1116, %v1298, %v1300
      %v1302 = vrot.slane %v407, 7
      %v1303 = vsel %vm1116, %v1300, %v1302
      %v1304 = vrot.slane %v408, 7
      %v1305 = vsel %vm1116, %v1302, %v1304
      %v1306 = vrot.slane %v409, 7
      %v1307 = vsel %vm1116, %v1304, %v1306
      %v1308 = vrot.slane %v410, 7
      %v1309 = vsel %vm1116, %v1306, %v1308
      %v1312 = vsel %vm1116, 0.0, %v1247
      %v1313 = vsel %vm1116, %v1308, 0.0
      %v1346 = vrot.slane %v1052, 7
      %v1347 = vrot.slane %v1053, 7
      %v1348 = vsel %vm1116, %v1346, %v1347
      %v1349 = vrot.slane %v1054, 7
      %v1350 = vsel %vm1116, %v1347, %v1349
      %v1351 = vrot.slane %v1055, 7
      %v1352 = vsel %vm1116, %v1349, %v1351
      %v1353 = vrot.slane %v1056, 7
      %v1354 = vsel %vm1116, %v1351, %v1353
      %v1355 = vrot.slane %v1057, 7
      %v1356 = vsel %vm1116, %v1353, %v1355
      %v1357 = vrot.slane %v1058, 7
      %v1358 = vsel %vm1116, %v1355, %v1357
      %v1359 = vrot.slane %v1059, 7
      %v1360 = vsel %vm1116, %v1357, %v1359
      %v1361 = vrot.slane %v1060, 7
      %v1362 = vsel %vm1116, %v1359, %v1361
      %v1363 = vrot.slane %v1061, 7
      %v1364 = vsel %vm1116, %v1361, %v1363
      %v1365 = vrot.slane %v1062, 7
      %v1366 = vsel %vm1116, %v1363, %v1365
      %v1367 = vrot.slane %v1063, 7
      %v1368 = vsel %vm1116, %v1365, %v1367
      %v1369 = vrot.slane %v1064, 7
      %v1370 = vsel %vm1116, %v1367, %v1369
      %v1371 = vrot.slane %v1065, 7
      %v1372 = vsel %vm1116, %v1369, %v1371
      %v1373 = vrot.slane %v1066, 7
      %v1374 = vsel %vm1116, %v1371, %v1373
      %v1375 = vrot.slane %v1067, 7
      %v1376 = vsel %vm1116, %v1373, %v1375
      %v1377 = vrot.slane %v1068, 7
      %v1378 = vsel %vm1116, %v1375, %v1377
      %v1379 = vrot.slane %v1069, 7
      %v1380 = vsel %vm1116, %v1377, %v1379
      %v1381 = vrot.slane %v1070, 7
      %v1382 = vsel %vm1116, %v1379, %v1381
      %v1383 = vrot.slane %v1071, 7
      %v1384 = vsel %vm1116, %v1381, %v1383
      %v1385 = vrot.slane %v1072, 7
      %v1386 = vsel %vm1116, %v1383, %v1385
      %v1387 = vrot.slane %v1073, 7
      %v1388 = vsel %vm1116, %v1385, %v1387
      %v1389 = vrot.slane %v1074, 7
      %v1390 = vsel %vm1116, %v1387, %v1389
      %v1391 = vrot.slane %v1075, 7
      %v1392 = vsel %vm1116, %v1389, %v1391
      %v1393 = vrot.slane %v1076, 7
      %v1394 = vsel %vm1116, %v1391, %v1393
      %v1395 = vrot.slane %v1077, 7
      %v1396 = vsel %vm1116, %v1393, %v1395
      %v1397 = vrot.slane %v1078, 7
      %v1398 = vsel %vm1116, %v1395, %v1397
      %v1399 = vrot.slane %v1079, 7
      %v1400 = vsel %vm1116, %v1397, %v1399
      %v1401 = vrot.slane %v1080, 7
      %v1402 = vsel %vm1116, %v1399, %v1401
      %v1403 = vrot.slane %v1081, 7
      %v1404 = vsel %vm1116, %v1401, %v1403
      %v1405 = vrot.slane %v1082, 7
      %v1406 = vsel %vm1116, %v1403, %v1405
      %v1407 = vrot.slane %v1083, 7
      %v1408 = vsel %vm1116, %v1405, %v1407
      %v1411 = vsel %vm1116, 0.0, %v1346
      %v1412 = vsel %vm1116, %v1407, 0.0
      %v1413 = vld [vmem:[%s3] sm:$0xff]
      %v1414 = vld [vmem:[%s3 + $0x8] sm:$0xff]
      %v1415 = vld [vmem:[%s3 + $0x10] sm:$0xff]
      %v1416 = vld [vmem:[%s3 + $0x18] sm:$0xff]
      %v1417 = vld [vmem:[%s3 + $0x20] sm:$0xff]
      %v1418 = vld [vmem:[%s3 + $0x28] sm:$0xff]
      %v1419 = vld [vmem:[%s3 + $0x30] sm:$0xff]
      %v1420 = vld [vmem:[%s3 + $0x38] sm:$0xff]
      %v1421 = vld [vmem:[%s3 + $0x40] sm:$0xff]
      %v1422 = vld [vmem:[%s3 + $0x48] sm:$0xff]
      %v1423 = vld [vmem:[%s3 + $0x50] sm:$0xff]
      %v1424 = vld [vmem:[%s3 + $0x58] sm:$0xff]
      %v1425 = vld [vmem:[%s3 + $0x60] sm:$0xff]
      %v1426 = vld [vmem:[%s3 + $0x68] sm:$0xff]
      %v1427 = vld [vmem:[%s3 + $0x70] sm:$0xff]
      %v1428 = vld [vmem:[%s3 + $0x78] sm:$0xff]
      %s1429 = scalar_lea.vmem %s3, 128
      %v1430 = vld [vmem:[%s1429] sm:$0xff]
      %v1431 = vld [vmem:[%s1429 + $0x8] sm:$0xff]
      %v1432 = vld [vmem:[%s1429 + $0x10] sm:$0xff]
      %v1433 = vld [vmem:[%s1429 + $0x18] sm:$0xff]
      %v1434 = vld [vmem:[%s1429 + $0x20] sm:$0xff]
      %v1435 = vld [vmem:[%s1429 + $0x28] sm:$0xff]
      %v1436 = vld [vmem:[%s1429 + $0x30] sm:$0xff]
      %v1437 = vld [vmem:[%s1429 + $0x38] sm:$0xff]
      %v1438 = vld [vmem:[%s1429 + $0x40] sm:$0xff]
      %v1439 = vld [vmem:[%s1429 + $0x48] sm:$0xff]
      %v1440 = vld [vmem:[%s1429 + $0x50] sm:$0xff]
      %v1441 = vld [vmem:[%s1429 + $0x58] sm:$0xff]
      %v1442 = vld [vmem:[%s1429 + $0x60] sm:$0xff]
      %v1443 = vld [vmem:[%s1429 + $0x68] sm:$0xff]
      %v1444 = vld [vmem:[%s1429 + $0x70] sm:$0xff]
      %v1445 = vld [vmem:[%s1429 + $0x78] sm:$0xff]
      %vm1448 = vcmask 1046528
      %v1449 = vrot.slane 0.0, 1
      %v1450 = vsel %vm1448, %v1449, %v1449
      %v1451 = vrot.slane %v1312, 1
      %v1452 = vsel %vm1448, %v1449, %v1451
      %v1453 = vrot.slane %v1249, 1
      %v1454 = vsel %vm1448, %v1451, %v1453
      %v1455 = vrot.slane %v1251, 1
      %v1456 = vsel %vm1448, %v1453, %v1455
      %v1457 = vrot.slane %v1253, 1
      %v1458 = vsel %vm1448, %v1455, %v1457
      %v1459 = vrot.slane %v1255, 1
      %v1460 = vsel %vm1448, %v1457, %v1459
      %v1461 = vrot.slane %v1257, 1
      %v1462 = vsel %vm1448, %v1459, %v1461
      %v1463 = vrot.slane %v1259, 1
      %v1464 = vsel %vm1448, %v1461, %v1463
      %v1465 = vrot.slane %v1261, 1
      %v1466 = vsel %vm1448, %v1463, %v1465
      %v1467 = vrot.slane %v1263, 1
      %v1468 = vsel %vm1448, %v1465, %v1467
      %v1469 = vrot.slane %v1265, 1
      %v1470 = vsel %vm1448, %v1467, %v1469
      %v1471 = vrot.slane %v1267, 1
      %v1472 = vsel %vm1448, %v1469, %v1471
      %v1473 = vrot.slane %v1269, 1
      %v1474 = vsel %vm1448, %v1471, %v1473
      %v1475 = vrot.slane %v1271, 1
      %v1476 = vsel %vm1448, %v1473, %v1475
      %v1477 = vrot.slane %v1273, 1
      %v1478 = vsel %vm1448, %v1475, %v1477
      %v1479 = vrot.slane %v1275, 1
      %v1480 = vsel %vm1448, %v1477, %v1479
      %v1481 = vrot.slane %v1277, 1
      %v1482 = vsel %vm1448, %v1479, %v1481
      %v1483 = vrot.slane %v1279, 1
      %v1484 = vsel %vm1448, %v1481, %v1483
      %v1485 = vrot.slane %v1281, 1
      %v1486 = vsel %vm1448, %v1483, %v1485
      %v1487 = vrot.slane %v1283, 1
      %v1488 = vsel %vm1448, %v1485, %v1487
      %v1489 = vrot.slane %v1285, 1
      %v1490 = vsel %vm1448, %v1487, %v1489
      %v1491 = vrot.slane %v1287, 1
      %v1492 = vsel %vm1448, %v1489, %v1491
      %v1493 = vrot.slane %v1289, 1
      %v1494 = vsel %vm1448, %v1491, %v1493
      %v1495 = vrot.slane %v1291, 1
      %v1496 = vsel %vm1448, %v1493, %v1495
      %v1497 = vrot.slane %v1293, 1
      %v1498 = vsel %vm1448, %v1495, %v1497
      %v1499 = vrot.slane %v1295, 1
      %v1500 = vsel %vm1448, %v1497, %v1499
      %v1501 = vrot.slane %v1297, 1
      %v1502 = vsel %vm1448, %v1499, %v1501
      %v1503 = vrot.slane %v1299, 1
      %v1504 = vsel %vm1448, %v1501, %v1503
      %v1505 = vrot.slane %v1301, 1
      %v1506 = vsel %vm1448, %v1503, %v1505
      %v1507 = vrot.slane %v1303, 1
      %v1508 = vsel %vm1448, %v1505, %v1507
      %v1509 = vrot.slane %v1305, 1
      %v1510 = vsel %vm1448, %v1507, %v1509
      %v1511 = vrot.slane %v1307, 1
      %v1512 = vsel %vm1448, %v1509, %v1511
      %1545 = vmatprep.subr.mxu0 0.0
      %1546 = vmatpush1.msra.mxu0 %v1445
      %1547 = vmatprep.subr.mxu0 0.0
      %1548 = vmatpush1.msra.mxu0 %v1444
      %1549 = vmatprep.subr.mxu0 0.0
      %1550 = vmatpush1.msra.mxu0 %v1443
      %1551 = vmatprep.subr.mxu0 0.0
      %1552 = vmatpush1.msra.mxu0 %v1442
      %1553 = vmatprep.subr.mxu0 0.0
      %1554 = vmatpush1.msra.mxu0 %v1441
      %1555 = vmatprep.subr.mxu0 0.0
      %1556 = vmatpush1.msra.mxu0 %v1440
      %1557 = vmatprep.subr.mxu0 0.0
      %1558 = vmatpush1.msra.mxu0 %v1439
      %1559 = vmatprep.subr.mxu0 0.0
      %1560 = vmatpush1.msra.mxu0 %v1438
      %1561 = vmatprep.subr.mxu0 0.0
      %1562 = vmatpush1.msra.mxu0 %v1437
      %1563 = vmatprep.subr.mxu0 0.0
      %1564 = vmatpush1.msra.mxu0 %v1436
      %1565 = vmatprep.subr.mxu0 0.0
      %1566 = vmatpush1.msra.mxu0 %v1435
      %1567 = vmatprep.subr.mxu0 0.0
      %1568 = vmatpush1.msra.mxu0 %v1434
      %1569 = vmatprep.subr.mxu0 0.0
      %1570 = vmatpush1.msra.mxu0 %v1433
      %1571 = vmatprep.subr.mxu0 0.0
      %1572 = vmatpush1.msra.mxu0 %v1432
      %1573 = vmatprep.subr.mxu0 0.0
      %1574 = vmatpush1.msra.mxu0 %v1431
      %1575 = vmatprep.subr.mxu0 0.0
      %1576 = vmatpush1.msra.mxu0 %v1430
      %1577 = vmatprep.subr.mxu0 0.0
      %1578 = vmatpush2.msra.mxu0 0.0
      %1579 = vmatprep.subr.mxu0 0.0
      %1580 = vmatpush2.msra.mxu0 0.0
      %1581 = vmatprep.subr.mxu0 0.0
      %1582 = vmatpush2.msra.mxu0 0.0
      %1583 = vmatprep.subr.mxu0 0.0
      %1584 = vmatpush2.msra.mxu0 0.0
      %1585 = vmatprep.subr.mxu0 0.0
      %1586 = vmatpush2.msra.mxu0 0.0
      %1587 = vmatprep.subr.mxu0 0.0
      %1588 = vmatpush2.msra.mxu0 0.0
      %1589 = vmatprep.subr.mxu0 0.0
      %1590 = vmatpush2.msra.mxu0 0.0
      %1591 = vmatprep.subr.mxu0 0.0
      %1592 = vmatpush2.msra.mxu0 0.0
      %1593 = vmatprep.subr.mxu0 0.0
      %1594 = vmatpush2.msra.mxu0 0.0
      %1595 = vmatprep.subr.mxu0 0.0
      %1596 = vmatpush2.msra.mxu0 0.0
      %1597 = vmatprep.subr.mxu0 0.0
      %1598 = vmatpush2.msra.mxu0 0.0
      %1599 = vmatprep.subr.mxu0 0.0
      %1600 = vmatpush2.msra.mxu0 0.0
      %1601 = vmatprep.subr.mxu0 0.0
      %1602 = vmatpush2.msra.mxu0 0.0
      %1603 = vmatprep.subr.mxu0 0.0
      %1604 = vmatpush2.msra.mxu0 0.0
      %1605 = vmatprep.subr.mxu0 0.0
      %1606 = vmatpush2.msra.mxu0 0.0
      %1607 = vmatprep.subr.mxu0 0.0
      %1608 = vmatpush2.msra.mxu0 0.0
      %1609 = vmatprep.mubr.f32.mxu0 0.0
      %1610 = vmatmul.mubr.f32.gmra.mxu0 %v1450
      %v1611 = vpop.f32.mrf.mxu0
      %v1612 = vadd.f32 0.0, %v1611
      %v1613 = vpop.f32.mrf.mxu0
      %1614 = vmatprep.mubr.f32.mxu0 0.0
      %1615 = vmatmul.mubr.f32.gmra.mxu0 %v1452
      %v1616 = vpop.f32.mrf.mxu0
      %v1617 = vadd.f32 0.0, %v1616
      %v1618 = vpop.f32.mrf.mxu0
      %1619 = vmatprep.mubr.f32.mxu0 0.0
      %1620 = vmatmul.mubr.f32.gmra.mxu0 %v1454
      %v1621 = vpop.f32.mrf.mxu0
      %v1622 = vadd.f32 0.0, %v1621
      %v1623 = vpop.f32.mrf.mxu0
      %1624 = vmatprep.mubr.f32.mxu0 0.0
      %1625 = vmatmul.mubr.f32.gmra.mxu0 %v1456
      %v1626 = vpop.f32.mrf.mxu0
      %v1627 = vadd.f32 0.0, %v1626
      %v1628 = vpop.f32.mrf.mxu0
      %1629 = vmatprep.mubr.f32.mxu0 0.0
      %1630 = vmatmul.mubr.f32.gmra.mxu0 %v1458
      %v1631 = vpop.f32.mrf.mxu0
      %v1632 = vadd.f32 0.0, %v1631
      %v1633 = vpop.f32.mrf.mxu0
      %1634 = vmatprep.mubr.f32.mxu0 0.0
      %1635 = vmatmul.mubr.f32.gmra.mxu0 %v1460
      %v1636 = vpop.f32.mrf.mxu0
      %v1637 = vadd.f32 0.0, %v1636
      %v1638 = vpop.f32.mrf.mxu0
      %1639 = vmatprep.mubr.f32.mxu0 0.0
      %1640 = vmatmul.mubr.f32.gmra.mxu0 %v1462
      %v1641 = vpop.f32.mrf.mxu0
      %v1642 = vadd.f32 0.0, %v1641
      %v1643 = vpop.f32.mrf.mxu0
      %1644 = vmatprep.mubr.f32.mxu0 0.0
      %1645 = vmatmul.mubr.f32.gmra.mxu0 %v1464
      %v1646 = vpop.f32.mrf.mxu0
      %v1647 = vadd.f32 0.0, %v1646
      %v1648 = vpop.f32.mrf.mxu0
      %1649 = vmatprep.mubr.f32.mxu0 0.0
      %1650 = vmatmul.mubr.f32.gmra.mxu0 %v1466
      %v1651 = vpop.f32.mrf.mxu0
      %v1652 = vadd.f32 0.0, %v1651
      %v1653 = vpop.f32.mrf.mxu0
      %1654 = vmatprep.mubr.f32.mxu0 0.0
      %1655 = vmatmul.mubr.f32.gmra.mxu0 %v1468
      %v1656 = vpop.f32.mrf.mxu0
      %v1657 = vadd.f32 0.0, %v1656
      %v1658 = vpop.f32.mrf.mxu0
      %1659 = vmatprep.mubr.f32.mxu0 0.0
      %1660 = vmatmul.mubr.f32.gmra.mxu0 %v1470
      %v1661 = vpop.f32.mrf.mxu0
      %v1662 = vadd.f32 0.0, %v1661
      %v1663 = vpop.f32.mrf.mxu0
      %1664 = vmatprep.mubr.f32.mxu0 0.0
      %1665 = vmatmul.mubr.f32.gmra.mxu0 %v1472
      %v1666 = vpop.f32.mrf.mxu0
      %v1667 = vadd.f32 0.0, %v1666
      %v1668 = vpop.f32.mrf.mxu0
      %1669 = vmatprep.mubr.f32.mxu0 0.0
      %1670 = vmatmul.mubr.f32.gmra.mxu0 %v1474
      %v1671 = vpop.f32.mrf.mxu0
      %v1672 = vadd.f32 0.0, %v1671
      %v1673 = vpop.f32.mrf.mxu0
      %1674 = vmatprep.mubr.f32.mxu0 0.0
      %1675 = vmatmul.mubr.f32.gmra.mxu0 %v1476
      %v1676 = vpop.f32.mrf.mxu0
      %v1677 = vadd.f32 0.0, %v1676
      %v1678 = vpop.f32.mrf.mxu0
      %1679 = vmatprep.mubr.f32.mxu0 0.0
      %1680 = vmatmul.mubr.f32.gmra.mxu0 %v1478
      %v1681 = vpop.f32.mrf.mxu0
      %v1682 = vadd.f32 0.0, %v1681
      %v1683 = vpop.f32.mrf.mxu0
      %1684 = vmatprep.mubr.f32.mxu0 0.0
      %1685 = vmatmul.mubr.f32.gmra.mxu0 %v1480
      %v1686 = vpop.f32.mrf.mxu0
      %v1687 = vadd.f32 0.0, %v1686
      %v1688 = vpop.f32.mrf.mxu0
      %1689 = vmatprep.mubr.f32.mxu0 0.0
      %1690 = vmatmul.mubr.f32.gmra.mxu0 %v1482
      %v1691 = vpop.f32.mrf.mxu0
      %v1692 = vadd.f32 0.0, %v1691
      %v1693 = vpop.f32.mrf.mxu0
      %1694 = vmatprep.mubr.f32.mxu0 0.0
      %1695 = vmatmul.mubr.f32.gmra.mxu0 %v1484
      %v1696 = vpop.f32.mrf.mxu0
      %v1697 = vadd.f32 0.0, %v1696
      %v1698 = vpop.f32.mrf.mxu0
      %1699 = vmatprep.mubr.f32.mxu0 0.0
      %1700 = vmatmul.mubr.f32.gmra.mxu0 %v1486
      %v1701 = vpop.f32.mrf.mxu0
      %v1702 = vadd.f32 0.0, %v1701
      %v1703 = vpop.f32.mrf.mxu0
      %1704 = vmatprep.mubr.f32.mxu0 0.0
      %1705 = vmatmul.mubr.f32.gmra.mxu0 %v1488
      %v1706 = vpop.f32.mrf.mxu0
      %v1707 = vadd.f32 0.0, %v1706
      %v1708 = vpop.f32.mrf.mxu0
      %1709 = vmatprep.mubr.f32.mxu0 0.0
      %1710 = vmatmul.mubr.f32.gmra.mxu0 %v1490
      %v1711 = vpop.f32.mrf.mxu0
      %v1712 = vadd.f32 0.0, %v1711
      %v1713 = vpop.f32.mrf.mxu0
      %1714 = vmatprep.mubr.f32.mxu0 0.0
      %1715 = vmatmul.mubr.f32.gmra.mxu0 %v1492
      %v1716 = vpop.f32.mrf.mxu0
      %v1717 = vadd.f32 0.0, %v1716
      %v1718 = vpop.f32.mrf.mxu0
      %1719 = vmatprep.mubr.f32.mxu0 0.0
      %1720 = vmatmul.mubr.f32.gmra.mxu0 %v1494
      %v1721 = vpop.f32.mrf.mxu0
      %v1722 = vadd.f32 0.0, %v1721
      %v1723 = vpop.f32.mrf.mxu0
      %1724 = vmatprep.mubr.f32.mxu0 0.0
      %1725 = vmatmul.mubr.f32.gmra.mxu0 %v1496
      %v1726 = vpop.f32.mrf.mxu0
      %v1727 = vadd.f32 0.0, %v1726
      %v1728 = vpop.f32.mrf.mxu0
      %1729 = vmatprep.mubr.f32.mxu0 0.0
      %1730 = vmatmul.mubr.f32.gmra.mxu0 %v1498
      %v1731 = vpop.f32.mrf.mxu0
      %v1732 = vadd.f32 0.0, %v1731
      %v1733 = vpop.f32.mrf.mxu0
      %1734 = vmatprep.mubr.f32.mxu0 0.0
      %1735 = vmatmul.mubr.f32.gmra.mxu0 %v1500
      %v1736 = vpop.f32.mrf.mxu0
      %v1737 = vadd.f32 0.0, %v1736
      %v1738 = vpop.f32.mrf.mxu0
      %1739 = vmatprep.mubr.f32.mxu0 0.0
      %1740 = vmatmul.mubr.f32.gmra.mxu0 %v1502
      %v1741 = vpop.f32.mrf.mxu0
      %v1742 = vadd.f32 0.0, %v1741
      %v1743 = vpop.f32.mrf.mxu0
      %1744 = vmatprep.mubr.f32.mxu0 0.0
      %1745 = vmatmul.mubr.f32.gmra.mxu0 %v1504
      %v1746 = vpop.f32.mrf.mxu0
      %v1747 = vadd.f32 0.0, %v1746
      %v1748 = vpop.f32.mrf.mxu0
      %1749 = vmatprep.mubr.f32.mxu0 0.0
      %1750 = vmatmul.mubr.f32.gmra.mxu0 %v1506
      %v1751 = vpop.f32.mrf.mxu0
      %v1752 = vadd.f32 0.0, %v1751
      %v1753 = vpop.f32.mrf.mxu0
      %1754 = vmatprep.mubr.f32.mxu0 0.0
      %1755 = vmatmul.mubr.f32.gmra.mxu0 %v1508
      %v1756 = vpop.f32.mrf.mxu0
      %v1757 = vadd.f32 0.0, %v1756
      %v1758 = vpop.f32.mrf.mxu0
      %1759 = vmatprep.mubr.f32.mxu0 0.0
      %1760 = vmatmul.mubr.f32.gmra.mxu0 %v1510
      %v1761 = vpop.f32.mrf.mxu0
      %v1762 = vadd.f32 0.0, %v1761
      %v1763 = vpop.f32.mrf.mxu0
      %1764 = vmatprep.mubr.f32.mxu0 0.0
      %1765 = vmatmul.mubr.f32.gmra.mxu0 %v1512
      %v1766 = vpop.f32.mrf.mxu0
      %v1767 = vadd.f32 0.0, %v1766
      %v1768 = vpop.f32.mrf.mxu0
      %1769 = vdwg.mxu0
      %1770 = vmatprep.subr.mxu0 0.0
      %1771 = vmatpush1.msra.mxu0 %v1428
      %1772 = vmatprep.subr.mxu0 0.0
      %1773 = vmatpush1.msra.mxu0 %v1427
      %1774 = vmatprep.subr.mxu0 0.0
      %1775 = vmatpush1.msra.mxu0 %v1426
      %1776 = vmatprep.subr.mxu0 0.0
      %1777 = vmatpush1.msra.mxu0 %v1425
      %1778 = vmatprep.subr.mxu0 0.0
      %1779 = vmatpush1.msra.mxu0 %v1424
      %1780 = vmatprep.subr.mxu0 0.0
      %1781 = vmatpush1.msra.mxu0 %v1423
      %1782 = vmatprep.subr.mxu0 0.0
      %1783 = vmatpush1.msra.mxu0 %v1422
      %1784 = vmatprep.subr.mxu0 0.0
      %1785 = vmatpush1.msra.mxu0 %v1421
      %1786 = vmatprep.subr.mxu0 0.0
      %1787 = vmatpush1.msra.mxu0 %v1420
      %1788 = vmatprep.subr.mxu0 0.0
      %1789 = vmatpush1.msra.mxu0 %v1419
      %1790 = vmatprep.subr.mxu0 0.0
      %1791 = vmatpush1.msra.mxu0 %v1418
      %1792 = vmatprep.subr.mxu0 0.0
      %1793 = vmatpush1.msra.mxu0 %v1417
      %1794 = vmatprep.subr.mxu0 0.0
      %1795 = vmatpush1.msra.mxu0 %v1416
      %1796 = vmatprep.subr.mxu0 0.0
      %1797 = vmatpush1.msra.mxu0 %v1415
      %1798 = vmatprep.subr.mxu0 0.0
      %1799 = vmatpush1.msra.mxu0 %v1414
      %1800 = vmatprep.subr.mxu0 0.0
      %1801 = vmatpush1.msra.mxu0 %v1413
      %1802 = vmatprep.subr.mxu0 0.0
      %1803 = vmatpush2.msra.mxu0 0.0
      %1804 = vmatprep.subr.mxu0 0.0
      %1805 = vmatpush2.msra.mxu0 0.0
      %1806 = vmatprep.subr.mxu0 0.0
      %1807 = vmatpush2.msra.mxu0 0.0
      %1808 = vmatprep.subr.mxu0 0.0
      %1809 = vmatpush2.msra.mxu0 0.0
      %1810 = vmatprep.subr.mxu0 0.0
      %1811 = vmatpush2.msra.mxu0 0.0
      %1812 = vmatprep.subr.mxu0 0.0
      %1813 = vmatpush2.msra.mxu0 0.0
      %1814 = vmatprep.subr.mxu0 0.0
      %1815 = vmatpush2.msra.mxu0 0.0
      %1816 = vmatprep.subr.mxu0 0.0
      %1817 = vmatpush2.msra.mxu0 0.0
      %1818 = vmatprep.subr.mxu0 0.0
      %1819 = vmatpush2.msra.mxu0 0.0
      %1820 = vmatprep.subr.mxu0 0.0
      %1821 = vmatpush2.msra.mxu0 0.0
      %1822 = vmatprep.subr.mxu0 0.0
      %1823 = vmatpush2.msra.mxu0 0.0
      %1824 = vmatprep.subr.mxu0 0.0
      %1825 = vmatpush2.msra.mxu0 0.0
      %1826 = vmatprep.subr.mxu0 0.0
      %1827 = vmatpush2.msra.mxu0 0.0
      %1828 = vmatprep.subr.mxu0 0.0
      %1829 = vmatpush2.msra.mxu0 0.0
      %1830 = vmatprep.subr.mxu0 0.0
      %1831 = vmatpush2.msra.mxu0 0.0
      %1832 = vmatprep.subr.mxu0 0.0
      %1833 = vmatpush2.msra.mxu0 0.0
      %1834 = vmatprep.mubr.f32.mxu0 0.0
      %1835 = vmatmul.mubr.f32.gmra.mxu0 0.0
      %v1836 = vpop.f32.mrf.mxu0
      %v1837 = vadd.f32 %v1612, %v1836
      %v1838 = vpop.f32.mrf.mxu0
      %1839 = vmatprep.mubr.f32.mxu0 0.0
      %1840 = vmatmul.mubr.f32.gmra.mxu0 0.0
      %v1841 = vpop.f32.mrf.mxu0
      %v1842 = vadd.f32 %v1617, %v1841
      %v1843 = vpop.f32.mrf.mxu0
      %1844 = vmatprep.mubr.f32.mxu0 0.0
      %1845 = vmatmul.mubr.f32.gmra.mxu0 %v1213
      %v1846 = vpop.f32.mrf.mxu0
      %v1847 = vadd.f32 %v1622, %v1846
      %v1848 = vpop.f32.mrf.mxu0
      %1849 = vmatprep.mubr.f32.mxu0 0.0
      %1850 = vmatmul.mubr.f32.gmra.mxu0 %v1119
      %v1851 = vpop.f32.mrf.mxu0
      %v1852 = vadd.f32 %v1627, %v1851
      %v1853 = vpop.f32.mrf.mxu0
      %1854 = vmatprep.mubr.f32.mxu0 0.0
      %1855 = vmatmul.mubr.f32.gmra.mxu0 %v1121
      %v1856 = vpop.f32.mrf.mxu0
      %v1857 = vadd.f32 %v1632, %v1856
      %v1858 = vpop.f32.mrf.mxu0
      %1859 = vmatprep.mubr.f32.mxu0 0.0
      %1860 = vmatmul.mubr.f32.gmra.mxu0 %v1123
      %v1861 = vpop.f32.mrf.mxu0
      %v1862 = vadd.f32 %v1637, %v1861
      %v1863 = vpop.f32.mrf.mxu0
      %1864 = vmatprep.mubr.f32.mxu0 0.0
      %1865 = vmatmul.mubr.f32.gmra.mxu0 %v1125
      %v1866 = vpop.f32.mrf.mxu0
      %v1867 = vadd.f32 %v1642, %v1866
      %v1868 = vpop.f32.mrf.mxu0
      %1869 = vmatprep.mubr.f32.mxu0 0.0
      %1870 = vmatmul.mubr.f32.gmra.mxu0 %v1127
      %v1871 = vpop.f32.mrf.mxu0
      %v1872 = vadd.f32 %v1647, %v1871
      %v1873 = vpop.f32.mrf.mxu0
      %1874 = vmatprep.mubr.f32.mxu0 0.0
      %1875 = vmatmul.mubr.f32.gmra.mxu0 %v1129
      %v1876 = vpop.f32.mrf.mxu0
      %v1877 = vadd.f32 %v1652, %v1876
      %v1878 = vpop.f32.mrf.mxu0
      %1879 = vmatprep.mubr.f32.mxu0 0.0
      %1880 = vmatmul.mubr.f32.gmra.mxu0 %v1131
      %v1881 = vpop.f32.mrf.mxu0
      %v1882 = vadd.f32 %v1657, %v1881
      %v1883 = vpop.f32.mrf.mxu0
      %1884 = vmatprep.mubr.f32.mxu0 0.0
      %1885 = vmatmul.mubr.f32.gmra.mxu0 %v1133
      %v1886 = vpop.f32.mrf.mxu0
      %v1887 = vadd.f32 %v1662, %v1886
      %v1888 = vpop.f32.mrf.mxu0
      %1889 = vmatprep.mubr.f32.mxu0 0.0
      %1890 = vmatmul.mubr.f32.gmra.mxu0 %v1135
      %v1891 = vpop.f32.mrf.mxu0
      %v1892 = vadd.f32 %v1667, %v1891
      %v1893 = vpop.f32.mrf.mxu0
      %1894 = vmatprep.mubr.f32.mxu0 0.0
      %1895 = vmatmul.mubr.f32.gmra.mxu0 %v1137
      %v1896 = vpop.f32.mrf.mxu0
      %v1897 = vadd.f32 %v1672, %v1896
      %v1898 = vpop.f32.mrf.mxu0
      %1899 = vmatprep.mubr.f32.mxu0 0.0
      %1900 = vmatmul.mubr.f32.gmra.mxu0 %v1139
      %v1901 = vpop.f32.mrf.mxu0
      %v1902 = vadd.f32 %v1677, %v1901
      %v1903 = vpop.f32.mrf.mxu0
      %1904 = vmatprep.mubr.f32.mxu0 0.0
      %1905 = vmatmul.mubr.f32.gmra.mxu0 %v1141
      %v1906 = vpop.f32.mrf.mxu0
      %v1907 = vadd.f32 %v1682, %v1906
      %v1908 = vpop.f32.mrf.mxu0
      %1909 = vmatprep.mubr.f32.mxu0 0.0
      %1910 = vmatmul.mubr.f32.gmra.mxu0 %v1143
      %v1911 = vpop.f32.mrf.mxu0
      %v1912 = vadd.f32 %v1687, %v1911
      %v1913 = vpop.f32.mrf.mxu0
      %1914 = vmatprep.mubr.f32.mxu0 0.0
      %1915 = vmatmul.mubr.f32.gmra.mxu0 %v1145
      %v1916 = vpop.f32.mrf.mxu0
      %v1917 = vadd.f32 %v1692, %v1916
      %v1918 = vpop.f32.mrf.mxu0
      %1919 = vmatprep.mubr.f32.mxu0 0.0
      %1920 = vmatmul.mubr.f32.gmra.mxu0 %v1147
      %v1921 = vpop.f32.mrf.mxu0
      %v1922 = vadd.f32 %v1697, %v1921
      %v1923 = vpop.f32.mrf.mxu0
      %1924 = vmatprep.mubr.f32.mxu0 0.0
      %1925 = vmatmul.mubr.f32.gmra.mxu0 %v1149
      %v1926 = vpop.f32.mrf.mxu0
      %v1927 = vadd.f32 %v1702, %v1926
      %v1928 = vpop.f32.mrf.mxu0
      %1929 = vmatprep.mubr.f32.mxu0 0.0
      %1930 = vmatmul.mubr.f32.gmra.mxu0 %v1151
      %v1931 = vpop.f32.mrf.mxu0
      %v1932 = vadd.f32 %v1707, %v1931
      %v1933 = vpop.f32.mrf.mxu0
      %1934 = vmatprep.mubr.f32.mxu0 0.0
      %1935 = vmatmul.mubr.f32.gmra.mxu0 %v1153
      %v1936 = vpop.f32.mrf.mxu0
      %v1937 = vadd.f32 %v1712, %v1936
      %v1938 = vpop.f32.mrf.mxu0
      %1939 = vmatprep.mubr.f32.mxu0 0.0
      %1940 = vmatmul.mubr.f32.gmra.mxu0 %v1155
      %v1941 = vpop.f32.mrf.mxu0
      %v1942 = vadd.f32 %v1717, %v1941
      %v1943 = vpop.f32.mrf.mxu0
      %1944 = vmatprep.mubr.f32.mxu0 0.0
      %1945 = vmatmul.mubr.f32.gmra.mxu0 %v1157
      %v1946 = vpop.f32.mrf.mxu0
      %v1947 = vadd.f32 %v1722, %v1946
      %v1948 = vpop.f32.mrf.mxu0
      %1949 = vmatprep.mubr.f32.mxu0 0.0
      %1950 = vmatmul.mubr.f32.gmra.mxu0 %v1159
      %v1951 = vpop.f32.mrf.mxu0
      %v1952 = vadd.f32 %v1727, %v1951
      %v1953 = vpop.f32.mrf.mxu0
      %1954 = vmatprep.mubr.f32.mxu0 0.0
      %1955 = vmatmul.mubr.f32.gmra.mxu0 %v1161
      %v1956 = vpop.f32.mrf.mxu0
      %v1957 = vadd.f32 %v1732, %v1956
      %v1958 = vpop.f32.mrf.mxu0
      %1959 = vmatprep.mubr.f32.mxu0 0.0
      %1960 = vmatmul.mubr.f32.gmra.mxu0 %v1163
      %v1961 = vpop.f32.mrf.mxu0
      %v1962 = vadd.f32 %v1737, %v1961
      %v1963 = vpop.f32.mrf.mxu0
      %1964 = vmatprep.mubr.f32.mxu0 0.0
      %1965 = vmatmul.mubr.f32.gmra.mxu0 %v1165
      %v1966 = vpop.f32.mrf.mxu0
      %v1967 = vadd.f32 %v1742, %v1966
      %v1968 = vpop.f32.mrf.mxu0
      %1969 = vmatprep.mubr.f32.mxu0 0.0
      %1970 = vmatmul.mubr.f32.gmra.mxu0 %v1167
      %v1971 = vpop.f32.mrf.mxu0
      %v1972 = vadd.f32 %v1747, %v1971
      %v1973 = vpop.f32.mrf.mxu0
      %1974 = vmatprep.mubr.f32.mxu0 0.0
      %1975 = vmatmul.mubr.f32.gmra.mxu0 %v1169
      %v1976 = vpop.f32.mrf.mxu0
      %v1977 = vadd.f32 %v1752, %v1976
      %v1978 = vpop.f32.mrf.mxu0
      %1979 = vmatprep.mubr.f32.mxu0 0.0
      %1980 = vmatmul.mubr.f32.gmra.mxu0 %v1171
      %v1981 = vpop.f32.mrf.mxu0
      %v1982 = vadd.f32 %v1757, %v1981
      %v1983 = vpop.f32.mrf.mxu0
      %1984 = vmatprep.mubr.f32.mxu0 0.0
      %1985 = vmatmul.mubr.f32.gmra.mxu0 %v1173
      %v1986 = vpop.f32.mrf.mxu0
      %v1987 = vadd.f32 %v1762, %v1986
      %v1988 = vpop.f32.mrf.mxu0
      %1989 = vmatprep.mubr.f32.mxu0 0.0
      %1990 = vmatmul.mubr.f32.gmra.mxu0 %v1175
      %v1991 = vpop.f32.mrf.mxu0
      %v1992 = vadd.f32 %v1767, %v1991
      %v1993 = vpop.f32.mrf.mxu0
      %1994 = vdwg.mxu0
      %s1995 = scalar_lea.vmem %s3, 256
      %v1996 = vld [vmem:[%s1995] sm:$0xff]
      %v1997 = vld [vmem:[%s1995 + $0x8] sm:$0xff]
      %v1998 = vld [vmem:[%s1995 + $0x10] sm:$0xff]
      %v1999 = vld [vmem:[%s1995 + $0x18] sm:$0xff]
      %v2000 = vld [vmem:[%s1995 + $0x20] sm:$0xff]
      %v2001 = vld [vmem:[%s1995 + $0x28] sm:$0xff]
      %v2002 = vld [vmem:[%s1995 + $0x30] sm:$0xff]
      %v2003 = vld [vmem:[%s1995 + $0x38] sm:$0xff]
      %v2004 = vld [vmem:[%s1995 + $0x40] sm:$0xff]
      %v2005 = vld [vmem:[%s1995 + $0x48] sm:$0xff]
      %v2006 = vld [vmem:[%s1995 + $0x50] sm:$0xff]
      %v2007 = vld [vmem:[%s1995 + $0x58] sm:$0xff]
      %v2008 = vld [vmem:[%s1995 + $0x60] sm:$0xff]
      %v2009 = vld [vmem:[%s1995 + $0x68] sm:$0xff]
      %v2010 = vld [vmem:[%s1995 + $0x70] sm:$0xff]
      %v2011 = vld [vmem:[%s1995 + $0x78] sm:$0xff]
      %vm2013 = vcmask 1045504
      %v2014 = vrot.slane 0.0, 2
      %v2015 = vsel %vm2013, %v2014, %v2014
      %v2016 = vrot.slane %v1411, 2
      %v2017 = vsel %vm2013, %v2014, %v2016
      %v2018 = vrot.slane %v1348, 2
      %v2019 = vsel %vm2013, %v2016, %v2018
      %v2020 = vrot.slane %v1350, 2
      %v2021 = vsel %vm2013, %v2018, %v2020
      %v2022 = vrot.slane %v1352, 2
      %v2023 = vsel %vm2013, %v2020, %v2022
      %v2024 = vrot.slane %v1354, 2
      %v2025 = vsel %vm2013, %v2022, %v2024
      %v2026 = vrot.slane %v1356, 2
      %v2027 = vsel %vm2013, %v2024, %v2026
      %v2028 = vrot.slane %v1358, 2
      %v2029 = vsel %vm2013, %v2026, %v2028
      %v2030 = vrot.slane %v1360, 2
      %v2031 = vsel %vm2013, %v2028, %v2030
      %v2032 = vrot.slane %v1362, 2
      %v2033 = vsel %vm2013, %v2030, %v2032
      %v2034 = vrot.slane %v1364, 2
      %v2035 = vsel %vm2013, %v2032, %v2034
      %v2036 = vrot.slane %v1366, 2
      %v2037 = vsel %vm2013, %v2034, %v2036
      %v2038 = vrot.slane %v1368, 2
      %v2039 = vsel %vm2013, %v2036, %v2038
      %v2040 = vrot.slane %v1370, 2
      %v2041 = vsel %vm2013, %v2038, %v2040
      %v2042 = vrot.slane %v1372, 2
      %v2043 = vsel %vm2013, %v2040, %v2042
      %v2044 = vrot.slane %v1374, 2
      %v2045 = vsel %vm2013, %v2042, %v2044
      %v2046 = vrot.slane %v1376, 2
      %v2047 = vsel %vm2013, %v2044, %v2046
      %v2048 = vrot.slane %v1378, 2
      %v2049 = vsel %vm2013, %v2046, %v2048
      %v2050 = vrot.slane %v1380, 2
      %v2051 = vsel %vm2013, %v2048, %v2050
      %v2052 = vrot.slane %v1382, 2
      %v2053 = vsel %vm2013, %v2050, %v2052
      %v2054 = vrot.slane %v1384, 2
      %v2055 = vsel %vm2013, %v2052, %v2054
      %v2056 = vrot.slane %v1386, 2
      %v2057 = vsel %vm2013, %v2054, %v2056
      %v2058 = vrot.slane %v1388, 2
      %v2059 = vsel %vm2013, %v2056, %v2058
      %v2060 = vrot.slane %v1390, 2
      %v2061 = vsel %vm2013, %v2058, %v2060
      %v2062 = vrot.slane %v1392, 2
      %v2063 = vsel %vm2013, %v2060, %v2062
      %v2064 = vrot.slane %v1394, 2
      %v2065 = vsel %vm2013, %v2062, %v2064
      %v2066 = vrot.slane %v1396, 2
      %v2067 = vsel %vm2013, %v2064, %v2066
      %v2068 = vrot.slane %v1398, 2
      %v2069 = vsel %vm2013, %v2066, %v2068
      %v2070 = vrot.slane %v1400, 2
      %v2071 = vsel %vm2013, %v2068, %v2070
      %v2072 = vrot.slane %v1402, 2
      %v2073 = vsel %vm2013, %v2070, %v2072
      %v2074 = vrot.slane %v1404, 2
      %v2075 = vsel %vm2013, %v2072, %v2074
      %v2076 = vrot.slane %v1406, 2
      %v2077 = vsel %vm2013, %v2074, %v2076
      %2110 = vmatprep.subr.mxu0 0.0
      %2111 = vmatpush1.msra.mxu0 %v2011
      %2112 = vmatprep.subr.mxu0 0.0
      %2113 = vmatpush1.msra.mxu0 %v2010
      %2114 = vmatprep.subr.mxu0 0.0
      %2115 = vmatpush1.msra.mxu0 %v2009
      %2116 = vmatprep.subr.mxu0 0.0
      %2117 = vmatpush1.msra.mxu0 %v2008
      %2118 = vmatprep.subr.mxu0 0.0
      %2119 = vmatpush1.msra.mxu0 %v2007
      %2120 = vmatprep.subr.mxu0 0.0
      %2121 = vmatpush1.msra.mxu0 %v2006
      %2122 = vmatprep.subr.mxu0 0.0
      %2123 = vmatpush1.msra.mxu0 %v2005
      %2124 = vmatprep.subr.mxu0 0.0
      %2125 = vmatpush1.msra.mxu0 %v2004
      %2126 = vmatprep.subr.mxu0 0.0
      %2127 = vmatpush1.msra.mxu0 %v2003
      %2128 = vmatprep.subr.mxu0 0.0
      %2129 = vmatpush1.msra.mxu0 %v2002
      %2130 = vmatprep.subr.mxu0 0.0
      %2131 = vmatpush1.msra.mxu0 %v2001
      %2132 = vmatprep.subr.mxu0 0.0
      %2133 = vmatpush1.msra.mxu0 %v2000
      %2134 = vmatprep.subr.mxu0 0.0
      %2135 = vmatpush1.msra.mxu0 %v1999
      %2136 = vmatprep.subr.mxu0 0.0
      %2137 = vmatpush1.msra.mxu0 %v1998
      %2138 = vmatprep.subr.mxu0 0.0
      %2139 = vmatpush1.msra.mxu0 %v1997
      %2140 = vmatprep.subr.mxu0 0.0
      %2141 = vmatpush1.msra.mxu0 %v1996
      %2142 = vmatprep.subr.mxu0 0.0
      %2143 = vmatpush2.msra.mxu0 0.0
      %2144 = vmatprep.subr.mxu0 0.0
      %2145 = vmatpush2.msra.mxu0 0.0
      %2146 = vmatprep.subr.mxu0 0.0
      %2147 = vmatpush2.msra.mxu0 0.0
      %2148 = vmatprep.subr.mxu0 0.0
      %2149 = vmatpush2.msra.mxu0 0.0
      %2150 = vmatprep.subr.mxu0 0.0
      %2151 = vmatpush2.msra.mxu0 0.0
      %2152 = vmatprep.subr.mxu0 0.0
      %2153 = vmatpush2.msra.mxu0 0.0
      %2154 = vmatprep.subr.mxu0 0.0
      %2155 = vmatpush2.msra.mxu0 0.0
      %2156 = vmatprep.subr.mxu0 0.0
      %2157 = vmatpush2.msra.mxu0 0.0
      %2158 = vmatprep.subr.mxu0 0.0
      %2159 = vmatpush2.msra.mxu0 0.0
      %2160 = vmatprep.subr.mxu0 0.0
      %2161 = vmatpush2.msra.mxu0 0.0
      %2162 = vmatprep.subr.mxu0 0.0
      %2163 = vmatpush2.msra.mxu0 0.0
      %2164 = vmatprep.subr.mxu0 0.0
      %2165 = vmatpush2.msra.mxu0 0.0
      %2166 = vmatprep.subr.mxu0 0.0
      %2167 = vmatpush2.msra.mxu0 0.0
      %2168 = vmatprep.subr.mxu0 0.0
      %2169 = vmatpush2.msra.mxu0 0.0
      %2170 = vmatprep.subr.mxu0 0.0
      %2171 = vmatpush2.msra.mxu0 0.0
      %2172 = vmatprep.subr.mxu0 0.0
      %2173 = vmatpush2.msra.mxu0 0.0
      %2174 = vmatprep.mubr.f32.mxu0 0.0
      %2175 = vmatmul.mubr.f32.gmra.mxu0 %v2015
      %v2176 = vpop.f32.mrf.mxu0
      %v2177 = vadd.f32 0.0, %v2176
      %v2178 = vpop.f32.mrf.mxu0
      %2179 = vmatprep.mubr.f32.mxu0 0.0
      %2180 = vmatmul.mubr.f32.gmra.mxu0 %v2017
      %v2181 = vpop.f32.mrf.mxu0
      %v2182 = vadd.f32 0.0, %v2181
      %v2183 = vpop.f32.mrf.mxu0
      %2184 = vmatprep.mubr.f32.mxu0 0.0
      %2185 = vmatmul.mubr.f32.gmra.mxu0 %v2019
      %v2186 = vpop.f32.mrf.mxu0
      %v2187 = vadd.f32 0.0, %v2186
      %v2188 = vpop.f32.mrf.mxu0
      %2189 = vmatprep.mubr.f32.mxu0 0.0
      %2190 = vmatmul.mubr.f32.gmra.mxu0 %v2021
      %v2191 = vpop.f32.mrf.mxu0
      %v2192 = vadd.f32 0.0, %v2191
      %v2193 = vpop.f32.mrf.mxu0
      %2194 = vmatprep.mubr.f32.mxu0 0.0
      %2195 = vmatmul.mubr.f32.gmra.mxu0 %v2023
      %v2196 = vpop.f32.mrf.mxu0
      %v2197 = vadd.f32 0.0, %v2196
      %v2198 = vpop.f32.mrf.mxu0
      %2199 = vmatprep.mubr.f32.mxu0 0.0
      %2200 = vmatmul.mubr.f32.gmra.mxu0 %v2025
      %v2201 = vpop.f32.mrf.mxu0
      %v2202 = vadd.f32 0.0, %v2201
      %v2203 = vpop.f32.mrf.mxu0
      %2204 = vmatprep.mubr.f32.mxu0 0.0
      %2205 = vmatmul.mubr.f32.gmra.mxu0 %v2027
      %v2206 = vpop.f32.mrf.mxu0
      %v2207 = vadd.f32 0.0, %v2206
      %v2208 = vpop.f32.mrf.mxu0
      %2209 = vmatprep.mubr.f32.mxu0 0.0
      %2210 = vmatmul.mubr.f32.gmra.mxu0 %v2029
      %v2211 = vpop.f32.mrf.mxu0
      %v2212 = vadd.f32 0.0, %v2211
      %v2213 = vpop.f32.mrf.mxu0
      %2214 = vmatprep.mubr.f32.mxu0 0.0
      %2215 = vmatmul.mubr.f32.gmra.mxu0 %v2031
      %v2216 = vpop.f32.mrf.mxu0
      %v2217 = vadd.f32 0.0, %v2216
      %v2218 = vpop.f32.mrf.mxu0
      %2219 = vmatprep.mubr.f32.mxu0 0.0
      %2220 = vmatmul.mubr.f32.gmra.mxu0 %v2033
      %v2221 = vpop.f32.mrf.mxu0
      %v2222 = vadd.f32 0.0, %v2221
      %v2223 = vpop.f32.mrf.mxu0
      %2224 = vmatprep.mubr.f32.mxu0 0.0
      %2225 = vmatmul.mubr.f32.gmra.mxu0 %v2035
      %v2226 = vpop.f32.mrf.mxu0
      %v2227 = vadd.f32 0.0, %v2226
      %v2228 = vpop.f32.mrf.mxu0
      %2229 = vmatprep.mubr.f32.mxu0 0.0
      %2230 = vmatmul.mubr.f32.gmra.mxu0 %v2037
      %v2231 = vpop.f32.mrf.mxu0
      %v2232 = vadd.f32 0.0, %v2231
      %v2233 = vpop.f32.mrf.mxu0
      %2234 = vmatprep.mubr.f32.mxu0 0.0
      %2235 = vmatmul.mubr.f32.gmra.mxu0 %v2039
      %v2236 = vpop.f32.mrf.mxu0
      %v2237 = vadd.f32 0.0, %v2236
      %v2238 = vpop.f32.mrf.mxu0
      %2239 = vmatprep.mubr.f32.mxu0 0.0
      %2240 = vmatmul.mubr.f32.gmra.mxu0 %v2041
      %v2241 = vpop.f32.mrf.mxu0
      %v2242 = vadd.f32 0.0, %v2241
      %v2243 = vpop.f32.mrf.mxu0
      %2244 = vmatprep.mubr.f32.mxu0 0.0
      %2245 = vmatmul.mubr.f32.gmra.mxu0 %v2043
      %v2246 = vpop.f32.mrf.mxu0
      %v2247 = vadd.f32 0.0, %v2246
      %v2248 = vpop.f32.mrf.mxu0
      %2249 = vmatprep.mubr.f32.mxu0 0.0
      %2250 = vmatmul.mubr.f32.gmra.mxu0 %v2045
      %v2251 = vpop.f32.mrf.mxu0
      %v2252 = vadd.f32 0.0, %v2251
      %v2253 = vpop.f32.mrf.mxu0
      %2254 = vmatprep.mubr.f32.mxu0 0.0
      %2255 = vmatmul.mubr.f32.gmra.mxu0 %v2047
      %v2256 = vpop.f32.mrf.mxu0
      %v2257 = vadd.f32 0.0, %v2256
      %v2258 = vpop.f32.mrf.mxu0
      %2259 = vmatprep.mubr.f32.mxu0 0.0
      %2260 = vmatmul.mubr.f32.gmra.mxu0 %v2049
      %v2261 = vpop.f32.mrf.mxu0
      %v2262 = vadd.f32 0.0, %v2261
      %v2263 = vpop.f32.mrf.mxu0
      %2264 = vmatprep.mubr.f32.mxu0 0.0
      %2265 = vmatmul.mubr.f32.gmra.mxu0 %v2051
      %v2266 = vpop.f32.mrf.mxu0
      %v2267 = vadd.f32 0.0, %v2266
      %v2268 = vpop.f32.mrf.mxu0
      %2269 = vmatprep.mubr.f32.mxu0 0.0
      %2270 = vmatmul.mubr.f32.gmra.mxu0 %v2053
      %v2271 = vpop.f32.mrf.mxu0
      %v2272 = vadd.f32 0.0, %v2271
      %v2273 = vpop.f32.mrf.mxu0
      %2274 = vmatprep.mubr.f32.mxu0 0.0
      %2275 = vmatmul.mubr.f32.gmra.mxu0 %v2055
      %v2276 = vpop.f32.mrf.mxu0
      %v2277 = vadd.f32 0.0, %v2276
      %v2278 = vpop.f32.mrf.mxu0
      %2279 = vmatprep.mubr.f32.mxu0 0.0
      %2280 = vmatmul.mubr.f32.gmra.mxu0 %v2057
      %v2281 = vpop.f32.mrf.mxu0
      %v2282 = vadd.f32 0.0, %v2281
      %v2283 = vpop.f32.mrf.mxu0
      %2284 = vmatprep.mubr.f32.mxu0 0.0
      %2285 = vmatmul.mubr.f32.gmra.mxu0 %v2059
      %v2286 = vpop.f32.mrf.mxu0
      %v2287 = vadd.f32 0.0, %v2286
      %v2288 = vpop.f32.mrf.mxu0
      %2289 = vmatprep.mubr.f32.mxu0 0.0
      %2290 = vmatmul.mubr.f32.gmra.mxu0 %v2061
      %v2291 = vpop.f32.mrf.mxu0
      %v2292 = vadd.f32 0.0, %v2291
      %v2293 = vpop.f32.mrf.mxu0
      %2294 = vmatprep.mubr.f32.mxu0 0.0
      %2295 = vmatmul.mubr.f32.gmra.mxu0 %v2063
      %v2296 = vpop.f32.mrf.mxu0
      %v2297 = vadd.f32 0.0, %v2296
      %v2298 = vpop.f32.mrf.mxu0
      %2299 = vmatprep.mubr.f32.mxu0 0.0
      %2300 = vmatmul.mubr.f32.gmra.mxu0 %v2065
      %v2301 = vpop.f32.mrf.mxu0
      %v2302 = vadd.f32 0.0, %v2301
      %v2303 = vpop.f32.mrf.mxu0
      %2304 = vmatprep.mubr.f32.mxu0 0.0
      %2305 = vmatmul.mubr.f32.gmra.mxu0 %v2067
      %v2306 = vpop.f32.mrf.mxu0
      %v2307 = vadd.f32 0.0, %v2306
      %v2308 = vpop.f32.mrf.mxu0
      %2309 = vmatprep.mubr.f32.mxu0 0.0
      %2310 = vmatmul.mubr.f32.gmra.mxu0 %v2069
      %v2311 = vpop.f32.mrf.mxu0
      %v2312 = vadd.f32 0.0, %v2311
      %v2313 = vpop.f32.mrf.mxu0
      %2314 = vmatprep.mubr.f32.mxu0 0.0
      %2315 = vmatmul.mubr.f32.gmra.mxu0 %v2071
      %v2316 = vpop.f32.mrf.mxu0
      %v2317 = vadd.f32 0.0, %v2316
      %v2318 = vpop.f32.mrf.mxu0
      %2319 = vmatprep.mubr.f32.mxu0 0.0
      %2320 = vmatmul.mubr.f32.gmra.mxu0 %v2073
      %v2321 = vpop.f32.mrf.mxu0
      %v2322 = vadd.f32 0.0, %v2321
      %v2323 = vpop.f32.mrf.mxu0
      %2324 = vmatprep.mubr.f32.mxu0 0.0
      %2325 = vmatmul.mubr.f32.gmra.mxu0 %v2075
      %v2326 = vpop.f32.mrf.mxu0
      %v2327 = vadd.f32 0.0, %v2326
      %v2328 = vpop.f32.mrf.mxu0
      %2329 = vmatprep.mubr.f32.mxu0 0.0
      %2330 = vmatmul.mubr.f32.gmra.mxu0 %v2077
      %v2331 = vpop.f32.mrf.mxu0
      %v2332 = vadd.f32 0.0, %v2331
      %v2333 = vpop.f32.mrf.mxu0
      %2334 = vdwg.mxu0
      %v2335 = vadd.f32 %v1837, %v2177
      %v2336 = vadd.f32 %v1842, %v2182
      %v2337 = vadd.f32 %v1847, %v2187
      %v2338 = vadd.f32 %v1852, %v2192
      %v2339 = vadd.f32 %v1857, %v2197
      %v2340 = vadd.f32 %v1862, %v2202
      %v2341 = vadd.f32 %v1867, %v2207
      %v2342 = vadd.f32 %v1872, %v2212
      %v2343 = vadd.f32 %v1877, %v2217
      %v2344 = vadd.f32 %v1882, %v2222
      %v2345 = vadd.f32 %v1887, %v2227
      %v2346 = vadd.f32 %v1892, %v2232
      %v2347 = vadd.f32 %v1897, %v2237
      %v2348 = vadd.f32 %v1902, %v2242
      %v2349 = vadd.f32 %v1907, %v2247
      %v2350 = vadd.f32 %v1912, %v2252
      %v2351 = vadd.f32 %v1917, %v2257
      %v2352 = vadd.f32 %v1922, %v2262
      %v2353 = vadd.f32 %v1927, %v2267
      %v2354 = vadd.f32 %v1932, %v2272
      %v2355 = vadd.f32 %v1937, %v2277
      %v2356 = vadd.f32 %v1942, %v2282
      %v2357 = vadd.f32 %v1947, %v2287
      %v2358 = vadd.f32 %v1952, %v2292
      %v2359 = vadd.f32 %v1957, %v2297
      %v2360 = vadd.f32 %v1962, %v2302
      %v2361 = vadd.f32 %v1967, %v2307
      %v2362 = vadd.f32 %v1972, %v2312
      %v2363 = vadd.f32 %v1977, %v2317
      %v2364 = vadd.f32 %v1982, %v2322
      %v2365 = vadd.f32 %v1987, %v2327
      %v2366 = vadd.f32 %v1992, %v2332
      %s2367 = scalar_lea.vmem %s3, 384
      %v2368 = vld [vmem:[%s2367] sm:$0xff]
      %v2369 = vld [vmem:[%s2367 + $0x8] sm:$0xff]
      %v2370 = vld [vmem:[%s2367 + $0x10] sm:$0xff]
      %v2371 = vld [vmem:[%s2367 + $0x18] sm:$0xff]
      %v2372 = vld [vmem:[%s2367 + $0x20] sm:$0xff]
      %v2373 = vld [vmem:[%s2367 + $0x28] sm:$0xff]
      %v2374 = vld [vmem:[%s2367 + $0x30] sm:$0xff]
      %v2375 = vld [vmem:[%s2367 + $0x38] sm:$0xff]
      %v2376 = vld [vmem:[%s2367 + $0x40] sm:$0xff]
      %v2377 = vld [vmem:[%s2367 + $0x48] sm:$0xff]
      %v2378 = vld [vmem:[%s2367 + $0x50] sm:$0xff]
      %v2379 = vld [vmem:[%s2367 + $0x58] sm:$0xff]
      %v2380 = vld [vmem:[%s2367 + $0x60] sm:$0xff]
      %v2381 = vld [vmem:[%s2367 + $0x68] sm:$0xff]
      %v2382 = vld [vmem:[%s2367 + $0x70] sm:$0xff]
      %v2383 = vld [vmem:[%s2367 + $0x78] sm:$0xff]
      %2384 = vmatprep.subr.mxu0 0.0
      %2385 = vmatpush1.msra.mxu0 %v2383
      %2386 = vmatprep.subr.mxu0 0.0
      %2387 = vmatpush1.msra.mxu0 %v2382
      %2388 = vmatprep.subr.mxu0 0.0
      %2389 = vmatpush1.msra.mxu0 %v2381
      %2390 = vmatprep.subr.mxu0 0.0
      %2391 = vmatpush1.msra.mxu0 %v2380
      %2392 = vmatprep.subr.mxu0 0.0
      %2393 = vmatpush1.msra.mxu0 %v2379
      %2394 = vmatprep.subr.mxu0 0.0
      %2395 = vmatpush1.msra.mxu0 %v2378
      %2396 = vmatprep.subr.mxu0 0.0
      %2397 = vmatpush1.msra.mxu0 %v2377
      %2398 = vmatprep.subr.mxu0 0.0
      %2399 = vmatpush1.msra.mxu0 %v2376
      %2400 = vmatprep.subr.mxu0 0.0
      %2401 = vmatpush1.msra.mxu0 %v2375
      %2402 = vmatprep.subr.mxu0 0.0
      %2403 = vmatpush1.msra.mxu0 %v2374
      %2404 = vmatprep.subr.mxu0 0.0
      %2405 = vmatpush1.msra.mxu0 %v2373
      %2406 = vmatprep.subr.mxu0 0.0
      %2407 = vmatpush1.msra.mxu0 %v2372
      %2408 = vmatprep.subr.mxu0 0.0
      %2409 = vmatpush1.msra.mxu0 %v2371
      %2410 = vmatprep.subr.mxu0 0.0
      %2411 = vmatpush1.msra.mxu0 %v2370
      %2412 = vmatprep.subr.mxu0 0.0
      %2413 = vmatpush1.msra.mxu0 %v2369
      %2414 = vmatprep.subr.mxu0 0.0
      %2415 = vmatpush1.msra.mxu0 %v2368
      %2416 = vmatprep.subr.mxu0 0.0
      %2417 = vmatpush2.msra.mxu0 0.0
      %2418 = vmatprep.subr.mxu0 0.0
      %2419 = vmatpush2.msra.mxu0 0.0
      %2420 = vmatprep.subr.mxu0 0.0
      %2421 = vmatpush2.msra.mxu0 0.0
      %2422 = vmatprep.subr.mxu0 0.0
      %2423 = vmatpush2.msra.mxu0 0.0
      %2424 = vmatprep.subr.mxu0 0.0
      %2425 = vmatpush2.msra.mxu0 0.0
      %2426 = vmatprep.subr.mxu0 0.0
      %2427 = vmatpush2.msra.mxu0 0.0
      %2428 = vmatprep.subr.mxu0 0.0
      %2429 = vmatpush2.msra.mxu0 0.0
      %2430 = vmatprep.subr.mxu0 0.0
      %2431 = vmatpush2.msra.mxu0 0.0
      %2432 = vmatprep.subr.mxu0 0.0
      %2433 = vmatpush2.msra.mxu0 0.0
      %2434 = vmatprep.subr.mxu0 0.0
      %2435 = vmatpush2.msra.mxu0 0.0
      %2436 = vmatprep.subr.mxu0 0.0
      %2437 = vmatpush2.msra.mxu0 0.0
      %2438 = vmatprep.subr.mxu0 0.0
      %2439 = vmatpush2.msra.mxu0 0.0
      %2440 = vmatprep.subr.mxu0 0.0
      %2441 = vmatpush2.msra.mxu0 0.0
      %2442 = vmatprep.subr.mxu0 0.0
      %2443 = vmatpush2.msra.mxu0 0.0
      %2444 = vmatprep.subr.mxu0 0.0
      %2445 = vmatpush2.msra.mxu0 0.0
      %2446 = vmatprep.subr.mxu0 0.0
      %2447 = vmatpush2.msra.mxu0 0.0
      %2448 = vmatprep.mubr.f32.mxu0 0.0
      %2449 = vmatmul.mubr.f32.gmra.mxu0 %v1213
      %v2450 = vpop.f32.mrf.mxu0
      %v2451 = vadd.f32 0.0, %v2450
      %v2452 = vpop.f32.mrf.mxu0
      %2453 = vmatprep.mubr.f32.mxu0 0.0
      %2454 = vmatmul.mubr.f32.gmra.mxu0 %v1119
      %v2455 = vpop.f32.mrf.mxu0
      %v2456 = vadd.f32 0.0, %v2455
      %v2457 = vpop.f32.mrf.mxu0
      %2458 = vmatprep.mubr.f32.mxu0 0.0
      %2459 = vmatmul.mubr.f32.gmra.mxu0 %v1121
      %v2460 = vpop.f32.mrf.mxu0
      %v2461 = vadd.f32 0.0, %v2460
      %v2462 = vpop.f32.mrf.mxu0
      %2463 = vmatprep.mubr.f32.mxu0 0.0
      %2464 = vmatmul.mubr.f32.gmra.mxu0 %v1123
      %v2465 = vpop.f32.mrf.mxu0
      %v2466 = vadd.f32 0.0, %v2465
      %v2467 = vpop.f32.mrf.mxu0
      %2468 = vmatprep.mubr.f32.mxu0 0.0
      %2469 = vmatmul.mubr.f32.gmra.mxu0 %v1125
      %v2470 = vpop.f32.mrf.mxu0
      %v2471 = vadd.f32 0.0, %v2470
      %v2472 = vpop.f32.mrf.mxu0
      %2473 = vmatprep.mubr.f32.mxu0 0.0
      %2474 = vmatmul.mubr.f32.gmra.mxu0 %v1127
      %v2475 = vpop.f32.mrf.mxu0
      %v2476 = vadd.f32 0.0, %v2475
      %v2477 = vpop.f32.mrf.mxu0
      %2478 = vmatprep.mubr.f32.mxu0 0.0
      %2479 = vmatmul.mubr.f32.gmra.mxu0 %v1129
      %v2480 = vpop.f32.mrf.mxu0
      %v2481 = vadd.f32 0.0, %v2480
      %v2482 = vpop.f32.mrf.mxu0
      %2483 = vmatprep.mubr.f32.mxu0 0.0
      %2484 = vmatmul.mubr.f32.gmra.mxu0 %v1131
      %v2485 = vpop.f32.mrf.mxu0
      %v2486 = vadd.f32 0.0, %v2485
      %v2487 = vpop.f32.mrf.mxu0
      %2488 = vmatprep.mubr.f32.mxu0 0.0
      %2489 = vmatmul.mubr.f32.gmra.mxu0 %v1133
      %v2490 = vpop.f32.mrf.mxu0
      %v2491 = vadd.f32 0.0, %v2490
      %v2492 = vpop.f32.mrf.mxu0
      %2493 = vmatprep.mubr.f32.mxu0 0.0
      %2494 = vmatmul.mubr.f32.gmra.mxu0 %v1135
      %v2495 = vpop.f32.mrf.mxu0
      %v2496 = vadd.f32 0.0, %v2495
      %v2497 = vpop.f32.mrf.mxu0
      %2498 = vmatprep.mubr.f32.mxu0 0.0
      %2499 = vmatmul.mubr.f32.gmra.mxu0 %v1137
      %v2500 = vpop.f32.mrf.mxu0
      %v2501 = vadd.f32 0.0, %v2500
      %v2502 = vpop.f32.mrf.mxu0
      %2503 = vmatprep.mubr.f32.mxu0 0.0
      %2504 = vmatmul.mubr.f32.gmra.mxu0 %v1139
      %v2505 = vpop.f32.mrf.mxu0
      %v2506 = vadd.f32 0.0, %v2505
      %v2507 = vpop.f32.mrf.mxu0
      %2508 = vmatprep.mubr.f32.mxu0 0.0
      %2509 = vmatmul.mubr.f32.gmra.mxu0 %v1141
      %v2510 = vpop.f32.mrf.mxu0
      %v2511 = vadd.f32 0.0, %v2510
      %v2512 = vpop.f32.mrf.mxu0
      %2513 = vmatprep.mubr.f32.mxu0 0.0
      %2514 = vmatmul.mubr.f32.gmra.mxu0 %v1143
      %v2515 = vpop.f32.mrf.mxu0
      %v2516 = vadd.f32 0.0, %v2515
      %v2517 = vpop.f32.mrf.mxu0
      %2518 = vmatprep.mubr.f32.mxu0 0.0
      %2519 = vmatmul.mubr.f32.gmra.mxu0 %v1145
      %v2520 = vpop.f32.mrf.mxu0
      %v2521 = vadd.f32 0.0, %v2520
      %v2522 = vpop.f32.mrf.mxu0
      %2523 = vmatprep.mubr.f32.mxu0 0.0
      %2524 = vmatmul.mubr.f32.gmra.mxu0 %v1147
      %v2525 = vpop.f32.mrf.mxu0
      %v2526 = vadd.f32 0.0, %v2525
      %v2527 = vpop.f32.mrf.mxu0
      %2528 = vmatprep.mubr.f32.mxu0 0.0
      %2529 = vmatmul.mubr.f32.gmra.mxu0 %v1149
      %v2530 = vpop.f32.mrf.mxu0
      %v2531 = vadd.f32 0.0, %v2530
      %v2532 = vpop.f32.mrf.mxu0
      %2533 = vmatprep.mubr.f32.mxu0 0.0
      %2534 = vmatmul.mubr.f32.gmra.mxu0 %v1151
      %v2535 = vpop.f32.mrf.mxu0
      %v2536 = vadd.f32 0.0, %v2535
      %v2537 = vpop.f32.mrf.mxu0
      %2538 = vmatprep.mubr.f32.mxu0 0.0
      %2539 = vmatmul.mubr.f32.gmra.mxu0 %v1153
      %v2540 = vpop.f32.mrf.mxu0
      %v2541 = vadd.f32 0.0, %v2540
      %v2542 = vpop.f32.mrf.mxu0
      %2543 = vmatprep.mubr.f32.mxu0 0.0
      %2544 = vmatmul.mubr.f32.gmra.mxu0 %v1155
      %v2545 = vpop.f32.mrf.mxu0
      %v2546 = vadd.f32 0.0, %v2545
      %v2547 = vpop.f32.mrf.mxu0
      %2548 = vmatprep.mubr.f32.mxu0 0.0
      %2549 = vmatmul.mubr.f32.gmra.mxu0 %v1157
      %v2550 = vpop.f32.mrf.mxu0
      %v2551 = vadd.f32 0.0, %v2550
      %v2552 = vpop.f32.mrf.mxu0
      %2553 = vmatprep.mubr.f32.mxu0 0.0
      %2554 = vmatmul.mubr.f32.gmra.mxu0 %v1159
      %v2555 = vpop.f32.mrf.mxu0
      %v2556 = vadd.f32 0.0, %v2555
      %v2557 = vpop.f32.mrf.mxu0
      %2558 = vmatprep.mubr.f32.mxu0 0.0
      %2559 = vmatmul.mubr.f32.gmra.mxu0 %v1161
      %v2560 = vpop.f32.mrf.mxu0
      %v2561 = vadd.f32 0.0, %v2560
      %v2562 = vpop.f32.mrf.mxu0
      %2563 = vmatprep.mubr.f32.mxu0 0.0
      %2564 = vmatmul.mubr.f32.gmra.mxu0 %v1163
      %v2565 = vpop.f32.mrf.mxu0
      %v2566 = vadd.f32 0.0, %v2565
      %v2567 = vpop.f32.mrf.mxu0
      %2568 = vmatprep.mubr.f32.mxu0 0.0
      %2569 = vmatmul.mubr.f32.gmra.mxu0 %v1165
      %v2570 = vpop.f32.mrf.mxu0
      %v2571 = vadd.f32 0.0, %v2570
      %v2572 = vpop.f32.mrf.mxu0
      %2573 = vmatprep.mubr.f32.mxu0 0.0
      %2574 = vmatmul.mubr.f32.gmra.mxu0 %v1167
      %v2575 = vpop.f32.mrf.mxu0
      %v2576 = vadd.f32 0.0, %v2575
      %v2577 = vpop.f32.mrf.mxu0
      %2578 = vmatprep.mubr.f32.mxu0 0.0
      %2579 = vmatmul.mubr.f32.gmra.mxu0 %v1169
      %v2580 = vpop.f32.mrf.mxu0
      %v2581 = vadd.f32 0.0, %v2580
      %v2582 = vpop.f32.mrf.mxu0
      %2583 = vmatprep.mubr.f32.mxu0 0.0
      %2584 = vmatmul.mubr.f32.gmra.mxu0 %v1171
      %v2585 = vpop.f32.mrf.mxu0
      %v2586 = vadd.f32 0.0, %v2585
      %v2587 = vpop.f32.mrf.mxu0
      %2588 = vmatprep.mubr.f32.mxu0 0.0
      %2589 = vmatmul.mubr.f32.gmra.mxu0 %v1173
      %v2590 = vpop.f32.mrf.mxu0
      %v2591 = vadd.f32 0.0, %v2590
      %v2592 = vpop.f32.mrf.mxu0
      %2593 = vmatprep.mubr.f32.mxu0 0.0
      %2594 = vmatmul.mubr.f32.gmra.mxu0 %v1175
      %v2595 = vpop.f32.mrf.mxu0
      %v2596 = vadd.f32 0.0, %v2595
      %v2597 = vpop.f32.mrf.mxu0
      %2598 = vmatprep.mubr.f32.mxu0 0.0
      %2599 = vmatmul.mubr.f32.gmra.mxu0 %v1177
      %v2600 = vpop.f32.mrf.mxu0
      %v2601 = vadd.f32 0.0, %v2600
      %v2602 = vpop.f32.mrf.mxu0
      %2603 = vmatprep.mubr.f32.mxu0 0.0
      %2604 = vmatmul.mubr.f32.gmra.mxu0 %v1179
      %v2605 = vpop.f32.mrf.mxu0
      %v2606 = vadd.f32 0.0, %v2605
      %v2607 = vpop.f32.mrf.mxu0
      %2608 = vdwg.mxu0
      %v2609 = vadd.f32 %v2335, %v2451
      %v2610 = vadd.f32 %v2336, %v2456
      %v2611 = vadd.f32 %v2337, %v2461
      %v2612 = vadd.f32 %v2338, %v2466
      %v2613 = vadd.f32 %v2339, %v2471
      %v2614 = vadd.f32 %v2340, %v2476
      %v2615 = vadd.f32 %v2341, %v2481
      %v2616 = vadd.f32 %v2342, %v2486
      %v2617 = vadd.f32 %v2343, %v2491
      %v2618 = vadd.f32 %v2344, %v2496
      %v2619 = vadd.f32 %v2345, %v2501
      %v2620 = vadd.f32 %v2346, %v2506
      %v2621 = vadd.f32 %v2347, %v2511
      %v2622 = vadd.f32 %v2348, %v2516
      %v2623 = vadd.f32 %v2349, %v2521
      %v2624 = vadd.f32 %v2350, %v2526
      %v2625 = vadd.f32 %v2351, %v2531
      %v2626 = vadd.f32 %v2352, %v2536
      %v2627 = vadd.f32 %v2353, %v2541
      %v2628 = vadd.f32 %v2354, %v2546
      %v2629 = vadd.f32 %v2355, %v2551
      %v2630 = vadd.f32 %v2356, %v2556
      %v2631 = vadd.f32 %v2357, %v2561
      %v2632 = vadd.f32 %v2358, %v2566
      %v2633 = vadd.f32 %v2359, %v2571
      %v2634 = vadd.f32 %v2360, %v2576
      %v2635 = vadd.f32 %v2361, %v2581
      %v2636 = vadd.f32 %v2362, %v2586
      %v2637 = vadd.f32 %v2363, %v2591
      %v2638 = vadd.f32 %v2364, %v2596
      %v2639 = vadd.f32 %v2365, %v2601
      %v2640 = vadd.f32 %v2366, %v2606
      %s2641 = scalar_lea.vmem %s3, 512
      %v2642 = vld [vmem:[%s2641] sm:$0xff]
      %v2643 = vld [vmem:[%s2641 + $0x8] sm:$0xff]
      %v2644 = vld [vmem:[%s2641 + $0x10] sm:$0xff]
      %v2645 = vld [vmem:[%s2641 + $0x18] sm:$0xff]
      %v2646 = vld [vmem:[%s2641 + $0x20] sm:$0xff]
      %v2647 = vld [vmem:[%s2641 + $0x28] sm:$0xff]
      %v2648 = vld [vmem:[%s2641 + $0x30] sm:$0xff]
      %v2649 = vld [vmem:[%s2641 + $0x38] sm:$0xff]
      %v2650 = vld [vmem:[%s2641 + $0x40] sm:$0xff]
      %v2651 = vld [vmem:[%s2641 + $0x48] sm:$0xff]
      %v2652 = vld [vmem:[%s2641 + $0x50] sm:$0xff]
      %v2653 = vld [vmem:[%s2641 + $0x58] sm:$0xff]
      %v2654 = vld [vmem:[%s2641 + $0x60] sm:$0xff]
      %v2655 = vld [vmem:[%s2641 + $0x68] sm:$0xff]
      %v2656 = vld [vmem:[%s2641 + $0x70] sm:$0xff]
      %v2657 = vld [vmem:[%s2641 + $0x78] sm:$0xff]
      %v2659 = vrot.slane %v1309, 1
      %v2660 = vsel %vm1448, %v1511, %v2659
      %v2661 = vrot.slane %v1313, 1
      %v2662 = vsel %vm1448, %v2659, %v2661
      %2665 = vmatprep.subr.mxu0 0.0
      %2666 = vmatpush1.msra.mxu0 %v2657
      %2667 = vmatprep.subr.mxu0 0.0
      %2668 = vmatpush1.msra.mxu0 %v2656
      %2669 = vmatprep.subr.mxu0 0.0
      %2670 = vmatpush1.msra.mxu0 %v2655
      %2671 = vmatprep.subr.mxu0 0.0
      %2672 = vmatpush1.msra.mxu0 %v2654
      %2673 = vmatprep.subr.mxu0 0.0
      %2674 = vmatpush1.msra.mxu0 %v2653
      %2675 = vmatprep.subr.mxu0 0.0
      %2676 = vmatpush1.msra.mxu0 %v2652
      %2677 = vmatprep.subr.mxu0 0.0
      %2678 = vmatpush1.msra.mxu0 %v2651
      %2679 = vmatprep.subr.mxu0 0.0
      %2680 = vmatpush1.msra.mxu0 %v2650
      %2681 = vmatprep.subr.mxu0 0.0
      %2682 = vmatpush1.msra.mxu0 %v2649
      %2683 = vmatprep.subr.mxu0 0.0
      %2684 = vmatpush1.msra.mxu0 %v2648
      %2685 = vmatprep.subr.mxu0 0.0
      %2686 = vmatpush1.msra.mxu0 %v2647
      %2687 = vmatprep.subr.mxu0 0.0
      %2688 = vmatpush1.msra.mxu0 %v2646
      %2689 = vmatprep.subr.mxu0 0.0
      %2690 = vmatpush1.msra.mxu0 %v2645
      %2691 = vmatprep.subr.mxu0 0.0
      %2692 = vmatpush1.msra.mxu0 %v2644
      %2693 = vmatprep.subr.mxu0 0.0
      %2694 = vmatpush1.msra.mxu0 %v2643
      %2695 = vmatprep.subr.mxu0 0.0
      %2696 = vmatpush1.msra.mxu0 %v2642
      %2697 = vmatprep.subr.mxu0 0.0
      %2698 = vmatpush2.msra.mxu0 0.0
      %2699 = vmatprep.subr.mxu0 0.0
      %2700 = vmatpush2.msra.mxu0 0.0
      %2701 = vmatprep.subr.mxu0 0.0
      %2702 = vmatpush2.msra.mxu0 0.0
      %2703 = vmatprep.subr.mxu0 0.0
      %2704 = vmatpush2.msra.mxu0 0.0
      %2705 = vmatprep.subr.mxu0 0.0
      %2706 = vmatpush2.msra.mxu0 0.0
      %2707 = vmatprep.subr.mxu0 0.0
      %2708 = vmatpush2.msra.mxu0 0.0
      %2709 = vmatprep.subr.mxu0 0.0
      %2710 = vmatpush2.msra.mxu0 0.0
      %2711 = vmatprep.subr.mxu0 0.0
      %2712 = vmatpush2.msra.mxu0 0.0
      %2713 = vmatprep.subr.mxu0 0.0
      %2714 = vmatpush2.msra.mxu0 0.0
      %2715 = vmatprep.subr.mxu0 0.0
      %2716 = vmatpush2.msra.mxu0 0.0
      %2717 = vmatprep.subr.mxu0 0.0
      %2718 = vmatpush2.msra.mxu0 0.0
      %2719 = vmatprep.subr.mxu0 0.0
      %2720 = vmatpush2.msra.mxu0 0.0
      %2721 = vmatprep.subr.mxu0 0.0
      %2722 = vmatpush2.msra.mxu0 0.0
      %2723 = vmatprep.subr.mxu0 0.0
      %2724 = vmatpush2.msra.mxu0 0.0
      %2725 = vmatprep.subr.mxu0 0.0
      %2726 = vmatpush2.msra.mxu0 0.0
      %2727 = vmatprep.subr.mxu0 0.0
      %2728 = vmatpush2.msra.mxu0 0.0
      %2729 = vmatprep.mubr.f32.mxu0 0.0
      %2730 = vmatmul.mubr.f32.gmra.mxu0 %v1454
      %v2731 = vpop.f32.mrf.mxu0
      %v2732 = vadd.f32 0.0, %v2731
      %v2733 = vpop.f32.mrf.mxu0
      %2734 = vmatprep.mubr.f32.mxu0 0.0
      %2735 = vmatmul.mubr.f32.gmra.mxu0 %v1456
      %v2736 = vpop.f32.mrf.mxu0
      %v2737 = vadd.f32 0.0, %v2736
      %v2738 = vpop.f32.mrf.mxu0
      %2739 = vmatprep.mubr.f32.mxu0 0.0
      %2740 = vmatmul.mubr.f32.gmra.mxu0 %v1458
      %v2741 = vpop.f32.mrf.mxu0
      %v2742 = vadd.f32 0.0, %v2741
      %v2743 = vpop.f32.mrf.mxu0
      %2744 = vmatprep.mubr.f32.mxu0 0.0
      %2745 = vmatmul.mubr.f32.gmra.mxu0 %v1460
      %v2746 = vpop.f32.mrf.mxu0
      %v2747 = vadd.f32 0.0, %v2746
      %v2748 = vpop.f32.mrf.mxu0
      %2749 = vmatprep.mubr.f32.mxu0 0.0
      %2750 = vmatmul.mubr.f32.gmra.mxu0 %v1462
      %v2751 = vpop.f32.mrf.mxu0
      %v2752 = vadd.f32 0.0, %v2751
      %v2753 = vpop.f32.mrf.mxu0
      %2754 = vmatprep.mubr.f32.mxu0 0.0
      %2755 = vmatmul.mubr.f32.gmra.mxu0 %v1464
      %v2756 = vpop.f32.mrf.mxu0
      %v2757 = vadd.f32 0.0, %v2756
      %v2758 = vpop.f32.mrf.mxu0
      %2759 = vmatprep.mubr.f32.mxu0 0.0
      %2760 = vmatmul.mubr.f32.gmra.mxu0 %v1466
      %v2761 = vpop.f32.mrf.mxu0
      %v2762 = vadd.f32 0.0, %v2761
      %v2763 = vpop.f32.mrf.mxu0
      %2764 = vmatprep.mubr.f32.mxu0 0.0
      %2765 = vmatmul.mubr.f32.gmra.mxu0 %v1468
      %v2766 = vpop.f32.mrf.mxu0
      %v2767 = vadd.f32 0.0, %v2766
      %v2768 = vpop.f32.mrf.mxu0
      %2769 = vmatprep.mubr.f32.mxu0 0.0
      %2770 = vmatmul.mubr.f32.gmra.mxu0 %v1470
      %v2771 = vpop.f32.mrf.mxu0
      %v2772 = vadd.f32 0.0, %v2771
      %v2773 = vpop.f32.mrf.mxu0
      %2774 = vmatprep.mubr.f32.mxu0 0.0
      %2775 = vmatmul.mubr.f32.gmra.mxu0 %v1472
      %v2776 = vpop.f32.mrf.mxu0
      %v2777 = vadd.f32 0.0, %v2776
      %v2778 = vpop.f32.mrf.mxu0
      %2779 = vmatprep.mubr.f32.mxu0 0.0
      %2780 = vmatmul.mubr.f32.gmra.mxu0 %v1474
      %v2781 = vpop.f32.mrf.mxu0
      %v2782 = vadd.f32 0.0, %v2781
      %v2783 = vpop.f32.mrf.mxu0
      %2784 = vmatprep.mubr.f32.mxu0 0.0
      %2785 = vmatmul.mubr.f32.gmra.mxu0 %v1476
      %v2786 = vpop.f32.mrf.mxu0
      %v2787 = vadd.f32 0.0, %v2786
      %v2788 = vpop.f32.mrf.mxu0
      %2789 = vmatprep.mubr.f32.mxu0 0.0
      %2790 = vmatmul.mubr.f32.gmra.mxu0 %v1478
      %v2791 = vpop.f32.mrf.mxu0
      %v2792 = vadd.f32 0.0, %v2791
      %v2793 = vpop.f32.mrf.mxu0
      %2794 = vmatprep.mubr.f32.mxu0 0.0
      %2795 = vmatmul.mubr.f32.gmra.mxu0 %v1480
      %v2796 = vpop.f32.mrf.mxu0
      %v2797 = vadd.f32 0.0, %v2796
      %v2798 = vpop.f32.mrf.mxu0
      %2799 = vmatprep.mubr.f32.mxu0 0.0
      %2800 = vmatmul.mubr.f32.gmra.mxu0 %v1482
      %v2801 = vpop.f32.mrf.mxu0
      %v2802 = vadd.f32 0.0, %v2801
      %v2803 = vpop.f32.mrf.mxu0
      %2804 = vmatprep.mubr.f32.mxu0 0.0
      %2805 = vmatmul.mubr.f32.gmra.mxu0 %v1484
      %v2806 = vpop.f32.mrf.mxu0
      %v2807 = vadd.f32 0.0, %v2806
      %v2808 = vpop.f32.mrf.mxu0
      %2809 = vmatprep.mubr.f32.mxu0 0.0
      %2810 = vmatmul.mubr.f32.gmra.mxu0 %v1486
      %v2811 = vpop.f32.mrf.mxu0
      %v2812 = vadd.f32 0.0, %v2811
      %v2813 = vpop.f32.mrf.mxu0
      %2814 = vmatprep.mubr.f32.mxu0 0.0
      %2815 = vmatmul.mubr.f32.gmra.mxu0 %v1488
      %v2816 = vpop.f32.mrf.mxu0
      %v2817 = vadd.f32 0.0, %v2816
      %v2818 = vpop.f32.mrf.mxu0
      %2819 = vmatprep.mubr.f32.mxu0 0.0
      %2820 = vmatmul.mubr.f32.gmra.mxu0 %v1490
      %v2821 = vpop.f32.mrf.mxu0
      %v2822 = vadd.f32 0.0, %v2821
      %v2823 = vpop.f32.mrf.mxu0
      %2824 = vmatprep.mubr.f32.mxu0 0.0
      %2825 = vmatmul.mubr.f32.gmra.mxu0 %v1492
      %v2826 = vpop.f32.mrf.mxu0
      %v2827 = vadd.f32 0.0, %v2826
      %v2828 = vpop.f32.mrf.mxu0
      %2829 = vmatprep.mubr.f32.mxu0 0.0
      %2830 = vmatmul.mubr.f32.gmra.mxu0 %v1494
      %v2831 = vpop.f32.mrf.mxu0
      %v2832 = vadd.f32 0.0, %v2831
      %v2833 = vpop.f32.mrf.mxu0
      %2834 = vmatprep.mubr.f32.mxu0 0.0
      %2835 = vmatmul.mubr.f32.gmra.mxu0 %v1496
      %v2836 = vpop.f32.mrf.mxu0
      %v2837 = vadd.f32 0.0, %v2836
      %v2838 = vpop.f32.mrf.mxu0
      %2839 = vmatprep.mubr.f32.mxu0 0.0
      %2840 = vmatmul.mubr.f32.gmra.mxu0 %v1498
      %v2841 = vpop.f32.mrf.mxu0
      %v2842 = vadd.f32 0.0, %v2841
      %v2843 = vpop.f32.mrf.mxu0
      %2844 = vmatprep.mubr.f32.mxu0 0.0
      %2845 = vmatmul.mubr.f32.gmra.mxu0 %v1500
      %v2846 = vpop.f32.mrf.mxu0
      %v2847 = vadd.f32 0.0, %v2846
      %v2848 = vpop.f32.mrf.mxu0
      %2849 = vmatprep.mubr.f32.mxu0 0.0
      %2850 = vmatmul.mubr.f32.gmra.mxu0 %v1502
      %v2851 = vpop.f32.mrf.mxu0
      %v2852 = vadd.f32 0.0, %v2851
      %v2853 = vpop.f32.mrf.mxu0
      %2854 = vmatprep.mubr.f32.mxu0 0.0
      %2855 = vmatmul.mubr.f32.gmra.mxu0 %v1504
      %v2856 = vpop.f32.mrf.mxu0
      %v2857 = vadd.f32 0.0, %v2856
      %v2858 = vpop.f32.mrf.mxu0
      %2859 = vmatprep.mubr.f32.mxu0 0.0
      %2860 = vmatmul.mubr.f32.gmra.mxu0 %v1506
      %v2861 = vpop.f32.mrf.mxu0
      %v2862 = vadd.f32 0.0, %v2861
      %v2863 = vpop.f32.mrf.mxu0
      %2864 = vmatprep.mubr.f32.mxu0 0.0
      %2865 = vmatmul.mubr.f32.gmra.mxu0 %v1508
      %v2866 = vpop.f32.mrf.mxu0
      %v2867 = vadd.f32 0.0, %v2866
      %v2868 = vpop.f32.mrf.mxu0
      %2869 = vmatprep.mubr.f32.mxu0 0.0
      %2870 = vmatmul.mubr.f32.gmra.mxu0 %v1510
      %v2871 = vpop.f32.mrf.mxu0
      %v2872 = vadd.f32 0.0, %v2871
      %v2873 = vpop.f32.mrf.mxu0
      %2874 = vmatprep.mubr.f32.mxu0 0.0
      %2875 = vmatmul.mubr.f32.gmra.mxu0 %v1512
      %v2876 = vpop.f32.mrf.mxu0
      %v2877 = vadd.f32 0.0, %v2876
      %v2878 = vpop.f32.mrf.mxu0
      %2879 = vmatprep.mubr.f32.mxu0 0.0
      %2880 = vmatmul.mubr.f32.gmra.mxu0 %v2660
      %v2881 = vpop.f32.mrf.mxu0
      %v2882 = vadd.f32 0.0, %v2881
      %v2883 = vpop.f32.mrf.mxu0
      %2884 = vmatprep.mubr.f32.mxu0 0.0
      %2885 = vmatmul.mubr.f32.gmra.mxu0 %v2662
      %v2886 = vpop.f32.mrf.mxu0
      %v2887 = vadd.f32 0.0, %v2886
      %v2888 = vpop.f32.mrf.mxu0
      %2889 = vdwg.mxu0
      %v2890 = vadd.f32 %v2609, %v2732
      %v2891 = vadd.f32 %v2610, %v2737
      %v2892 = vadd.f32 %v2611, %v2742
      %v2893 = vadd.f32 %v2612, %v2747
      %v2894 = vadd.f32 %v2613, %v2752
      %v2895 = vadd.f32 %v2614, %v2757
      %v2896 = vadd.f32 %v2615, %v2762
      %v2897 = vadd.f32 %v2616, %v2767
      %v2898 = vadd.f32 %v2617, %v2772
      %v2899 = vadd.f32 %v2618, %v2777
      %v2900 = vadd.f32 %v2619, %v2782
      %v2901 = vadd.f32 %v2620, %v2787
      %v2902 = vadd.f32 %v2621, %v2792
      %v2903 = vadd.f32 %v2622, %v2797
      %v2904 = vadd.f32 %v2623, %v2802
      %v2905 = vadd.f32 %v2624, %v2807
      %v2906 = vadd.f32 %v2625, %v2812
      %v2907 = vadd.f32 %v2626, %v2817
      %v2908 = vadd.f32 %v2627, %v2822
      %v2909 = vadd.f32 %v2628, %v2827
      %v2910 = vadd.f32 %v2629, %v2832
      %v2911 = vadd.f32 %v2630, %v2837
      %v2912 = vadd.f32 %v2631, %v2842
      %v2913 = vadd.f32 %v2632, %v2847
      %v2914 = vadd.f32 %v2633, %v2852
      %v2915 = vadd.f32 %v2634, %v2857
      %v2916 = vadd.f32 %v2635, %v2862
      %v2917 = vadd.f32 %v2636, %v2867
      %v2918 = vadd.f32 %v2637, %v2872
      %v2919 = vadd.f32 %v2638, %v2877
      %v2920 = vadd.f32 %v2639, %v2882
      %v2921 = vadd.f32 %v2640, %v2887
      %s2922 = scalar_lea.vmem %s3, 640
      %v2923 = vld [vmem:[%s2922] sm:$0xff]
      %v2924 = vld [vmem:[%s2922 + $0x8] sm:$0xff]
      %v2925 = vld [vmem:[%s2922 + $0x10] sm:$0xff]
      %v2926 = vld [vmem:[%s2922 + $0x18] sm:$0xff]
      %v2927 = vld [vmem:[%s2922 + $0x20] sm:$0xff]
      %v2928 = vld [vmem:[%s2922 + $0x28] sm:$0xff]
      %v2929 = vld [vmem:[%s2922 + $0x30] sm:$0xff]
      %v2930 = vld [vmem:[%s2922 + $0x38] sm:$0xff]
      %v2931 = vld [vmem:[%s2922 + $0x40] sm:$0xff]
      %v2932 = vld [vmem:[%s2922 + $0x48] sm:$0xff]
      %v2933 = vld [vmem:[%s2922 + $0x50] sm:$0xff]
      %v2934 = vld [vmem:[%s2922 + $0x58] sm:$0xff]
      %v2935 = vld [vmem:[%s2922 + $0x60] sm:$0xff]
      %v2936 = vld [vmem:[%s2922 + $0x68] sm:$0xff]
      %v2937 = vld [vmem:[%s2922 + $0x70] sm:$0xff]
      %v2938 = vld [vmem:[%s2922 + $0x78] sm:$0xff]
      %v2940 = vrot.slane %v1408, 2
      %v2941 = vsel %vm2013, %v2076, %v2940
      %v2942 = vrot.slane %v1412, 2
      %v2943 = vsel %vm2013, %v2940, %v2942
      %2946 = vmatprep.subr.mxu0 0.0
      %2947 = vmatpush1.msra.mxu0 %v2938
      %2948 = vmatprep.subr.mxu0 0.0
      %2949 = vmatpush1.msra.mxu0 %v2937
      %2950 = vmatprep.subr.mxu0 0.0
      %2951 = vmatpush1.msra.mxu0 %v2936
      %2952 = vmatprep.subr.mxu0 0.0
      %2953 = vmatpush1.msra.mxu0 %v2935
      %2954 = vmatprep.subr.mxu0 0.0
      %2955 = vmatpush1.msra.mxu0 %v2934
      %2956 = vmatprep.subr.mxu0 0.0
      %2957 = vmatpush1.msra.mxu0 %v2933
      %2958 = vmatprep.subr.mxu0 0.0
      %2959 = vmatpush1.msra.mxu0 %v2932
      %2960 = vmatprep.subr.mxu0 0.0
      %2961 = vmatpush1.msra.mxu0 %v2931
      %2962 = vmatprep.subr.mxu0 0.0
      %2963 = vmatpush1.msra.mxu0 %v2930
      %2964 = vmatprep.subr.mxu0 0.0
      %2965 = vmatpush1.msra.mxu0 %v2929
      %2966 = vmatprep.subr.mxu0 0.0
      %2967 = vmatpush1.msra.mxu0 %v2928
      %2968 = vmatprep.subr.mxu0 0.0
      %2969 = vmatpush1.msra.mxu0 %v2927
      %2970 = vmatprep.subr.mxu0 0.0
      %2971 = vmatpush1.msra.mxu0 %v2926
      %2972 = vmatprep.subr.mxu0 0.0
      %2973 = vmatpush1.msra.mxu0 %v2925
      %2974 = vmatprep.subr.mxu0 0.0
      %2975 = vmatpush1.msra.mxu0 %v2924
      %2976 = vmatprep.subr.mxu0 0.0
      %2977 = vmatpush1.msra.mxu0 %v2923
      %2978 = vmatprep.subr.mxu0 0.0
      %2979 = vmatpush2.msra.mxu0 0.0
      %2980 = vmatprep.subr.mxu0 0.0
      %2981 = vmatpush2.msra.mxu0 0.0
      %2982 = vmatprep.subr.mxu0 0.0
      %2983 = vmatpush2.msra.mxu0 0.0
      %2984 = vmatprep.subr.mxu0 0.0
      %2985 = vmatpush2.msra.mxu0 0.0
      %2986 = vmatprep.subr.mxu0 0.0
      %2987 = vmatpush2.msra.mxu0 0.0
      %2988 = vmatprep.subr.mxu0 0.0
      %2989 = vmatpush2.msra.mxu0 0.0
      %2990 = vmatprep.subr.mxu0 0.0
      %2991 = vmatpush2.msra.mxu0 0.0
      %2992 = vmatprep.subr.mxu0 0.0
      %2993 = vmatpush2.msra.mxu0 0.0
      %2994 = vmatprep.subr.mxu0 0.0
      %2995 = vmatpush2.msra.mxu0 0.0
      %2996 = vmatprep.subr.mxu0 0.0
      %2997 = vmatpush2.msra.mxu0 0.0
      %2998 = vmatprep.subr.mxu0 0.0
      %2999 = vmatpush2.msra.mxu0 0.0
      %3000 = vmatprep.subr.mxu0 0.0
      %3001 = vmatpush2.msra.mxu0 0.0
      %3002 = vmatprep.subr.mxu0 0.0
      %3003 = vmatpush2.msra.mxu0 0.0
      %3004 = vmatprep.subr.mxu0 0.0
      %3005 = vmatpush2.msra.mxu0 0.0
      %3006 = vmatprep.subr.mxu0 0.0
      %3007 = vmatpush2.msra.mxu0 0.0
      %3008 = vmatprep.subr.mxu0 0.0
      %3009 = vmatpush2.msra.mxu0 0.0
      %3010 = vmatprep.mubr.f32.mxu0 0.0
      %3011 = vmatmul.mubr.f32.gmra.mxu0 %v2019
      %v3012 = vpop.f32.mrf.mxu0
      %v3013 = vadd.f32 0.0, %v3012
      %v3014 = vpop.f32.mrf.mxu0
      %3015 = vmatprep.mubr.f32.mxu0 0.0
      %3016 = vmatmul.mubr.f32.gmra.mxu0 %v2021
      %v3017 = vpop.f32.mrf.mxu0
      %v3018 = vadd.f32 0.0, %v3017
      %v3019 = vpop.f32.mrf.mxu0
      %3020 = vmatprep.mubr.f32.mxu0 0.0
      %3021 = vmatmul.mubr.f32.gmra.mxu0 %v2023
      %v3022 = vpop.f32.mrf.mxu0
      %v3023 = vadd.f32 0.0, %v3022
      %v3024 = vpop.f32.mrf.mxu0
      %3025 = vmatprep.mubr.f32.mxu0 0.0
      %3026 = vmatmul.mubr.f32.gmra.mxu0 %v2025
      %v3027 = vpop.f32.mrf.mxu0
      %v3028 = vadd.f32 0.0, %v3027
      %v3029 = vpop.f32.mrf.mxu0
      %3030 = vmatprep.mubr.f32.mxu0 0.0
      %3031 = vmatmul.mubr.f32.gmra.mxu0 %v2027
      %v3032 = vpop.f32.mrf.mxu0
      %v3033 = vadd.f32 0.0, %v3032
      %v3034 = vpop.f32.mrf.mxu0
      %3035 = vmatprep.mubr.f32.mxu0 0.0
      %3036 = vmatmul.mubr.f32.gmra.mxu0 %v2029
      %v3037 = vpop.f32.mrf.mxu0
      %v3038 = vadd.f32 0.0, %v3037
      %v3039 = vpop.f32.mrf.mxu0
      %3040 = vmatprep.mubr.f32.mxu0 0.0
      %3041 = vmatmul.mubr.f32.gmra.mxu0 %v2031
      %v3042 = vpop.f32.mrf.mxu0
      %v3043 = vadd.f32 0.0, %v3042
      %v3044 = vpop.f32.mrf.mxu0
      %3045 = vmatprep.mubr.f32.mxu0 0.0
      %3046 = vmatmul.mubr.f32.gmra.mxu0 %v2033
      %v3047 = vpop.f32.mrf.mxu0
      %v3048 = vadd.f32 0.0, %v3047
      %v3049 = vpop.f32.mrf.mxu0
      %3050 = vmatprep.mubr.f32.mxu0 0.0
      %3051 = vmatmul.mubr.f32.gmra.mxu0 %v2035
      %v3052 = vpop.f32.mrf.mxu0
      %v3053 = vadd.f32 0.0, %v3052
      %v3054 = vpop.f32.mrf.mxu0
      %3055 = vmatprep.mubr.f32.mxu0 0.0
      %3056 = vmatmul.mubr.f32.gmra.mxu0 %v2037
      %v3057 = vpop.f32.mrf.mxu0
      %v3058 = vadd.f32 0.0, %v3057
      %v3059 = vpop.f32.mrf.mxu0
      %3060 = vmatprep.mubr.f32.mxu0 0.0
      %3061 = vmatmul.mubr.f32.gmra.mxu0 %v2039
      %v3062 = vpop.f32.mrf.mxu0
      %v3063 = vadd.f32 0.0, %v3062
      %v3064 = vpop.f32.mrf.mxu0
      %3065 = vmatprep.mubr.f32.mxu0 0.0
      %3066 = vmatmul.mubr.f32.gmra.mxu0 %v2041
      %v3067 = vpop.f32.mrf.mxu0
      %v3068 = vadd.f32 0.0, %v3067
      %v3069 = vpop.f32.mrf.mxu0
      %3070 = vmatprep.mubr.f32.mxu0 0.0
      %3071 = vmatmul.mubr.f32.gmra.mxu0 %v2043
      %v3072 = vpop.f32.mrf.mxu0
      %v3073 = vadd.f32 0.0, %v3072
      %v3074 = vpop.f32.mrf.mxu0
      %3075 = vmatprep.mubr.f32.mxu0 0.0
      %3076 = vmatmul.mubr.f32.gmra.mxu0 %v2045
      %v3077 = vpop.f32.mrf.mxu0
      %v3078 = vadd.f32 0.0, %v3077
      %v3079 = vpop.f32.mrf.mxu0
      %3080 = vmatprep.mubr.f32.mxu0 0.0
      %3081 = vmatmul.mubr.f32.gmra.mxu0 %v2047
      %v3082 = vpop.f32.mrf.mxu0
      %v3083 = vadd.f32 0.0, %v3082
      %v3084 = vpop.f32.mrf.mxu0
      %3085 = vmatprep.mubr.f32.mxu0 0.0
      %3086 = vmatmul.mubr.f32.gmra.mxu0 %v2049
      %v3087 = vpop.f32.mrf.mxu0
      %v3088 = vadd.f32 0.0, %v3087
      %v3089 = vpop.f32.mrf.mxu0
      %3090 = vmatprep.mubr.f32.mxu0 0.0
      %3091 = vmatmul.mubr.f32.gmra.mxu0 %v2051
      %v3092 = vpop.f32.mrf.mxu0
      %v3093 = vadd.f32 0.0, %v3092
      %v3094 = vpop.f32.mrf.mxu0
      %3095 = vmatprep.mubr.f32.mxu0 0.0
      %3096 = vmatmul.mubr.f32.gmra.mxu0 %v2053
      %v3097 = vpop.f32.mrf.mxu0
      %v3098 = vadd.f32 0.0, %v3097
      %v3099 = vpop.f32.mrf.mxu0
      %3100 = vmatprep.mubr.f32.mxu0 0.0
      %3101 = vmatmul.mubr.f32.gmra.mxu0 %v2055
      %v3102 = vpop.f32.mrf.mxu0
      %v3103 = vadd.f32 0.0, %v3102
      %v3104 = vpop.f32.mrf.mxu0
      %3105 = vmatprep.mubr.f32.mxu0 0.0
      %3106 = vmatmul.mubr.f32.gmra.mxu0 %v2057
      %v3107 = vpop.f32.mrf.mxu0
      %v3108 = vadd.f32 0.0, %v3107
      %v3109 = vpop.f32.mrf.mxu0
      %3110 = vmatprep.mubr.f32.mxu0 0.0
      %3111 = vmatmul.mubr.f32.gmra.mxu0 %v2059
      %v3112 = vpop.f32.mrf.mxu0
      %v3113 = vadd.f32 0.0, %v3112
      %v3114 = vpop.f32.mrf.mxu0
      %3115 = vmatprep.mubr.f32.mxu0 0.0
      %3116 = vmatmul.mubr.f32.gmra.mxu0 %v2061
      %v3117 = vpop.f32.mrf.mxu0
      %v3118 = vadd.f32 0.0, %v3117
      %v3119 = vpop.f32.mrf.mxu0
      %3120 = vmatprep.mubr.f32.mxu0 0.0
      %3121 = vmatmul.mubr.f32.gmra.mxu0 %v2063
      %v3122 = vpop.f32.mrf.mxu0
      %v3123 = vadd.f32 0.0, %v3122
      %v3124 = vpop.f32.mrf.mxu0
      %3125 = vmatprep.mubr.f32.mxu0 0.0
      %3126 = vmatmul.mubr.f32.gmra.mxu0 %v2065
      %v3127 = vpop.f32.mrf.mxu0
      %v3128 = vadd.f32 0.0, %v3127
      %v3129 = vpop.f32.mrf.mxu0
      %3130 = vmatprep.mubr.f32.mxu0 0.0
      %3131 = vmatmul.mubr.f32.gmra.mxu0 %v2067
      %v3132 = vpop.f32.mrf.mxu0
      %v3133 = vadd.f32 0.0, %v3132
      %v3134 = vpop.f32.mrf.mxu0
      %3135 = vmatprep.mubr.f32.mxu0 0.0
      %3136 = vmatmul.mubr.f32.gmra.mxu0 %v2069
      %v3137 = vpop.f32.mrf.mxu0
      %v3138 = vadd.f32 0.0, %v3137
      %v3139 = vpop.f32.mrf.mxu0
      %3140 = vmatprep.mubr.f32.mxu0 0.0
      %3141 = vmatmul.mubr.f32.gmra.mxu0 %v2071
      %v3142 = vpop.f32.mrf.mxu0
      %v3143 = vadd.f32 0.0, %v3142
      %v3144 = vpop.f32.mrf.mxu0
      %3145 = vmatprep.mubr.f32.mxu0 0.0
      %3146 = vmatmul.mubr.f32.gmra.mxu0 %v2073
      %v3147 = vpop.f32.mrf.mxu0
      %v3148 = vadd.f32 0.0, %v3147
      %v3149 = vpop.f32.mrf.mxu0
      %3150 = vmatprep.mubr.f32.mxu0 0.0
      %3151 = vmatmul.mubr.f32.gmra.mxu0 %v2075
      %v3152 = vpop.f32.mrf.mxu0
      %v3153 = vadd.f32 0.0, %v3152
      %v3154 = vpop.f32.mrf.mxu0
      %3155 = vmatprep.mubr.f32.mxu0 0.0
      %3156 = vmatmul.mubr.f32.gmra.mxu0 %v2077
      %v3157 = vpop.f32.mrf.mxu0
      %v3158 = vadd.f32 0.0, %v3157
      %v3159 = vpop.f32.mrf.mxu0
      %3160 = vmatprep.mubr.f32.mxu0 0.0
      %3161 = vmatmul.mubr.f32.gmra.mxu0 %v2941
      %v3162 = vpop.f32.mrf.mxu0
      %v3163 = vadd.f32 0.0, %v3162
      %v3164 = vpop.f32.mrf.mxu0
      %3165 = vmatprep.mubr.f32.mxu0 0.0
      %3166 = vmatmul.mubr.f32.gmra.mxu0 %v2943
      %v3167 = vpop.f32.mrf.mxu0
      %v3168 = vadd.f32 0.0, %v3167
      %v3169 = vpop.f32.mrf.mxu0
      %3170 = vdwg.mxu0
      %v3171 = vadd.f32 %v2890, %v3013
      %v3172 = vadd.f32 %v2891, %v3018
      %v3173 = vadd.f32 %v2892, %v3023
      %v3174 = vadd.f32 %v2893, %v3028
      %v3175 = vadd.f32 %v2894, %v3033
      %v3176 = vadd.f32 %v2895, %v3038
      %v3177 = vadd.f32 %v2896, %v3043
      %v3178 = vadd.f32 %v2897, %v3048
      %v3179 = vadd.f32 %v2898, %v3053
      %v3180 = vadd.f32 %v2899, %v3058
      %v3181 = vadd.f32 %v2900, %v3063
      %v3182 = vadd.f32 %v2901, %v3068
      %v3183 = vadd.f32 %v2902, %v3073
      %v3184 = vadd.f32 %v2903, %v3078
      %v3185 = vadd.f32 %v2904, %v3083
      %v3186 = vadd.f32 %v2905, %v3088
      %v3187 = vadd.f32 %v2906, %v3093
      %v3188 = vadd.f32 %v2907, %v3098
      %v3189 = vadd.f32 %v2908, %v3103
      %v3190 = vadd.f32 %v2909, %v3108
      %v3191 = vadd.f32 %v2910, %v3113
      %v3192 = vadd.f32 %v2911, %v3118
      %v3193 = vadd.f32 %v2912, %v3123
      %v3194 = vadd.f32 %v2913, %v3128
      %v3195 = vadd.f32 %v2914, %v3133
      %v3196 = vadd.f32 %v2915, %v3138
      %v3197 = vadd.f32 %v2916, %v3143
      %v3198 = vadd.f32 %v2917, %v3148
      %v3199 = vadd.f32 %v2918, %v3153
      %v3200 = vadd.f32 %v2919, %v3158
      %v3201 = vadd.f32 %v2920, %v3163
      %v3202 = vadd.f32 %v2921, %v3168
      %s3203 = scalar_lea.vmem %s3, 768
      %v3204 = vld [vmem:[%s3203] sm:$0xff]
      %v3205 = vld [vmem:[%s3203 + $0x8] sm:$0xff]
      %v3206 = vld [vmem:[%s3203 + $0x10] sm:$0xff]
      %v3207 = vld [vmem:[%s3203 + $0x18] sm:$0xff]
      %v3208 = vld [vmem:[%s3203 + $0x20] sm:$0xff]
      %v3209 = vld [vmem:[%s3203 + $0x28] sm:$0xff]
      %v3210 = vld [vmem:[%s3203 + $0x30] sm:$0xff]
      %v3211 = vld [vmem:[%s3203 + $0x38] sm:$0xff]
      %v3212 = vld [vmem:[%s3203 + $0x40] sm:$0xff]
      %v3213 = vld [vmem:[%s3203 + $0x48] sm:$0xff]
      %v3214 = vld [vmem:[%s3203 + $0x50] sm:$0xff]
      %v3215 = vld [vmem:[%s3203 + $0x58] sm:$0xff]
      %v3216 = vld [vmem:[%s3203 + $0x60] sm:$0xff]
      %v3217 = vld [vmem:[%s3203 + $0x68] sm:$0xff]
      %v3218 = vld [vmem:[%s3203 + $0x70] sm:$0xff]
      %v3219 = vld [vmem:[%s3203 + $0x78] sm:$0xff]
      %3220 = vmatprep.subr.mxu0 0.0
      %3221 = vmatpush1.msra.mxu0 %v3219
      %3222 = vmatprep.subr.mxu0 0.0
      %3223 = vmatpush1.msra.mxu0 %v3218
      %3224 = vmatprep.subr.mxu0 0.0
      %3225 = vmatpush1.msra.mxu0 %v3217
      %3226 = vmatprep.subr.mxu0 0.0
      %3227 = vmatpush1.msra.mxu0 %v3216
      %3228 = vmatprep.subr.mxu0 0.0
      %3229 = vmatpush1.msra.mxu0 %v3215
      %3230 = vmatprep.subr.mxu0 0.0
      %3231 = vmatpush1.msra.mxu0 %v3214
      %3232 = vmatprep.subr.mxu0 0.0
      %3233 = vmatpush1.msra.mxu0 %v3213
      %3234 = vmatprep.subr.mxu0 0.0
      %3235 = vmatpush1.msra.mxu0 %v3212
      %3236 = vmatprep.subr.mxu0 0.0
      %3237 = vmatpush1.msra.mxu0 %v3211
      %3238 = vmatprep.subr.mxu0 0.0
      %3239 = vmatpush1.msra.mxu0 %v3210
      %3240 = vmatprep.subr.mxu0 0.0
      %3241 = vmatpush1.msra.mxu0 %v3209
      %3242 = vmatprep.subr.mxu0 0.0
      %3243 = vmatpush1.msra.mxu0 %v3208
      %3244 = vmatprep.subr.mxu0 0.0
      %3245 = vmatpush1.msra.mxu0 %v3207
      %3246 = vmatprep.subr.mxu0 0.0
      %3247 = vmatpush1.msra.mxu0 %v3206
      %3248 = vmatprep.subr.mxu0 0.0
      %3249 = vmatpush1.msra.mxu0 %v3205
      %3250 = vmatprep.subr.mxu0 0.0
      %3251 = vmatpush1.msra.mxu0 %v3204
      %3252 = vmatprep.subr.mxu0 0.0
      %3253 = vmatpush2.msra.mxu0 0.0
      %3254 = vmatprep.subr.mxu0 0.0
      %3255 = vmatpush2.msra.mxu0 0.0
      %3256 = vmatprep.subr.mxu0 0.0
      %3257 = vmatpush2.msra.mxu0 0.0
      %3258 = vmatprep.subr.mxu0 0.0
      %3259 = vmatpush2.msra.mxu0 0.0
      %3260 = vmatprep.subr.mxu0 0.0
      %3261 = vmatpush2.msra.mxu0 0.0
      %3262 = vmatprep.subr.mxu0 0.0
      %3263 = vmatpush2.msra.mxu0 0.0
      %3264 = vmatprep.subr.mxu0 0.0
      %3265 = vmatpush2.msra.mxu0 0.0
      %3266 = vmatprep.subr.mxu0 0.0
      %3267 = vmatpush2.msra.mxu0 0.0
      %3268 = vmatprep.subr.mxu0 0.0
      %3269 = vmatpush2.msra.mxu0 0.0
      %3270 = vmatprep.subr.mxu0 0.0
      %3271 = vmatpush2.msra.mxu0 0.0
      %3272 = vmatprep.subr.mxu0 0.0
      %3273 = vmatpush2.msra.mxu0 0.0
      %3274 = vmatprep.subr.mxu0 0.0
      %3275 = vmatpush2.msra.mxu0 0.0
      %3276 = vmatprep.subr.mxu0 0.0
      %3277 = vmatpush2.msra.mxu0 0.0
      %3278 = vmatprep.subr.mxu0 0.0
      %3279 = vmatpush2.msra.mxu0 0.0
      %3280 = vmatprep.subr.mxu0 0.0
      %3281 = vmatpush2.msra.mxu0 0.0
      %3282 = vmatprep.subr.mxu0 0.0
      %3283 = vmatpush2.msra.mxu0 0.0
      %3284 = vmatprep.mubr.f32.mxu0 0.0
      %3285 = vmatmul.mubr.f32.gmra.mxu0 %v1121
      %v3286 = vpop.f32.mrf.mxu0
      %v3287 = vadd.f32 0.0, %v3286
      %v3288 = vpop.f32.mrf.mxu0
      %3289 = vmatprep.mubr.f32.mxu0 0.0
      %3290 = vmatmul.mubr.f32.gmra.mxu0 %v1123
      %v3291 = vpop.f32.mrf.mxu0
      %v3292 = vadd.f32 0.0, %v3291
      %v3293 = vpop.f32.mrf.mxu0
      %3294 = vmatprep.mubr.f32.mxu0 0.0
      %3295 = vmatmul.mubr.f32.gmra.mxu0 %v1125
      %v3296 = vpop.f32.mrf.mxu0
      %v3297 = vadd.f32 0.0, %v3296
      %v3298 = vpop.f32.mrf.mxu0
      %3299 = vmatprep.mubr.f32.mxu0 0.0
      %3300 = vmatmul.mubr.f32.gmra.mxu0 %v1127
      %v3301 = vpop.f32.mrf.mxu0
      %v3302 = vadd.f32 0.0, %v3301
      %v3303 = vpop.f32.mrf.mxu0
      %3304 = vmatprep.mubr.f32.mxu0 0.0
      %3305 = vmatmul.mubr.f32.gmra.mxu0 %v1129
      %v3306 = vpop.f32.mrf.mxu0
      %v3307 = vadd.f32 0.0, %v3306
      %v3308 = vpop.f32.mrf.mxu0
      %3309 = vmatprep.mubr.f32.mxu0 0.0
      %3310 = vmatmul.mubr.f32.gmra.mxu0 %v1131
      %v3311 = vpop.f32.mrf.mxu0
      %v3312 = vadd.f32 0.0, %v3311
      %v3313 = vpop.f32.mrf.mxu0
      %3314 = vmatprep.mubr.f32.mxu0 0.0
      %3315 = vmatmul.mubr.f32.gmra.mxu0 %v1133
      %v3316 = vpop.f32.mrf.mxu0
      %v3317 = vadd.f32 0.0, %v3316
      %v3318 = vpop.f32.mrf.mxu0
      %3319 = vmatprep.mubr.f32.mxu0 0.0
      %3320 = vmatmul.mubr.f32.gmra.mxu0 %v1135
      %v3321 = vpop.f32.mrf.mxu0
      %v3322 = vadd.f32 0.0, %v3321
      %v3323 = vpop.f32.mrf.mxu0
      %3324 = vmatprep.mubr.f32.mxu0 0.0
      %3325 = vmatmul.mubr.f32.gmra.mxu0 %v1137
      %v3326 = vpop.f32.mrf.mxu0
      %v3327 = vadd.f32 0.0, %v3326
      %v3328 = vpop.f32.mrf.mxu0
      %3329 = vmatprep.mubr.f32.mxu0 0.0
      %3330 = vmatmul.mubr.f32.gmra.mxu0 %v1139
      %v3331 = vpop.f32.mrf.mxu0
      %v3332 = vadd.f32 0.0, %v3331
      %v3333 = vpop.f32.mrf.mxu0
      %3334 = vmatprep.mubr.f32.mxu0 0.0
      %3335 = vmatmul.mubr.f32.gmra.mxu0 %v1141
      %v3336 = vpop.f32.mrf.mxu0
      %v3337 = vadd.f32 0.0, %v3336
      %v3338 = vpop.f32.mrf.mxu0
      %3339 = vmatprep.mubr.f32.mxu0 0.0
      %3340 = vmatmul.mubr.f32.gmra.mxu0 %v1143
      %v3341 = vpop.f32.mrf.mxu0
      %v3342 = vadd.f32 0.0, %v3341
      %v3343 = vpop.f32.mrf.mxu0
      %3344 = vmatprep.mubr.f32.mxu0 0.0
      %3345 = vmatmul.mubr.f32.gmra.mxu0 %v1145
      %v3346 = vpop.f32.mrf.mxu0
      %v3347 = vadd.f32 0.0, %v3346
      %v3348 = vpop.f32.mrf.mxu0
      %3349 = vmatprep.mubr.f32.mxu0 0.0
      %3350 = vmatmul.mubr.f32.gmra.mxu0 %v1147
      %v3351 = vpop.f32.mrf.mxu0
      %v3352 = vadd.f32 0.0, %v3351
      %v3353 = vpop.f32.mrf.mxu0
      %3354 = vmatprep.mubr.f32.mxu0 0.0
      %3355 = vmatmul.mubr.f32.gmra.mxu0 %v1149
      %v3356 = vpop.f32.mrf.mxu0
      %v3357 = vadd.f32 0.0, %v3356
      %v3358 = vpop.f32.mrf.mxu0
      %3359 = vmatprep.mubr.f32.mxu0 0.0
      %3360 = vmatmul.mubr.f32.gmra.mxu0 %v1151
      %v3361 = vpop.f32.mrf.mxu0
      %v3362 = vadd.f32 0.0, %v3361
      %v3363 = vpop.f32.mrf.mxu0
      %3364 = vmatprep.mubr.f32.mxu0 0.0
      %3365 = vmatmul.mubr.f32.gmra.mxu0 %v1153
      %v3366 = vpop.f32.mrf.mxu0
      %v3367 = vadd.f32 0.0, %v3366
      %v3368 = vpop.f32.mrf.mxu0
      %3369 = vmatprep.mubr.f32.mxu0 0.0
      %3370 = vmatmul.mubr.f32.gmra.mxu0 %v1155
      %v3371 = vpop.f32.mrf.mxu0
      %v3372 = vadd.f32 0.0, %v3371
      %v3373 = vpop.f32.mrf.mxu0
      %3374 = vmatprep.mubr.f32.mxu0 0.0
      %3375 = vmatmul.mubr.f32.gmra.mxu0 %v1157
      %v3376 = vpop.f32.mrf.mxu0
      %v3377 = vadd.f32 0.0, %v3376
      %v3378 = vpop.f32.mrf.mxu0
      %3379 = vmatprep.mubr.f32.mxu0 0.0
      %3380 = vmatmul.mubr.f32.gmra.mxu0 %v1159
      %v3381 = vpop.f32.mrf.mxu0
      %v3382 = vadd.f32 0.0, %v3381
      %v3383 = vpop.f32.mrf.mxu0
      %3384 = vmatprep.mubr.f32.mxu0 0.0
      %3385 = vmatmul.mubr.f32.gmra.mxu0 %v1161
      %v3386 = vpop.f32.mrf.mxu0
      %v3387 = vadd.f32 0.0, %v3386
      %v3388 = vpop.f32.mrf.mxu0
      %3389 = vmatprep.mubr.f32.mxu0 0.0
      %3390 = vmatmul.mubr.f32.gmra.mxu0 %v1163
      %v3391 = vpop.f32.mrf.mxu0
      %v3392 = vadd.f32 0.0, %v3391
      %v3393 = vpop.f32.mrf.mxu0
      %3394 = vmatprep.mubr.f32.mxu0 0.0
      %3395 = vmatmul.mubr.f32.gmra.mxu0 %v1165
      %v3396 = vpop.f32.mrf.mxu0
      %v3397 = vadd.f32 0.0, %v3396
      %v3398 = vpop.f32.mrf.mxu0
      %3399 = vmatprep.mubr.f32.mxu0 0.0
      %3400 = vmatmul.mubr.f32.gmra.mxu0 %v1167
      %v3401 = vpop.f32.mrf.mxu0
      %v3402 = vadd.f32 0.0, %v3401
      %v3403 = vpop.f32.mrf.mxu0
      %3404 = vmatprep.mubr.f32.mxu0 0.0
      %3405 = vmatmul.mubr.f32.gmra.mxu0 %v1169
      %v3406 = vpop.f32.mrf.mxu0
      %v3407 = vadd.f32 0.0, %v3406
      %v3408 = vpop.f32.mrf.mxu0
      %3409 = vmatprep.mubr.f32.mxu0 0.0
      %3410 = vmatmul.mubr.f32.gmra.mxu0 %v1171
      %v3411 = vpop.f32.mrf.mxu0
      %v3412 = vadd.f32 0.0, %v3411
      %v3413 = vpop.f32.mrf.mxu0
      %3414 = vmatprep.mubr.f32.mxu0 0.0
      %3415 = vmatmul.mubr.f32.gmra.mxu0 %v1173
      %v3416 = vpop.f32.mrf.mxu0
      %v3417 = vadd.f32 0.0, %v3416
      %v3418 = vpop.f32.mrf.mxu0
      %3419 = vmatprep.mubr.f32.mxu0 0.0
      %3420 = vmatmul.mubr.f32.gmra.mxu0 %v1175
      %v3421 = vpop.f32.mrf.mxu0
      %v3422 = vadd.f32 0.0, %v3421
      %v3423 = vpop.f32.mrf.mxu0
      %3424 = vmatprep.mubr.f32.mxu0 0.0
      %3425 = vmatmul.mubr.f32.gmra.mxu0 %v1177
      %v3426 = vpop.f32.mrf.mxu0
      %v3427 = vadd.f32 0.0, %v3426
      %v3428 = vpop.f32.mrf.mxu0
      %3429 = vmatprep.mubr.f32.mxu0 0.0
      %3430 = vmatmul.mubr.f32.gmra.mxu0 %v1179
      %v3431 = vpop.f32.mrf.mxu0
      %v3432 = vadd.f32 0.0, %v3431
      %v3433 = vpop.f32.mrf.mxu0
      %3434 = vmatprep.mubr.f32.mxu0 0.0
      %3435 = vmatmul.mubr.f32.gmra.mxu0 %v1214
      %v3436 = vpop.f32.mrf.mxu0
      %v3437 = vadd.f32 0.0, %v3436
      %v3438 = vpop.f32.mrf.mxu0
      %3439 = vmatprep.mubr.f32.mxu0 0.0
      %3440 = vmatmul.mubr.f32.gmra.mxu0 0.0
      %v3441 = vpop.f32.mrf.mxu0
      %v3442 = vadd.f32 0.0, %v3441
      %v3443 = vpop.f32.mrf.mxu0
      %3444 = vdwg.mxu0
      %v3445 = vadd.f32 %v3171, %v3287
      %v3446 = vadd.f32 %v3172, %v3292
      %v3447 = vadd.f32 %v3173, %v3297
      %v3448 = vadd.f32 %v3174, %v3302
      %v3449 = vadd.f32 %v3175, %v3307
      %v3450 = vadd.f32 %v3176, %v3312
      %v3451 = vadd.f32 %v3177, %v3317
      %v3452 = vadd.f32 %v3178, %v3322
      %v3453 = vadd.f32 %v3179, %v3327
      %v3454 = vadd.f32 %v3180, %v3332
      %v3455 = vadd.f32 %v3181, %v3337
      %v3456 = vadd.f32 %v3182, %v3342
      %v3457 = vadd.f32 %v3183, %v3347
      %v3458 = vadd.f32 %v3184, %v3352
      %v3459 = vadd.f32 %v3185, %v3357
      %v3460 = vadd.f32 %v3186, %v3362
      %v3461 = vadd.f32 %v3187, %v3367
      %v3462 = vadd.f32 %v3188, %v3372
      %v3463 = vadd.f32 %v3189, %v3377
      %v3464 = vadd.f32 %v3190, %v3382
      %v3465 = vadd.f32 %v3191, %v3387
      %v3466 = vadd.f32 %v3192, %v3392
      %v3467 = vadd.f32 %v3193, %v3397
      %v3468 = vadd.f32 %v3194, %v3402
      %v3469 = vadd.f32 %v3195, %v3407
      %v3470 = vadd.f32 %v3196, %v3412
      %v3471 = vadd.f32 %v3197, %v3417
      %v3472 = vadd.f32 %v3198, %v3422
      %v3473 = vadd.f32 %v3199, %v3427
      %v3474 = vadd.f32 %v3200, %v3432
      %v3475 = vadd.f32 %v3201, %v3437
      %v3476 = vadd.f32 %v3202, %v3442
      %s3477 = scalar_lea.vmem %s3, 896
      %v3478 = vld [vmem:[%s3477] sm:$0xff]
      %v3479 = vld [vmem:[%s3477 + $0x8] sm:$0xff]
      %v3480 = vld [vmem:[%s3477 + $0x10] sm:$0xff]
      %v3481 = vld [vmem:[%s3477 + $0x18] sm:$0xff]
      %v3482 = vld [vmem:[%s3477 + $0x20] sm:$0xff]
      %v3483 = vld [vmem:[%s3477 + $0x28] sm:$0xff]
      %v3484 = vld [vmem:[%s3477 + $0x30] sm:$0xff]
      %v3485 = vld [vmem:[%s3477 + $0x38] sm:$0xff]
      %v3486 = vld [vmem:[%s3477 + $0x40] sm:$0xff]
      %v3487 = vld [vmem:[%s3477 + $0x48] sm:$0xff]
      %v3488 = vld [vmem:[%s3477 + $0x50] sm:$0xff]
      %v3489 = vld [vmem:[%s3477 + $0x58] sm:$0xff]
      %v3490 = vld [vmem:[%s3477 + $0x60] sm:$0xff]
      %v3491 = vld [vmem:[%s3477 + $0x68] sm:$0xff]
      %v3492 = vld [vmem:[%s3477 + $0x70] sm:$0xff]
      %v3493 = vld [vmem:[%s3477 + $0x78] sm:$0xff]
      %v3494 = vsel %vm1448, %v2661, %v1449
      %3496 = vmatprep.subr.mxu0 0.0
      %3497 = vmatpush1.msra.mxu0 %v3493
      %3498 = vmatprep.subr.mxu0 0.0
      %3499 = vmatpush1.msra.mxu0 %v3492
      %3500 = vmatprep.subr.mxu0 0.0
      %3501 = vmatpush1.msra.mxu0 %v3491
      %3502 = vmatprep.subr.mxu0 0.0
      %3503 = vmatpush1.msra.mxu0 %v3490
      %3504 = vmatprep.subr.mxu0 0.0
      %3505 = vmatpush1.msra.mxu0 %v3489
      %3506 = vmatprep.subr.mxu0 0.0
      %3507 = vmatpush1.msra.mxu0 %v3488
      %3508 = vmatprep.subr.mxu0 0.0
      %3509 = vmatpush1.msra.mxu0 %v3487
      %3510 = vmatprep.subr.mxu0 0.0
      %3511 = vmatpush1.msra.mxu0 %v3486
      %3512 = vmatprep.subr.mxu0 0.0
      %3513 = vmatpush1.msra.mxu0 %v3485
      %3514 = vmatprep.subr.mxu0 0.0
      %3515 = vmatpush1.msra.mxu0 %v3484
      %3516 = vmatprep.subr.mxu0 0.0
      %3517 = vmatpush1.msra.mxu0 %v3483
      %3518 = vmatprep.subr.mxu0 0.0
      %3519 = vmatpush1.msra.mxu0 %v3482
      %3520 = vmatprep.subr.mxu0 0.0
      %3521 = vmatpush1.msra.mxu0 %v3481
      %3522 = vmatprep.subr.mxu0 0.0
      %3523 = vmatpush1.msra.mxu0 %v3480
      %3524 = vmatprep.subr.mxu0 0.0
      %3525 = vmatpush1.msra.mxu0 %v3479
      %3526 = vmatprep.subr.mxu0 0.0
      %3527 = vmatpush1.msra.mxu0 %v3478
      %3528 = vmatprep.subr.mxu0 0.0
      %3529 = vmatpush2.msra.mxu0 0.0
      %3530 = vmatprep.subr.mxu0 0.0
      %3531 = vmatpush2.msra.mxu0 0.0
      %3532 = vmatprep.subr.mxu0 0.0
      %3533 = vmatpush2.msra.mxu0 0.0
      %3534 = vmatprep.subr.mxu0 0.0
      %3535 = vmatpush2.msra.mxu0 0.0
      %3536 = vmatprep.subr.mxu0 0.0
      %3537 = vmatpush2.msra.mxu0 0.0
      %3538 = vmatprep.subr.mxu0 0.0
      %3539 = vmatpush2.msra.mxu0 0.0
      %3540 = vmatprep.subr.mxu0 0.0
      %3541 = vmatpush2.msra.mxu0 0.0
      %3542 = vmatprep.subr.mxu0 0.0
      %3543 = vmatpush2.msra.mxu0 0.0
      %3544 = vmatprep.subr.mxu0 0.0
      %3545 = vmatpush2.msra.mxu0 0.0
      %3546 = vmatprep.subr.mxu0 0.0
      %3547 = vmatpush2.msra.mxu0 0.0
      %3548 = vmatprep.subr.mxu0 0.0
      %3549 = vmatpush2.msra.mxu0 0.0
      %3550 = vmatprep.subr.mxu0 0.0
      %3551 = vmatpush2.msra.mxu0 0.0
      %3552 = vmatprep.subr.mxu0 0.0
      %3553 = vmatpush2.msra.mxu0 0.0
      %3554 = vmatprep.subr.mxu0 0.0
      %3555 = vmatpush2.msra.mxu0 0.0
      %3556 = vmatprep.subr.mxu0 0.0
      %3557 = vmatpush2.msra.mxu0 0.0
      %3558 = vmatprep.subr.mxu0 0.0
      %3559 = vmatpush2.msra.mxu0 0.0
      %3560 = vmatprep.mubr.f32.mxu0 0.0
      %3561 = vmatmul.mubr.f32.gmra.mxu0 %v1458
      %v3562 = vpop.f32.mrf.mxu0
      %v3563 = vadd.f32 0.0, %v3562
      %v3564 = vpop.f32.mrf.mxu0
      %3565 = vmatprep.mubr.f32.mxu0 0.0
      %3566 = vmatmul.mubr.f32.gmra.mxu0 %v1460
      %v3567 = vpop.f32.mrf.mxu0
      %v3568 = vadd.f32 0.0, %v3567
      %v3569 = vpop.f32.mrf.mxu0
      %3570 = vmatprep.mubr.f32.mxu0 0.0
      %3571 = vmatmul.mubr.f32.gmra.mxu0 %v1462
      %v3572 = vpop.f32.mrf.mxu0
      %v3573 = vadd.f32 0.0, %v3572
      %v3574 = vpop.f32.mrf.mxu0
      %3575 = vmatprep.mubr.f32.mxu0 0.0
      %3576 = vmatmul.mubr.f32.gmra.mxu0 %v1464
      %v3577 = vpop.f32.mrf.mxu0
      %v3578 = vadd.f32 0.0, %v3577
      %v3579 = vpop.f32.mrf.mxu0
      %3580 = vmatprep.mubr.f32.mxu0 0.0
      %3581 = vmatmul.mubr.f32.gmra.mxu0 %v1466
      %v3582 = vpop.f32.mrf.mxu0
      %v3583 = vadd.f32 0.0, %v3582
      %v3584 = vpop.f32.mrf.mxu0
      %3585 = vmatprep.mubr.f32.mxu0 0.0
      %3586 = vmatmul.mubr.f32.gmra.mxu0 %v1468
      %v3587 = vpop.f32.mrf.mxu0
      %v3588 = vadd.f32 0.0, %v3587
      %v3589 = vpop.f32.mrf.mxu0
      %3590 = vmatprep.mubr.f32.mxu0 0.0
      %3591 = vmatmul.mubr.f32.gmra.mxu0 %v1470
      %v3592 = vpop.f32.mrf.mxu0
      %v3593 = vadd.f32 0.0, %v3592
      %v3594 = vpop.f32.mrf.mxu0
      %3595 = vmatprep.mubr.f32.mxu0 0.0
      %3596 = vmatmul.mubr.f32.gmra.mxu0 %v1472
      %v3597 = vpop.f32.mrf.mxu0
      %v3598 = vadd.f32 0.0, %v3597
      %v3599 = vpop.f32.mrf.mxu0
      %3600 = vmatprep.mubr.f32.mxu0 0.0
      %3601 = vmatmul.mubr.f32.gmra.mxu0 %v1474
      %v3602 = vpop.f32.mrf.mxu0
      %v3603 = vadd.f32 0.0, %v3602
      %v3604 = vpop.f32.mrf.mxu0
      %3605 = vmatprep.mubr.f32.mxu0 0.0
      %3606 = vmatmul.mubr.f32.gmra.mxu0 %v1476
      %v3607 = vpop.f32.mrf.mxu0
      %v3608 = vadd.f32 0.0, %v3607
      %v3609 = vpop.f32.mrf.mxu0
      %3610 = vmatprep.mubr.f32.mxu0 0.0
      %3611 = vmatmul.mubr.f32.gmra.mxu0 %v1478
      %v3612 = vpop.f32.mrf.mxu0
      %v3613 = vadd.f32 0.0, %v3612
      %v3614 = vpop.f32.mrf.mxu0
      %3615 = vmatprep.mubr.f32.mxu0 0.0
      %3616 = vmatmul.mubr.f32.gmra.mxu0 %v1480
      %v3617 = vpop.f32.mrf.mxu0
      %v3618 = vadd.f32 0.0, %v3617
      %v3619 = vpop.f32.mrf.mxu0
      %3620 = vmatprep.mubr.f32.mxu0 0.0
      %3621 = vmatmul.mubr.f32.gmra.mxu0 %v1482
      %v3622 = vpop.f32.mrf.mxu0
      %v3623 = vadd.f32 0.0, %v3622
      %v3624 = vpop.f32.mrf.mxu0
      %3625 = vmatprep.mubr.f32.mxu0 0.0
      %3626 = vmatmul.mubr.f32.gmra.mxu0 %v1484
      %v3627 = vpop.f32.mrf.mxu0
      %v3628 = vadd.f32 0.0, %v3627
      %v3629 = vpop.f32.mrf.mxu0
      %3630 = vmatprep.mubr.f32.mxu0 0.0
      %3631 = vmatmul.mubr.f32.gmra.mxu0 %v1486
      %v3632 = vpop.f32.mrf.mxu0
      %v3633 = vadd.f32 0.0, %v3632
      %v3634 = vpop.f32.mrf.mxu0
      %3635 = vmatprep.mubr.f32.mxu0 0.0
      %3636 = vmatmul.mubr.f32.gmra.mxu0 %v1488
      %v3637 = vpop.f32.mrf.mxu0
      %v3638 = vadd.f32 0.0, %v3637
      %v3639 = vpop.f32.mrf.mxu0
      %3640 = vmatprep.mubr.f32.mxu0 0.0
      %3641 = vmatmul.mubr.f32.gmra.mxu0 %v1490
      %v3642 = vpop.f32.mrf.mxu0
      %v3643 = vadd.f32 0.0, %v3642
      %v3644 = vpop.f32.mrf.mxu0
      %3645 = vmatprep.mubr.f32.mxu0 0.0
      %3646 = vmatmul.mubr.f32.gmra.mxu0 %v1492
      %v3647 = vpop.f32.mrf.mxu0
      %v3648 = vadd.f32 0.0, %v3647
      %v3649 = vpop.f32.mrf.mxu0
      %3650 = vmatprep.mubr.f32.mxu0 0.0
      %3651 = vmatmul.mubr.f32.gmra.mxu0 %v1494
      %v3652 = vpop.f32.mrf.mxu0
      %v3653 = vadd.f32 0.0, %v3652
      %v3654 = vpop.f32.mrf.mxu0
      %3655 = vmatprep.mubr.f32.mxu0 0.0
      %3656 = vmatmul.mubr.f32.gmra.mxu0 %v1496
      %v3657 = vpop.f32.mrf.mxu0
      %v3658 = vadd.f32 0.0, %v3657
      %v3659 = vpop.f32.mrf.mxu0
      %3660 = vmatprep.mubr.f32.mxu0 0.0
      %3661 = vmatmul.mubr.f32.gmra.mxu0 %v1498
      %v3662 = vpop.f32.mrf.mxu0
      %v3663 = vadd.f32 0.0, %v3662
      %v3664 = vpop.f32.mrf.mxu0
      %3665 = vmatprep.mubr.f32.mxu0 0.0
      %3666 = vmatmul.mubr.f32.gmra.mxu0 %v1500
      %v3667 = vpop.f32.mrf.mxu0
      %v3668 = vadd.f32 0.0, %v3667
      %v3669 = vpop.f32.mrf.mxu0
      %3670 = vmatprep.mubr.f32.mxu0 0.0
      %3671 = vmatmul.mubr.f32.gmra.mxu0 %v1502
      %v3672 = vpop.f32.mrf.mxu0
      %v3673 = vadd.f32 0.0, %v3672
      %v3674 = vpop.f32.mrf.mxu0
      %3675 = vmatprep.mubr.f32.mxu0 0.0
      %3676 = vmatmul.mubr.f32.gmra.mxu0 %v1504
      %v3677 = vpop.f32.mrf.mxu0
      %v3678 = vadd.f32 0.0, %v3677
      %v3679 = vpop.f32.mrf.mxu0
      %3680 = vmatprep.mubr.f32.mxu0 0.0
      %3681 = vmatmul.mubr.f32.gmra.mxu0 %v1506
      %v3682 = vpop.f32.mrf.mxu0
      %v3683 = vadd.f32 0.0, %v3682
      %v3684 = vpop.f32.mrf.mxu0
      %3685 = vmatprep.mubr.f32.mxu0 0.0
      %3686 = vmatmul.mubr.f32.gmra.mxu0 %v1508
      %v3687 = vpop.f32.mrf.mxu0
      %v3688 = vadd.f32 0.0, %v3687
      %v3689 = vpop.f32.mrf.mxu0
      %3690 = vmatprep.mubr.f32.mxu0 0.0
      %3691 = vmatmul.mubr.f32.gmra.mxu0 %v1510
      %v3692 = vpop.f32.mrf.mxu0
      %v3693 = vadd.f32 0.0, %v3692
      %v3694 = vpop.f32.mrf.mxu0
      %3695 = vmatprep.mubr.f32.mxu0 0.0
      %3696 = vmatmul.mubr.f32.gmra.mxu0 %v1512
      %v3697 = vpop.f32.mrf.mxu0
      %v3698 = vadd.f32 0.0, %v3697
      %v3699 = vpop.f32.mrf.mxu0
      %3700 = vmatprep.mubr.f32.mxu0 0.0
      %3701 = vmatmul.mubr.f32.gmra.mxu0 %v2660
      %v3702 = vpop.f32.mrf.mxu0
      %v3703 = vadd.f32 0.0, %v3702
      %v3704 = vpop.f32.mrf.mxu0
      %3705 = vmatprep.mubr.f32.mxu0 0.0
      %3706 = vmatmul.mubr.f32.gmra.mxu0 %v2662
      %v3707 = vpop.f32.mrf.mxu0
      %v3708 = vadd.f32 0.0, %v3707
      %v3709 = vpop.f32.mrf.mxu0
      %3710 = vmatprep.mubr.f32.mxu0 0.0
      %3711 = vmatmul.mubr.f32.gmra.mxu0 %v3494
      %v3712 = vpop.f32.mrf.mxu0
      %v3713 = vadd.f32 0.0, %v3712
      %v3714 = vpop.f32.mrf.mxu0
      %3715 = vmatprep.mubr.f32.mxu0 0.0
      %3716 = vmatmul.mubr.f32.gmra.mxu0 %v1450
      %v3717 = vpop.f32.mrf.mxu0
      %v3718 = vadd.f32 0.0, %v3717
      %v3719 = vpop.f32.mrf.mxu0
      %3720 = vdwg.mxu0
      %v3721 = vadd.f32 %v3445, %v3563
      %v3722 = vadd.f32 %v3446, %v3568
      %v3723 = vadd.f32 %v3447, %v3573
      %v3724 = vadd.f32 %v3448, %v3578
      %v3725 = vadd.f32 %v3449, %v3583
      %v3726 = vadd.f32 %v3450, %v3588
      %v3727 = vadd.f32 %v3451, %v3593
      %v3728 = vadd.f32 %v3452, %v3598
      %v3729 = vadd.f32 %v3453, %v3603
      %v3730 = vadd.f32 %v3454, %v3608
      %v3731 = vadd.f32 %v3455, %v3613
      %v3732 = vadd.f32 %v3456, %v3618
      %v3733 = vadd.f32 %v3457, %v3623
      %v3734 = vadd.f32 %v3458, %v3628
      %v3735 = vadd.f32 %v3459, %v3633
      %v3736 = vadd.f32 %v3460, %v3638
      %v3737 = vadd.f32 %v3461, %v3643
      %v3738 = vadd.f32 %v3462, %v3648
      %v3739 = vadd.f32 %v3463, %v3653
      %v3740 = vadd.f32 %v3464, %v3658
      %v3741 = vadd.f32 %v3465, %v3663
      %v3742 = vadd.f32 %v3466, %v3668
      %v3743 = vadd.f32 %v3467, %v3673
      %v3744 = vadd.f32 %v3468, %v3678
      %v3745 = vadd.f32 %v3469, %v3683
      %v3746 = vadd.f32 %v3470, %v3688
      %v3747 = vadd.f32 %v3471, %v3693
      %v3748 = vadd.f32 %v3472, %v3698
      %v3749 = vadd.f32 %v3473, %v3703
      %v3750 = vadd.f32 %v3474, %v3708
      %v3751 = vadd.f32 %v3475, %v3713
      %v3752 = vadd.f32 %v3476, %v3718
      %s3753 = scalar_lea.vmem %s3, 1024
      %v3754 = vld [vmem:[%s3753] sm:$0xff]
      %v3755 = vld [vmem:[%s3753 + $0x8] sm:$0xff]
      %v3756 = vld [vmem:[%s3753 + $0x10] sm:$0xff]
      %v3757 = vld [vmem:[%s3753 + $0x18] sm:$0xff]
      %v3758 = vld [vmem:[%s3753 + $0x20] sm:$0xff]
      %v3759 = vld [vmem:[%s3753 + $0x28] sm:$0xff]
      %v3760 = vld [vmem:[%s3753 + $0x30] sm:$0xff]
      %v3761 = vld [vmem:[%s3753 + $0x38] sm:$0xff]
      %v3762 = vld [vmem:[%s3753 + $0x40] sm:$0xff]
      %v3763 = vld [vmem:[%s3753 + $0x48] sm:$0xff]
      %v3764 = vld [vmem:[%s3753 + $0x50] sm:$0xff]
      %v3765 = vld [vmem:[%s3753 + $0x58] sm:$0xff]
      %v3766 = vld [vmem:[%s3753 + $0x60] sm:$0xff]
      %v3767 = vld [vmem:[%s3753 + $0x68] sm:$0xff]
      %v3768 = vld [vmem:[%s3753 + $0x70] sm:$0xff]
      %v3769 = vld [vmem:[%s3753 + $0x78] sm:$0xff]
      %v3770 = vsel %vm2013, %v2942, %v2014
      %3772 = vmatprep.subr.mxu0 0.0
      %3773 = vmatpush1.msra.mxu0 %v3769
      %3774 = vmatprep.subr.mxu0 0.0
      %3775 = vmatpush1.msra.mxu0 %v3768
      %3776 = vmatprep.subr.mxu0 0.0
      %3777 = vmatpush1.msra.mxu0 %v3767
      %3778 = vmatprep.subr.mxu0 0.0
      %3779 = vmatpush1.msra.mxu0 %v3766
      %3780 = vmatprep.subr.mxu0 0.0
      %3781 = vmatpush1.msra.mxu0 %v3765
      %3782 = vmatprep.subr.mxu0 0.0
      %3783 = vmatpush1.msra.mxu0 %v3764
      %3784 = vmatprep.subr.mxu0 0.0
      %3785 = vmatpush1.msra.mxu0 %v3763
      %3786 = vmatprep.subr.mxu0 0.0
      %3787 = vmatpush1.msra.mxu0 %v3762
      %3788 = vmatprep.subr.mxu0 0.0
      %3789 = vmatpush1.msra.mxu0 %v3761
      %3790 = vmatprep.subr.mxu0 0.0
      %3791 = vmatpush1.msra.mxu0 %v3760
      %3792 = vmatprep.subr.mxu0 0.0
      %3793 = vmatpush1.msra.mxu0 %v3759
      %3794 = vmatprep.subr.mxu0 0.0
      %3795 = vmatpush1.msra.mxu0 %v3758
      %3796 = vmatprep.subr.mxu0 0.0
      %3797 = vmatpush1.msra.mxu0 %v3757
      %3798 = vmatprep.subr.mxu0 0.0
      %3799 = vmatpush1.msra.mxu0 %v3756
      %3800 = vmatprep.subr.mxu0 0.0
      %3801 = vmatpush1.msra.mxu0 %v3755
      %3802 = vmatprep.subr.mxu0 0.0
      %3803 = vmatpush1.msra.mxu0 %v3754
      %3804 = vmatprep.subr.mxu0 0.0
      %3805 = vmatpush2.msra.mxu0 0.0
      %3806 = vmatprep.subr.mxu0 0.0
      %3807 = vmatpush2.msra.mxu0 0.0
      %3808 = vmatprep.subr.mxu0 0.0
      %3809 = vmatpush2.msra.mxu0 0.0
      %3810 = vmatprep.subr.mxu0 0.0
      %3811 = vmatpush2.msra.mxu0 0.0
      %3812 = vmatprep.subr.mxu0 0.0
      %3813 = vmatpush2.msra.mxu0 0.0
      %3814 = vmatprep.subr.mxu0 0.0
      %3815 = vmatpush2.msra.mxu0 0.0
      %3816 = vmatprep.subr.mxu0 0.0
      %3817 = vmatpush2.msra.mxu0 0.0
      %3818 = vmatprep.subr.mxu0 0.0
      %3819 = vmatpush2.msra.mxu0 0.0
      %3820 = vmatprep.subr.mxu0 0.0
      %3821 = vmatpush2.msra.mxu0 0.0
      %3822 = vmatprep.subr.mxu0 0.0
      %3823 = vmatpush2.msra.mxu0 0.0
      %3824 = vmatprep.subr.mxu0 0.0
      %3825 = vmatpush2.msra.mxu0 0.0
      %3826 = vmatprep.subr.mxu0 0.0
      %3827 = vmatpush2.msra.mxu0 0.0
      %3828 = vmatprep.subr.mxu0 0.0
      %3829 = vmatpush2.msra.mxu0 0.0
      %3830 = vmatprep.subr.mxu0 0.0
      %3831 = vmatpush2.msra.mxu0 0.0
      %3832 = vmatprep.subr.mxu0 0.0
      %3833 = vmatpush2.msra.mxu0 0.0
      %3834 = vmatprep.subr.mxu0 0.0
      %3835 = vmatpush2.msra.mxu0 0.0
      %3836 = vmatprep.mubr.f32.mxu0 0.0
      %3837 = vmatmul.mubr.f32.gmra.mxu0 %v2023
      %v3838 = vpop.f32.mrf.mxu0
      %v3839 = vadd.f32 0.0, %v3838
      %v3840 = vpop.f32.mrf.mxu0
      %3841 = vmatprep.mubr.f32.mxu0 0.0
      %3842 = vmatmul.mubr.f32.gmra.mxu0 %v2025
      %v3843 = vpop.f32.mrf.mxu0
      %v3844 = vadd.f32 0.0, %v3843
      %v3845 = vpop.f32.mrf.mxu0
      %3846 = vmatprep.mubr.f32.mxu0 0.0
      %3847 = vmatmul.mubr.f32.gmra.mxu0 %v2027
      %v3848 = vpop.f32.mrf.mxu0
      %v3849 = vadd.f32 0.0, %v3848
      %v3850 = vpop.f32.mrf.mxu0
      %3851 = vmatprep.mubr.f32.mxu0 0.0
      %3852 = vmatmul.mubr.f32.gmra.mxu0 %v2029
      %v3853 = vpop.f32.mrf.mxu0
      %v3854 = vadd.f32 0.0, %v3853
      %v3855 = vpop.f32.mrf.mxu0
      %3856 = vmatprep.mubr.f32.mxu0 0.0
      %3857 = vmatmul.mubr.f32.gmra.mxu0 %v2031
      %v3858 = vpop.f32.mrf.mxu0
      %v3859 = vadd.f32 0.0, %v3858
      %v3860 = vpop.f32.mrf.mxu0
      %3861 = vmatprep.mubr.f32.mxu0 0.0
      %3862 = vmatmul.mubr.f32.gmra.mxu0 %v2033
      %v3863 = vpop.f32.mrf.mxu0
      %v3864 = vadd.f32 0.0, %v3863
      %v3865 = vpop.f32.mrf.mxu0
      %3866 = vmatprep.mubr.f32.mxu0 0.0
      %3867 = vmatmul.mubr.f32.gmra.mxu0 %v2035
      %v3868 = vpop.f32.mrf.mxu0
      %v3869 = vadd.f32 0.0, %v3868
      %v3870 = vpop.f32.mrf.mxu0
      %3871 = vmatprep.mubr.f32.mxu0 0.0
      %3872 = vmatmul.mubr.f32.gmra.mxu0 %v2037
      %v3873 = vpop.f32.mrf.mxu0
      %v3874 = vadd.f32 0.0, %v3873
      %v3875 = vpop.f32.mrf.mxu0
      %3876 = vmatprep.mubr.f32.mxu0 0.0
      %3877 = vmatmul.mubr.f32.gmra.mxu0 %v2039
      %v3878 = vpop.f32.mrf.mxu0
      %v3879 = vadd.f32 0.0, %v3878
      %v3880 = vpop.f32.mrf.mxu0
      %3881 = vmatprep.mubr.f32.mxu0 0.0
      %3882 = vmatmul.mubr.f32.gmra.mxu0 %v2041
      %v3883 = vpop.f32.mrf.mxu0
      %v3884 = vadd.f32 0.0, %v3883
      %v3885 = vpop.f32.mrf.mxu0
      %3886 = vmatprep.mubr.f32.mxu0 0.0
      %3887 = vmatmul.mubr.f32.gmra.mxu0 %v2043
      %v3888 = vpop.f32.mrf.mxu0
      %v3889 = vadd.f32 0.0, %v3888
      %v3890 = vpop.f32.mrf.mxu0
      %3891 = vmatprep.mubr.f32.mxu0 0.0
      %3892 = vmatmul.mubr.f32.gmra.mxu0 %v2045
      %v3893 = vpop.f32.mrf.mxu0
      %v3894 = vadd.f32 0.0, %v3893
      %v3895 = vpop.f32.mrf.mxu0
      %3896 = vmatprep.mubr.f32.mxu0 0.0
      %3897 = vmatmul.mubr.f32.gmra.mxu0 %v2047
      %v3898 = vpop.f32.mrf.mxu0
      %v3899 = vadd.f32 0.0, %v3898
      %v3900 = vpop.f32.mrf.mxu0
      %3901 = vmatprep.mubr.f32.mxu0 0.0
      %3902 = vmatmul.mubr.f32.gmra.mxu0 %v2049
      %v3903 = vpop.f32.mrf.mxu0
      %v3904 = vadd.f32 0.0, %v3903
      %v3905 = vpop.f32.mrf.mxu0
      %3906 = vmatprep.mubr.f32.mxu0 0.0
      %3907 = vmatmul.mubr.f32.gmra.mxu0 %v2051
      %v3908 = vpop.f32.mrf.mxu0
      %v3909 = vadd.f32 0.0, %v3908
      %v3910 = vpop.f32.mrf.mxu0
      %3911 = vmatprep.mubr.f32.mxu0 0.0
      %3912 = vmatmul.mubr.f32.gmra.mxu0 %v2053
      %v3913 = vpop.f32.mrf.mxu0
      %v3914 = vadd.f32 0.0, %v3913
      %v3915 = vpop.f32.mrf.mxu0
      %3916 = vmatprep.mubr.f32.mxu0 0.0
      %3917 = vmatmul.mubr.f32.gmra.mxu0 %v2055
      %v3918 = vpop.f32.mrf.mxu0
      %v3919 = vadd.f32 0.0, %v3918
      %v3920 = vpop.f32.mrf.mxu0
      %3921 = vmatprep.mubr.f32.mxu0 0.0
      %3922 = vmatmul.mubr.f32.gmra.mxu0 %v2057
      %v3923 = vpop.f32.mrf.mxu0
      %v3924 = vadd.f32 0.0, %v3923
      %v3925 = vpop.f32.mrf.mxu0
      %3926 = vmatprep.mubr.f32.mxu0 0.0
      %3927 = vmatmul.mubr.f32.gmra.mxu0 %v2059
      %v3928 = vpop.f32.mrf.mxu0
      %v3929 = vadd.f32 0.0, %v3928
      %v3930 = vpop.f32.mrf.mxu0
      %3931 = vmatprep.mubr.f32.mxu0 0.0
      %3932 = vmatmul.mubr.f32.gmra.mxu0 %v2061
      %v3933 = vpop.f32.mrf.mxu0
      %v3934 = vadd.f32 0.0, %v3933
      %v3935 = vpop.f32.mrf.mxu0
      %3936 = vmatprep.mubr.f32.mxu0 0.0
      %3937 = vmatmul.mubr.f32.gmra.mxu0 %v2063
      %v3938 = vpop.f32.mrf.mxu0
      %v3939 = vadd.f32 0.0, %v3938
      %v3940 = vpop.f32.mrf.mxu0
      %3941 = vmatprep.mubr.f32.mxu0 0.0
      %3942 = vmatmul.mubr.f32.gmra.mxu0 %v2065
      %v3943 = vpop.f32.mrf.mxu0
      %v3944 = vadd.f32 0.0, %v3943
      %v3945 = vpop.f32.mrf.mxu0
      %3946 = vmatprep.mubr.f32.mxu0 0.0
      %3947 = vmatmul.mubr.f32.gmra.mxu0 %v2067
      %v3948 = vpop.f32.mrf.mxu0
      %v3949 = vadd.f32 0.0, %v3948
      %v3950 = vpop.f32.mrf.mxu0
      %3951 = vmatprep.mubr.f32.mxu0 0.0
      %3952 = vmatmul.mubr.f32.gmra.mxu0 %v2069
      %v3953 = vpop.f32.mrf.mxu0
      %v3954 = vadd.f32 0.0, %v3953
      %v3955 = vpop.f32.mrf.mxu0
      %3956 = vmatprep.mubr.f32.mxu0 0.0
      %3957 = vmatmul.mubr.f32.gmra.mxu0 %v2071
      %v3958 = vpop.f32.mrf.mxu0
      %v3959 = vadd.f32 0.0, %v3958
      %v3960 = vpop.f32.mrf.mxu0
      %3961 = vmatprep.mubr.f32.mxu0 0.0
      %3962 = vmatmul.mubr.f32.gmra.mxu0 %v2073
      %v3963 = vpop.f32.mrf.mxu0
      %v3964 = vadd.f32 0.0, %v3963
      %v3965 = vpop.f32.mrf.mxu0
      %3966 = vmatprep.mubr.f32.mxu0 0.0
      %3967 = vmatmul.mubr.f32.gmra.mxu0 %v2075
      %v3968 = vpop.f32.mrf.mxu0
      %v3969 = vadd.f32 0.0, %v3968
      %v3970 = vpop.f32.mrf.mxu0
      %3971 = vmatprep.mubr.f32.mxu0 0.0
      %3972 = vmatmul.mubr.f32.gmra.mxu0 %v2077
      %v3973 = vpop.f32.mrf.mxu0
      %v3974 = vadd.f32 0.0, %v3973
      %v3975 = vpop.f32.mrf.mxu0
      %3976 = vmatprep.mubr.f32.mxu0 0.0
      %3977 = vmatmul.mubr.f32.gmra.mxu0 %v2941
      %v3978 = vpop.f32.mrf.mxu0
      %v3979 = vadd.f32 0.0, %v3978
      %v3980 = vpop.f32.mrf.mxu0
      %3981 = vmatprep.mubr.f32.mxu0 0.0
      %3982 = vmatmul.mubr.f32.gmra.mxu0 %v2943
      %v3983 = vpop.f32.mrf.mxu0
      %v3984 = vadd.f32 0.0, %v3983
      %v3985 = vpop.f32.mrf.mxu0
      %3986 = vmatprep.mubr.f32.mxu0 0.0
      %3987 = vmatmul.mubr.f32.gmra.mxu0 %v3770
      %v3988 = vpop.f32.mrf.mxu0
      %v3989 = vadd.f32 0.0, %v3988
      %v3990 = vpop.f32.mrf.mxu0
      %3991 = vmatprep.mubr.f32.mxu0 0.0
      %3992 = vmatmul.mubr.f32.gmra.mxu0 %v2015
      %v3993 = vpop.f32.mrf.mxu0
      %v3994 = vadd.f32 0.0, %v3993
      %v3995 = vpop.f32.mrf.mxu0
      %3996 = vdwg.mxu0
      %v3997 = vadd.f32 %v3721, %v3839
      %v3998 = vadd.f32 %v3722, %v3844
      %v3999 = vadd.f32 %v3723, %v3849
      %v4000 = vadd.f32 %v3724, %v3854
      %v4001 = vadd.f32 %v3725, %v3859
      %v4002 = vadd.f32 %v3726, %v3864
      %v4003 = vadd.f32 %v3727, %v3869
      %v4004 = vadd.f32 %v3728, %v3874
      %v4005 = vadd.f32 %v3729, %v3879
      %v4006 = vadd.f32 %v3730, %v3884
      %v4007 = vadd.f32 %v3731, %v3889
      %v4008 = vadd.f32 %v3732, %v3894
      %v4009 = vadd.f32 %v3733, %v3899
      %v4010 = vadd.f32 %v3734, %v3904
      %v4011 = vadd.f32 %v3735, %v3909
      %v4012 = vadd.f32 %v3736, %v3914
      %v4013 = vadd.f32 %v3737, %v3919
      %v4014 = vadd.f32 %v3738, %v3924
      %v4015 = vadd.f32 %v3739, %v3929
      %v4016 = vadd.f32 %v3740, %v3934
      %v4017 = vadd.f32 %v3741, %v3939
      %v4018 = vadd.f32 %v3742, %v3944
      %v4019 = vadd.f32 %v3743, %v3949
      %v4020 = vadd.f32 %v3744, %v3954
      %v4021 = vadd.f32 %v3745, %v3959
      %v4022 = vadd.f32 %v3746, %v3964
      %v4023 = vadd.f32 %v3747, %v3969
      %v4024 = vadd.f32 %v3748, %v3974
      %v4025 = vadd.f32 %v3749, %v3979
      %v4026 = vadd.f32 %v3750, %v3984
      %v4027 = vadd.f32 %v3751, %v3989
      %v4028 = vadd.f32 %v3752, %v3994
      %4029 = vst [vmem:[%s262] sm:$0xff] %v3997
      %4030 = vst [vmem:[%s262 + $0x8] sm:$0xff] %v3998
      %4031 = vst [vmem:[%s262 + $0x10] sm:$0xff] %v3999
      %4032 = vst [vmem:[%s262 + $0x18] sm:$0xff] %v4000
      %4033 = vst [vmem:[%s262 + $0x20] sm:$0xff] %v4001
      %4034 = vst [vmem:[%s262 + $0x28] sm:$0xff] %v4002
      %4035 = vst [vmem:[%s262 + $0x30] sm:$0xff] %v4003
      %4036 = vst [vmem:[%s262 + $0x38] sm:$0xff] %v4004
      %4037 = vst [vmem:[%s262 + $0x40] sm:$0xff] %v4005
      %4038 = vst [vmem:[%s262 + $0x48] sm:$0xff] %v4006
      %4039 = vst [vmem:[%s262 + $0x50] sm:$0xff] %v4007
      %4040 = vst [vmem:[%s262 + $0x58] sm:$0xff] %v4008
      %4041 = vst [vmem:[%s262 + $0x60] sm:$0xff] %v4009
      %4042 = vst [vmem:[%s262 + $0x68] sm:$0xff] %v4010
      %4043 = vst [vmem:[%s262 + $0x70] sm:$0xff] %v4011
      %4044 = vst [vmem:[%s262 + $0x78] sm:$0xff] %v4012
      %4045 = vst [vmem:[%s262 + $0x80] sm:$0xff] %v4013
      %4046 = vst [vmem:[%s262 + $0x88] sm:$0xff] %v4014
      %4047 = vst [vmem:[%s262 + $0x90] sm:$0xff] %v4015
      %4048 = vst [vmem:[%s262 + $0x98] sm:$0xff] %v4016
      %4049 = vst [vmem:[%s262 + $0xa0] sm:$0xff] %v4017
      %4050 = vst [vmem:[%s262 + $0xa8] sm:$0xff] %v4018
      %4051 = vst [vmem:[%s262 + $0xb0] sm:$0xff] %v4019
      %4052 = vst [vmem:[%s262 + $0xb8] sm:$0xff] %v4020
      %4053 = vst [vmem:[%s262 + $0xc0] sm:$0xff] %v4021
      %4054 = vst [vmem:[%s262 + $0xc8] sm:$0xff] %v4022
      %4055 = vst [vmem:[%s262 + $0xd0] sm:$0xff] %v4023
      %4056 = vst [vmem:[%s262 + $0xd8] sm:$0xff] %v4024
      %4057 = vst [vmem:[%s262 + $0xe0] sm:$0xff] %v4025
      %4058 = vst [vmem:[%s262 + $0xe8] sm:$0xff] %v4026
      %4059 = vst [vmem:[%s262 + $0xf0] sm:$0xff] %v4027
      %4060 = vst [vmem:[%s262 + $0xf8] sm:$0xff] %v4028
      %v4061 = vadd.f32 %v3997, %v3998
      %v4062 = vadd.f32 %v4061, %v3999
      %v4063 = vadd.f32 %v4062, %v4000
      %v4064 = vadd.f32 %v4063, %v4001
      %v4065 = vadd.f32 %v4064, %v4002
      %v4066 = vadd.f32 %v4065, %v4003
      %v4067 = vadd.f32 %v4066, %v4004
      %v4068 = vadd.f32 %v4067, %v4005
      %v4069 = vadd.f32 %v4068, %v4006
      %v4070 = vadd.f32 %v4069, %v4007
      %v4071 = vadd.f32 %v4070, %v4008
      %v4072 = vadd.f32 %v4071, %v4009
      %v4073 = vadd.f32 %v4072, %v4010
      %v4074 = vadd.f32 %v4073, %v4011
      %v4075 = vadd.f32 %v4074, %v4012
      %v4076 = vadd.f32 %v4075, %v4013
      %v4077 = vadd.f32 %v4076, %v4014
      %v4078 = vadd.f32 %v4077, %v4015
      %v4079 = vadd.f32 %v4078, %v4016
      %v4080 = vadd.f32 %v4079, %v4017
      %v4081 = vadd.f32 %v4080, %v4018
      %v4082 = vadd.f32 %v4081, %v4019
      %v4083 = vadd.f32 %v4082, %v4020
      %v4084 = vadd.f32 %v4083, %v4021
      %v4085 = vadd.f32 %v4084, %v4022
      %v4086 = vadd.f32 %v4085, %v4023
      %v4087 = vadd.f32 %v4086, %v4024
      %v4088 = vadd.f32 %v4087, %v4025
      %v4089 = vadd.f32 %v4088, %v4026
      %v4090 = vadd.f32 %v4089, %v4027
      %v4091 = vadd.f32 %v4090, %v4028
      %v4092 = vrot.slane %v4091, 4
      %v4093 = vadd.f32 %v4091, %v4092
      %v4094 = vrot.slane %v4093, 2
      %v4095 = vadd.f32 %v4093, %v4094
      %v4096 = vrot.slane %v4095, 1
      %v4097 = vadd.f32 %v4095, %v4096
      %4098 = vst [vmem:[%s265] sm:$0x1] %v4097
      %v4099 = vmul.f32 %v3997, %v3997
      %v4100 = vmul.f32 %v3998, %v3998
      %v4101 = vmul.f32 %v3999, %v3999
      %v4102 = vmul.f32 %v4000, %v4000
      %v4103 = vmul.f32 %v4001, %v4001
      %v4104 = vmul.f32 %v4002, %v4002
      %v4105 = vmul.f32 %v4003, %v4003
      %v4106 = vmul.f32 %v4004, %v4004
      %v4107 = vmul.f32 %v4005, %v4005
      %v4108 = vmul.f32 %v4006, %v4006
      %v4109 = vmul.f32 %v4007, %v4007
      %v4110 = vmul.f32 %v4008, %v4008
      %v4111 = vmul.f32 %v4009, %v4009
      %v4112 = vmul.f32 %v4010, %v4010
      %v4113 = vmul.f32 %v4011, %v4011
      %v4114 = vmul.f32 %v4012, %v4012
      %v4115 = vmul.f32 %v4013, %v4013
      %v4116 = vmul.f32 %v4014, %v4014
      %v4117 = vmul.f32 %v4015, %v4015
      %v4118 = vmul.f32 %v4016, %v4016
      %v4119 = vmul.f32 %v4017, %v4017
      %v4120 = vmul.f32 %v4018, %v4018
      %v4121 = vmul.f32 %v4019, %v4019
      %v4122 = vmul.f32 %v4020, %v4020
      %v4123 = vmul.f32 %v4021, %v4021
      %v4124 = vmul.f32 %v4022, %v4022
      %v4125 = vmul.f32 %v4023, %v4023
      %v4126 = vmul.f32 %v4024, %v4024
      %v4127 = vmul.f32 %v4025, %v4025
      %v4128 = vmul.f32 %v4026, %v4026
      %v4129 = vmul.f32 %v4027, %v4027
      %v4130 = vmul.f32 %v4028, %v4028
      %v4131 = vadd.f32 %v4099, %v4100
      %v4132 = vadd.f32 %v4131, %v4101
      %v4133 = vadd.f32 %v4132, %v4102
      %v4134 = vadd.f32 %v4133, %v4103
      %v4135 = vadd.f32 %v4134, %v4104
      %v4136 = vadd.f32 %v4135, %v4105
      %v4137 = vadd.f32 %v4136, %v4106
      %v4138 = vadd.f32 %v4137, %v4107
      %v4139 = vadd.f32 %v4138, %v4108
      %v4140 = vadd.f32 %v4139, %v4109
      %v4141 = vadd.f32 %v4140, %v4110
      %v4142 = vadd.f32 %v4141, %v4111
      %v4143 = vadd.f32 %v4142, %v4112
      %v4144 = vadd.f32 %v4143, %v4113
      %v4145 = vadd.f32 %v4144, %v4114
      %v4146 = vadd.f32 %v4145, %v4115
      %v4147 = vadd.f32 %v4146, %v4116
      %v4148 = vadd.f32 %v4147, %v4117
      %v4149 = vadd.f32 %v4148, %v4118
      %v4150 = vadd.f32 %v4149, %v4119
      %v4151 = vadd.f32 %v4150, %v4120
      %v4152 = vadd.f32 %v4151, %v4121
      %v4153 = vadd.f32 %v4152, %v4122
      %v4154 = vadd.f32 %v4153, %v4123
      %v4155 = vadd.f32 %v4154, %v4124
      %v4156 = vadd.f32 %v4155, %v4125
      %v4157 = vadd.f32 %v4156, %v4126
      %v4158 = vadd.f32 %v4157, %v4127
      %v4159 = vadd.f32 %v4158, %v4128
      %v4160 = vadd.f32 %v4159, %v4129
      %v4161 = vadd.f32 %v4160, %v4130
      %v4162 = vrot.slane %v4161, 4
      %v4163 = vadd.f32 %v4161, %v4162
      %v4164 = vrot.slane %v4163, 2
      %v4165 = vadd.f32 %v4163, %v4164
      %v4166 = vrot.slane %v4165, 1
      %v4167 = vadd.f32 %v4165, %v4166
      %4168 = vst [vmem:[%s268] sm:$0x1] %v4167
      %p4169 = scmp.lt.s32.totalorder %s18, 1
      %s4170 = scalar_select %p4169, %s18, 1
      %s4171 = smul.addr %s4170, 32
      %s4172 = smul.addr %s4171, 8
      %s4173 = scalar_lea.vmem %s4, %s4172
      %p4174 = scmp.lt.s32.totalorder %s18, 1
      %s4175 = scalar_select %p4174, %s18, 1
      %s4176 = scalar_lea.vmem %s5, %s4175
      %p4177 = scmp.lt.s32.totalorder %s18, 1
      %s4178 = scalar_select %p4177, %s18, 1
      %s4179 = scalar_lea.vmem %s6, %s4178
      // Predicated region
      $region37: #{residual_block_forward.4} parent=35 // pred_check
        %p4180 = pneg %p125
      $region38: #{residual_block_forward.4} parent=35 // pred_check_branch
        %4182 = sbr.rel (%p4180) target = $region40
      $region39: #{residual_block_forward.4} parent=35 // pred_region
        _
      $region40: #{residual_block_forward.4} parent=35 // pred_fallthru
        _
      // Predicated region
      $region41: #{residual_block_forward.4} parent=35 // pred_check
        %p4183 = pneg %p151
      $region42: #{residual_block_forward.4} parent=35 // pred_check_branch
        %4185 = sbr.rel (%p4183) target = $region44
      $region43: #{residual_block_forward.4} parent=35 // pred_region
        _
      $region44: #{residual_block_forward.4} parent=35 // pred_fallthru
        _
      // Predicated region
      $region45: #{residual_block_forward.4} parent=35 // pred_check
        %p4186 = pneg %p177
      $region46: #{residual_block_forward.4} parent=35 // pred_check_branch
        %4188 = sbr.rel (%p4186) target = $region48
      $region47: #{residual_block_forward.4} parent=35 // pred_region
        _
      $region48: #{residual_block_forward.4} parent=35 // pred_fallthru
        _
    $region36: #{residual_block_forward.4} parent=5 // pred_fallthru
      _
    %p4189 = scmp.le.s32.totalorder 2, %s13
    // Predicated region
    $region49: #{residual_block_forward.4} parent=5 // pred_check
      %p4190 = pneg %p4189
    $region50: #{residual_block_forward.4} parent=5 // pred_check_branch
      %4192 = sbr.rel (%p4190) target = $region52
    $region51: #{residual_block_forward.4} parent=5 // pred_region
      %s4193 = ssub.s32 %s13, 2
      // Predicated region
      $region53: #{residual_block_forward.4} parent=51 // pred_check
        %p4194 = pneg %p131
      $region54: #{residual_block_forward.4} parent=51 // pred_check_branch
        %4196 = sbr.rel (%p4194) target = $region56
      $region55: #{residual_block_forward.4} parent=51 // pred_region
        %p4197 = scmp.lt.s32.totalorder %s19, 1
        %s4198 = scalar_select %p4197, %s19, 1
        %s4199 = smul.addr %s4198, 32
        %s4200 = smul.addr %s4199, 8
        %s4201 = scalar_lea.vmem %s4, %s4200
      $region56: #{residual_block_forward.4} parent=51 // pred_fallthru
        _
      // Predicated region
      $region57: #{residual_block_forward.4} parent=51 // pred_check
        %p4202 = pneg %p157
      $region58: #{residual_block_forward.4} parent=51 // pred_check_branch
        %4204 = sbr.rel (%p4202) target = $region60
      $region59: #{residual_block_forward.4} parent=51 // pred_region
        %p4205 = scmp.lt.s32.totalorder %s19, 1
        %s4206 = scalar_select %p4205, %s19, 1
        %s4207 = scalar_lea.vmem %s5, %s4206
      $region60: #{residual_block_forward.4} parent=51 // pred_fallthru
        _
      // Predicated region
      $region61: #{residual_block_forward.4} parent=51 // pred_check
        %p4208 = pneg %p183
      $region62: #{residual_block_forward.4} parent=51 // pred_check_branch
        %4210 = sbr.rel (%p4208) target = $region64
      $region63: #{residual_block_forward.4} parent=51 // pred_region
        %p4211 = scmp.lt.s32.totalorder %s19, 1
        %s4212 = scalar_select %p4211, %s19, 1
        %s4213 = scalar_lea.vmem %s6, %s4212
      $region64: #{residual_block_forward.4} parent=51 // pred_fallthru
        _
    $region52: #{residual_block_forward.4} parent=5 // pred_fallthru
      _
  $region6: #{residual_block_forward.4} parent=0 // loop_footer
    %s17 = sadd.s32 1, %s13
  $region7: #{residual_block_forward.4} parent=0 // loop_footer_branch
    %12 = sbr.rel target = $region3
  $region8: #{residual_block_forward.4} parent=0 // loop_exit
    _

</llo_original>
